<compile_context>
chip_gen: v5e
topology: v5e:2x2
jax: 0.10.0
libtpu: 0.0.40
codegen_flags: <defaults>
</compile_context>

<pallas_src>
import functools

import jax
import jax.numpy as jnp
from jax.experimental import pallas as pl
from jax.experimental.pallas import tpu as pltpu


def _round_up(x, m):
    return ((x + m - 1) // m) * m


def _sublane(itemsize):
    # native sublane tile: 8 for 32-bit, 16 for 16-bit dtypes
    return max(8, 32 // itemsize)


def _tile_bytes(rows, cols, itemsize, sub):
    # physical VMEM footprint of a 2-D tile including sublane/lane padding
    return _round_up(max(int(rows), 1), sub) * _round_up(max(int(cols), 1), 128) * itemsize


def _device_kind():
    try:
        return jax.devices()[0].device_kind.lower()
    except Exception:
        return ""


def _vmem_budget_and_limit():
    kind = _device_kind()
    try:
        cap = pltpu.get_tpu_info().vmem_capacity_bytes
    except Exception:
        cap = (64 << 20) if "v7" in kind else (128 << 20)
    if cap <= (64 << 20):
        # v7x: 64 MiB per TensorCore -> leave headroom for compiler scratch
        return 44 << 20, 56 << 20
    # v5e / v6e: 128 MiB per TensorCore
    return 96 << 20, 112 << 20


def _tree_attn_kernel(hidden_ref, enc_ref, wh_ref, we_ref, ba_ref, ws_ref,
                      mask_ref, out_ref, *, ew_dtype):
    # hidden_ref: (tB, H)        enc_ref: (S_pad, tB, I)  (seq-major block)
    # wh_ref: (H, H) = attn_W[:, :H].T   we_ref: (I, H) = attn_W[:, H:].T
    # ba_ref: (1, H) f32   ws_ref: (1, H) f32 (= score_W)
    # mask_ref: (tB, S_pad) f32 (1.0 where masked; padded columns are 1.0)
    # out_ref: (tB, S_pad) f32  -- S_pad a multiple of 128 (lane-dense store)
    S_pad, tB, I = enc_ref.shape
    H = wh_ref.shape[1]

    # Hidden-side projection + attn bias, hoisted once per batch tile.
    hpb = (jnp.dot(hidden_ref[...], wh_ref[...],
                   preferred_element_type=jnp.float32) + ba_ref[...])        # (tB, H) f32

    # Encoder-side projection as ONE tall 2-D MXU matmul (relayout-free
    # reshape because tB is a multiple of the sublane tile).
    ep = jnp.dot(enc_ref[...].reshape(S_pad * tB, I), we_ref[...],
                 preferred_element_type=jnp.float32)                         # (S_pad*tB, H) f32
    pre = ep.reshape(S_pad, tB, H) + hpb[None, :, :]

    # tanh in bf16 on v6e/v7x (native EUP bf16), f32 elsewhere; the score
    # reduction promotes back to f32 via the f32 score weight.
    feat = jnp.tanh(pre.astype(ew_dtype))                                    # (S_pad, tB, H)
    e = jnp.sum(feat * ws_ref[...][None, :, :], axis=-1)                     # (S_pad, tB) f32
    e = jnp.transpose(e)                                                     # (tB, S_pad) -- tiny XLU transpose

    # masked_fill + softmax over the (padded) seq axis. Padded columns carry
    # mask==1 -> -1e12 -> exp underflows to exactly 0, so no extra masking.
    e = jnp.where(mask_ref[...] > 0.0, jnp.float32(-1e12), e)
    m = jnp.max(e, axis=1, keepdims=True)
    p = jnp.exp(e - m)
    out_ref[...] = p / jnp.sum(p, axis=1, keepdims=True)                     # single unmasked full-width store


def _choose_batch_tile(B_sub, S_pad, I, H, md, single_buffer_weights, budget):
    """Largest multiple-of-sublane batch tile whose padded VMEM footprint
    fits the budget; capped so the grid has >= 2 steps when B allows it."""
    it = jnp.dtype(md).itemsize
    sub = _sublane(it)

    def cost(tb):
        enc_in = 2 * S_pad * _tile_bytes(tb, I, it, sub)        # double-buffered enc tile
        hid_in = 2 * _tile_bytes(tb, H, it, sub)
        msk_in = 2 * _tile_bytes(tb, S_pad, 4, 8)
        out_bf = 2 * _tile_bytes(tb, S_pad, 4, 8)
        interm = 3 * _tile_bytes(S_pad * tb, H, 4, 8)           # ep / feat / product (f32, lane-padded)
        e_buf = _tile_bytes(S_pad, tb, 4, 8) + _tile_bytes(tb, S_pad, 4, 8)
        wrep = 1 if single_buffer_weights else 2
        wts = wrep * (_tile_bytes(H, H, it, sub) + _tile_bytes(I, H, it, sub)) \
            + 2 * 2 * _tile_bytes(1, H, 4, 8)
        return enc_in + hid_in + msk_in + out_bf + interm + e_buf + wts

    best = None
    t = sub
    while t <= B_sub:
        if cost(t) <= budget:
            best = t
        t += sub
    if best is None:
        # smallest legal tile; for extreme S an S-axis online softmax is the
        # right fix (see TODO at top of file).
        best = sub
    # keep >= 2 grid steps when the padded batch allows it, so the enc DMA
    # overlaps compute and both v7x TensorCores get work.
    if B_sub >= 2 * sub:
        best = min(best, max(sub, (B_sub // 2 // sub) * sub))
    return best


def tree_attn(hidden, encoder_outputs, attn_w, attn_b, score_w, score_b,
              seq_mask=None, *, matmul_dtype=jnp.bfloat16):
    """Pallas TreeAttn forward.

    hidden:          (1, B, H)
    encoder_outputs: (S, B, I)   (seq-major; never transposed in HBM)
    attn_w: (H, H + I), attn_b: (H,), score_w: (1, H), score_b: (1,)
    seq_mask: optional (B, S) bool
    matmul_dtype: dtype fed to the MXU (default bf16: the kernel is
        HBM-bound, so halving encoder bytes is the dominant win);
        accumulation and softmax stay float32.
    returns: (B, 1, S) float32
    """
    S, B, I = encoder_outputs.shape
    H = attn_w.shape[0]
    md = jnp.dtype(matmul_dtype)
    S_pad = _round_up(S, 128)

    kind = _device_kind()
    budget, vmem_limit = _vmem_budget_and_limit()
    # bf16 elementwise math only where the EUP/VPU support it natively.
    if md == jnp.dtype(jnp.bfloat16) and ("v6" in kind or "v7" in kind):
        ew_dtype = jnp.bfloat16
    else:
        ew_dtype = jnp.float32

    sub = _sublane(md.itemsize)
    B_sub = _round_up(B, sub)
    tB = _choose_batch_tile(B_sub, S_pad, I, H, md, True, budget)
    B_pad = _round_up(B_sub, tB)
    grid = (B_pad // tB,)

    # Wrapper-side padding so the kernel runs at (B_pad, S_pad) everywhere and
    # the output write is a single unmasked lane-dense store.
    h2d = jnp.pad(hidden.reshape(B, H), ((0, B_pad - B), (0, 0))).astype(md)
    enc = jnp.pad(encoder_outputs,
                  ((0, S_pad - S), (0, B_pad - B), (0, 0))).astype(md)      # stays seq-major
    wh_t = attn_w[:, :H].T.astype(md)                                       # (H, H)
    we_t = attn_w[:, H:].T.astype(md)                                       # (I, H)
    ba = attn_b.reshape(1, H).astype(jnp.float32)
    ws = score_w.reshape(1, H).astype(jnp.float32)
    # score_b shifts every logit equally and is cancelled exactly by the
    # softmax -> dropped from the kernel (bit-identical output).
    del score_b

    mask_f = jnp.ones((B_pad, S_pad), jnp.float32)                          # padded rows/cols masked
    if seq_mask is not None:
        mask_f = mask_f.at[:B, :S].set(seq_mask.astype(jnp.float32))
    else:
        mask_f = mask_f.at[:B, :S].set(0.0)

    def run(single_buffer_weights, ew):
        kernel = functools.partial(_tree_attn_kernel, ew_dtype=ew)
        if single_buffer_weights:
            def wspec(shape):
                return pl.BlockSpec(shape, lambda b: (0,) * len(shape),
                                    pipeline_mode=pl.Buffered(1))
        else:
            def wspec(shape):
                return pl.BlockSpec(shape, lambda b: (0,) * len(shape))
        out = pl.pallas_call(
            kernel,
            out_shape=jax.ShapeDtypeStruct((B_pad, S_pad), jnp.float32),
            grid=grid,
            in_specs=[
                pl.BlockSpec((tB, H), lambda b: (b, 0)),             # hidden tile
                pl.BlockSpec((S_pad, tB, I), lambda b: (0, b, 0)),   # encoder tile (seq-major)
                wspec((H, H)),                                       # attn W (hidden part)
                wspec((I, H)),                                       # attn W (encoder part)
                wspec((1, H)),                                       # attn bias
                wspec((1, H)),                                       # score weight
                pl.BlockSpec((tB, S_pad), lambda b: (b, 0)),         # seq mask
            ],
            out_specs=pl.BlockSpec((tB, S_pad), lambda b: (b, 0)),
            compiler_params=pltpu.CompilerParams(
                dimension_semantics=("parallel",),
                vmem_limit_bytes=vmem_limit),
        )(h2d, enc, wh_t, we_t, ba, ws, mask_f)
        return jax.block_until_ready(out)

    try:
        out = run(True, ew_dtype)
    except Exception:
        # conservative fallback: double-buffered weights, f32 elementwise.
        out = run(False, jnp.float32)

    return out[:B, :S].reshape(B, 1, S)


def tree_attn_ref(hidden, encoder_outputs, attn_w, attn_b, score_w, score_b,
                  seq_mask=None):
    """Pure-JAX reference mirroring the PyTorch forward exactly."""
    S, B, I = encoder_outputs.shape
    H = attn_w.shape[0]
    hid = jnp.broadcast_to(hidden, (S, B, H))                               # repeat over seq
    energy_in = jnp.concatenate([hid, encoder_outputs], axis=2).reshape(-1, H + I)
    feat = jnp.tanh(energy_in @ attn_w.T + attn_b)
    e = (feat @ score_w.T + score_b)[:, 0]
    e = e.reshape(S, B).T                                                   # (B, S)
    if seq_mask is not None:
        e = jnp.where(seq_mask, -1e12, e)
    return jax.nn.softmax(e, axis=1)[:, None, :]                            # (B, 1, S)


if __name__ == "__main__":
    # small shapes consistent with the module
    B, S = 2, 8
    input_size, hidden_size = 32, 32

    key = jax.random.PRNGKey(0)
    k_h, k_e, k_aw, k_ab, k_sw, k_sb = jax.random.split(key, 6)

    hidden = jax.random.normal(k_h, (1, B, hidden_size), jnp.float32)
    encoder_outputs = jax.random.normal(k_e, (S, B, input_size), jnp.float32)

    # deterministic nn.Linear-style init (uniform in +-1/sqrt(fan_in))
    bound_a = 1.0 / (hidden_size + input_size) ** 0.5
    attn_w = jax.random.uniform(k_aw, (hidden_size, hidden_size + input_size),
                                jnp.float32, -bound_a, bound_a)
    attn_b = jax.random.uniform(k_ab, (hidden_size,), jnp.float32,
                                -bound_a, bound_a)
    bound_s = 1.0 / hidden_size ** 0.5
    score_w = jax.random.uniform(k_sw, (1, hidden_size), jnp.float32,
                                 -bound_s, bound_s)
    score_b = jax.random.uniform(k_sb, (1,), jnp.float32, -bound_s, bound_s)

    # mask the tail of the second batch element
    seq_mask = jnp.zeros((B, S), bool).at[1, S - 2:].set(True)

    ref = tree_attn_ref(hidden, encoder_outputs, attn_w, attn_b, score_w,
                        score_b, seq_mask)

    # default (fast) path: bf16 MXU inputs -> relaxed tolerance vs f32 ref
    out_bf16 = tree_attn(hidden, encoder_outputs, attn_w, attn_b, score_w,
                         score_b, seq_mask)
    out_bf16 = jax.block_until_ready(out_bf16)
    assert out_bf16.shape == (B, 1, S)
    assert jnp.allclose(out_bf16, ref, atol=3e-2, rtol=3e-2), (out_bf16, ref)

    # exactness path: f32 everywhere, tight tolerance
    out_f32 = tree_attn(hidden, encoder_outputs, attn_w, attn_b, score_w,
                        score_b, seq_mask, matmul_dtype=jnp.float32)
    out_f32 = jax.block_until_ready(out_f32)
    assert out_f32.shape == (B, 1, S)
    assert jnp.allclose(out_f32, ref, atol=1e-5, rtol=1e-5), (out_f32, ref)

    print("KERNEL_OK")
</pallas_src>

<mosaic_0001>
module attributes {stable_mosaic.version = 11 : i64} {
  func.func @_tree_attn_kernel(%arg0: i32, %arg1: memref<16x32xbf16, #tpu.memory_space<vmem>>, %arg2: memref<128x16x32xbf16, #tpu.memory_space<vmem>>, %arg3: memref<32x32xbf16, #tpu.memory_space<vmem>>, %arg4: memref<32x32xbf16, #tpu.memory_space<vmem>>, %arg5: memref<1x32xf32, #tpu.memory_space<vmem>>, %arg6: memref<1x32xf32, #tpu.memory_space<vmem>>, %arg7: memref<16x128xf32, #tpu.memory_space<vmem>>, %arg8: memref<16x128xf32, #tpu.memory_space<vmem>>) attributes {dimension_semantics = [#tpu.dimension_semantics<parallel>], iteration_bounds = array<i64: 1>, scalar_prefetch = 0 : i64, scratch_operands = 0 : i64, tpu.core_type = #tpu.core_type<tc>, window_params = [{transform_indices = @transform_0, window_bounds = array<i64: 16, 32>}, {transform_indices = @transform_1, window_bounds = array<i64: 128, 16, 32>}, {pipeline_mode = #tpu.pipeline_mode<synchronous>, transform_indices = @transform_2, window_bounds = array<i64: 32, 32>}, {pipeline_mode = #tpu.pipeline_mode<synchronous>, transform_indices = @transform_3, window_bounds = array<i64: 32, 32>}, {pipeline_mode = #tpu.pipeline_mode<synchronous>, transform_indices = @transform_4, window_bounds = array<i64: 1, 32>}, {pipeline_mode = #tpu.pipeline_mode<synchronous>, transform_indices = @transform_5, window_bounds = array<i64: 1, 32>}, {transform_indices = @transform_6, window_bounds = array<i64: 16, 128>}, {transform_indices = @transform_7, window_bounds = array<i64: 16, 128>}]} {
    %c0 = arith.constant 0 : index
    %c0_0 = arith.constant 0 : index
    %0 = vector.load %arg1[%c0, %c0_0] : memref<16x32xbf16, #tpu.memory_space<vmem>>, vector<16x32xbf16>
    %c0_1 = arith.constant 0 : index
    %c0_2 = arith.constant 0 : index
    %1 = vector.load %arg3[%c0_1, %c0_2] : memref<32x32xbf16, #tpu.memory_space<vmem>>, vector<32x32xbf16>
    %cst = arith.constant dense<0.000000e+00> : vector<16x32xf32>
    %2 = tpu.matmul %0, %1, %cst {dimension_numbers = #tpu.dot_dimension_numbers<[1], [0], [0], [1], [0, 0, 1, 1], [], []>} : vector<16x32xbf16>, vector<32x32xbf16>, vector<16x32xf32> -> vector<16x32xf32>
    %c0_3 = arith.constant 0 : index
    %c0_4 = arith.constant 0 : index
    %3 = vector.load %arg5[%c0_3, %c0_4] : memref<1x32xf32, #tpu.memory_space<vmem>>, vector<1x32xf32>
    %4 = vector.broadcast %3 : vector<1x32xf32> to vector<16x32xf32>
    %5 = arith.addf %2, %4 : vector<16x32xf32>
    %c0_5 = arith.constant 0 : index
    %c0_6 = arith.constant 0 : index
    %c0_7 = arith.constant 0 : index
    %6 = vector.load %arg2[%c0_5, %c0_6, %c0_7] : memref<128x16x32xbf16, #tpu.memory_space<vmem>>, vector<128x16x32xbf16>
    %7 = vector.shape_cast %6 : vector<128x16x32xbf16> to vector<2048x32xbf16>
    %c0_8 = arith.constant 0 : index
    %c0_9 = arith.constant 0 : index
    %8 = vector.load %arg4[%c0_8, %c0_9] : memref<32x32xbf16, #tpu.memory_space<vmem>>, vector<32x32xbf16>
    %cst_10 = arith.constant dense<0.000000e+00> : vector<2048x32xf32>
    %9 = tpu.matmul %7, %8, %cst_10 {dimension_numbers = #tpu.dot_dimension_numbers<[1], [0], [0], [1], [0, 0, 1, 1], [], []>} : vector<2048x32xbf16>, vector<32x32xbf16>, vector<2048x32xf32> -> vector<2048x32xf32>
    %10 = vector.shape_cast %9 : vector<2048x32xf32> to vector<128x16x32xf32>
    %11 = vector.shape_cast %5 : vector<16x32xf32> to vector<1x16x32xf32>
    %12 = vector.broadcast %11 : vector<1x16x32xf32> to vector<128x16x32xf32>
    %13 = arith.addf %10, %12 : vector<128x16x32xf32>
    %14 = math.tanh %13 : vector<128x16x32xf32>
    %c0_11 = arith.constant 0 : index
    %c0_12 = arith.constant 0 : index
    %15 = vector.load %arg6[%c0_11, %c0_12] : memref<1x32xf32, #tpu.memory_space<vmem>>, vector<1x32xf32>
    %16 = vector.shape_cast %15 : vector<1x32xf32> to vector<1x1x32xf32>
    %17 = vector.broadcast %16 : vector<1x1x32xf32> to vector<128x16x32xf32>
    %18 = arith.mulf %14, %17 : vector<128x16x32xf32>
    %cst_13 = arith.constant dense<0.000000e+00> : vector<128x16xf32>
    %19 = vector.multi_reduction <add>, %18, %cst_13 [2] : vector<128x16x32xf32> to vector<128x16xf32>
    %20 = tpu.transpose %19, [1, 0] : vector<128x16xf32> -> vector<16x128xf32>
    %c0_14 = arith.constant 0 : index
    %c0_15 = arith.constant 0 : index
    %21 = vector.load %arg7[%c0_14, %c0_15] : memref<16x128xf32, #tpu.memory_space<vmem>>, vector<16x128xf32>
    %cst_16 = arith.constant 0.000000e+00 : f32
    %22 = vector.broadcast %cst_16 : f32 to vector<16x128xf32>
    %23 = arith.cmpf ogt, %21, %22 : vector<16x128xf32>
    %cst_17 = arith.constant -9.99999995E+11 : f32
    %24 = vector.broadcast %cst_17 : f32 to vector<16x128xf32>
    %25 = arith.select %23, %24, %20 : vector<16x128xi1>, vector<16x128xf32>
    %cst_18 = arith.constant dense<0xFF800000> : vector<16xf32>
    %26 = vector.multi_reduction <maximumf>, %25, %cst_18 [1] : vector<16x128xf32> to vector<16xf32>
    %27 = vector.shape_cast %26 : vector<16xf32> to vector<16x1xf32>
    %28 = vector.broadcast %27 : vector<16x1xf32> to vector<16x128xf32>
    %29 = arith.subf %25, %28 : vector<16x128xf32>
    %30 = math.exp %29 : vector<16x128xf32>
    %cst_19 = arith.constant dense<0.000000e+00> : vector<16xf32>
    %31 = vector.multi_reduction <add>, %30, %cst_19 [1] : vector<16x128xf32> to vector<16xf32>
    %32 = vector.shape_cast %31 : vector<16xf32> to vector<16x1xf32>
    %33 = vector.broadcast %32 : vector<16x1xf32> to vector<16x128xf32>
    %34 = arith.divf %30, %33 : vector<16x128xf32>
    %c0_20 = arith.constant 0 : index
    %c0_21 = arith.constant 0 : index
    %35 = vector.load %arg8[%c0_20, %c0_21] : memref<16x128xf32, #tpu.memory_space<vmem>>, vector<16x128xf32>
    tpu.vector_store %arg8[%c0_20, %c0_21], %34 {strides = array<i32>} : memref<16x128xf32, #tpu.memory_space<vmem>>, vector<16x128xf32>,
    return
  }
  func.func @transform_0(%arg0: i32) -> (i32, i32) {
    %c0_i32 = arith.constant 0 : i32
    %c0_i32_0 = arith.constant 0 : i32
    return %arg0, %c0_i32 : i32, i32
  }
  func.func @transform_1(%arg0: i32) -> (i32, i32, i32) {
    %c0_i32 = arith.constant 0 : i32
    %c0_i32_0 = arith.constant 0 : i32
    %c0_i32_1 = arith.constant 0 : i32
    return %c0_i32, %arg0, %c0_i32_0 : i32, i32, i32
  }
  func.func @transform_2(%arg0: i32) -> (i32, i32) {
    %c0_i32 = arith.constant 0 : i32
    %c0_i32_0 = arith.constant 0 : i32
    %c0_i32_1 = arith.constant 0 : i32
    return %c0_i32, %c0_i32_0 : i32, i32
  }
  func.func @transform_3(%arg0: i32) -> (i32, i32) {
    %c0_i32 = arith.constant 0 : i32
    %c0_i32_0 = arith.constant 0 : i32
    %c0_i32_1 = arith.constant 0 : i32
    return %c0_i32, %c0_i32_0 : i32, i32
  }
  func.func @transform_4(%arg0: i32) -> (i32, i32) {
    %c0_i32 = arith.constant 0 : i32
    %c0_i32_0 = arith.constant 0 : i32
    %c0_i32_1 = arith.constant 0 : i32
    return %c0_i32, %c0_i32_0 : i32, i32
  }
  func.func @transform_5(%arg0: i32) -> (i32, i32) {
    %c0_i32 = arith.constant 0 : i32
    %c0_i32_0 = arith.constant 0 : i32
    %c0_i32_1 = arith.constant 0 : i32
    return %c0_i32, %c0_i32_0 : i32, i32
  }
  func.func @transform_6(%arg0: i32) -> (i32, i32) {
    %c0_i32 = arith.constant 0 : i32
    %c0_i32_0 = arith.constant 0 : i32
    return %arg0, %c0_i32 : i32, i32
  }
  func.func @transform_7(%arg0: i32) -> (i32, i32) {
    %c0_i32 = arith.constant 0 : i32
    %c0_i32_0 = arith.constant 0 : i32
    return %arg0, %c0_i32 : i32, i32
  }
}

module attributes {stable_mosaic.version = 11 : i64} {
  func.func @_tree_attn_kernel(%arg0: i32, %arg1: memref<16x32xbf16, #tpu.memory_space<vmem>>, %arg2: memref<128x16x32xbf16, #tpu.memory_space<vmem>>, %arg3: memref<32x32xbf16, #tpu.memory_space<vmem>>, %arg4: memref<32x32xbf16, #tpu.memory_space<vmem>>, %arg5: memref<1x32xf32, #tpu.memory_space<vmem>>, %arg6: memref<1x32xf32, #tpu.memory_space<vmem>>, %arg7: memref<16x128xf32, #tpu.memory_space<vmem>>, %arg8: memref<16x128xf32, #tpu.memory_space<vmem>>) attributes {dimension_semantics = [#tpu.dimension_semantics<parallel>], iteration_bounds = array<i64: 1>, scalar_prefetch = 0 : i64, scratch_operands = 0 : i64, tpu.core_type = #tpu.core_type<tc>, window_params = [{transform_indices = @transform_0, window_bounds = array<i64: 16, 32>}, {transform_indices = @transform_1, window_bounds = array<i64: 128, 16, 32>}, {pipeline_mode = #tpu.pipeline_mode<synchronous>, transform_indices = @transform_2, window_bounds = array<i64: 32, 32>}, {pipeline_mode = #tpu.pipeline_mode<synchronous>, transform_indices = @transform_3, window_bounds = array<i64: 32, 32>}, {pipeline_mode = #tpu.pipeline_mode<synchronous>, transform_indices = @transform_4, window_bounds = array<i64: 1, 32>}, {pipeline_mode = #tpu.pipeline_mode<synchronous>, transform_indices = @transform_5, window_bounds = array<i64: 1, 32>}, {transform_indices = @transform_6, window_bounds = array<i64: 16, 128>}, {transform_indices = @transform_7, window_bounds = array<i64: 16, 128>}]} {
    %c0 = arith.constant 0 : index
    %c0_0 = arith.constant 0 : index
    %0 = vector.load %arg1[%c0, %c0_0] : memref<16x32xbf16, #tpu.memory_space<vmem>>, vector<16x32xbf16>
    %c0_1 = arith.constant 0 : index
    %c0_2 = arith.constant 0 : index
    %1 = vector.load %arg3[%c0_1, %c0_2] : memref<32x32xbf16, #tpu.memory_space<vmem>>, vector<32x32xbf16>
    %cst = arith.constant dense<0.000000e+00> : vector<16x32xf32>
    %2 = tpu.matmul %0, %1, %cst {dimension_numbers = #tpu.dot_dimension_numbers<[1], [0], [0], [1], [0, 0, 1, 1], [], []>} : vector<16x32xbf16>, vector<32x32xbf16>, vector<16x32xf32> -> vector<16x32xf32>
    %c0_3 = arith.constant 0 : index
    %c0_4 = arith.constant 0 : index
    %3 = vector.load %arg5[%c0_3, %c0_4] : memref<1x32xf32, #tpu.memory_space<vmem>>, vector<1x32xf32>
    %4 = vector.broadcast %3 : vector<1x32xf32> to vector<16x32xf32>
    %5 = arith.addf %2, %4 : vector<16x32xf32>
    %c0_5 = arith.constant 0 : index
    %c0_6 = arith.constant 0 : index
    %c0_7 = arith.constant 0 : index
    %6 = vector.load %arg2[%c0_5, %c0_6, %c0_7] : memref<128x16x32xbf16, #tpu.memory_space<vmem>>, vector<128x16x32xbf16>
    %7 = vector.shape_cast %6 : vector<128x16x32xbf16> to vector<2048x32xbf16>
    %c0_8 = arith.constant 0 : index
    %c0_9 = arith.constant 0 : index
    %8 = vector.load %arg4[%c0_8, %c0_9] : memref<32x32xbf16, #tpu.memory_space<vmem>>, vector<32x32xbf16>
    %cst_10 = arith.constant dense<0.000000e+00> : vector<2048x32xf32>
    %9 = tpu.matmul %7, %8, %cst_10 {dimension_numbers = #tpu.dot_dimension_numbers<[1], [0], [0], [1], [0, 0, 1, 1], [], []>} : vector<2048x32xbf16>, vector<32x32xbf16>, vector<2048x32xf32> -> vector<2048x32xf32>
    %10 = vector.shape_cast %9 : vector<2048x32xf32> to vector<128x16x32xf32>
    %11 = vector.shape_cast %5 : vector<16x32xf32> to vector<1x16x32xf32>
    %12 = vector.broadcast %11 : vector<1x16x32xf32> to vector<128x16x32xf32>
    %13 = arith.addf %10, %12 : vector<128x16x32xf32>
    %14 = math.tanh %13 : vector<128x16x32xf32>
    %c0_11 = arith.constant 0 : index
    %c0_12 = arith.constant 0 : index
    %15 = vector.load %arg6[%c0_11, %c0_12] : memref<1x32xf32, #tpu.memory_space<vmem>>, vector<1x32xf32>
    %16 = vector.shape_cast %15 : vector<1x32xf32> to vector<1x1x32xf32>
    %17 = vector.broadcast %16 : vector<1x1x32xf32> to vector<128x16x32xf32>
    %18 = arith.mulf %14, %17 : vector<128x16x32xf32>
    %cst_13 = arith.constant dense<0.000000e+00> : vector<128x16xf32>
    %19 = vector.multi_reduction <add>, %18, %cst_13 [2] : vector<128x16x32xf32> to vector<128x16xf32>
    %20 = tpu.transpose %19, [1, 0] : vector<128x16xf32> -> vector<16x128xf32>
    %c0_14 = arith.constant 0 : index
    %c0_15 = arith.constant 0 : index
    %21 = vector.load %arg7[%c0_14, %c0_15] : memref<16x128xf32, #tpu.memory_space<vmem>>, vector<16x128xf32>
    %cst_16 = arith.constant 0.000000e+00 : f32
    %22 = vector.broadcast %cst_16 : f32 to vector<16x128xf32>
    %23 = arith.cmpf ogt, %21, %22 : vector<16x128xf32>
    %cst_17 = arith.constant -9.99999995E+11 : f32
    %24 = vector.broadcast %cst_17 : f32 to vector<16x128xf32>
    %25 = arith.select %23, %24, %20 : vector<16x128xi1>, vector<16x128xf32>
    %cst_18 = arith.constant dense<0xFF800000> : vector<16xf32>
    %26 = vector.multi_reduction <maximumf>, %25, %cst_18 [1] : vector<16x128xf32> to vector<16xf32>
    %27 = vector.shape_cast %26 : vector<16xf32> to vector<16x1xf32>
    %28 = vector.broadcast %27 : vector<16x1xf32> to vector<16x128xf32>
    %29 = arith.subf %25, %28 : vector<16x128xf32>
    %30 = math.exp %29 : vector<16x128xf32>
    %cst_19 = arith.constant dense<0.000000e+00> : vector<16xf32>
    %31 = vector.multi_reduction <add>, %30, %cst_19 [1] : vector<16x128xf32> to vector<16xf32>
    %32 = vector.shape_cast %31 : vector<16xf32> to vector<16x1xf32>
    %33 = vector.broadcast %32 : vector<16x1xf32> to vector<16x128xf32>
    %34 = arith.divf %30, %33 : vector<16x128xf32>
    %c0_20 = arith.constant 0 : index
    %c0_21 = arith.constant 0 : index
    %35 = vector.load %arg8[%c0_20, %c0_21] : memref<16x128xf32, #tpu.memory_space<vmem>>, vector<16x128xf32>
    tpu.vector_store %arg8[%c0_20, %c0_21], %34 {strides = array<i32>} : memref<16x128xf32, #tpu.memory_space<vmem>>, vector<16x128xf32>,
    return
  }
  func.func @transform_0(%arg0: i32) -> (i32, i32) {
    %c0_i32 = arith.constant 0 : i32
    %c0_i32_0 = arith.constant 0 : i32
    return %arg0, %c0_i32 : i32, i32
  }
  func.func @transform_1(%arg0: i32) -> (i32, i32, i32) {
    %c0_i32 = arith.constant 0 : i32
    %c0_i32_0 = arith.constant 0 : i32
    %c0_i32_1 = arith.constant 0 : i32
    return %c0_i32, %arg0, %c0_i32_0 : i32, i32, i32
  }
  func.func @transform_2(%arg0: i32) -> (i32, i32) {
    %c0_i32 = arith.constant 0 : i32
    %c0_i32_0 = arith.constant 0 : i32
    %c0_i32_1 = arith.constant 0 : i32
    return %c0_i32, %c0_i32_0 : i32, i32
  }
  func.func @transform_3(%arg0: i32) -> (i32, i32) {
    %c0_i32 = arith.constant 0 : i32
    %c0_i32_0 = arith.constant 0 : i32
    %c0_i32_1 = arith.constant 0 : i32
    return %c0_i32, %c0_i32_0 : i32, i32
  }
  func.func @transform_4(%arg0: i32) -> (i32, i32) {
    %c0_i32 = arith.constant 0 : i32
    %c0_i32_0 = arith.constant 0 : i32
    %c0_i32_1 = arith.constant 0 : i32
    return %c0_i32, %c0_i32_0 : i32, i32
  }
  func.func @transform_5(%arg0: i32) -> (i32, i32) {
    %c0_i32 = arith.constant 0 : i32
    %c0_i32_0 = arith.constant 0 : i32
    %c0_i32_1 = arith.constant 0 : i32
    return %c0_i32, %c0_i32_0 : i32, i32
  }
  func.func @transform_6(%arg0: i32) -> (i32, i32) {
    %c0_i32 = arith.constant 0 : i32
    %c0_i32_0 = arith.constant 0 : i32
    return %arg0, %c0_i32 : i32, i32
  }
  func.func @transform_7(%arg0: i32) -> (i32, i32) {
    %c0_i32 = arith.constant 0 : i32
    %c0_i32_0 = arith.constant 0 : i32
    return %arg0, %c0_i32 : i32, i32
  }
}

</mosaic_0001>

<llo_original>
// kernel: tpu_custom_call.1
$region0: #{tpu_custom_call.1}
  #allocation0 [shape = 'u32[]', space=smem, size = 0x4, offset = 0x4, fixed_abs, tag = 'smem constant byte address 0x4 - core index']
  #allocation1 [shape = 'u32[72,128]{1,0:T(1,128)}', space=vmem, size = 0x9000, scoped, tag = 'internal scratch']
  %s0 = inlined_call_operand.vmem [shape: bf16[16,32], index: 0, kind: input, shape index: {}]
  %s1 = inlined_call_operand.vmem [shape: bf16[128,16,32], index: 1, kind: input, shape index: {}]
  %s2 = inlined_call_operand.vmem [shape: bf16[32,32], index: 2, kind: input, shape index: {}]
  %s3 = inlined_call_operand.vmem [shape: bf16[32,32], index: 3, kind: input, shape index: {}]
  %s4 = inlined_call_operand.vmem [shape: f32[1,32], index: 4, kind: input, shape index: {}]
  %s5 = inlined_call_operand.vmem [shape: f32[1,32], index: 5, kind: input, shape index: {}]
  %s6 = inlined_call_operand.vmem [shape: f32[16,128], index: 6, kind: input, shape index: {}]
  %s7 = inlined_call_operand.hbm [shape: f32[16,128], index: 7, kind: output, shape index: {}]
  %s8 = sld [smem:[#allocation0]]
  $region38: #{tpu_custom_call.1} parent=0
    _
  %s10 = ssub.s32 1, %s8
  %s11 = scalar_select 0, %s10, %s8
  $region1: #{tpu_custom_call.1} parent=0
    #allocation2 [shape = 'u8[8192]{0}', space=vmem, size = 0x2000, scoped, tag = 'output window, operand 0, single buffered']
    #allocation3 [shape = 's32[1]{0}', space=sflag, size = 0x4, scoped, tag = 'scoped memory for tpu_custom_call.1']
    %12 = vsyncpa [#allocation3], 0
    // Predicated region
    $region2: #{tpu_custom_call.1} parent=1 // pred_check
      _
    $region3: #{tpu_custom_call.1} parent=1 // pred_check_branch
      %14 = sbr.rel (0) target = $region5
    $region4: #{tpu_custom_call.1} parent=1 // pred_region
      _
    $region5: #{tpu_custom_call.1} parent=1 // pred_fallthru
      _
    // Predicated region
    $region6: #{tpu_custom_call.1} parent=1 // pred_check
      _
    $region7: #{tpu_custom_call.1} parent=1 // pred_check_branch
      %16 = sbr.rel (0) target = $region9
    $region8: #{tpu_custom_call.1} parent=1 // pred_region
      _
    $region9: #{tpu_custom_call.1} parent=1 // pred_fallthru
      _
    // Predicated region
    $region10: #{tpu_custom_call.1} parent=1 // pred_check
      _
    $region11: #{tpu_custom_call.1} parent=1 // pred_check_branch
      %18 = sbr.rel (0) target = $region13
    $region12: #{tpu_custom_call.1} parent=1 // pred_region
      _
    $region13: #{tpu_custom_call.1} parent=1 // pred_fallthru
      _
    // Predicated region
    $region14: #{tpu_custom_call.1} parent=1 // pred_check
      _
    $region15: #{tpu_custom_call.1} parent=1 // pred_check_branch
      %20 = sbr.rel (0) target = $region17
    $region16: #{tpu_custom_call.1} parent=1 // pred_region
      _
    $region17: #{tpu_custom_call.1} parent=1 // pred_fallthru
      _
    // Predicated region
    $region18: #{tpu_custom_call.1} parent=1 // pred_check
      _
    $region19: #{tpu_custom_call.1} parent=1 // pred_check_branch
      %22 = sbr.rel (0) target = $region21
    $region20: #{tpu_custom_call.1} parent=1 // pred_region
      _
    $region21: #{tpu_custom_call.1} parent=1 // pred_fallthru
      _
    // Predicated region
    $region22: #{tpu_custom_call.1} parent=1 // pred_check
      _
    $region23: #{tpu_custom_call.1} parent=1 // pred_check_branch
      %24 = sbr.rel (0) target = $region25
    $region24: #{tpu_custom_call.1} parent=1 // pred_region
      _
    $region25: #{tpu_custom_call.1} parent=1 // pred_fallthru
      _
    // Predicated region
    $region26: #{tpu_custom_call.1} parent=1 // pred_check
      _
    $region27: #{tpu_custom_call.1} parent=1 // pred_check_branch
      %26 = sbr.rel (0) target = $region29
    $region28: #{tpu_custom_call.1} parent=1 // pred_region
      _
    $region29: #{tpu_custom_call.1} parent=1 // pred_fallthru
      _
    %v28 = vld [vmem:[%s0] sm:$0xf]
    %v29 = vld [vmem:[%s0 + $0x4] sm:$0xf]
    %v30 = vld [vmem:[%s2] sm:$0xf]
    %v31 = vld [vmem:[%s2 + $0x4] sm:$0xf]
    %v32 = vld [vmem:[%s2 + $0x8] sm:$0xf]
    %v33 = vld [vmem:[%s2 + $0xc] sm:$0xf]
    %v34 = vld [vmem:[%s4] sm:$0x1]
    %v36 = vperm.slane %v34, 0
    %v40 = vunpack.c.l.b16 %v28
    %v41 = vunpack.c.l.b16 %v29
    %v42 = vpack.c.b16 %v41, %v40
    %v47 = vunpack.c.l.b16 %v30
    %v48 = vunpack.c.l.b16 %v31
    %v49 = vunpack.c.l.b16 %v32
    %v50 = vunpack.c.l.b16 %v33
    %v51 = vpack.c.b16 %v48, %v47
    %v52 = vpack.c.b16 %v50, %v49
    %vm55 = vcmask 261120
    %v57 = vsel %vm55, %v42, 0
    %59 = vmatpush.bf16.msra.mxu0 0
    %60 = vmatpush.bf16.msra.mxu0 0
    %61 = vmatpush.bf16.msra.mxu0 0
    %62 = vmatpush.bf16.msra.mxu0 0
    %63 = vmatpush.bf16.msra.mxu0 0
    %64 = vmatpush.bf16.msra.mxu0 0
    %65 = vmatpush.bf16.msra.mxu0 %v52
    %66 = vmatpush.bf16.msra.mxu0 %v51
    %67 = vmatmul.bf16.gmra.mxu0 %v57
    %v68 = vpop.f32.mrf.mxu0
    %v69 = vadd.f32 %v36, %v68
    %v70 = vpop.f32.mrf.mxu0
    %v71 = vadd.f32 %v36, %v70
    %72 = vdwg.mxu0
    %v73 = vld [vmem:[%s1] sm:$0xf]
    %v74 = vld [vmem:[%s1 + $0x4] sm:$0xf]
    %v75 = vld [vmem:[%s1 + $0x8] sm:$0xf]
    %v76 = vld [vmem:[%s1 + $0xc] sm:$0xf]
    %v77 = vld [vmem:[%s1 + $0x10] sm:$0xf]
    %v78 = vld [vmem:[%s1 + $0x14] sm:$0xf]
    %v79 = vld [vmem:[%s1 + $0x18] sm:$0xf]
    %v80 = vld [vmem:[%s1 + $0x1c] sm:$0xf]
    %v81 = vld [vmem:[%s1 + $0x20] sm:$0xf]
    %v82 = vld [vmem:[%s1 + $0x24] sm:$0xf]
    %v83 = vld [vmem:[%s1 + $0x28] sm:$0xf]
    %v84 = vld [vmem:[%s1 + $0x2c] sm:$0xf]
    %v85 = vld [vmem:[%s1 + $0x30] sm:$0xf]
    %v86 = vld [vmem:[%s1 + $0x34] sm:$0xf]
    %v87 = vld [vmem:[%s1 + $0x38] sm:$0xf]
    %v88 = vld [vmem:[%s1 + $0x3c] sm:$0xf]
    %v89 = vld [vmem:[%s1 + $0x40] sm:$0xf]
    %v90 = vld [vmem:[%s1 + $0x44] sm:$0xf]
    %v91 = vld [vmem:[%s1 + $0x48] sm:$0xf]
    %v92 = vld [vmem:[%s1 + $0x4c] sm:$0xf]
    %v93 = vld [vmem:[%s1 + $0x50] sm:$0xf]
    %v94 = vld [vmem:[%s1 + $0x54] sm:$0xf]
    %v95 = vld [vmem:[%s1 + $0x58] sm:$0xf]
    %v96 = vld [vmem:[%s1 + $0x5c] sm:$0xf]
    %v97 = vld [vmem:[%s1 + $0x60] sm:$0xf]
    %v98 = vld [vmem:[%s1 + $0x64] sm:$0xf]
    %v99 = vld [vmem:[%s1 + $0x68] sm:$0xf]
    %v100 = vld [vmem:[%s1 + $0x6c] sm:$0xf]
    %v101 = vld [vmem:[%s1 + $0x70] sm:$0xf]
    %v102 = vld [vmem:[%s1 + $0x74] sm:$0xf]
    %v103 = vld [vmem:[%s1 + $0x78] sm:$0xf]
    %v104 = vld [vmem:[%s1 + $0x7c] sm:$0xf]
    %v105 = vld [vmem:[%s1 + $0x80] sm:$0xf]
    %v106 = vld [vmem:[%s1 + $0x84] sm:$0xf]
    %v107 = vld [vmem:[%s1 + $0x88] sm:$0xf]
    %v108 = vld [vmem:[%s1 + $0x8c] sm:$0xf]
    %v109 = vld [vmem:[%s1 + $0x90] sm:$0xf]
    %v110 = vld [vmem:[%s1 + $0x94] sm:$0xf]
    %v111 = vld [vmem:[%s1 + $0x98] sm:$0xf]
    %v112 = vld [vmem:[%s1 + $0x9c] sm:$0xf]
    %v113 = vld [vmem:[%s1 + $0xa0] sm:$0xf]
    %v114 = vld [vmem:[%s1 + $0xa4] sm:$0xf]
    %v115 = vld [vmem:[%s1 + $0xa8] sm:$0xf]
    %v116 = vld [vmem:[%s1 + $0xac] sm:$0xf]
    %v117 = vld [vmem:[%s1 + $0xb0] sm:$0xf]
    %v118 = vld [vmem:[%s1 + $0xb4] sm:$0xf]
    %v119 = vld [vmem:[%s1 + $0xb8] sm:$0xf]
    %v120 = vld [vmem:[%s1 + $0xbc] sm:$0xf]
    %v121 = vld [vmem:[%s1 + $0xc0] sm:$0xf]
    %v122 = vld [vmem:[%s1 + $0xc4] sm:$0xf]
    %v123 = vld [vmem:[%s1 + $0xc8] sm:$0xf]
    %v124 = vld [vmem:[%s1 + $0xcc] sm:$0xf]
    %v125 = vld [vmem:[%s1 + $0xd0] sm:$0xf]
    %v126 = vld [vmem:[%s1 + $0xd4] sm:$0xf]
    %v127 = vld [vmem:[%s1 + $0xd8] sm:$0xf]
    %v128 = vld [vmem:[%s1 + $0xdc] sm:$0xf]
    %v129 = vld [vmem:[%s1 + $0xe0] sm:$0xf]
    %v130 = vld [vmem:[%s1 + $0xe4] sm:$0xf]
    %v131 = vld [vmem:[%s1 + $0xe8] sm:$0xf]
    %v132 = vld [vmem:[%s1 + $0xec] sm:$0xf]
    %v133 = vld [vmem:[%s1 + $0xf0] sm:$0xf]
    %v134 = vld [vmem:[%s1 + $0xf4] sm:$0xf]
    %v135 = vld [vmem:[%s1 + $0xf8] sm:$0xf]
    %v136 = vld [vmem:[%s1 + $0xfc] sm:$0xf]
    %v137 = vld [vmem:[%s1 + $0x100] sm:$0xf]
    %v138 = vld [vmem:[%s1 + $0x104] sm:$0xf]
    %v139 = vld [vmem:[%s1 + $0x108] sm:$0xf]
    %v140 = vld [vmem:[%s1 + $0x10c] sm:$0xf]
    %v141 = vld [vmem:[%s1 + $0x110] sm:$0xf]
    %v142 = vld [vmem:[%s1 + $0x114] sm:$0xf]
    %v143 = vld [vmem:[%s1 + $0x118] sm:$0xf]
    %v144 = vld [vmem:[%s1 + $0x11c] sm:$0xf]
    %v145 = vld [vmem:[%s1 + $0x120] sm:$0xf]
    %v146 = vld [vmem:[%s1 + $0x124] sm:$0xf]
    %v147 = vld [vmem:[%s1 + $0x128] sm:$0xf]
    %v148 = vld [vmem:[%s1 + $0x12c] sm:$0xf]
    %v149 = vld [vmem:[%s1 + $0x130] sm:$0xf]
    %v150 = vld [vmem:[%s1 + $0x134] sm:$0xf]
    %v151 = vld [vmem:[%s1 + $0x138] sm:$0xf]
    %v152 = vld [vmem:[%s1 + $0x13c] sm:$0xf]
    %v153 = vld [vmem:[%s1 + $0x140] sm:$0xf]
    %v154 = vld [vmem:[%s1 + $0x144] sm:$0xf]
    %v155 = vld [vmem:[%s1 + $0x148] sm:$0xf]
    %v156 = vld [vmem:[%s1 + $0x14c] sm:$0xf]
    %v157 = vld [vmem:[%s1 + $0x150] sm:$0xf]
    %v158 = vld [vmem:[%s1 + $0x154] sm:$0xf]
    %v159 = vld [vmem:[%s1 + $0x158] sm:$0xf]
    %v160 = vld [vmem:[%s1 + $0x15c] sm:$0xf]
    %v161 = vld [vmem:[%s1 + $0x160] sm:$0xf]
    %v162 = vld [vmem:[%s1 + $0x164] sm:$0xf]
    %v163 = vld [vmem:[%s1 + $0x168] sm:$0xf]
    %v164 = vld [vmem:[%s1 + $0x16c] sm:$0xf]
    %v165 = vld [vmem:[%s1 + $0x170] sm:$0xf]
    %v166 = vld [vmem:[%s1 + $0x174] sm:$0xf]
    %v167 = vld [vmem:[%s1 + $0x178] sm:$0xf]
    %v168 = vld [vmem:[%s1 + $0x17c] sm:$0xf]
    %v169 = vld [vmem:[%s1 + $0x180] sm:$0xf]
    %v170 = vld [vmem:[%s1 + $0x184] sm:$0xf]
    %v171 = vld [vmem:[%s1 + $0x188] sm:$0xf]
    %v172 = vld [vmem:[%s1 + $0x18c] sm:$0xf]
    %v173 = vld [vmem:[%s1 + $0x190] sm:$0xf]
    %v174 = vld [vmem:[%s1 + $0x194] sm:$0xf]
    %v175 = vld [vmem:[%s1 + $0x198] sm:$0xf]
    %v176 = vld [vmem:[%s1 + $0x19c] sm:$0xf]
    %v177 = vld [vmem:[%s1 + $0x1a0] sm:$0xf]
    %v178 = vld [vmem:[%s1 + $0x1a4] sm:$0xf]
    %v179 = vld [vmem:[%s1 + $0x1a8] sm:$0xf]
    %v180 = vld [vmem:[%s1 + $0x1ac] sm:$0xf]
    %v181 = vld [vmem:[%s1 + $0x1b0] sm:$0xf]
    %v182 = vld [vmem:[%s1 + $0x1b4] sm:$0xf]
    %v183 = vld [vmem:[%s1 + $0x1b8] sm:$0xf]
    %v184 = vld [vmem:[%s1 + $0x1bc] sm:$0xf]
    %v185 = vld [vmem:[%s1 + $0x1c0] sm:$0xf]
    %v186 = vld [vmem:[%s1 + $0x1c4] sm:$0xf]
    %v187 = vld [vmem:[%s1 + $0x1c8] sm:$0xf]
    %v188 = vld [vmem:[%s1 + $0x1cc] sm:$0xf]
    %v189 = vld [vmem:[%s1 + $0x1d0] sm:$0xf]
    %v190 = vld [vmem:[%s1 + $0x1d4] sm:$0xf]
    %v191 = vld [vmem:[%s1 + $0x1d8] sm:$0xf]
    %v192 = vld [vmem:[%s1 + $0x1dc] sm:$0xf]
    %v193 = vld [vmem:[%s1 + $0x1e0] sm:$0xf]
    %v194 = vld [vmem:[%s1 + $0x1e4] sm:$0xf]
    %v195 = vld [vmem:[%s1 + $0x1e8] sm:$0xf]
    %v196 = vld [vmem:[%s1 + $0x1ec] sm:$0xf]
    %v197 = vld [vmem:[%s1 + $0x1f0] sm:$0xf]
    %v198 = vld [vmem:[%s1 + $0x1f4] sm:$0xf]
    %v199 = vld [vmem:[%s1 + $0x1f8] sm:$0xf]
    %v200 = vld [vmem:[%s1 + $0x1fc] sm:$0xf]
    %v201 = vld [vmem:[%s1 + $0x200] sm:$0xf]
    %v202 = vld [vmem:[%s1 + $0x204] sm:$0xf]
    %v203 = vld [vmem:[%s1 + $0x208] sm:$0xf]
    %v204 = vld [vmem:[%s1 + $0x20c] sm:$0xf]
    %v205 = vld [vmem:[%s1 + $0x210] sm:$0xf]
    %v206 = vld [vmem:[%s1 + $0x214] sm:$0xf]
    %v207 = vld [vmem:[%s1 + $0x218] sm:$0xf]
    %v208 = vld [vmem:[%s1 + $0x21c] sm:$0xf]
    %v209 = vld [vmem:[%s1 + $0x220] sm:$0xf]
    %v210 = vld [vmem:[%s1 + $0x224] sm:$0xf]
    %v211 = vld [vmem:[%s1 + $0x228] sm:$0xf]
    %v212 = vld [vmem:[%s1 + $0x22c] sm:$0xf]
    %v213 = vld [vmem:[%s1 + $0x230] sm:$0xf]
    %v214 = vld [vmem:[%s1 + $0x234] sm:$0xf]
    %v215 = vld [vmem:[%s1 + $0x238] sm:$0xf]
    %v216 = vld [vmem:[%s1 + $0x23c] sm:$0xf]
    %v217 = vld [vmem:[%s1 + $0x240] sm:$0xf]
    %v218 = vld [vmem:[%s1 + $0x244] sm:$0xf]
    %v219 = vld [vmem:[%s1 + $0x248] sm:$0xf]
    %v220 = vld [vmem:[%s1 + $0x24c] sm:$0xf]
    %v221 = vld [vmem:[%s1 + $0x250] sm:$0xf]
    %v222 = vld [vmem:[%s1 + $0x254] sm:$0xf]
    %v223 = vld [vmem:[%s1 + $0x258] sm:$0xf]
    %v224 = vld [vmem:[%s1 + $0x25c] sm:$0xf]
    %v225 = vld [vmem:[%s1 + $0x260] sm:$0xf]
    %v226 = vld [vmem:[%s1 + $0x264] sm:$0xf]
    %v227 = vld [vmem:[%s1 + $0x268] sm:$0xf]
    %v228 = vld [vmem:[%s1 + $0x26c] sm:$0xf]
    %v229 = vld [vmem:[%s1 + $0x270] sm:$0xf]
    %v230 = vld [vmem:[%s1 + $0x274] sm:$0xf]
    %v231 = vld [vmem:[%s1 + $0x278] sm:$0xf]
    %v232 = vld [vmem:[%s1 + $0x27c] sm:$0xf]
    %v233 = vld [vmem:[%s1 + $0x280] sm:$0xf]
    %v234 = vld [vmem:[%s1 + $0x284] sm:$0xf]
    %v235 = vld [vmem:[%s1 + $0x288] sm:$0xf]
    %v236 = vld [vmem:[%s1 + $0x28c] sm:$0xf]
    %v237 = vld [vmem:[%s1 + $0x290] sm:$0xf]
    %v238 = vld [vmem:[%s1 + $0x294] sm:$0xf]
    %v239 = vld [vmem:[%s1 + $0x298] sm:$0xf]
    %v240 = vld [vmem:[%s1 + $0x29c] sm:$0xf]
    %v241 = vld [vmem:[%s1 + $0x2a0] sm:$0xf]
    %v242 = vld [vmem:[%s1 + $0x2a4] sm:$0xf]
    %v243 = vld [vmem:[%s1 + $0x2a8] sm:$0xf]
    %v244 = vld [vmem:[%s1 + $0x2ac] sm:$0xf]
    %v245 = vld [vmem:[%s1 + $0x2b0] sm:$0xf]
    %v246 = vld [vmem:[%s1 + $0x2b4] sm:$0xf]
    %v247 = vld [vmem:[%s1 + $0x2b8] sm:$0xf]
    %v248 = vld [vmem:[%s1 + $0x2bc] sm:$0xf]
    %v249 = vld [vmem:[%s1 + $0x2c0] sm:$0xf]
    %v250 = vld [vmem:[%s1 + $0x2c4] sm:$0xf]
    %v251 = vld [vmem:[%s1 + $0x2c8] sm:$0xf]
    %v252 = vld [vmem:[%s1 + $0x2cc] sm:$0xf]
    %v253 = vld [vmem:[%s1 + $0x2d0] sm:$0xf]
    %v254 = vld [vmem:[%s1 + $0x2d4] sm:$0xf]
    %v255 = vld [vmem:[%s1 + $0x2d8] sm:$0xf]
    %v256 = vld [vmem:[%s1 + $0x2dc] sm:$0xf]
    %v257 = vld [vmem:[%s1 + $0x2e0] sm:$0xf]
    %v258 = vld [vmem:[%s1 + $0x2e4] sm:$0xf]
    %v259 = vld [vmem:[%s1 + $0x2e8] sm:$0xf]
    %v260 = vld [vmem:[%s1 + $0x2ec] sm:$0xf]
    %v261 = vld [vmem:[%s1 + $0x2f0] sm:$0xf]
    %v262 = vld [vmem:[%s1 + $0x2f4] sm:$0xf]
    %v263 = vld [vmem:[%s1 + $0x2f8] sm:$0xf]
    %v264 = vld [vmem:[%s1 + $0x2fc] sm:$0xf]
    %v265 = vld [vmem:[%s1 + $0x300] sm:$0xf]
    %v266 = vld [vmem:[%s1 + $0x304] sm:$0xf]
    %v267 = vld [vmem:[%s1 + $0x308] sm:$0xf]
    %v268 = vld [vmem:[%s1 + $0x30c] sm:$0xf]
    %v269 = vld [vmem:[%s1 + $0x310] sm:$0xf]
    %v270 = vld [vmem:[%s1 + $0x314] sm:$0xf]
    %v271 = vld [vmem:[%s1 + $0x318] sm:$0xf]
    %v272 = vld [vmem:[%s1 + $0x31c] sm:$0xf]
    %v273 = vld [vmem:[%s1 + $0x320] sm:$0xf]
    %v274 = vld [vmem:[%s1 + $0x324] sm:$0xf]
    %v275 = vld [vmem:[%s1 + $0x328] sm:$0xf]
    %v276 = vld [vmem:[%s1 + $0x32c] sm:$0xf]
    %v277 = vld [vmem:[%s1 + $0x330] sm:$0xf]
    %v278 = vld [vmem:[%s1 + $0x334] sm:$0xf]
    %v279 = vld [vmem:[%s1 + $0x338] sm:$0xf]
    %v280 = vld [vmem:[%s1 + $0x33c] sm:$0xf]
    %v281 = vld [vmem:[%s1 + $0x340] sm:$0xf]
    %v282 = vld [vmem:[%s1 + $0x344] sm:$0xf]
    %v283 = vld [vmem:[%s1 + $0x348] sm:$0xf]
    %v284 = vld [vmem:[%s1 + $0x34c] sm:$0xf]
    %v285 = vld [vmem:[%s1 + $0x350] sm:$0xf]
    %v286 = vld [vmem:[%s1 + $0x354] sm:$0xf]
    %v287 = vld [vmem:[%s1 + $0x358] sm:$0xf]
    %v288 = vld [vmem:[%s1 + $0x35c] sm:$0xf]
    %v289 = vld [vmem:[%s1 + $0x360] sm:$0xf]
    %v290 = vld [vmem:[%s1 + $0x364] sm:$0xf]
    %v291 = vld [vmem:[%s1 + $0x368] sm:$0xf]
    %v292 = vld [vmem:[%s1 + $0x36c] sm:$0xf]
    %v293 = vld [vmem:[%s1 + $0x370] sm:$0xf]
    %v294 = vld [vmem:[%s1 + $0x374] sm:$0xf]
    %v295 = vld [vmem:[%s1 + $0x378] sm:$0xf]
    %v296 = vld [vmem:[%s1 + $0x37c] sm:$0xf]
    %v297 = vld [vmem:[%s1 + $0x380] sm:$0xf]
    %v298 = vld [vmem:[%s1 + $0x384] sm:$0xf]
    %v299 = vld [vmem:[%s1 + $0x388] sm:$0xf]
    %v300 = vld [vmem:[%s1 + $0x38c] sm:$0xf]
    %v301 = vld [vmem:[%s1 + $0x390] sm:$0xf]
    %v302 = vld [vmem:[%s1 + $0x394] sm:$0xf]
    %v303 = vld [vmem:[%s1 + $0x398] sm:$0xf]
    %v304 = vld [vmem:[%s1 + $0x39c] sm:$0xf]
    %v305 = vld [vmem:[%s1 + $0x3a0] sm:$0xf]
    %v306 = vld [vmem:[%s1 + $0x3a4] sm:$0xf]
    %v307 = vld [vmem:[%s1 + $0x3a8] sm:$0xf]
    %v308 = vld [vmem:[%s1 + $0x3ac] sm:$0xf]
    %v309 = vld [vmem:[%s1 + $0x3b0] sm:$0xf]
    %v310 = vld [vmem:[%s1 + $0x3b4] sm:$0xf]
    %v311 = vld [vmem:[%s1 + $0x3b8] sm:$0xf]
    %v312 = vld [vmem:[%s1 + $0x3bc] sm:$0xf]
    %v313 = vld [vmem:[%s1 + $0x3c0] sm:$0xf]
    %v314 = vld [vmem:[%s1 + $0x3c4] sm:$0xf]
    %v315 = vld [vmem:[%s1 + $0x3c8] sm:$0xf]
    %v316 = vld [vmem:[%s1 + $0x3cc] sm:$0xf]
    %v317 = vld [vmem:[%s1 + $0x3d0] sm:$0xf]
    %v318 = vld [vmem:[%s1 + $0x3d4] sm:$0xf]
    %v319 = vld [vmem:[%s1 + $0x3d8] sm:$0xf]
    %v320 = vld [vmem:[%s1 + $0x3dc] sm:$0xf]
    %v321 = vld [vmem:[%s1 + $0x3e0] sm:$0xf]
    %v322 = vld [vmem:[%s1 + $0x3e4] sm:$0xf]
    %v323 = vld [vmem:[%s1 + $0x3e8] sm:$0xf]
    %v324 = vld [vmem:[%s1 + $0x3ec] sm:$0xf]
    %v325 = vld [vmem:[%s1 + $0x3f0] sm:$0xf]
    %v326 = vld [vmem:[%s1 + $0x3f4] sm:$0xf]
    %v327 = vld [vmem:[%s1 + $0x3f8] sm:$0xf]
    %v328 = vld [vmem:[%s1 + $0x3fc] sm:$0xf]
    %v329 = vld [vmem:[%s3] sm:$0xf]
    %v330 = vld [vmem:[%s3 + $0x4] sm:$0xf]
    %v331 = vld [vmem:[%s3 + $0x8] sm:$0xf]
    %v332 = vld [vmem:[%s3 + $0xc] sm:$0xf]
    %v589 = vunpack.c.l.b16 %v73
    %v590 = vunpack.c.l.b16 %v74
    %v591 = vunpack.c.l.b16 %v75
    %v592 = vunpack.c.l.b16 %v76
    %v593 = vunpack.c.l.b16 %v77
    %v594 = vunpack.c.l.b16 %v78
    %v595 = vunpack.c.l.b16 %v79
    %v596 = vunpack.c.l.b16 %v80
    %v597 = vunpack.c.l.b16 %v81
    %v598 = vunpack.c.l.b16 %v82
    %v599 = vunpack.c.l.b16 %v83
    %v600 = vunpack.c.l.b16 %v84
    %v601 = vunpack.c.l.b16 %v85
    %v602 = vunpack.c.l.b16 %v86
    %v603 = vunpack.c.l.b16 %v87
    %v604 = vunpack.c.l.b16 %v88
    %v605 = vunpack.c.l.b16 %v89
    %v606 = vunpack.c.l.b16 %v90
    %v607 = vunpack.c.l.b16 %v91
    %v608 = vunpack.c.l.b16 %v92
    %v609 = vunpack.c.l.b16 %v93
    %v610 = vunpack.c.l.b16 %v94
    %v611 = vunpack.c.l.b16 %v95
    %v612 = vunpack.c.l.b16 %v96
    %v613 = vunpack.c.l.b16 %v97
    %v614 = vunpack.c.l.b16 %v98
    %v615 = vunpack.c.l.b16 %v99
    %v616 = vunpack.c.l.b16 %v100
    %v617 = vunpack.c.l.b16 %v101
    %v618 = vunpack.c.l.b16 %v102
    %v619 = vunpack.c.l.b16 %v103
    %v620 = vunpack.c.l.b16 %v104
    %v621 = vunpack.c.l.b16 %v105
    %v622 = vunpack.c.l.b16 %v106
    %v623 = vunpack.c.l.b16 %v107
    %v624 = vunpack.c.l.b16 %v108
    %v625 = vunpack.c.l.b16 %v109
    %v626 = vunpack.c.l.b16 %v110
    %v627 = vunpack.c.l.b16 %v111
    %v628 = vunpack.c.l.b16 %v112
    %v629 = vunpack.c.l.b16 %v113
    %v630 = vunpack.c.l.b16 %v114
    %v631 = vunpack.c.l.b16 %v115
    %v632 = vunpack.c.l.b16 %v116
    %v633 = vunpack.c.l.b16 %v117
    %v634 = vunpack.c.l.b16 %v118
    %v635 = vunpack.c.l.b16 %v119
    %v636 = vunpack.c.l.b16 %v120
    %v637 = vunpack.c.l.b16 %v121
    %v638 = vunpack.c.l.b16 %v122
    %v639 = vunpack.c.l.b16 %v123
    %v640 = vunpack.c.l.b16 %v124
    %v641 = vunpack.c.l.b16 %v125
    %v642 = vunpack.c.l.b16 %v126
    %v643 = vunpack.c.l.b16 %v127
    %v644 = vunpack.c.l.b16 %v128
    %v645 = vunpack.c.l.b16 %v129
    %v646 = vunpack.c.l.b16 %v130
    %v647 = vunpack.c.l.b16 %v131
    %v648 = vunpack.c.l.b16 %v132
    %v649 = vunpack.c.l.b16 %v133
    %v650 = vunpack.c.l.b16 %v134
    %v651 = vunpack.c.l.b16 %v135
    %v652 = vunpack.c.l.b16 %v136
    %v653 = vunpack.c.l.b16 %v137
    %v654 = vunpack.c.l.b16 %v138
    %v655 = vunpack.c.l.b16 %v139
    %v656 = vunpack.c.l.b16 %v140
    %v657 = vunpack.c.l.b16 %v141
    %v658 = vunpack.c.l.b16 %v142
    %v659 = vunpack.c.l.b16 %v143
    %v660 = vunpack.c.l.b16 %v144
    %v661 = vunpack.c.l.b16 %v145
    %v662 = vunpack.c.l.b16 %v146
    %v663 = vunpack.c.l.b16 %v147
    %v664 = vunpack.c.l.b16 %v148
    %v665 = vunpack.c.l.b16 %v149
    %v666 = vunpack.c.l.b16 %v150
    %v667 = vunpack.c.l.b16 %v151
    %v668 = vunpack.c.l.b16 %v152
    %v669 = vunpack.c.l.b16 %v153
    %v670 = vunpack.c.l.b16 %v154
    %v671 = vunpack.c.l.b16 %v155
    %v672 = vunpack.c.l.b16 %v156
    %v673 = vunpack.c.l.b16 %v157
    %v674 = vunpack.c.l.b16 %v158
    %v675 = vunpack.c.l.b16 %v159
    %v676 = vunpack.c.l.b16 %v160
    %v677 = vunpack.c.l.b16 %v161
    %v678 = vunpack.c.l.b16 %v162
    %v679 = vunpack.c.l.b16 %v163
    %v680 = vunpack.c.l.b16 %v164
    %v681 = vunpack.c.l.b16 %v165
    %v682 = vunpack.c.l.b16 %v166
    %v683 = vunpack.c.l.b16 %v167
    %v684 = vunpack.c.l.b16 %v168
    %v685 = vunpack.c.l.b16 %v169
    %v686 = vunpack.c.l.b16 %v170
    %v687 = vunpack.c.l.b16 %v171
    %v688 = vunpack.c.l.b16 %v172
    %v689 = vunpack.c.l.b16 %v173
    %v690 = vunpack.c.l.b16 %v174
    %v691 = vunpack.c.l.b16 %v175
    %v692 = vunpack.c.l.b16 %v176
    %v693 = vunpack.c.l.b16 %v177
    %v694 = vunpack.c.l.b16 %v178
    %v695 = vunpack.c.l.b16 %v179
    %v696 = vunpack.c.l.b16 %v180
    %v697 = vunpack.c.l.b16 %v181
    %v698 = vunpack.c.l.b16 %v182
    %v699 = vunpack.c.l.b16 %v183
    %v700 = vunpack.c.l.b16 %v184
    %v701 = vunpack.c.l.b16 %v185
    %v702 = vunpack.c.l.b16 %v186
    %v703 = vunpack.c.l.b16 %v187
    %v704 = vunpack.c.l.b16 %v188
    %v705 = vunpack.c.l.b16 %v189
    %v706 = vunpack.c.l.b16 %v190
    %v707 = vunpack.c.l.b16 %v191
    %v708 = vunpack.c.l.b16 %v192
    %v709 = vunpack.c.l.b16 %v193
    %v710 = vunpack.c.l.b16 %v194
    %v711 = vunpack.c.l.b16 %v195
    %v712 = vunpack.c.l.b16 %v196
    %v713 = vunpack.c.l.b16 %v197
    %v714 = vunpack.c.l.b16 %v198
    %v715 = vunpack.c.l.b16 %v199
    %v716 = vunpack.c.l.b16 %v200
    %v717 = vunpack.c.l.b16 %v201
    %v718 = vunpack.c.l.b16 %v202
    %v719 = vunpack.c.l.b16 %v203
    %v720 = vunpack.c.l.b16 %v204
    %v721 = vunpack.c.l.b16 %v205
    %v722 = vunpack.c.l.b16 %v206
    %v723 = vunpack.c.l.b16 %v207
    %v724 = vunpack.c.l.b16 %v208
    %v725 = vunpack.c.l.b16 %v209
    %v726 = vunpack.c.l.b16 %v210
    %v727 = vunpack.c.l.b16 %v211
    %v728 = vunpack.c.l.b16 %v212
    %v729 = vunpack.c.l.b16 %v213
    %v730 = vunpack.c.l.b16 %v214
    %v731 = vunpack.c.l.b16 %v215
    %v732 = vunpack.c.l.b16 %v216
    %v733 = vunpack.c.l.b16 %v217
    %v734 = vunpack.c.l.b16 %v218
    %v735 = vunpack.c.l.b16 %v219
    %v736 = vunpack.c.l.b16 %v220
    %v737 = vunpack.c.l.b16 %v221
    %v738 = vunpack.c.l.b16 %v222
    %v739 = vunpack.c.l.b16 %v223
    %v740 = vunpack.c.l.b16 %v224
    %v741 = vunpack.c.l.b16 %v225
    %v742 = vunpack.c.l.b16 %v226
    %v743 = vunpack.c.l.b16 %v227
    %v744 = vunpack.c.l.b16 %v228
    %v745 = vunpack.c.l.b16 %v229
    %v746 = vunpack.c.l.b16 %v230
    %v747 = vunpack.c.l.b16 %v231
    %v748 = vunpack.c.l.b16 %v232
    %v749 = vunpack.c.l.b16 %v233
    %v750 = vunpack.c.l.b16 %v234
    %v751 = vunpack.c.l.b16 %v235
    %v752 = vunpack.c.l.b16 %v236
    %v753 = vunpack.c.l.b16 %v237
    %v754 = vunpack.c.l.b16 %v238
    %v755 = vunpack.c.l.b16 %v239
    %v756 = vunpack.c.l.b16 %v240
    %v757 = vunpack.c.l.b16 %v241
    %v758 = vunpack.c.l.b16 %v242
    %v759 = vunpack.c.l.b16 %v243
    %v760 = vunpack.c.l.b16 %v244
    %v761 = vunpack.c.l.b16 %v245
    %v762 = vunpack.c.l.b16 %v246
    %v763 = vunpack.c.l.b16 %v247
    %v764 = vunpack.c.l.b16 %v248
    %v765 = vunpack.c.l.b16 %v249
    %v766 = vunpack.c.l.b16 %v250
    %v767 = vunpack.c.l.b16 %v251
    %v768 = vunpack.c.l.b16 %v252
    %v769 = vunpack.c.l.b16 %v253
    %v770 = vunpack.c.l.b16 %v254
    %v771 = vunpack.c.l.b16 %v255
    %v772 = vunpack.c.l.b16 %v256
    %v773 = vunpack.c.l.b16 %v257
    %v774 = vunpack.c.l.b16 %v258
    %v775 = vunpack.c.l.b16 %v259
    %v776 = vunpack.c.l.b16 %v260
    %v777 = vunpack.c.l.b16 %v261
    %v778 = vunpack.c.l.b16 %v262
    %v779 = vunpack.c.l.b16 %v263
    %v780 = vunpack.c.l.b16 %v264
    %v781 = vunpack.c.l.b16 %v265
    %v782 = vunpack.c.l.b16 %v266
    %v783 = vunpack.c.l.b16 %v267
    %v784 = vunpack.c.l.b16 %v268
    %v785 = vunpack.c.l.b16 %v269
    %v786 = vunpack.c.l.b16 %v270
    %v787 = vunpack.c.l.b16 %v271
    %v788 = vunpack.c.l.b16 %v272
    %v789 = vunpack.c.l.b16 %v273
    %v790 = vunpack.c.l.b16 %v274
    %v791 = vunpack.c.l.b16 %v275
    %v792 = vunpack.c.l.b16 %v276
    %v793 = vunpack.c.l.b16 %v277
    %v794 = vunpack.c.l.b16 %v278
    %v795 = vunpack.c.l.b16 %v279
    %v796 = vunpack.c.l.b16 %v280
    %v797 = vunpack.c.l.b16 %v281
    %v798 = vunpack.c.l.b16 %v282
    %v799 = vunpack.c.l.b16 %v283
    %v800 = vunpack.c.l.b16 %v284
    %v801 = vunpack.c.l.b16 %v285
    %v802 = vunpack.c.l.b16 %v286
    %v803 = vunpack.c.l.b16 %v287
    %v804 = vunpack.c.l.b16 %v288
    %v805 = vunpack.c.l.b16 %v289
    %v806 = vunpack.c.l.b16 %v290
    %v807 = vunpack.c.l.b16 %v291
    %v808 = vunpack.c.l.b16 %v292
    %v809 = vunpack.c.l.b16 %v293
    %v810 = vunpack.c.l.b16 %v294
    %v811 = vunpack.c.l.b16 %v295
    %v812 = vunpack.c.l.b16 %v296
    %v813 = vunpack.c.l.b16 %v297
    %v814 = vunpack.c.l.b16 %v298
    %v815 = vunpack.c.l.b16 %v299
    %v816 = vunpack.c.l.b16 %v300
    %v817 = vunpack.c.l.b16 %v301
    %v818 = vunpack.c.l.b16 %v302
    %v819 = vunpack.c.l.b16 %v303
    %v820 = vunpack.c.l.b16 %v304
    %v821 = vunpack.c.l.b16 %v305
    %v822 = vunpack.c.l.b16 %v306
    %v823 = vunpack.c.l.b16 %v307
    %v824 = vunpack.c.l.b16 %v308
    %v825 = vunpack.c.l.b16 %v309
    %v826 = vunpack.c.l.b16 %v310
    %v827 = vunpack.c.l.b16 %v311
    %v828 = vunpack.c.l.b16 %v312
    %v829 = vunpack.c.l.b16 %v313
    %v830 = vunpack.c.l.b16 %v314
    %v831 = vunpack.c.l.b16 %v315
    %v832 = vunpack.c.l.b16 %v316
    %v833 = vunpack.c.l.b16 %v317
    %v834 = vunpack.c.l.b16 %v318
    %v835 = vunpack.c.l.b16 %v319
    %v836 = vunpack.c.l.b16 %v320
    %v837 = vunpack.c.l.b16 %v321
    %v838 = vunpack.c.l.b16 %v322
    %v839 = vunpack.c.l.b16 %v323
    %v840 = vunpack.c.l.b16 %v324
    %v841 = vunpack.c.l.b16 %v325
    %v842 = vunpack.c.l.b16 %v326
    %v843 = vunpack.c.l.b16 %v327
    %v844 = vunpack.c.l.b16 %v328
    %v845 = vpack.c.b16 %v590, %v589
    %v846 = vpack.c.b16 %v592, %v591
    %v847 = vpack.c.b16 %v594, %v593
    %v848 = vpack.c.b16 %v596, %v595
    %v849 = vpack.c.b16 %v598, %v597
    %v850 = vpack.c.b16 %v600, %v599
    %v851 = vpack.c.b16 %v602, %v601
    %v852 = vpack.c.b16 %v604, %v603
    %v853 = vpack.c.b16 %v606, %v605
    %v854 = vpack.c.b16 %v608, %v607
    %v855 = vpack.c.b16 %v610, %v609
    %v856 = vpack.c.b16 %v612, %v611
    %v857 = vpack.c.b16 %v614, %v613
    %v858 = vpack.c.b16 %v616, %v615
    %v859 = vpack.c.b16 %v618, %v617
    %v860 = vpack.c.b16 %v620, %v619
    %v861 = vpack.c.b16 %v622, %v621
    %v862 = vpack.c.b16 %v624, %v623
    %v863 = vpack.c.b16 %v626, %v625
    %v864 = vpack.c.b16 %v628, %v627
    %v865 = vpack.c.b16 %v630, %v629
    %v866 = vpack.c.b16 %v632, %v631
    %v867 = vpack.c.b16 %v634, %v633
    %v868 = vpack.c.b16 %v636, %v635
    %v869 = vpack.c.b16 %v638, %v637
    %v870 = vpack.c.b16 %v640, %v639
    %v871 = vpack.c.b16 %v642, %v641
    %v872 = vpack.c.b16 %v644, %v643
    %v873 = vpack.c.b16 %v646, %v645
    %v874 = vpack.c.b16 %v648, %v647
    %v875 = vpack.c.b16 %v650, %v649
    %v876 = vpack.c.b16 %v652, %v651
    %v877 = vpack.c.b16 %v654, %v653
    %v878 = vpack.c.b16 %v656, %v655
    %v879 = vpack.c.b16 %v658, %v657
    %v880 = vpack.c.b16 %v660, %v659
    %v881 = vpack.c.b16 %v662, %v661
    %v882 = vpack.c.b16 %v664, %v663
    %v883 = vpack.c.b16 %v666, %v665
    %v884 = vpack.c.b16 %v668, %v667
    %v885 = vpack.c.b16 %v670, %v669
    %v886 = vpack.c.b16 %v672, %v671
    %v887 = vpack.c.b16 %v674, %v673
    %v888 = vpack.c.b16 %v676, %v675
    %v889 = vpack.c.b16 %v678, %v677
    %v890 = vpack.c.b16 %v680, %v679
    %v891 = vpack.c.b16 %v682, %v681
    %v892 = vpack.c.b16 %v684, %v683
    %v893 = vpack.c.b16 %v686, %v685
    %v894 = vpack.c.b16 %v688, %v687
    %v895 = vpack.c.b16 %v690, %v689
    %v896 = vpack.c.b16 %v692, %v691
    %v897 = vpack.c.b16 %v694, %v693
    %v898 = vpack.c.b16 %v696, %v695
    %v899 = vpack.c.b16 %v698, %v697
    %v900 = vpack.c.b16 %v700, %v699
    %v901 = vpack.c.b16 %v702, %v701
    %v902 = vpack.c.b16 %v704, %v703
    %v903 = vpack.c.b16 %v706, %v705
    %v904 = vpack.c.b16 %v708, %v707
    %v905 = vpack.c.b16 %v710, %v709
    %v906 = vpack.c.b16 %v712, %v711
    %v907 = vpack.c.b16 %v714, %v713
    %v908 = vpack.c.b16 %v716, %v715
    %v909 = vpack.c.b16 %v718, %v717
    %v910 = vpack.c.b16 %v720, %v719
    %v911 = vpack.c.b16 %v722, %v721
    %v912 = vpack.c.b16 %v724, %v723
    %v913 = vpack.c.b16 %v726, %v725
    %v914 = vpack.c.b16 %v728, %v727
    %v915 = vpack.c.b16 %v730, %v729
    %v916 = vpack.c.b16 %v732, %v731
    %v917 = vpack.c.b16 %v734, %v733
    %v918 = vpack.c.b16 %v736, %v735
    %v919 = vpack.c.b16 %v738, %v737
    %v920 = vpack.c.b16 %v740, %v739
    %v921 = vpack.c.b16 %v742, %v741
    %v922 = vpack.c.b16 %v744, %v743
    %v923 = vpack.c.b16 %v746, %v745
    %v924 = vpack.c.b16 %v748, %v747
    %v925 = vpack.c.b16 %v750, %v749
    %v926 = vpack.c.b16 %v752, %v751
    %v927 = vpack.c.b16 %v754, %v753
    %v928 = vpack.c.b16 %v756, %v755
    %v929 = vpack.c.b16 %v758, %v757
    %v930 = vpack.c.b16 %v760, %v759
    %v931 = vpack.c.b16 %v762, %v761
    %v932 = vpack.c.b16 %v764, %v763
    %v933 = vpack.c.b16 %v766, %v765
    %v934 = vpack.c.b16 %v768, %v767
    %v935 = vpack.c.b16 %v770, %v769
    %v936 = vpack.c.b16 %v772, %v771
    %v937 = vpack.c.b16 %v774, %v773
    %v938 = vpack.c.b16 %v776, %v775
    %v939 = vpack.c.b16 %v778, %v777
    %v940 = vpack.c.b16 %v780, %v779
    %v941 = vpack.c.b16 %v782, %v781
    %v942 = vpack.c.b16 %v784, %v783
    %v943 = vpack.c.b16 %v786, %v785
    %v944 = vpack.c.b16 %v788, %v787
    %v945 = vpack.c.b16 %v790, %v789
    %v946 = vpack.c.b16 %v792, %v791
    %v947 = vpack.c.b16 %v794, %v793
    %v948 = vpack.c.b16 %v796, %v795
    %v949 = vpack.c.b16 %v798, %v797
    %v950 = vpack.c.b16 %v800, %v799
    %v951 = vpack.c.b16 %v802, %v801
    %v952 = vpack.c.b16 %v804, %v803
    %v953 = vpack.c.b16 %v806, %v805
    %v954 = vpack.c.b16 %v808, %v807
    %v955 = vpack.c.b16 %v810, %v809
    %v956 = vpack.c.b16 %v812, %v811
    %v957 = vpack.c.b16 %v814, %v813
    %v958 = vpack.c.b16 %v816, %v815
    %v959 = vpack.c.b16 %v818, %v817
    %v960 = vpack.c.b16 %v820, %v819
    %v961 = vpack.c.b16 %v822, %v821
    %v962 = vpack.c.b16 %v824, %v823
    %v963 = vpack.c.b16 %v826, %v825
    %v964 = vpack.c.b16 %v828, %v827
    %v965 = vpack.c.b16 %v830, %v829
    %v966 = vpack.c.b16 %v832, %v831
    %v967 = vpack.c.b16 %v834, %v833
    %v968 = vpack.c.b16 %v836, %v835
    %v969 = vpack.c.b16 %v838, %v837
    %v970 = vpack.c.b16 %v840, %v839
    %v971 = vpack.c.b16 %v842, %v841
    %v972 = vpack.c.b16 %v844, %v843
    %v977 = vunpack.c.l.b16 %v329
    %v978 = vunpack.c.l.b16 %v330
    %v979 = vunpack.c.l.b16 %v331
    %v980 = vunpack.c.l.b16 %v332
    %v981 = vpack.c.b16 %v978, %v977
    %v982 = vpack.c.b16 %v980, %v979
    %v986 = vsel %vm55, %v845, 0
    %v989 = vsel %vm55, %v846, 0
    %v992 = vsel %vm55, %v847, 0
    %v995 = vsel %vm55, %v848, 0
    %v998 = vsel %vm55, %v849, 0
    %v1001 = vsel %vm55, %v850, 0
    %v1004 = vsel %vm55, %v851, 0
    %v1007 = vsel %vm55, %v852, 0
    %v1010 = vsel %vm55, %v853, 0
    %v1013 = vsel %vm55, %v854, 0
    %v1016 = vsel %vm55, %v855, 0
    %v1019 = vsel %vm55, %v856, 0
    %v1022 = vsel %vm55, %v857, 0
    %v1025 = vsel %vm55, %v858, 0
    %v1028 = vsel %vm55, %v859, 0
    %v1031 = vsel %vm55, %v860, 0
    %v1034 = vsel %vm55, %v861, 0
    %v1037 = vsel %vm55, %v862, 0
    %v1040 = vsel %vm55, %v863, 0
    %v1043 = vsel %vm55, %v864, 0
    %v1046 = vsel %vm55, %v865, 0
    %v1049 = vsel %vm55, %v866, 0
    %v1052 = vsel %vm55, %v867, 0
    %v1055 = vsel %vm55, %v868, 0
    %v1058 = vsel %vm55, %v869, 0
    %v1061 = vsel %vm55, %v870, 0
    %v1064 = vsel %vm55, %v871, 0
    %v1067 = vsel %vm55, %v872, 0
    %v1070 = vsel %vm55, %v873, 0
    %v1073 = vsel %vm55, %v874, 0
    %v1076 = vsel %vm55, %v875, 0
    %v1079 = vsel %vm55, %v876, 0
    %v1082 = vsel %vm55, %v877, 0
    %v1085 = vsel %vm55, %v878, 0
    %v1088 = vsel %vm55, %v879, 0
    %v1091 = vsel %vm55, %v880, 0
    %v1094 = vsel %vm55, %v881, 0
    %v1097 = vsel %vm55, %v882, 0
    %v1100 = vsel %vm55, %v883, 0
    %v1103 = vsel %vm55, %v884, 0
    %v1106 = vsel %vm55, %v885, 0
    %v1109 = vsel %vm55, %v886, 0
    %v1112 = vsel %vm55, %v887, 0
    %v1115 = vsel %vm55, %v888, 0
    %v1118 = vsel %vm55, %v889, 0
    %v1121 = vsel %vm55, %v890, 0
    %v1124 = vsel %vm55, %v891, 0
    %v1127 = vsel %vm55, %v892, 0
    %v1130 = vsel %vm55, %v893, 0
    %v1133 = vsel %vm55, %v894, 0
    %v1136 = vsel %vm55, %v895, 0
    %v1139 = vsel %vm55, %v896, 0
    %v1142 = vsel %vm55, %v897, 0
    %v1145 = vsel %vm55, %v898, 0
    %v1148 = vsel %vm55, %v899, 0
    %v1151 = vsel %vm55, %v900, 0
    %v1154 = vsel %vm55, %v901, 0
    %v1157 = vsel %vm55, %v902, 0
    %v1160 = vsel %vm55, %v903, 0
    %v1163 = vsel %vm55, %v904, 0
    %v1166 = vsel %vm55, %v905, 0
    %v1169 = vsel %vm55, %v906, 0
    %v1172 = vsel %vm55, %v907, 0
    %v1175 = vsel %vm55, %v908, 0
    %v1178 = vsel %vm55, %v909, 0
    %v1181 = vsel %vm55, %v910, 0
    %v1184 = vsel %vm55, %v911, 0
    %v1187 = vsel %vm55, %v912, 0
    %v1190 = vsel %vm55, %v913, 0
    %v1193 = vsel %vm55, %v914, 0
    %v1196 = vsel %vm55, %v915, 0
    %v1199 = vsel %vm55, %v916, 0
    %v1202 = vsel %vm55, %v917, 0
    %v1205 = vsel %vm55, %v918, 0
    %v1208 = vsel %vm55, %v919, 0
    %v1211 = vsel %vm55, %v920, 0
    %v1214 = vsel %vm55, %v921, 0
    %v1217 = vsel %vm55, %v922, 0
    %v1220 = vsel %vm55, %v923, 0
    %v1223 = vsel %vm55, %v924, 0
    %v1226 = vsel %vm55, %v925, 0
    %v1229 = vsel %vm55, %v926, 0
    %v1232 = vsel %vm55, %v927, 0
    %v1235 = vsel %vm55, %v928, 0
    %v1238 = vsel %vm55, %v929, 0
    %v1241 = vsel %vm55, %v930, 0
    %v1244 = vsel %vm55, %v931, 0
    %v1247 = vsel %vm55, %v932, 0
    %v1250 = vsel %vm55, %v933, 0
    %v1253 = vsel %vm55, %v934, 0
    %v1256 = vsel %vm55, %v935, 0
    %v1259 = vsel %vm55, %v936, 0
    %v1262 = vsel %vm55, %v937, 0
    %v1265 = vsel %vm55, %v938, 0
    %v1268 = vsel %vm55, %v939, 0
    %v1271 = vsel %vm55, %v940, 0
    %v1274 = vsel %vm55, %v941, 0
    %v1277 = vsel %vm55, %v942, 0
    %v1280 = vsel %vm55, %v943, 0
    %v1283 = vsel %vm55, %v944, 0
    %v1286 = vsel %vm55, %v945, 0
    %v1289 = vsel %vm55, %v946, 0
    %v1292 = vsel %vm55, %v947, 0
    %v1295 = vsel %vm55, %v948, 0
    %v1298 = vsel %vm55, %v949, 0
    %v1301 = vsel %vm55, %v950, 0
    %v1304 = vsel %vm55, %v951, 0
    %v1307 = vsel %vm55, %v952, 0
    %v1310 = vsel %vm55, %v953, 0
    %v1313 = vsel %vm55, %v954, 0
    %v1316 = vsel %vm55, %v955, 0
    %v1319 = vsel %vm55, %v956, 0
    %v1322 = vsel %vm55, %v957, 0
    %v1325 = vsel %vm55, %v958, 0
    %v1328 = vsel %vm55, %v959, 0
    %v1331 = vsel %vm55, %v960, 0
    %v1334 = vsel %vm55, %v961, 0
    %v1337 = vsel %vm55, %v962, 0
    %v1340 = vsel %vm55, %v963, 0
    %v1343 = vsel %vm55, %v964, 0
    %v1346 = vsel %vm55, %v965, 0
    %v1349 = vsel %vm55, %v966, 0
    %v1352 = vsel %vm55, %v967, 0
    %v1355 = vsel %vm55, %v968, 0
    %v1358 = vsel %vm55, %v969, 0
    %v1361 = vsel %vm55, %v970, 0
    %v1364 = vsel %vm55, %v971, 0
    %v1367 = vsel %vm55, %v972, 0
    %1369 = vmatpush.bf16.msra.mxu0 0
    %1370 = vmatpush.bf16.msra.mxu0 0
    %1371 = vmatpush.bf16.msra.mxu0 0
    %1372 = vmatpush.bf16.msra.mxu0 0
    %1373 = vmatpush.bf16.msra.mxu0 0
    %1374 = vmatpush.bf16.msra.mxu0 0
    %1375 = vmatpush.bf16.msra.mxu0 %v982
    %1376 = vmatpush.bf16.msra.mxu0 %v981
    %1377 = vmatmul.bf16.gmra.mxu0 %v986
    %v1378 = vpop.f32.mrf.mxu0
    %v1379 = vadd.f32 0.0, %v1378
    %v1380 = vpop.f32.mrf.mxu0
    %v1381 = vadd.f32 0.0, %v1380
    %1382 = vmatmul.bf16.gmra.mxu0 %v989
    %v1383 = vpop.f32.mrf.mxu0
    %v1384 = vadd.f32 0.0, %v1383
    %v1385 = vpop.f32.mrf.mxu0
    %v1386 = vadd.f32 0.0, %v1385
    %1387 = vmatmul.bf16.gmra.mxu0 %v992
    %v1388 = vpop.f32.mrf.mxu0
    %v1389 = vadd.f32 0.0, %v1388
    %v1390 = vpop.f32.mrf.mxu0
    %v1391 = vadd.f32 0.0, %v1390
    %1392 = vmatmul.bf16.gmra.mxu0 %v995
    %v1393 = vpop.f32.mrf.mxu0
    %v1394 = vadd.f32 0.0, %v1393
    %v1395 = vpop.f32.mrf.mxu0
    %v1396 = vadd.f32 0.0, %v1395
    %1397 = vmatmul.bf16.gmra.mxu0 %v998
    %v1398 = vpop.f32.mrf.mxu0
    %v1399 = vadd.f32 0.0, %v1398
    %v1400 = vpop.f32.mrf.mxu0
    %v1401 = vadd.f32 0.0, %v1400
    %1402 = vmatmul.bf16.gmra.mxu0 %v1001
    %v1403 = vpop.f32.mrf.mxu0
    %v1404 = vadd.f32 0.0, %v1403
    %v1405 = vpop.f32.mrf.mxu0
    %v1406 = vadd.f32 0.0, %v1405
    %1407 = vmatmul.bf16.gmra.mxu0 %v1004
    %v1408 = vpop.f32.mrf.mxu0
    %v1409 = vadd.f32 0.0, %v1408
    %v1410 = vpop.f32.mrf.mxu0
    %v1411 = vadd.f32 0.0, %v1410
    %1412 = vmatmul.bf16.gmra.mxu0 %v1007
    %v1413 = vpop.f32.mrf.mxu0
    %v1414 = vadd.f32 0.0, %v1413
    %v1415 = vpop.f32.mrf.mxu0
    %v1416 = vadd.f32 0.0, %v1415
    %1417 = vmatmul.bf16.gmra.mxu0 %v1010
    %v1418 = vpop.f32.mrf.mxu0
    %v1419 = vadd.f32 0.0, %v1418
    %v1420 = vpop.f32.mrf.mxu0
    %v1421 = vadd.f32 0.0, %v1420
    %1422 = vmatmul.bf16.gmra.mxu0 %v1013
    %v1423 = vpop.f32.mrf.mxu0
    %v1424 = vadd.f32 0.0, %v1423
    %v1425 = vpop.f32.mrf.mxu0
    %v1426 = vadd.f32 0.0, %v1425
    %1427 = vmatmul.bf16.gmra.mxu0 %v1016
    %v1428 = vpop.f32.mrf.mxu0
    %v1429 = vadd.f32 0.0, %v1428
    %v1430 = vpop.f32.mrf.mxu0
    %v1431 = vadd.f32 0.0, %v1430
    %1432 = vmatmul.bf16.gmra.mxu0 %v1019
    %v1433 = vpop.f32.mrf.mxu0
    %v1434 = vadd.f32 0.0, %v1433
    %v1435 = vpop.f32.mrf.mxu0
    %v1436 = vadd.f32 0.0, %v1435
    %1437 = vmatmul.bf16.gmra.mxu0 %v1022
    %v1438 = vpop.f32.mrf.mxu0
    %v1439 = vadd.f32 0.0, %v1438
    %v1440 = vpop.f32.mrf.mxu0
    %v1441 = vadd.f32 0.0, %v1440
    %1442 = vmatmul.bf16.gmra.mxu0 %v1025
    %v1443 = vpop.f32.mrf.mxu0
    %v1444 = vadd.f32 0.0, %v1443
    %v1445 = vpop.f32.mrf.mxu0
    %v1446 = vadd.f32 0.0, %v1445
    %1447 = vmatmul.bf16.gmra.mxu0 %v1028
    %v1448 = vpop.f32.mrf.mxu0
    %v1449 = vadd.f32 0.0, %v1448
    %v1450 = vpop.f32.mrf.mxu0
    %v1451 = vadd.f32 0.0, %v1450
    %1452 = vmatmul.bf16.gmra.mxu0 %v1031
    %v1453 = vpop.f32.mrf.mxu0
    %v1454 = vadd.f32 0.0, %v1453
    %v1455 = vpop.f32.mrf.mxu0
    %v1456 = vadd.f32 0.0, %v1455
    %1457 = vmatmul.bf16.gmra.mxu0 %v1034
    %v1458 = vpop.f32.mrf.mxu0
    %v1459 = vadd.f32 0.0, %v1458
    %v1460 = vpop.f32.mrf.mxu0
    %v1461 = vadd.f32 0.0, %v1460
    %1462 = vmatmul.bf16.gmra.mxu0 %v1037
    %v1463 = vpop.f32.mrf.mxu0
    %v1464 = vadd.f32 0.0, %v1463
    %v1465 = vpop.f32.mrf.mxu0
    %v1466 = vadd.f32 0.0, %v1465
    %1467 = vmatmul.bf16.gmra.mxu0 %v1040
    %v1468 = vpop.f32.mrf.mxu0
    %v1469 = vadd.f32 0.0, %v1468
    %v1470 = vpop.f32.mrf.mxu0
    %v1471 = vadd.f32 0.0, %v1470
    %1472 = vmatmul.bf16.gmra.mxu0 %v1043
    %v1473 = vpop.f32.mrf.mxu0
    %v1474 = vadd.f32 0.0, %v1473
    %v1475 = vpop.f32.mrf.mxu0
    %v1476 = vadd.f32 0.0, %v1475
    %1477 = vmatmul.bf16.gmra.mxu0 %v1046
    %v1478 = vpop.f32.mrf.mxu0
    %v1479 = vadd.f32 0.0, %v1478
    %v1480 = vpop.f32.mrf.mxu0
    %v1481 = vadd.f32 0.0, %v1480
    %1482 = vmatmul.bf16.gmra.mxu0 %v1049
    %v1483 = vpop.f32.mrf.mxu0
    %v1484 = vadd.f32 0.0, %v1483
    %v1485 = vpop.f32.mrf.mxu0
    %v1486 = vadd.f32 0.0, %v1485
    %1487 = vmatmul.bf16.gmra.mxu0 %v1052
    %v1488 = vpop.f32.mrf.mxu0
    %v1489 = vadd.f32 0.0, %v1488
    %v1490 = vpop.f32.mrf.mxu0
    %v1491 = vadd.f32 0.0, %v1490
    %1492 = vmatmul.bf16.gmra.mxu0 %v1055
    %v1493 = vpop.f32.mrf.mxu0
    %v1494 = vadd.f32 0.0, %v1493
    %v1495 = vpop.f32.mrf.mxu0
    %v1496 = vadd.f32 0.0, %v1495
    %1497 = vmatmul.bf16.gmra.mxu0 %v1058
    %v1498 = vpop.f32.mrf.mxu0
    %v1499 = vadd.f32 0.0, %v1498
    %v1500 = vpop.f32.mrf.mxu0
    %v1501 = vadd.f32 0.0, %v1500
    %1502 = vmatmul.bf16.gmra.mxu0 %v1061
    %v1503 = vpop.f32.mrf.mxu0
    %v1504 = vadd.f32 0.0, %v1503
    %v1505 = vpop.f32.mrf.mxu0
    %v1506 = vadd.f32 0.0, %v1505
    %1507 = vmatmul.bf16.gmra.mxu0 %v1064
    %v1508 = vpop.f32.mrf.mxu0
    %v1509 = vadd.f32 0.0, %v1508
    %v1510 = vpop.f32.mrf.mxu0
    %v1511 = vadd.f32 0.0, %v1510
    %1512 = vmatmul.bf16.gmra.mxu0 %v1067
    %v1513 = vpop.f32.mrf.mxu0
    %v1514 = vadd.f32 0.0, %v1513
    %v1515 = vpop.f32.mrf.mxu0
    %v1516 = vadd.f32 0.0, %v1515
    %1517 = vmatmul.bf16.gmra.mxu0 %v1070
    %v1518 = vpop.f32.mrf.mxu0
    %v1519 = vadd.f32 0.0, %v1518
    %v1520 = vpop.f32.mrf.mxu0
    %v1521 = vadd.f32 0.0, %v1520
    %1522 = vmatmul.bf16.gmra.mxu0 %v1073
    %v1523 = vpop.f32.mrf.mxu0
    %v1524 = vadd.f32 0.0, %v1523
    %v1525 = vpop.f32.mrf.mxu0
    %v1526 = vadd.f32 0.0, %v1525
    %1527 = vmatmul.bf16.gmra.mxu0 %v1076
    %v1528 = vpop.f32.mrf.mxu0
    %v1529 = vadd.f32 0.0, %v1528
    %v1530 = vpop.f32.mrf.mxu0
    %v1531 = vadd.f32 0.0, %v1530
    %1532 = vmatmul.bf16.gmra.mxu0 %v1079
    %v1533 = vpop.f32.mrf.mxu0
    %v1534 = vadd.f32 0.0, %v1533
    %v1535 = vpop.f32.mrf.mxu0
    %v1536 = vadd.f32 0.0, %v1535
    %1537 = vmatmul.bf16.gmra.mxu0 %v1082
    %v1538 = vpop.f32.mrf.mxu0
    %v1539 = vadd.f32 0.0, %v1538
    %v1540 = vpop.f32.mrf.mxu0
    %v1541 = vadd.f32 0.0, %v1540
    %1542 = vmatmul.bf16.gmra.mxu0 %v1085
    %v1543 = vpop.f32.mrf.mxu0
    %v1544 = vadd.f32 0.0, %v1543
    %v1545 = vpop.f32.mrf.mxu0
    %v1546 = vadd.f32 0.0, %v1545
    %1547 = vmatmul.bf16.gmra.mxu0 %v1088
    %v1548 = vpop.f32.mrf.mxu0
    %v1549 = vadd.f32 0.0, %v1548
    %v1550 = vpop.f32.mrf.mxu0
    %v1551 = vadd.f32 0.0, %v1550
    %1552 = vmatmul.bf16.gmra.mxu0 %v1091
    %v1553 = vpop.f32.mrf.mxu0
    %v1554 = vadd.f32 0.0, %v1553
    %v1555 = vpop.f32.mrf.mxu0
    %v1556 = vadd.f32 0.0, %v1555
    %1557 = vmatmul.bf16.gmra.mxu0 %v1094
    %v1558 = vpop.f32.mrf.mxu0
    %v1559 = vadd.f32 0.0, %v1558
    %v1560 = vpop.f32.mrf.mxu0
    %v1561 = vadd.f32 0.0, %v1560
    %1562 = vmatmul.bf16.gmra.mxu0 %v1097
    %v1563 = vpop.f32.mrf.mxu0
    %v1564 = vadd.f32 0.0, %v1563
    %v1565 = vpop.f32.mrf.mxu0
    %v1566 = vadd.f32 0.0, %v1565
    %1567 = vmatmul.bf16.gmra.mxu0 %v1100
    %v1568 = vpop.f32.mrf.mxu0
    %v1569 = vadd.f32 0.0, %v1568
    %v1570 = vpop.f32.mrf.mxu0
    %v1571 = vadd.f32 0.0, %v1570
    %1572 = vmatmul.bf16.gmra.mxu0 %v1103
    %v1573 = vpop.f32.mrf.mxu0
    %v1574 = vadd.f32 0.0, %v1573
    %v1575 = vpop.f32.mrf.mxu0
    %v1576 = vadd.f32 0.0, %v1575
    %1577 = vmatmul.bf16.gmra.mxu0 %v1106
    %v1578 = vpop.f32.mrf.mxu0
    %v1579 = vadd.f32 0.0, %v1578
    %v1580 = vpop.f32.mrf.mxu0
    %v1581 = vadd.f32 0.0, %v1580
    %1582 = vmatmul.bf16.gmra.mxu0 %v1109
    %v1583 = vpop.f32.mrf.mxu0
    %v1584 = vadd.f32 0.0, %v1583
    %v1585 = vpop.f32.mrf.mxu0
    %v1586 = vadd.f32 0.0, %v1585
    %1587 = vmatmul.bf16.gmra.mxu0 %v1112
    %v1588 = vpop.f32.mrf.mxu0
    %v1589 = vadd.f32 0.0, %v1588
    %v1590 = vpop.f32.mrf.mxu0
    %v1591 = vadd.f32 0.0, %v1590
    %1592 = vmatmul.bf16.gmra.mxu0 %v1115
    %v1593 = vpop.f32.mrf.mxu0
    %v1594 = vadd.f32 0.0, %v1593
    %v1595 = vpop.f32.mrf.mxu0
    %v1596 = vadd.f32 0.0, %v1595
    %1597 = vmatmul.bf16.gmra.mxu0 %v1118
    %v1598 = vpop.f32.mrf.mxu0
    %v1599 = vadd.f32 0.0, %v1598
    %v1600 = vpop.f32.mrf.mxu0
    %v1601 = vadd.f32 0.0, %v1600
    %1602 = vmatmul.bf16.gmra.mxu0 %v1121
    %v1603 = vpop.f32.mrf.mxu0
    %v1604 = vadd.f32 0.0, %v1603
    %v1605 = vpop.f32.mrf.mxu0
    %v1606 = vadd.f32 0.0, %v1605
    %1607 = vmatmul.bf16.gmra.mxu0 %v1124
    %v1608 = vpop.f32.mrf.mxu0
    %v1609 = vadd.f32 0.0, %v1608
    %v1610 = vpop.f32.mrf.mxu0
    %v1611 = vadd.f32 0.0, %v1610
    %1612 = vmatmul.bf16.gmra.mxu0 %v1127
    %v1613 = vpop.f32.mrf.mxu0
    %v1614 = vadd.f32 0.0, %v1613
    %v1615 = vpop.f32.mrf.mxu0
    %v1616 = vadd.f32 0.0, %v1615
    %1617 = vmatmul.bf16.gmra.mxu0 %v1130
    %v1618 = vpop.f32.mrf.mxu0
    %v1619 = vadd.f32 0.0, %v1618
    %v1620 = vpop.f32.mrf.mxu0
    %v1621 = vadd.f32 0.0, %v1620
    %1622 = vmatmul.bf16.gmra.mxu0 %v1133
    %v1623 = vpop.f32.mrf.mxu0
    %v1624 = vadd.f32 0.0, %v1623
    %v1625 = vpop.f32.mrf.mxu0
    %v1626 = vadd.f32 0.0, %v1625
    %1627 = vmatmul.bf16.gmra.mxu0 %v1136
    %v1628 = vpop.f32.mrf.mxu0
    %v1629 = vadd.f32 0.0, %v1628
    %v1630 = vpop.f32.mrf.mxu0
    %v1631 = vadd.f32 0.0, %v1630
    %1632 = vmatmul.bf16.gmra.mxu0 %v1139
    %v1633 = vpop.f32.mrf.mxu0
    %v1634 = vadd.f32 0.0, %v1633
    %v1635 = vpop.f32.mrf.mxu0
    %v1636 = vadd.f32 0.0, %v1635
    %1637 = vmatmul.bf16.gmra.mxu0 %v1142
    %v1638 = vpop.f32.mrf.mxu0
    %v1639 = vadd.f32 0.0, %v1638
    %v1640 = vpop.f32.mrf.mxu0
    %v1641 = vadd.f32 0.0, %v1640
    %1642 = vmatmul.bf16.gmra.mxu0 %v1145
    %v1643 = vpop.f32.mrf.mxu0
    %v1644 = vadd.f32 0.0, %v1643
    %v1645 = vpop.f32.mrf.mxu0
    %v1646 = vadd.f32 0.0, %v1645
    %1647 = vmatmul.bf16.gmra.mxu0 %v1148
    %v1648 = vpop.f32.mrf.mxu0
    %v1649 = vadd.f32 0.0, %v1648
    %v1650 = vpop.f32.mrf.mxu0
    %v1651 = vadd.f32 0.0, %v1650
    %1652 = vmatmul.bf16.gmra.mxu0 %v1151
    %v1653 = vpop.f32.mrf.mxu0
    %v1654 = vadd.f32 0.0, %v1653
    %v1655 = vpop.f32.mrf.mxu0
    %v1656 = vadd.f32 0.0, %v1655
    %1657 = vmatmul.bf16.gmra.mxu0 %v1154
    %v1658 = vpop.f32.mrf.mxu0
    %v1659 = vadd.f32 0.0, %v1658
    %v1660 = vpop.f32.mrf.mxu0
    %v1661 = vadd.f32 0.0, %v1660
    %1662 = vmatmul.bf16.gmra.mxu0 %v1157
    %v1663 = vpop.f32.mrf.mxu0
    %v1664 = vadd.f32 0.0, %v1663
    %v1665 = vpop.f32.mrf.mxu0
    %v1666 = vadd.f32 0.0, %v1665
    %1667 = vmatmul.bf16.gmra.mxu0 %v1160
    %v1668 = vpop.f32.mrf.mxu0
    %v1669 = vadd.f32 0.0, %v1668
    %v1670 = vpop.f32.mrf.mxu0
    %v1671 = vadd.f32 0.0, %v1670
    %1672 = vmatmul.bf16.gmra.mxu0 %v1163
    %v1673 = vpop.f32.mrf.mxu0
    %v1674 = vadd.f32 0.0, %v1673
    %v1675 = vpop.f32.mrf.mxu0
    %v1676 = vadd.f32 0.0, %v1675
    %1677 = vmatmul.bf16.gmra.mxu0 %v1166
    %v1678 = vpop.f32.mrf.mxu0
    %v1679 = vadd.f32 0.0, %v1678
    %v1680 = vpop.f32.mrf.mxu0
    %v1681 = vadd.f32 0.0, %v1680
    %1682 = vmatmul.bf16.gmra.mxu0 %v1169
    %v1683 = vpop.f32.mrf.mxu0
    %v1684 = vadd.f32 0.0, %v1683
    %v1685 = vpop.f32.mrf.mxu0
    %v1686 = vadd.f32 0.0, %v1685
    %1687 = vmatmul.bf16.gmra.mxu0 %v1172
    %v1688 = vpop.f32.mrf.mxu0
    %v1689 = vadd.f32 0.0, %v1688
    %v1690 = vpop.f32.mrf.mxu0
    %v1691 = vadd.f32 0.0, %v1690
    %1692 = vmatmul.bf16.gmra.mxu0 %v1175
    %v1693 = vpop.f32.mrf.mxu0
    %v1694 = vadd.f32 0.0, %v1693
    %v1695 = vpop.f32.mrf.mxu0
    %v1696 = vadd.f32 0.0, %v1695
    %1697 = vmatmul.bf16.gmra.mxu0 %v1178
    %v1698 = vpop.f32.mrf.mxu0
    %v1699 = vadd.f32 0.0, %v1698
    %v1700 = vpop.f32.mrf.mxu0
    %v1701 = vadd.f32 0.0, %v1700
    %1702 = vmatmul.bf16.gmra.mxu0 %v1181
    %v1703 = vpop.f32.mrf.mxu0
    %v1704 = vadd.f32 0.0, %v1703
    %v1705 = vpop.f32.mrf.mxu0
    %v1706 = vadd.f32 0.0, %v1705
    %1707 = vmatmul.bf16.gmra.mxu0 %v1184
    %v1708 = vpop.f32.mrf.mxu0
    %v1709 = vadd.f32 0.0, %v1708
    %v1710 = vpop.f32.mrf.mxu0
    %v1711 = vadd.f32 0.0, %v1710
    %1712 = vmatmul.bf16.gmra.mxu0 %v1187
    %v1713 = vpop.f32.mrf.mxu0
    %v1714 = vadd.f32 0.0, %v1713
    %v1715 = vpop.f32.mrf.mxu0
    %v1716 = vadd.f32 0.0, %v1715
    %1717 = vmatmul.bf16.gmra.mxu0 %v1190
    %v1718 = vpop.f32.mrf.mxu0
    %v1719 = vadd.f32 0.0, %v1718
    %v1720 = vpop.f32.mrf.mxu0
    %v1721 = vadd.f32 0.0, %v1720
    %1722 = vmatmul.bf16.gmra.mxu0 %v1193
    %v1723 = vpop.f32.mrf.mxu0
    %v1724 = vadd.f32 0.0, %v1723
    %v1725 = vpop.f32.mrf.mxu0
    %v1726 = vadd.f32 0.0, %v1725
    %1727 = vmatmul.bf16.gmra.mxu0 %v1196
    %v1728 = vpop.f32.mrf.mxu0
    %v1729 = vadd.f32 0.0, %v1728
    %v1730 = vpop.f32.mrf.mxu0
    %v1731 = vadd.f32 0.0, %v1730
    %1732 = vmatmul.bf16.gmra.mxu0 %v1199
    %v1733 = vpop.f32.mrf.mxu0
    %v1734 = vadd.f32 0.0, %v1733
    %v1735 = vpop.f32.mrf.mxu0
    %v1736 = vadd.f32 0.0, %v1735
    %1737 = vmatmul.bf16.gmra.mxu0 %v1202
    %v1738 = vpop.f32.mrf.mxu0
    %v1739 = vadd.f32 0.0, %v1738
    %v1740 = vpop.f32.mrf.mxu0
    %v1741 = vadd.f32 0.0, %v1740
    %1742 = vmatmul.bf16.gmra.mxu0 %v1205
    %v1743 = vpop.f32.mrf.mxu0
    %v1744 = vadd.f32 0.0, %v1743
    %v1745 = vpop.f32.mrf.mxu0
    %v1746 = vadd.f32 0.0, %v1745
    %1747 = vmatmul.bf16.gmra.mxu0 %v1208
    %v1748 = vpop.f32.mrf.mxu0
    %v1749 = vadd.f32 0.0, %v1748
    %v1750 = vpop.f32.mrf.mxu0
    %v1751 = vadd.f32 0.0, %v1750
    %1752 = vmatmul.bf16.gmra.mxu0 %v1211
    %v1753 = vpop.f32.mrf.mxu0
    %v1754 = vadd.f32 0.0, %v1753
    %v1755 = vpop.f32.mrf.mxu0
    %v1756 = vadd.f32 0.0, %v1755
    %1757 = vmatmul.bf16.gmra.mxu0 %v1214
    %v1758 = vpop.f32.mrf.mxu0
    %v1759 = vadd.f32 0.0, %v1758
    %v1760 = vpop.f32.mrf.mxu0
    %v1761 = vadd.f32 0.0, %v1760
    %1762 = vmatmul.bf16.gmra.mxu0 %v1217
    %v1763 = vpop.f32.mrf.mxu0
    %v1764 = vadd.f32 0.0, %v1763
    %v1765 = vpop.f32.mrf.mxu0
    %v1766 = vadd.f32 0.0, %v1765
    %1767 = vmatmul.bf16.gmra.mxu0 %v1220
    %v1768 = vpop.f32.mrf.mxu0
    %v1769 = vadd.f32 0.0, %v1768
    %v1770 = vpop.f32.mrf.mxu0
    %v1771 = vadd.f32 0.0, %v1770
    %1772 = vmatmul.bf16.gmra.mxu0 %v1223
    %v1773 = vpop.f32.mrf.mxu0
    %v1774 = vadd.f32 0.0, %v1773
    %v1775 = vpop.f32.mrf.mxu0
    %v1776 = vadd.f32 0.0, %v1775
    %1777 = vmatmul.bf16.gmra.mxu0 %v1226
    %v1778 = vpop.f32.mrf.mxu0
    %v1779 = vadd.f32 0.0, %v1778
    %v1780 = vpop.f32.mrf.mxu0
    %v1781 = vadd.f32 0.0, %v1780
    %1782 = vmatmul.bf16.gmra.mxu0 %v1229
    %v1783 = vpop.f32.mrf.mxu0
    %v1784 = vadd.f32 0.0, %v1783
    %v1785 = vpop.f32.mrf.mxu0
    %v1786 = vadd.f32 0.0, %v1785
    %1787 = vmatmul.bf16.gmra.mxu0 %v1232
    %v1788 = vpop.f32.mrf.mxu0
    %v1789 = vadd.f32 0.0, %v1788
    %v1790 = vpop.f32.mrf.mxu0
    %v1791 = vadd.f32 0.0, %v1790
    %1792 = vmatmul.bf16.gmra.mxu0 %v1235
    %v1793 = vpop.f32.mrf.mxu0
    %v1794 = vadd.f32 0.0, %v1793
    %v1795 = vpop.f32.mrf.mxu0
    %v1796 = vadd.f32 0.0, %v1795
    %1797 = vmatmul.bf16.gmra.mxu0 %v1238
    %v1798 = vpop.f32.mrf.mxu0
    %v1799 = vadd.f32 0.0, %v1798
    %v1800 = vpop.f32.mrf.mxu0
    %v1801 = vadd.f32 0.0, %v1800
    %1802 = vmatmul.bf16.gmra.mxu0 %v1241
    %v1803 = vpop.f32.mrf.mxu0
    %v1804 = vadd.f32 0.0, %v1803
    %v1805 = vpop.f32.mrf.mxu0
    %v1806 = vadd.f32 0.0, %v1805
    %1807 = vmatmul.bf16.gmra.mxu0 %v1244
    %v1808 = vpop.f32.mrf.mxu0
    %v1809 = vadd.f32 0.0, %v1808
    %v1810 = vpop.f32.mrf.mxu0
    %v1811 = vadd.f32 0.0, %v1810
    %1812 = vmatmul.bf16.gmra.mxu0 %v1247
    %v1813 = vpop.f32.mrf.mxu0
    %v1814 = vadd.f32 0.0, %v1813
    %v1815 = vpop.f32.mrf.mxu0
    %v1816 = vadd.f32 0.0, %v1815
    %1817 = vmatmul.bf16.gmra.mxu0 %v1250
    %v1818 = vpop.f32.mrf.mxu0
    %v1819 = vadd.f32 0.0, %v1818
    %v1820 = vpop.f32.mrf.mxu0
    %v1821 = vadd.f32 0.0, %v1820
    %1822 = vmatmul.bf16.gmra.mxu0 %v1253
    %v1823 = vpop.f32.mrf.mxu0
    %v1824 = vadd.f32 0.0, %v1823
    %v1825 = vpop.f32.mrf.mxu0
    %v1826 = vadd.f32 0.0, %v1825
    %1827 = vmatmul.bf16.gmra.mxu0 %v1256
    %v1828 = vpop.f32.mrf.mxu0
    %v1829 = vadd.f32 0.0, %v1828
    %v1830 = vpop.f32.mrf.mxu0
    %v1831 = vadd.f32 0.0, %v1830
    %1832 = vmatmul.bf16.gmra.mxu0 %v1259
    %v1833 = vpop.f32.mrf.mxu0
    %v1834 = vadd.f32 0.0, %v1833
    %v1835 = vpop.f32.mrf.mxu0
    %v1836 = vadd.f32 0.0, %v1835
    %1837 = vmatmul.bf16.gmra.mxu0 %v1262
    %v1838 = vpop.f32.mrf.mxu0
    %v1839 = vadd.f32 0.0, %v1838
    %v1840 = vpop.f32.mrf.mxu0
    %v1841 = vadd.f32 0.0, %v1840
    %1842 = vmatmul.bf16.gmra.mxu0 %v1265
    %v1843 = vpop.f32.mrf.mxu0
    %v1844 = vadd.f32 0.0, %v1843
    %v1845 = vpop.f32.mrf.mxu0
    %v1846 = vadd.f32 0.0, %v1845
    %1847 = vmatmul.bf16.gmra.mxu0 %v1268
    %v1848 = vpop.f32.mrf.mxu0
    %v1849 = vadd.f32 0.0, %v1848
    %v1850 = vpop.f32.mrf.mxu0
    %v1851 = vadd.f32 0.0, %v1850
    %1852 = vmatmul.bf16.gmra.mxu0 %v1271
    %v1853 = vpop.f32.mrf.mxu0
    %v1854 = vadd.f32 0.0, %v1853
    %v1855 = vpop.f32.mrf.mxu0
    %v1856 = vadd.f32 0.0, %v1855
    %1857 = vmatmul.bf16.gmra.mxu0 %v1274
    %v1858 = vpop.f32.mrf.mxu0
    %v1859 = vadd.f32 0.0, %v1858
    %v1860 = vpop.f32.mrf.mxu0
    %v1861 = vadd.f32 0.0, %v1860
    %1862 = vmatmul.bf16.gmra.mxu0 %v1277
    %v1863 = vpop.f32.mrf.mxu0
    %v1864 = vadd.f32 0.0, %v1863
    %v1865 = vpop.f32.mrf.mxu0
    %v1866 = vadd.f32 0.0, %v1865
    %1867 = vmatmul.bf16.gmra.mxu0 %v1280
    %v1868 = vpop.f32.mrf.mxu0
    %v1869 = vadd.f32 0.0, %v1868
    %v1870 = vpop.f32.mrf.mxu0
    %v1871 = vadd.f32 0.0, %v1870
    %1872 = vmatmul.bf16.gmra.mxu0 %v1283
    %v1873 = vpop.f32.mrf.mxu0
    %v1874 = vadd.f32 0.0, %v1873
    %v1875 = vpop.f32.mrf.mxu0
    %v1876 = vadd.f32 0.0, %v1875
    %1877 = vmatmul.bf16.gmra.mxu0 %v1286
    %v1878 = vpop.f32.mrf.mxu0
    %v1879 = vadd.f32 0.0, %v1878
    %v1880 = vpop.f32.mrf.mxu0
    %v1881 = vadd.f32 0.0, %v1880
    %1882 = vmatmul.bf16.gmra.mxu0 %v1289
    %v1883 = vpop.f32.mrf.mxu0
    %v1884 = vadd.f32 0.0, %v1883
    %v1885 = vpop.f32.mrf.mxu0
    %v1886 = vadd.f32 0.0, %v1885
    %1887 = vmatmul.bf16.gmra.mxu0 %v1292
    %v1888 = vpop.f32.mrf.mxu0
    %v1889 = vadd.f32 0.0, %v1888
    %v1890 = vpop.f32.mrf.mxu0
    %v1891 = vadd.f32 0.0, %v1890
    %1892 = vmatmul.bf16.gmra.mxu0 %v1295
    %v1893 = vpop.f32.mrf.mxu0
    %v1894 = vadd.f32 0.0, %v1893
    %v1895 = vpop.f32.mrf.mxu0
    %v1896 = vadd.f32 0.0, %v1895
    %1897 = vmatmul.bf16.gmra.mxu0 %v1298
    %v1898 = vpop.f32.mrf.mxu0
    %v1899 = vadd.f32 0.0, %v1898
    %v1900 = vpop.f32.mrf.mxu0
    %v1901 = vadd.f32 0.0, %v1900
    %1902 = vmatmul.bf16.gmra.mxu0 %v1301
    %v1903 = vpop.f32.mrf.mxu0
    %v1904 = vadd.f32 0.0, %v1903
    %v1905 = vpop.f32.mrf.mxu0
    %v1906 = vadd.f32 0.0, %v1905
    %1907 = vmatmul.bf16.gmra.mxu0 %v1304
    %v1908 = vpop.f32.mrf.mxu0
    %v1909 = vadd.f32 0.0, %v1908
    %v1910 = vpop.f32.mrf.mxu0
    %v1911 = vadd.f32 0.0, %v1910
    %1912 = vmatmul.bf16.gmra.mxu0 %v1307
    %v1913 = vpop.f32.mrf.mxu0
    %v1914 = vadd.f32 0.0, %v1913
    %v1915 = vpop.f32.mrf.mxu0
    %v1916 = vadd.f32 0.0, %v1915
    %1917 = vmatmul.bf16.gmra.mxu0 %v1310
    %v1918 = vpop.f32.mrf.mxu0
    %v1919 = vadd.f32 0.0, %v1918
    %v1920 = vpop.f32.mrf.mxu0
    %v1921 = vadd.f32 0.0, %v1920
    %1922 = vmatmul.bf16.gmra.mxu0 %v1313
    %v1923 = vpop.f32.mrf.mxu0
    %v1924 = vadd.f32 0.0, %v1923
    %v1925 = vpop.f32.mrf.mxu0
    %v1926 = vadd.f32 0.0, %v1925
    %1927 = vmatmul.bf16.gmra.mxu0 %v1316
    %v1928 = vpop.f32.mrf.mxu0
    %v1929 = vadd.f32 0.0, %v1928
    %v1930 = vpop.f32.mrf.mxu0
    %v1931 = vadd.f32 0.0, %v1930
    %1932 = vmatmul.bf16.gmra.mxu0 %v1319
    %v1933 = vpop.f32.mrf.mxu0
    %v1934 = vadd.f32 0.0, %v1933
    %v1935 = vpop.f32.mrf.mxu0
    %v1936 = vadd.f32 0.0, %v1935
    %1937 = vmatmul.bf16.gmra.mxu0 %v1322
    %v1938 = vpop.f32.mrf.mxu0
    %v1939 = vadd.f32 0.0, %v1938
    %v1940 = vpop.f32.mrf.mxu0
    %v1941 = vadd.f32 0.0, %v1940
    %1942 = vmatmul.bf16.gmra.mxu0 %v1325
    %v1943 = vpop.f32.mrf.mxu0
    %v1944 = vadd.f32 0.0, %v1943
    %v1945 = vpop.f32.mrf.mxu0
    %v1946 = vadd.f32 0.0, %v1945
    %1947 = vmatmul.bf16.gmra.mxu0 %v1328
    %v1948 = vpop.f32.mrf.mxu0
    %v1949 = vadd.f32 0.0, %v1948
    %v1950 = vpop.f32.mrf.mxu0
    %v1951 = vadd.f32 0.0, %v1950
    %1952 = vmatmul.bf16.gmra.mxu0 %v1331
    %v1953 = vpop.f32.mrf.mxu0
    %v1954 = vadd.f32 0.0, %v1953
    %v1955 = vpop.f32.mrf.mxu0
    %v1956 = vadd.f32 0.0, %v1955
    %1957 = vmatmul.bf16.gmra.mxu0 %v1334
    %v1958 = vpop.f32.mrf.mxu0
    %v1959 = vadd.f32 0.0, %v1958
    %v1960 = vpop.f32.mrf.mxu0
    %v1961 = vadd.f32 0.0, %v1960
    %1962 = vmatmul.bf16.gmra.mxu0 %v1337
    %v1963 = vpop.f32.mrf.mxu0
    %v1964 = vadd.f32 0.0, %v1963
    %v1965 = vpop.f32.mrf.mxu0
    %v1966 = vadd.f32 0.0, %v1965
    %1967 = vmatmul.bf16.gmra.mxu0 %v1340
    %v1968 = vpop.f32.mrf.mxu0
    %v1969 = vadd.f32 0.0, %v1968
    %v1970 = vpop.f32.mrf.mxu0
    %v1971 = vadd.f32 0.0, %v1970
    %1972 = vmatmul.bf16.gmra.mxu0 %v1343
    %v1973 = vpop.f32.mrf.mxu0
    %v1974 = vadd.f32 0.0, %v1973
    %v1975 = vpop.f32.mrf.mxu0
    %v1976 = vadd.f32 0.0, %v1975
    %1977 = vmatmul.bf16.gmra.mxu0 %v1346
    %v1978 = vpop.f32.mrf.mxu0
    %v1979 = vadd.f32 0.0, %v1978
    %v1980 = vpop.f32.mrf.mxu0
    %v1981 = vadd.f32 0.0, %v1980
    %1982 = vmatmul.bf16.gmra.mxu0 %v1349
    %v1983 = vpop.f32.mrf.mxu0
    %v1984 = vadd.f32 0.0, %v1983
    %v1985 = vpop.f32.mrf.mxu0
    %v1986 = vadd.f32 0.0, %v1985
    %1987 = vmatmul.bf16.gmra.mxu0 %v1352
    %v1988 = vpop.f32.mrf.mxu0
    %v1989 = vadd.f32 0.0, %v1988
    %v1990 = vpop.f32.mrf.mxu0
    %v1991 = vadd.f32 0.0, %v1990
    %1992 = vmatmul.bf16.gmra.mxu0 %v1355
    %v1993 = vpop.f32.mrf.mxu0
    %v1994 = vadd.f32 0.0, %v1993
    %v1995 = vpop.f32.mrf.mxu0
    %v1996 = vadd.f32 0.0, %v1995
    %1997 = vmatmul.bf16.gmra.mxu0 %v1358
    %v1998 = vpop.f32.mrf.mxu0
    %v1999 = vadd.f32 0.0, %v1998
    %v2000 = vpop.f32.mrf.mxu0
    %v2001 = vadd.f32 0.0, %v2000
    %2002 = vmatmul.bf16.gmra.mxu0 %v1361
    %v2003 = vpop.f32.mrf.mxu0
    %v2004 = vadd.f32 0.0, %v2003
    %v2005 = vpop.f32.mrf.mxu0
    %v2006 = vadd.f32 0.0, %v2005
    %2007 = vmatmul.bf16.gmra.mxu0 %v1364
    %v2008 = vpop.f32.mrf.mxu0
    %v2009 = vadd.f32 0.0, %v2008
    %v2010 = vpop.f32.mrf.mxu0
    %v2011 = vadd.f32 0.0, %v2010
    %2012 = vmatmul.bf16.gmra.mxu0 %v1367
    %v2013 = vpop.f32.mrf.mxu0
    %v2014 = vadd.f32 0.0, %v2013
    %v2015 = vpop.f32.mrf.mxu0
    %v2016 = vadd.f32 0.0, %v2015
    %2017 = vdwg.mxu0
    %v2018 = vadd.f32 %v1379, %v69
    %v2019 = vadd.f32 %v1381, %v71
    %v2020 = vadd.f32 %v1384, %v69
    %v2021 = vadd.f32 %v1386, %v71
    %v2022 = vadd.f32 %v1389, %v69
    %v2023 = vadd.f32 %v1391, %v71
    %v2024 = vadd.f32 %v1394, %v69
    %v2025 = vadd.f32 %v1396, %v71
    %v2026 = vadd.f32 %v1399, %v69
    %v2027 = vadd.f32 %v1401, %v71
    %v2028 = vadd.f32 %v1404, %v69
    %v2029 = vadd.f32 %v1406, %v71
    %v2030 = vadd.f32 %v1409, %v69
    %v2031 = vadd.f32 %v1411, %v71
    %v2032 = vadd.f32 %v1414, %v69
    %v2033 = vadd.f32 %v1416, %v71
    %v2034 = vadd.f32 %v1419, %v69
    %v2035 = vadd.f32 %v1421, %v71
    %v2036 = vadd.f32 %v1424, %v69
    %v2037 = vadd.f32 %v1426, %v71
    %v2038 = vadd.f32 %v1429, %v69
    %v2039 = vadd.f32 %v1431, %v71
    %v2040 = vadd.f32 %v1434, %v69
    %v2041 = vadd.f32 %v1436, %v71
    %v2042 = vadd.f32 %v1439, %v69
    %v2043 = vadd.f32 %v1441, %v71
    %v2044 = vadd.f32 %v1444, %v69
    %v2045 = vadd.f32 %v1446, %v71
    %v2046 = vadd.f32 %v1449, %v69
    %v2047 = vadd.f32 %v1451, %v71
    %v2048 = vadd.f32 %v1454, %v69
    %v2049 = vadd.f32 %v1456, %v71
    %v2050 = vadd.f32 %v1459, %v69
    %v2051 = vadd.f32 %v1461, %v71
    %v2052 = vadd.f32 %v1464, %v69
    %v2053 = vadd.f32 %v1466, %v71
    %v2054 = vadd.f32 %v1469, %v69
    %v2055 = vadd.f32 %v1471, %v71
    %v2056 = vadd.f32 %v1474, %v69
    %v2057 = vadd.f32 %v1476, %v71
    %v2058 = vadd.f32 %v1479, %v69
    %v2059 = vadd.f32 %v1481, %v71
    %v2060 = vadd.f32 %v1484, %v69
    %v2061 = vadd.f32 %v1486, %v71
    %v2062 = vadd.f32 %v1489, %v69
    %v2063 = vadd.f32 %v1491, %v71
    %v2064 = vadd.f32 %v1494, %v69
    %v2065 = vadd.f32 %v1496, %v71
    %v2066 = vadd.f32 %v1499, %v69
    %v2067 = vadd.f32 %v1501, %v71
    %v2068 = vadd.f32 %v1504, %v69
    %v2069 = vadd.f32 %v1506, %v71
    %v2070 = vadd.f32 %v1509, %v69
    %v2071 = vadd.f32 %v1511, %v71
    %v2072 = vadd.f32 %v1514, %v69
    %v2073 = vadd.f32 %v1516, %v71
    %v2074 = vadd.f32 %v1519, %v69
    %v2075 = vadd.f32 %v1521, %v71
    %v2076 = vadd.f32 %v1524, %v69
    %v2077 = vadd.f32 %v1526, %v71
    %v2078 = vadd.f32 %v1529, %v69
    %v2079 = vadd.f32 %v1531, %v71
    %v2080 = vadd.f32 %v1534, %v69
    %v2081 = vadd.f32 %v1536, %v71
    %v2082 = vadd.f32 %v1539, %v69
    %v2083 = vadd.f32 %v1541, %v71
    %v2084 = vadd.f32 %v1544, %v69
    %v2085 = vadd.f32 %v1546, %v71
    %v2086 = vadd.f32 %v1549, %v69
    %v2087 = vadd.f32 %v1551, %v71
    %v2088 = vadd.f32 %v1554, %v69
    %v2089 = vadd.f32 %v1556, %v71
    %v2090 = vadd.f32 %v1559, %v69
    %v2091 = vadd.f32 %v1561, %v71
    %v2092 = vadd.f32 %v1564, %v69
    %v2093 = vadd.f32 %v1566, %v71
    %v2094 = vadd.f32 %v1569, %v69
    %v2095 = vadd.f32 %v1571, %v71
    %v2096 = vadd.f32 %v1574, %v69
    %v2097 = vadd.f32 %v1576, %v71
    %v2098 = vadd.f32 %v1579, %v69
    %v2099 = vadd.f32 %v1581, %v71
    %v2100 = vadd.f32 %v1584, %v69
    %v2101 = vadd.f32 %v1586, %v71
    %v2102 = vadd.f32 %v1589, %v69
    %v2103 = vadd.f32 %v1591, %v71
    %v2104 = vadd.f32 %v1594, %v69
    %v2105 = vadd.f32 %v1596, %v71
    %v2106 = vadd.f32 %v1599, %v69
    %v2107 = vadd.f32 %v1601, %v71
    %v2108 = vadd.f32 %v1604, %v69
    %v2109 = vadd.f32 %v1606, %v71
    %v2110 = vadd.f32 %v1609, %v69
    %v2111 = vadd.f32 %v1611, %v71
    %v2112 = vadd.f32 %v1614, %v69
    %v2113 = vadd.f32 %v1616, %v71
    %v2114 = vadd.f32 %v1619, %v69
    %v2115 = vadd.f32 %v1621, %v71
    %v2116 = vadd.f32 %v1624, %v69
    %v2117 = vadd.f32 %v1626, %v71
    %v2118 = vadd.f32 %v1629, %v69
    %v2119 = vadd.f32 %v1631, %v71
    %v2120 = vadd.f32 %v1634, %v69
    %v2121 = vadd.f32 %v1636, %v71
    %v2122 = vadd.f32 %v1639, %v69
    %v2123 = vadd.f32 %v1641, %v71
    %v2124 = vadd.f32 %v1644, %v69
    %v2125 = vadd.f32 %v1646, %v71
    %v2126 = vadd.f32 %v1649, %v69
    %v2127 = vadd.f32 %v1651, %v71
    %v2128 = vadd.f32 %v1654, %v69
    %v2129 = vadd.f32 %v1656, %v71
    %v2130 = vadd.f32 %v1659, %v69
    %v2131 = vadd.f32 %v1661, %v71
    %v2132 = vadd.f32 %v1664, %v69
    %v2133 = vadd.f32 %v1666, %v71
    %v2134 = vadd.f32 %v1669, %v69
    %v2135 = vadd.f32 %v1671, %v71
    %v2136 = vadd.f32 %v1674, %v69
    %v2137 = vadd.f32 %v1676, %v71
    %v2138 = vadd.f32 %v1679, %v69
    %v2139 = vadd.f32 %v1681, %v71
    %v2140 = vadd.f32 %v1684, %v69
    %v2141 = vadd.f32 %v1686, %v71
    %v2142 = vadd.f32 %v1689, %v69
    %v2143 = vadd.f32 %v1691, %v71
    %v2144 = vadd.f32 %v1694, %v69
    %v2145 = vadd.f32 %v1696, %v71
    %v2146 = vadd.f32 %v1699, %v69
    %v2147 = vadd.f32 %v1701, %v71
    %v2148 = vadd.f32 %v1704, %v69
    %v2149 = vadd.f32 %v1706, %v71
    %v2150 = vadd.f32 %v1709, %v69
    %v2151 = vadd.f32 %v1711, %v71
    %v2152 = vadd.f32 %v1714, %v69
    %v2153 = vadd.f32 %v1716, %v71
    %v2154 = vadd.f32 %v1719, %v69
    %v2155 = vadd.f32 %v1721, %v71
    %v2156 = vadd.f32 %v1724, %v69
    %v2157 = vadd.f32 %v1726, %v71
    %v2158 = vadd.f32 %v1729, %v69
    %v2159 = vadd.f32 %v1731, %v71
    %v2160 = vadd.f32 %v1734, %v69
    %v2161 = vadd.f32 %v1736, %v71
    %v2162 = vadd.f32 %v1739, %v69
    %v2163 = vadd.f32 %v1741, %v71
    %v2164 = vadd.f32 %v1744, %v69
    %v2165 = vadd.f32 %v1746, %v71
    %v2166 = vadd.f32 %v1749, %v69
    %v2167 = vadd.f32 %v1751, %v71
    %v2168 = vadd.f32 %v1754, %v69
    %v2169 = vadd.f32 %v1756, %v71
    %v2170 = vadd.f32 %v1759, %v69
    %v2171 = vadd.f32 %v1761, %v71
    %v2172 = vadd.f32 %v1764, %v69
    %v2173 = vadd.f32 %v1766, %v71
    %v2174 = vadd.f32 %v1769, %v69
    %v2175 = vadd.f32 %v1771, %v71
    %v2176 = vadd.f32 %v1774, %v69
    %v2177 = vadd.f32 %v1776, %v71
    %v2178 = vadd.f32 %v1779, %v69
    %v2179 = vadd.f32 %v1781, %v71
    %v2180 = vadd.f32 %v1784, %v69
    %v2181 = vadd.f32 %v1786, %v71
    %v2182 = vadd.f32 %v1789, %v69
    %v2183 = vadd.f32 %v1791, %v71
    %v2184 = vadd.f32 %v1794, %v69
    %v2185 = vadd.f32 %v1796, %v71
    %v2186 = vadd.f32 %v1799, %v69
    %v2187 = vadd.f32 %v1801, %v71
    %v2188 = vadd.f32 %v1804, %v69
    %v2189 = vadd.f32 %v1806, %v71
    %v2190 = vadd.f32 %v1809, %v69
    %v2191 = vadd.f32 %v1811, %v71
    %v2192 = vadd.f32 %v1814, %v69
    %v2193 = vadd.f32 %v1816, %v71
    %v2194 = vadd.f32 %v1819, %v69
    %v2195 = vadd.f32 %v1821, %v71
    %v2196 = vadd.f32 %v1824, %v69
    %v2197 = vadd.f32 %v1826, %v71
    %v2198 = vadd.f32 %v1829, %v69
    %v2199 = vadd.f32 %v1831, %v71
    %v2200 = vadd.f32 %v1834, %v69
    %v2201 = vadd.f32 %v1836, %v71
    %v2202 = vadd.f32 %v1839, %v69
    %v2203 = vadd.f32 %v1841, %v71
    %v2204 = vadd.f32 %v1844, %v69
    %v2205 = vadd.f32 %v1846, %v71
    %v2206 = vadd.f32 %v1849, %v69
    %v2207 = vadd.f32 %v1851, %v71
    %v2208 = vadd.f32 %v1854, %v69
    %v2209 = vadd.f32 %v1856, %v71
    %v2210 = vadd.f32 %v1859, %v69
    %v2211 = vadd.f32 %v1861, %v71
    %v2212 = vadd.f32 %v1864, %v69
    %v2213 = vadd.f32 %v1866, %v71
    %v2214 = vadd.f32 %v1869, %v69
    %v2215 = vadd.f32 %v1871, %v71
    %v2216 = vadd.f32 %v1874, %v69
    %v2217 = vadd.f32 %v1876, %v71
    %v2218 = vadd.f32 %v1879, %v69
    %v2219 = vadd.f32 %v1881, %v71
    %v2220 = vadd.f32 %v1884, %v69
    %v2221 = vadd.f32 %v1886, %v71
    %v2222 = vadd.f32 %v1889, %v69
    %v2223 = vadd.f32 %v1891, %v71
    %v2224 = vadd.f32 %v1894, %v69
    %v2225 = vadd.f32 %v1896, %v71
    %v2226 = vadd.f32 %v1899, %v69
    %v2227 = vadd.f32 %v1901, %v71
    %v2228 = vadd.f32 %v1904, %v69
    %v2229 = vadd.f32 %v1906, %v71
    %v2230 = vadd.f32 %v1909, %v69
    %v2231 = vadd.f32 %v1911, %v71
    %v2232 = vadd.f32 %v1914, %v69
    %v2233 = vadd.f32 %v1916, %v71
    %v2234 = vadd.f32 %v1919, %v69
    %v2235 = vadd.f32 %v1921, %v71
    %v2236 = vadd.f32 %v1924, %v69
    %v2237 = vadd.f32 %v1926, %v71
    %v2238 = vadd.f32 %v1929, %v69
    %v2239 = vadd.f32 %v1931, %v71
    %v2240 = vadd.f32 %v1934, %v69
    %v2241 = vadd.f32 %v1936, %v71
    %v2242 = vadd.f32 %v1939, %v69
    %v2243 = vadd.f32 %v1941, %v71
    %v2244 = vadd.f32 %v1944, %v69
    %v2245 = vadd.f32 %v1946, %v71
    %v2246 = vadd.f32 %v1949, %v69
    %v2247 = vadd.f32 %v1951, %v71
    %v2248 = vadd.f32 %v1954, %v69
    %v2249 = vadd.f32 %v1956, %v71
    %v2250 = vadd.f32 %v1959, %v69
    %v2251 = vadd.f32 %v1961, %v71
    %v2252 = vadd.f32 %v1964, %v69
    %v2253 = vadd.f32 %v1966, %v71
    %v2254 = vadd.f32 %v1969, %v69
    %v2255 = vadd.f32 %v1971, %v71
    %v2256 = vadd.f32 %v1974, %v69
    %v2257 = vadd.f32 %v1976, %v71
    %v2258 = vadd.f32 %v1979, %v69
    %v2259 = vadd.f32 %v1981, %v71
    %v2260 = vadd.f32 %v1984, %v69
    %v2261 = vadd.f32 %v1986, %v71
    %v2262 = vadd.f32 %v1989, %v69
    %v2263 = vadd.f32 %v1991, %v71
    %v2264 = vadd.f32 %v1994, %v69
    %v2265 = vadd.f32 %v1996, %v71
    %v2266 = vadd.f32 %v1999, %v69
    %v2267 = vadd.f32 %v2001, %v71
    %v2268 = vadd.f32 %v2004, %v69
    %v2269 = vadd.f32 %v2006, %v71
    %v2270 = vadd.f32 %v2009, %v69
    %v2271 = vadd.f32 %v2011, %v71
    %v2272 = vadd.f32 %v2014, %v69
    %v2273 = vadd.f32 %v2016, %v71
    %v2274 = vtanh.pop %v2018
    %v2275 = vtanh.pop %v2019
    %v2276 = vtanh.pop %v2020
    %v2277 = vtanh.pop %v2021
    %v2278 = vtanh.pop %v2022
    %v2279 = vtanh.pop %v2023
    %v2280 = vtanh.pop %v2024
    %v2281 = vtanh.pop %v2025
    %v2282 = vtanh.pop %v2026
    %v2283 = vtanh.pop %v2027
    %v2284 = vtanh.pop %v2028
    %v2285 = vtanh.pop %v2029
    %v2286 = vtanh.pop %v2030
    %v2287 = vtanh.pop %v2031
    %v2288 = vtanh.pop %v2032
    %v2289 = vtanh.pop %v2033
    %v2290 = vtanh.pop %v2034
    %v2291 = vtanh.pop %v2035
    %v2292 = vtanh.pop %v2036
    %v2293 = vtanh.pop %v2037
    %v2294 = vtanh.pop %v2038
    %v2295 = vtanh.pop %v2039
    %v2296 = vtanh.pop %v2040
    %v2297 = vtanh.pop %v2041
    %v2298 = vtanh.pop %v2042
    %v2299 = vtanh.pop %v2043
    %v2300 = vtanh.pop %v2044
    %v2301 = vtanh.pop %v2045
    %v2302 = vtanh.pop %v2046
    %v2303 = vtanh.pop %v2047
    %v2304 = vtanh.pop %v2048
    %v2305 = vtanh.pop %v2049
    %v2306 = vtanh.pop %v2050
    %v2307 = vtanh.pop %v2051
    %v2308 = vtanh.pop %v2052
    %v2309 = vtanh.pop %v2053
    %v2310 = vtanh.pop %v2054
    %v2311 = vtanh.pop %v2055
    %v2312 = vtanh.pop %v2056
    %v2313 = vtanh.pop %v2057
    %v2314 = vtanh.pop %v2058
    %v2315 = vtanh.pop %v2059
    %v2316 = vtanh.pop %v2060
    %v2317 = vtanh.pop %v2061
    %v2318 = vtanh.pop %v2062
    %v2319 = vtanh.pop %v2063
    %v2320 = vtanh.pop %v2064
    %v2321 = vtanh.pop %v2065
    %v2322 = vtanh.pop %v2066
    %v2323 = vtanh.pop %v2067
    %v2324 = vtanh.pop %v2068
    %v2325 = vtanh.pop %v2069
    %v2326 = vtanh.pop %v2070
    %v2327 = vtanh.pop %v2071
    %v2328 = vtanh.pop %v2072
    %v2329 = vtanh.pop %v2073
    %v2330 = vtanh.pop %v2074
    %v2331 = vtanh.pop %v2075
    %v2332 = vtanh.pop %v2076
    %v2333 = vtanh.pop %v2077
    %v2334 = vtanh.pop %v2078
    %v2335 = vtanh.pop %v2079
    %v2336 = vtanh.pop %v2080
    %v2337 = vtanh.pop %v2081
    %v2338 = vtanh.pop %v2082
    %v2339 = vtanh.pop %v2083
    %v2340 = vtanh.pop %v2084
    %v2341 = vtanh.pop %v2085
    %v2342 = vtanh.pop %v2086
    %v2343 = vtanh.pop %v2087
    %v2344 = vtanh.pop %v2088
    %v2345 = vtanh.pop %v2089
    %v2346 = vtanh.pop %v2090
    %v2347 = vtanh.pop %v2091
    %v2348 = vtanh.pop %v2092
    %v2349 = vtanh.pop %v2093
    %v2350 = vtanh.pop %v2094
    %v2351 = vtanh.pop %v2095
    %v2352 = vtanh.pop %v2096
    %v2353 = vtanh.pop %v2097
    %v2354 = vtanh.pop %v2098
    %v2355 = vtanh.pop %v2099
    %v2356 = vtanh.pop %v2100
    %v2357 = vtanh.pop %v2101
    %v2358 = vtanh.pop %v2102
    %v2359 = vtanh.pop %v2103
    %v2360 = vtanh.pop %v2104
    %v2361 = vtanh.pop %v2105
    %v2362 = vtanh.pop %v2106
    %v2363 = vtanh.pop %v2107
    %v2364 = vtanh.pop %v2108
    %v2365 = vtanh.pop %v2109
    %v2366 = vtanh.pop %v2110
    %v2367 = vtanh.pop %v2111
    %v2368 = vtanh.pop %v2112
    %v2369 = vtanh.pop %v2113
    %v2370 = vtanh.pop %v2114
    %v2371 = vtanh.pop %v2115
    %v2372 = vtanh.pop %v2116
    %v2373 = vtanh.pop %v2117
    %v2374 = vtanh.pop %v2118
    %v2375 = vtanh.pop %v2119
    %v2376 = vtanh.pop %v2120
    %v2377 = vtanh.pop %v2121
    %v2378 = vtanh.pop %v2122
    %v2379 = vtanh.pop %v2123
    %v2380 = vtanh.pop %v2124
    %v2381 = vtanh.pop %v2125
    %v2382 = vtanh.pop %v2126
    %v2383 = vtanh.pop %v2127
    %v2384 = vtanh.pop %v2128
    %v2385 = vtanh.pop %v2129
    %v2386 = vtanh.pop %v2130
    %v2387 = vtanh.pop %v2131
    %v2388 = vtanh.pop %v2132
    %v2389 = vtanh.pop %v2133
    %v2390 = vtanh.pop %v2134
    %v2391 = vtanh.pop %v2135
    %v2392 = vtanh.pop %v2136
    %v2393 = vtanh.pop %v2137
    %v2394 = vtanh.pop %v2138
    %v2395 = vtanh.pop %v2139
    %v2396 = vtanh.pop %v2140
    %v2397 = vtanh.pop %v2141
    %v2398 = vtanh.pop %v2142
    %v2399 = vtanh.pop %v2143
    %v2400 = vtanh.pop %v2144
    %v2401 = vtanh.pop %v2145
    %v2402 = vtanh.pop %v2146
    %v2403 = vtanh.pop %v2147
    %v2404 = vtanh.pop %v2148
    %v2405 = vtanh.pop %v2149
    %v2406 = vtanh.pop %v2150
    %v2407 = vtanh.pop %v2151
    %v2408 = vtanh.pop %v2152
    %v2409 = vtanh.pop %v2153
    %v2410 = vtanh.pop %v2154
    %v2411 = vtanh.pop %v2155
    %v2412 = vtanh.pop %v2156
    %v2413 = vtanh.pop %v2157
    %v2414 = vtanh.pop %v2158
    %v2415 = vtanh.pop %v2159
    %v2416 = vtanh.pop %v2160
    %v2417 = vtanh.pop %v2161
    %v2418 = vtanh.pop %v2162
    %v2419 = vtanh.pop %v2163
    %v2420 = vtanh.pop %v2164
    %v2421 = vtanh.pop %v2165
    %v2422 = vtanh.pop %v2166
    %v2423 = vtanh.pop %v2167
    %v2424 = vtanh.pop %v2168
    %v2425 = vtanh.pop %v2169
    %v2426 = vtanh.pop %v2170
    %v2427 = vtanh.pop %v2171
    %v2428 = vtanh.pop %v2172
    %v2429 = vtanh.pop %v2173
    %v2430 = vtanh.pop %v2174
    %v2431 = vtanh.pop %v2175
    %v2432 = vtanh.pop %v2176
    %v2433 = vtanh.pop %v2177
    %v2434 = vtanh.pop %v2178
    %v2435 = vtanh.pop %v2179
    %v2436 = vtanh.pop %v2180
    %v2437 = vtanh.pop %v2181
    %v2438 = vtanh.pop %v2182
    %v2439 = vtanh.pop %v2183
    %v2440 = vtanh.pop %v2184
    %v2441 = vtanh.pop %v2185
    %v2442 = vtanh.pop %v2186
    %v2443 = vtanh.pop %v2187
    %v2444 = vtanh.pop %v2188
    %v2445 = vtanh.pop %v2189
    %v2446 = vtanh.pop %v2190
    %v2447 = vtanh.pop %v2191
    %v2448 = vtanh.pop %v2192
    %v2449 = vtanh.pop %v2193
    %v2450 = vtanh.pop %v2194
    %v2451 = vtanh.pop %v2195
    %v2452 = vtanh.pop %v2196
    %v2453 = vtanh.pop %v2197
    %v2454 = vtanh.pop %v2198
    %v2455 = vtanh.pop %v2199
    %v2456 = vtanh.pop %v2200
    %v2457 = vtanh.pop %v2201
    %v2458 = vtanh.pop %v2202
    %v2459 = vtanh.pop %v2203
    %v2460 = vtanh.pop %v2204
    %v2461 = vtanh.pop %v2205
    %v2462 = vtanh.pop %v2206
    %v2463 = vtanh.pop %v2207
    %v2464 = vtanh.pop %v2208
    %v2465 = vtanh.pop %v2209
    %v2466 = vtanh.pop %v2210
    %v2467 = vtanh.pop %v2211
    %v2468 = vtanh.pop %v2212
    %v2469 = vtanh.pop %v2213
    %v2470 = vtanh.pop %v2214
    %v2471 = vtanh.pop %v2215
    %v2472 = vtanh.pop %v2216
    %v2473 = vtanh.pop %v2217
    %v2474 = vtanh.pop %v2218
    %v2475 = vtanh.pop %v2219
    %v2476 = vtanh.pop %v2220
    %v2477 = vtanh.pop %v2221
    %v2478 = vtanh.pop %v2222
    %v2479 = vtanh.pop %v2223
    %v2480 = vtanh.pop %v2224
    %v2481 = vtanh.pop %v2225
    %v2482 = vtanh.pop %v2226
    %v2483 = vtanh.pop %v2227
    %v2484 = vtanh.pop %v2228
    %v2485 = vtanh.pop %v2229
    %v2486 = vtanh.pop %v2230
    %v2487 = vtanh.pop %v2231
    %v2488 = vtanh.pop %v2232
    %v2489 = vtanh.pop %v2233
    %v2490 = vtanh.pop %v2234
    %v2491 = vtanh.pop %v2235
    %v2492 = vtanh.pop %v2236
    %v2493 = vtanh.pop %v2237
    %v2494 = vtanh.pop %v2238
    %v2495 = vtanh.pop %v2239
    %v2496 = vtanh.pop %v2240
    %v2497 = vtanh.pop %v2241
    %v2498 = vtanh.pop %v2242
    %v2499 = vtanh.pop %v2243
    %v2500 = vtanh.pop %v2244
    %v2501 = vtanh.pop %v2245
    %v2502 = vtanh.pop %v2246
    %v2503 = vtanh.pop %v2247
    %v2504 = vtanh.pop %v2248
    %v2505 = vtanh.pop %v2249
    %v2506 = vtanh.pop %v2250
    %v2507 = vtanh.pop %v2251
    %v2508 = vtanh.pop %v2252
    %v2509 = vtanh.pop %v2253
    %v2510 = vtanh.pop %v2254
    %v2511 = vtanh.pop %v2255
    %v2512 = vtanh.pop %v2256
    %v2513 = vtanh.pop %v2257
    %v2514 = vtanh.pop %v2258
    %v2515 = vtanh.pop %v2259
    %v2516 = vtanh.pop %v2260
    %v2517 = vtanh.pop %v2261
    %v2518 = vtanh.pop %v2262
    %v2519 = vtanh.pop %v2263
    %v2520 = vtanh.pop %v2264
    %v2521 = vtanh.pop %v2265
    %v2522 = vtanh.pop %v2266
    %v2523 = vtanh.pop %v2267
    %v2524 = vtanh.pop %v2268
    %v2525 = vtanh.pop %v2269
    %v2526 = vtanh.pop %v2270
    %v2527 = vtanh.pop %v2271
    %v2528 = vtanh.pop %v2272
    %v2529 = vtanh.pop %v2273
    %v2530 = vld [vmem:[%s5] sm:$0x1]
    %v2532 = vperm.slane %v2530, 0
    %v2534 = vmul.f32 %v2274, %v2532
    %v2535 = vmul.f32 %v2275, %v2532
    %v2536 = vmul.f32 %v2276, %v2532
    %v2537 = vmul.f32 %v2277, %v2532
    %v2538 = vmul.f32 %v2278, %v2532
    %v2539 = vmul.f32 %v2279, %v2532
    %v2540 = vmul.f32 %v2280, %v2532
    %v2541 = vmul.f32 %v2281, %v2532
    %v2542 = vmul.f32 %v2282, %v2532
    %v2543 = vmul.f32 %v2283, %v2532
    %v2544 = vmul.f32 %v2284, %v2532
    %v2545 = vmul.f32 %v2285, %v2532
    %v2546 = vmul.f32 %v2286, %v2532
    %v2547 = vmul.f32 %v2287, %v2532
    %v2548 = vmul.f32 %v2288, %v2532
    %v2549 = vmul.f32 %v2289, %v2532
    %v2550 = vmul.f32 %v2290, %v2532
    %v2551 = vmul.f32 %v2291, %v2532
    %v2552 = vmul.f32 %v2292, %v2532
    %v2553 = vmul.f32 %v2293, %v2532
    %v2554 = vmul.f32 %v2294, %v2532
    %v2555 = vmul.f32 %v2295, %v2532
    %v2556 = vmul.f32 %v2296, %v2532
    %v2557 = vmul.f32 %v2297, %v2532
    %v2558 = vmul.f32 %v2298, %v2532
    %v2559 = vmul.f32 %v2299, %v2532
    %v2560 = vmul.f32 %v2300, %v2532
    %v2561 = vmul.f32 %v2301, %v2532
    %v2562 = vmul.f32 %v2302, %v2532
    %v2563 = vmul.f32 %v2303, %v2532
    %v2564 = vmul.f32 %v2304, %v2532
    %v2565 = vmul.f32 %v2305, %v2532
    %v2566 = vmul.f32 %v2306, %v2532
    %v2567 = vmul.f32 %v2307, %v2532
    %v2568 = vmul.f32 %v2308, %v2532
    %v2569 = vmul.f32 %v2309, %v2532
    %v2570 = vmul.f32 %v2310, %v2532
    %v2571 = vmul.f32 %v2311, %v2532
    %v2572 = vmul.f32 %v2312, %v2532
    %v2573 = vmul.f32 %v2313, %v2532
    %v2574 = vmul.f32 %v2314, %v2532
    %v2575 = vmul.f32 %v2315, %v2532
    %v2576 = vmul.f32 %v2316, %v2532
    %v2577 = vmul.f32 %v2317, %v2532
    %v2578 = vmul.f32 %v2318, %v2532
    %v2579 = vmul.f32 %v2319, %v2532
    %v2580 = vmul.f32 %v2320, %v2532
    %v2581 = vmul.f32 %v2321, %v2532
    %v2582 = vmul.f32 %v2322, %v2532
    %v2583 = vmul.f32 %v2323, %v2532
    %v2584 = vmul.f32 %v2324, %v2532
    %v2585 = vmul.f32 %v2325, %v2532
    %v2586 = vmul.f32 %v2326, %v2532
    %v2587 = vmul.f32 %v2327, %v2532
    %v2588 = vmul.f32 %v2328, %v2532
    %v2589 = vmul.f32 %v2329, %v2532
    %v2590 = vmul.f32 %v2330, %v2532
    %v2591 = vmul.f32 %v2331, %v2532
    %v2592 = vmul.f32 %v2332, %v2532
    %v2593 = vmul.f32 %v2333, %v2532
    %v2594 = vmul.f32 %v2334, %v2532
    %v2595 = vmul.f32 %v2335, %v2532
    %v2596 = vmul.f32 %v2336, %v2532
    %v2597 = vmul.f32 %v2337, %v2532
    %v2598 = vmul.f32 %v2338, %v2532
    %v2599 = vmul.f32 %v2339, %v2532
    %v2600 = vmul.f32 %v2340, %v2532
    %v2601 = vmul.f32 %v2341, %v2532
    %v2602 = vmul.f32 %v2342, %v2532
    %v2603 = vmul.f32 %v2343, %v2532
    %v2604 = vmul.f32 %v2344, %v2532
    %v2605 = vmul.f32 %v2345, %v2532
    %v2606 = vmul.f32 %v2346, %v2532
    %v2607 = vmul.f32 %v2347, %v2532
    %v2608 = vmul.f32 %v2348, %v2532
    %v2609 = vmul.f32 %v2349, %v2532
    %v2610 = vmul.f32 %v2350, %v2532
    %v2611 = vmul.f32 %v2351, %v2532
    %v2612 = vmul.f32 %v2352, %v2532
    %v2613 = vmul.f32 %v2353, %v2532
    %v2614 = vmul.f32 %v2354, %v2532
    %v2615 = vmul.f32 %v2355, %v2532
    %v2616 = vmul.f32 %v2356, %v2532
    %v2617 = vmul.f32 %v2357, %v2532
    %v2618 = vmul.f32 %v2358, %v2532
    %v2619 = vmul.f32 %v2359, %v2532
    %v2620 = vmul.f32 %v2360, %v2532
    %v2621 = vmul.f32 %v2361, %v2532
    %v2622 = vmul.f32 %v2362, %v2532
    %v2623 = vmul.f32 %v2363, %v2532
    %v2624 = vmul.f32 %v2364, %v2532
    %v2625 = vmul.f32 %v2365, %v2532
    %v2626 = vmul.f32 %v2366, %v2532
    %v2627 = vmul.f32 %v2367, %v2532
    %v2628 = vmul.f32 %v2368, %v2532
    %v2629 = vmul.f32 %v2369, %v2532
    %v2630 = vmul.f32 %v2370, %v2532
    %v2631 = vmul.f32 %v2371, %v2532
    %v2632 = vmul.f32 %v2372, %v2532
    %v2633 = vmul.f32 %v2373, %v2532
    %v2634 = vmul.f32 %v2374, %v2532
    %v2635 = vmul.f32 %v2375, %v2532
    %v2636 = vmul.f32 %v2376, %v2532
    %v2637 = vmul.f32 %v2377, %v2532
    %v2638 = vmul.f32 %v2378, %v2532
    %v2639 = vmul.f32 %v2379, %v2532
    %v2640 = vmul.f32 %v2380, %v2532
    %v2641 = vmul.f32 %v2381, %v2532
    %v2642 = vmul.f32 %v2382, %v2532
    %v2643 = vmul.f32 %v2383, %v2532
    %v2644 = vmul.f32 %v2384, %v2532
    %v2645 = vmul.f32 %v2385, %v2532
    %v2646 = vmul.f32 %v2386, %v2532
    %v2647 = vmul.f32 %v2387, %v2532
    %v2648 = vmul.f32 %v2388, %v2532
    %v2649 = vmul.f32 %v2389, %v2532
    %v2650 = vmul.f32 %v2390, %v2532
    %v2651 = vmul.f32 %v2391, %v2532
    %v2652 = vmul.f32 %v2392, %v2532
    %v2653 = vmul.f32 %v2393, %v2532
    %v2654 = vmul.f32 %v2394, %v2532
    %v2655 = vmul.f32 %v2395, %v2532
    %v2656 = vmul.f32 %v2396, %v2532
    %v2657 = vmul.f32 %v2397, %v2532
    %v2658 = vmul.f32 %v2398, %v2532
    %v2659 = vmul.f32 %v2399, %v2532
    %v2660 = vmul.f32 %v2400, %v2532
    %v2661 = vmul.f32 %v2401, %v2532
    %v2662 = vmul.f32 %v2402, %v2532
    %v2663 = vmul.f32 %v2403, %v2532
    %v2664 = vmul.f32 %v2404, %v2532
    %v2665 = vmul.f32 %v2405, %v2532
    %v2666 = vmul.f32 %v2406, %v2532
    %v2667 = vmul.f32 %v2407, %v2532
    %v2668 = vmul.f32 %v2408, %v2532
    %v2669 = vmul.f32 %v2409, %v2532
    %v2670 = vmul.f32 %v2410, %v2532
    %v2671 = vmul.f32 %v2411, %v2532
    %v2672 = vmul.f32 %v2412, %v2532
    %v2673 = vmul.f32 %v2413, %v2532
    %v2674 = vmul.f32 %v2414, %v2532
    %v2675 = vmul.f32 %v2415, %v2532
    %v2676 = vmul.f32 %v2416, %v2532
    %v2677 = vmul.f32 %v2417, %v2532
    %v2678 = vmul.f32 %v2418, %v2532
    %v2679 = vmul.f32 %v2419, %v2532
    %v2680 = vmul.f32 %v2420, %v2532
    %v2681 = vmul.f32 %v2421, %v2532
    %v2682 = vmul.f32 %v2422, %v2532
    %v2683 = vmul.f32 %v2423, %v2532
    %v2684 = vmul.f32 %v2424, %v2532
    %v2685 = vmul.f32 %v2425, %v2532
    %v2686 = vmul.f32 %v2426, %v2532
    %v2687 = vmul.f32 %v2427, %v2532
    %v2688 = vmul.f32 %v2428, %v2532
    %v2689 = vmul.f32 %v2429, %v2532
    %v2690 = vmul.f32 %v2430, %v2532
    %v2691 = vmul.f32 %v2431, %v2532
    %v2692 = vmul.f32 %v2432, %v2532
    %v2693 = vmul.f32 %v2433, %v2532
    %v2694 = vmul.f32 %v2434, %v2532
    %v2695 = vmul.f32 %v2435, %v2532
    %v2696 = vmul.f32 %v2436, %v2532
    %v2697 = vmul.f32 %v2437, %v2532
    %v2698 = vmul.f32 %v2438, %v2532
    %v2699 = vmul.f32 %v2439, %v2532
    %v2700 = vmul.f32 %v2440, %v2532
    %v2701 = vmul.f32 %v2441, %v2532
    %v2702 = vmul.f32 %v2442, %v2532
    %v2703 = vmul.f32 %v2443, %v2532
    %v2704 = vmul.f32 %v2444, %v2532
    %v2705 = vmul.f32 %v2445, %v2532
    %v2706 = vmul.f32 %v2446, %v2532
    %v2707 = vmul.f32 %v2447, %v2532
    %v2708 = vmul.f32 %v2448, %v2532
    %v2709 = vmul.f32 %v2449, %v2532
    %v2710 = vmul.f32 %v2450, %v2532
    %v2711 = vmul.f32 %v2451, %v2532
    %v2712 = vmul.f32 %v2452, %v2532
    %v2713 = vmul.f32 %v2453, %v2532
    %v2714 = vmul.f32 %v2454, %v2532
    %v2715 = vmul.f32 %v2455, %v2532
    %v2716 = vmul.f32 %v2456, %v2532
    %v2717 = vmul.f32 %v2457, %v2532
    %v2718 = vmul.f32 %v2458, %v2532
    %v2719 = vmul.f32 %v2459, %v2532
    %v2720 = vmul.f32 %v2460, %v2532
    %v2721 = vmul.f32 %v2461, %v2532
    %v2722 = vmul.f32 %v2462, %v2532
    %v2723 = vmul.f32 %v2463, %v2532
    %v2724 = vmul.f32 %v2464, %v2532
    %v2725 = vmul.f32 %v2465, %v2532
    %v2726 = vmul.f32 %v2466, %v2532
    %v2727 = vmul.f32 %v2467, %v2532
    %v2728 = vmul.f32 %v2468, %v2532
    %v2729 = vmul.f32 %v2469, %v2532
    %v2730 = vmul.f32 %v2470, %v2532
    %v2731 = vmul.f32 %v2471, %v2532
    %v2732 = vmul.f32 %v2472, %v2532
    %v2733 = vmul.f32 %v2473, %v2532
    %v2734 = vmul.f32 %v2474, %v2532
    %v2735 = vmul.f32 %v2475, %v2532
    %v2736 = vmul.f32 %v2476, %v2532
    %v2737 = vmul.f32 %v2477, %v2532
    %v2738 = vmul.f32 %v2478, %v2532
    %v2739 = vmul.f32 %v2479, %v2532
    %v2740 = vmul.f32 %v2480, %v2532
    %v2741 = vmul.f32 %v2481, %v2532
    %v2742 = vmul.f32 %v2482, %v2532
    %v2743 = vmul.f32 %v2483, %v2532
    %v2744 = vmul.f32 %v2484, %v2532
    %v2745 = vmul.f32 %v2485, %v2532
    %v2746 = vmul.f32 %v2486, %v2532
    %v2747 = vmul.f32 %v2487, %v2532
    %v2748 = vmul.f32 %v2488, %v2532
    %v2749 = vmul.f32 %v2489, %v2532
    %v2750 = vmul.f32 %v2490, %v2532
    %v2751 = vmul.f32 %v2491, %v2532
    %v2752 = vmul.f32 %v2492, %v2532
    %v2753 = vmul.f32 %v2493, %v2532
    %v2754 = vmul.f32 %v2494, %v2532
    %v2755 = vmul.f32 %v2495, %v2532
    %v2756 = vmul.f32 %v2496, %v2532
    %v2757 = vmul.f32 %v2497, %v2532
    %v2758 = vmul.f32 %v2498, %v2532
    %v2759 = vmul.f32 %v2499, %v2532
    %v2760 = vmul.f32 %v2500, %v2532
    %v2761 = vmul.f32 %v2501, %v2532
    %v2762 = vmul.f32 %v2502, %v2532
    %v2763 = vmul.f32 %v2503, %v2532
    %v2764 = vmul.f32 %v2504, %v2532
    %v2765 = vmul.f32 %v2505, %v2532
    %v2766 = vmul.f32 %v2506, %v2532
    %v2767 = vmul.f32 %v2507, %v2532
    %v2768 = vmul.f32 %v2508, %v2532
    %v2769 = vmul.f32 %v2509, %v2532
    %v2770 = vmul.f32 %v2510, %v2532
    %v2771 = vmul.f32 %v2511, %v2532
    %v2772 = vmul.f32 %v2512, %v2532
    %v2773 = vmul.f32 %v2513, %v2532
    %v2774 = vmul.f32 %v2514, %v2532
    %v2775 = vmul.f32 %v2515, %v2532
    %v2776 = vmul.f32 %v2516, %v2532
    %v2777 = vmul.f32 %v2517, %v2532
    %v2778 = vmul.f32 %v2518, %v2532
    %v2779 = vmul.f32 %v2519, %v2532
    %v2780 = vmul.f32 %v2520, %v2532
    %v2781 = vmul.f32 %v2521, %v2532
    %v2782 = vmul.f32 %v2522, %v2532
    %v2783 = vmul.f32 %v2523, %v2532
    %v2784 = vmul.f32 %v2524, %v2532
    %v2785 = vmul.f32 %v2525, %v2532
    %v2786 = vmul.f32 %v2526, %v2532
    %v2787 = vmul.f32 %v2527, %v2532
    %v2788 = vmul.f32 %v2528, %v2532
    %v2789 = vmul.f32 %v2529, %v2532
    %v2790 = vsel %vm55, %v2534, 0.0
    %2791 = vadd.xlane.f32.xlu0 %v2790
    %v2792 = vpop.xlane.xlu0 %2791
    %v2793 = vsel %vm55, %v2535, 0.0
    %2794 = vadd.xlane.f32.xlu0 %v2793
    %v2795 = vpop.xlane.xlu0 %2794
    %v2796 = vsel %vm55, %v2536, 0.0
    %2797 = vadd.xlane.f32.xlu0 %v2796
    %v2798 = vpop.xlane.xlu0 %2797
    %v2799 = vsel %vm55, %v2537, 0.0
    %2800 = vadd.xlane.f32.xlu0 %v2799
    %v2801 = vpop.xlane.xlu0 %2800
    %v2802 = vsel %vm55, %v2538, 0.0
    %2803 = vadd.xlane.f32.xlu0 %v2802
    %v2804 = vpop.xlane.xlu0 %2803
    %v2805 = vsel %vm55, %v2539, 0.0
    %2806 = vadd.xlane.f32.xlu0 %v2805
    %v2807 = vpop.xlane.xlu0 %2806
    %v2808 = vsel %vm55, %v2540, 0.0
    %2809 = vadd.xlane.f32.xlu0 %v2808
    %v2810 = vpop.xlane.xlu0 %2809
    %v2811 = vsel %vm55, %v2541, 0.0
    %2812 = vadd.xlane.f32.xlu0 %v2811
    %v2813 = vpop.xlane.xlu0 %2812
    %v2814 = vsel %vm55, %v2542, 0.0
    %2815 = vadd.xlane.f32.xlu0 %v2814
    %v2816 = vpop.xlane.xlu0 %2815
    %v2817 = vsel %vm55, %v2543, 0.0
    %2818 = vadd.xlane.f32.xlu0 %v2817
    %v2819 = vpop.xlane.xlu0 %2818
    %v2820 = vsel %vm55, %v2544, 0.0
    %2821 = vadd.xlane.f32.xlu0 %v2820
    %v2822 = vpop.xlane.xlu0 %2821
    %v2823 = vsel %vm55, %v2545, 0.0
    %2824 = vadd.xlane.f32.xlu0 %v2823
    %v2825 = vpop.xlane.xlu0 %2824
    %v2826 = vsel %vm55, %v2546, 0.0
    %2827 = vadd.xlane.f32.xlu0 %v2826
    %v2828 = vpop.xlane.xlu0 %2827
    %v2829 = vsel %vm55, %v2547, 0.0
    %2830 = vadd.xlane.f32.xlu0 %v2829
    %v2831 = vpop.xlane.xlu0 %2830
    %v2832 = vsel %vm55, %v2548, 0.0
    %2833 = vadd.xlane.f32.xlu0 %v2832
    %v2834 = vpop.xlane.xlu0 %2833
    %v2835 = vsel %vm55, %v2549, 0.0
    %2836 = vadd.xlane.f32.xlu0 %v2835
    %v2837 = vpop.xlane.xlu0 %2836
    %v2838 = vsel %vm55, %v2550, 0.0
    %2839 = vadd.xlane.f32.xlu0 %v2838
    %v2840 = vpop.xlane.xlu0 %2839
    %v2841 = vsel %vm55, %v2551, 0.0
    %2842 = vadd.xlane.f32.xlu0 %v2841
    %v2843 = vpop.xlane.xlu0 %2842
    %v2844 = vsel %vm55, %v2552, 0.0
    %2845 = vadd.xlane.f32.xlu0 %v2844
    %v2846 = vpop.xlane.xlu0 %2845
    %v2847 = vsel %vm55, %v2553, 0.0
    %2848 = vadd.xlane.f32.xlu0 %v2847
    %v2849 = vpop.xlane.xlu0 %2848
    %v2850 = vsel %vm55, %v2554, 0.0
    %2851 = vadd.xlane.f32.xlu0 %v2850
    %v2852 = vpop.xlane.xlu0 %2851
    %v2853 = vsel %vm55, %v2555, 0.0
    %2854 = vadd.xlane.f32.xlu0 %v2853
    %v2855 = vpop.xlane.xlu0 %2854
    %v2856 = vsel %vm55, %v2556, 0.0
    %2857 = vadd.xlane.f32.xlu0 %v2856
    %v2858 = vpop.xlane.xlu0 %2857
    %v2859 = vsel %vm55, %v2557, 0.0
    %2860 = vadd.xlane.f32.xlu0 %v2859
    %v2861 = vpop.xlane.xlu0 %2860
    %v2862 = vsel %vm55, %v2558, 0.0
    %2863 = vadd.xlane.f32.xlu0 %v2862
    %v2864 = vpop.xlane.xlu0 %2863
    %v2865 = vsel %vm55, %v2559, 0.0
    %2866 = vadd.xlane.f32.xlu0 %v2865
    %v2867 = vpop.xlane.xlu0 %2866
    %v2868 = vsel %vm55, %v2560, 0.0
    %2869 = vadd.xlane.f32.xlu0 %v2868
    %v2870 = vpop.xlane.xlu0 %2869
    %v2871 = vsel %vm55, %v2561, 0.0
    %2872 = vadd.xlane.f32.xlu0 %v2871
    %v2873 = vpop.xlane.xlu0 %2872
    %v2874 = vsel %vm55, %v2562, 0.0
    %2875 = vadd.xlane.f32.xlu0 %v2874
    %v2876 = vpop.xlane.xlu0 %2875
    %v2877 = vsel %vm55, %v2563, 0.0
    %2878 = vadd.xlane.f32.xlu0 %v2877
    %v2879 = vpop.xlane.xlu0 %2878
    %v2880 = vsel %vm55, %v2564, 0.0
    %2881 = vadd.xlane.f32.xlu0 %v2880
    %v2882 = vpop.xlane.xlu0 %2881
    %v2883 = vsel %vm55, %v2565, 0.0
    %2884 = vadd.xlane.f32.xlu0 %v2883
    %v2885 = vpop.xlane.xlu0 %2884
    %v2886 = vsel %vm55, %v2566, 0.0
    %2887 = vadd.xlane.f32.xlu0 %v2886
    %v2888 = vpop.xlane.xlu0 %2887
    %v2889 = vsel %vm55, %v2567, 0.0
    %2890 = vadd.xlane.f32.xlu0 %v2889
    %v2891 = vpop.xlane.xlu0 %2890
    %v2892 = vsel %vm55, %v2568, 0.0
    %2893 = vadd.xlane.f32.xlu0 %v2892
    %v2894 = vpop.xlane.xlu0 %2893
    %v2895 = vsel %vm55, %v2569, 0.0
    %2896 = vadd.xlane.f32.xlu0 %v2895
    %v2897 = vpop.xlane.xlu0 %2896
    %v2898 = vsel %vm55, %v2570, 0.0
    %2899 = vadd.xlane.f32.xlu0 %v2898
    %v2900 = vpop.xlane.xlu0 %2899
    %v2901 = vsel %vm55, %v2571, 0.0
    %2902 = vadd.xlane.f32.xlu0 %v2901
    %v2903 = vpop.xlane.xlu0 %2902
    %v2904 = vsel %vm55, %v2572, 0.0
    %2905 = vadd.xlane.f32.xlu0 %v2904
    %v2906 = vpop.xlane.xlu0 %2905
    %v2907 = vsel %vm55, %v2573, 0.0
    %2908 = vadd.xlane.f32.xlu0 %v2907
    %v2909 = vpop.xlane.xlu0 %2908
    %v2910 = vsel %vm55, %v2574, 0.0
    %2911 = vadd.xlane.f32.xlu0 %v2910
    %v2912 = vpop.xlane.xlu0 %2911
    %v2913 = vsel %vm55, %v2575, 0.0
    %2914 = vadd.xlane.f32.xlu0 %v2913
    %v2915 = vpop.xlane.xlu0 %2914
    %v2916 = vsel %vm55, %v2576, 0.0
    %2917 = vadd.xlane.f32.xlu0 %v2916
    %v2918 = vpop.xlane.xlu0 %2917
    %v2919 = vsel %vm55, %v2577, 0.0
    %2920 = vadd.xlane.f32.xlu0 %v2919
    %v2921 = vpop.xlane.xlu0 %2920
    %v2922 = vsel %vm55, %v2578, 0.0
    %2923 = vadd.xlane.f32.xlu0 %v2922
    %v2924 = vpop.xlane.xlu0 %2923
    %v2925 = vsel %vm55, %v2579, 0.0
    %2926 = vadd.xlane.f32.xlu0 %v2925
    %v2927 = vpop.xlane.xlu0 %2926
    %v2928 = vsel %vm55, %v2580, 0.0
    %2929 = vadd.xlane.f32.xlu0 %v2928
    %v2930 = vpop.xlane.xlu0 %2929
    %v2931 = vsel %vm55, %v2581, 0.0
    %2932 = vadd.xlane.f32.xlu0 %v2931
    %v2933 = vpop.xlane.xlu0 %2932
    %v2934 = vsel %vm55, %v2582, 0.0
    %2935 = vadd.xlane.f32.xlu0 %v2934
    %v2936 = vpop.xlane.xlu0 %2935
    %v2937 = vsel %vm55, %v2583, 0.0
    %2938 = vadd.xlane.f32.xlu0 %v2937
    %v2939 = vpop.xlane.xlu0 %2938
    %v2940 = vsel %vm55, %v2584, 0.0
    %2941 = vadd.xlane.f32.xlu0 %v2940
    %v2942 = vpop.xlane.xlu0 %2941
    %v2943 = vsel %vm55, %v2585, 0.0
    %2944 = vadd.xlane.f32.xlu0 %v2943
    %v2945 = vpop.xlane.xlu0 %2944
    %v2946 = vsel %vm55, %v2586, 0.0
    %2947 = vadd.xlane.f32.xlu0 %v2946
    %v2948 = vpop.xlane.xlu0 %2947
    %v2949 = vsel %vm55, %v2587, 0.0
    %2950 = vadd.xlane.f32.xlu0 %v2949
    %v2951 = vpop.xlane.xlu0 %2950
    %v2952 = vsel %vm55, %v2588, 0.0
    %2953 = vadd.xlane.f32.xlu0 %v2952
    %v2954 = vpop.xlane.xlu0 %2953
    %v2955 = vsel %vm55, %v2589, 0.0
    %2956 = vadd.xlane.f32.xlu0 %v2955
    %v2957 = vpop.xlane.xlu0 %2956
    %v2958 = vsel %vm55, %v2590, 0.0
    %2959 = vadd.xlane.f32.xlu0 %v2958
    %v2960 = vpop.xlane.xlu0 %2959
    %v2961 = vsel %vm55, %v2591, 0.0
    %2962 = vadd.xlane.f32.xlu0 %v2961
    %v2963 = vpop.xlane.xlu0 %2962
    %v2964 = vsel %vm55, %v2592, 0.0
    %2965 = vadd.xlane.f32.xlu0 %v2964
    %v2966 = vpop.xlane.xlu0 %2965
    %v2967 = vsel %vm55, %v2593, 0.0
    %2968 = vadd.xlane.f32.xlu0 %v2967
    %v2969 = vpop.xlane.xlu0 %2968
    %v2970 = vsel %vm55, %v2594, 0.0
    %2971 = vadd.xlane.f32.xlu0 %v2970
    %v2972 = vpop.xlane.xlu0 %2971
    %v2973 = vsel %vm55, %v2595, 0.0
    %2974 = vadd.xlane.f32.xlu0 %v2973
    %v2975 = vpop.xlane.xlu0 %2974
    %v2976 = vsel %vm55, %v2596, 0.0
    %2977 = vadd.xlane.f32.xlu0 %v2976
    %v2978 = vpop.xlane.xlu0 %2977
    %v2979 = vsel %vm55, %v2597, 0.0
    %2980 = vadd.xlane.f32.xlu0 %v2979
    %v2981 = vpop.xlane.xlu0 %2980
    %v2982 = vsel %vm55, %v2598, 0.0
    %2983 = vadd.xlane.f32.xlu0 %v2982
    %v2984 = vpop.xlane.xlu0 %2983
    %v2985 = vsel %vm55, %v2599, 0.0
    %2986 = vadd.xlane.f32.xlu0 %v2985
    %v2987 = vpop.xlane.xlu0 %2986
    %v2988 = vsel %vm55, %v2600, 0.0
    %2989 = vadd.xlane.f32.xlu0 %v2988
    %v2990 = vpop.xlane.xlu0 %2989
    %v2991 = vsel %vm55, %v2601, 0.0
    %2992 = vadd.xlane.f32.xlu0 %v2991
    %v2993 = vpop.xlane.xlu0 %2992
    %v2994 = vsel %vm55, %v2602, 0.0
    %2995 = vadd.xlane.f32.xlu0 %v2994
    %v2996 = vpop.xlane.xlu0 %2995
    %v2997 = vsel %vm55, %v2603, 0.0
    %2998 = vadd.xlane.f32.xlu0 %v2997
    %v2999 = vpop.xlane.xlu0 %2998
    %v3000 = vsel %vm55, %v2604, 0.0
    %3001 = vadd.xlane.f32.xlu0 %v3000
    %v3002 = vpop.xlane.xlu0 %3001
    %v3003 = vsel %vm55, %v2605, 0.0
    %3004 = vadd.xlane.f32.xlu0 %v3003
    %v3005 = vpop.xlane.xlu0 %3004
    %v3006 = vsel %vm55, %v2606, 0.0
    %3007 = vadd.xlane.f32.xlu0 %v3006
    %v3008 = vpop.xlane.xlu0 %3007
    %v3009 = vsel %vm55, %v2607, 0.0
    %3010 = vadd.xlane.f32.xlu0 %v3009
    %v3011 = vpop.xlane.xlu0 %3010
    %v3012 = vsel %vm55, %v2608, 0.0
    %3013 = vadd.xlane.f32.xlu0 %v3012
    %v3014 = vpop.xlane.xlu0 %3013
    %v3015 = vsel %vm55, %v2609, 0.0
    %3016 = vadd.xlane.f32.xlu0 %v3015
    %v3017 = vpop.xlane.xlu0 %3016
    %v3018 = vsel %vm55, %v2610, 0.0
    %3019 = vadd.xlane.f32.xlu0 %v3018
    %v3020 = vpop.xlane.xlu0 %3019
    %v3021 = vsel %vm55, %v2611, 0.0
    %3022 = vadd.xlane.f32.xlu0 %v3021
    %v3023 = vpop.xlane.xlu0 %3022
    %v3024 = vsel %vm55, %v2612, 0.0
    %3025 = vadd.xlane.f32.xlu0 %v3024
    %v3026 = vpop.xlane.xlu0 %3025
    %v3027 = vsel %vm55, %v2613, 0.0
    %3028 = vadd.xlane.f32.xlu0 %v3027
    %v3029 = vpop.xlane.xlu0 %3028
    %v3030 = vsel %vm55, %v2614, 0.0
    %3031 = vadd.xlane.f32.xlu0 %v3030
    %v3032 = vpop.xlane.xlu0 %3031
    %v3033 = vsel %vm55, %v2615, 0.0
    %3034 = vadd.xlane.f32.xlu0 %v3033
    %v3035 = vpop.xlane.xlu0 %3034
    %v3036 = vsel %vm55, %v2616, 0.0
    %3037 = vadd.xlane.f32.xlu0 %v3036
    %v3038 = vpop.xlane.xlu0 %3037
    %v3039 = vsel %vm55, %v2617, 0.0
    %3040 = vadd.xlane.f32.xlu0 %v3039
    %v3041 = vpop.xlane.xlu0 %3040
    %v3042 = vsel %vm55, %v2618, 0.0
    %3043 = vadd.xlane.f32.xlu0 %v3042
    %v3044 = vpop.xlane.xlu0 %3043
    %v3045 = vsel %vm55, %v2619, 0.0
    %3046 = vadd.xlane.f32.xlu0 %v3045
    %v3047 = vpop.xlane.xlu0 %3046
    %v3048 = vsel %vm55, %v2620, 0.0
    %3049 = vadd.xlane.f32.xlu0 %v3048
    %v3050 = vpop.xlane.xlu0 %3049
    %v3051 = vsel %vm55, %v2621, 0.0
    %3052 = vadd.xlane.f32.xlu0 %v3051
    %v3053 = vpop.xlane.xlu0 %3052
    %v3054 = vsel %vm55, %v2622, 0.0
    %3055 = vadd.xlane.f32.xlu0 %v3054
    %v3056 = vpop.xlane.xlu0 %3055
    %v3057 = vsel %vm55, %v2623, 0.0
    %3058 = vadd.xlane.f32.xlu0 %v3057
    %v3059 = vpop.xlane.xlu0 %3058
    %v3060 = vsel %vm55, %v2624, 0.0
    %3061 = vadd.xlane.f32.xlu0 %v3060
    %v3062 = vpop.xlane.xlu0 %3061
    %v3063 = vsel %vm55, %v2625, 0.0
    %3064 = vadd.xlane.f32.xlu0 %v3063
    %v3065 = vpop.xlane.xlu0 %3064
    %v3066 = vsel %vm55, %v2626, 0.0
    %3067 = vadd.xlane.f32.xlu0 %v3066
    %v3068 = vpop.xlane.xlu0 %3067
    %v3069 = vsel %vm55, %v2627, 0.0
    %3070 = vadd.xlane.f32.xlu0 %v3069
    %v3071 = vpop.xlane.xlu0 %3070
    %v3072 = vsel %vm55, %v2628, 0.0
    %3073 = vadd.xlane.f32.xlu0 %v3072
    %v3074 = vpop.xlane.xlu0 %3073
    %v3075 = vsel %vm55, %v2629, 0.0
    %3076 = vadd.xlane.f32.xlu0 %v3075
    %v3077 = vpop.xlane.xlu0 %3076
    %v3078 = vsel %vm55, %v2630, 0.0
    %3079 = vadd.xlane.f32.xlu0 %v3078
    %v3080 = vpop.xlane.xlu0 %3079
    %v3081 = vsel %vm55, %v2631, 0.0
    %3082 = vadd.xlane.f32.xlu0 %v3081
    %v3083 = vpop.xlane.xlu0 %3082
    %v3084 = vsel %vm55, %v2632, 0.0
    %3085 = vadd.xlane.f32.xlu0 %v3084
    %v3086 = vpop.xlane.xlu0 %3085
    %v3087 = vsel %vm55, %v2633, 0.0
    %3088 = vadd.xlane.f32.xlu0 %v3087
    %v3089 = vpop.xlane.xlu0 %3088
    %v3090 = vsel %vm55, %v2634, 0.0
    %3091 = vadd.xlane.f32.xlu0 %v3090
    %v3092 = vpop.xlane.xlu0 %3091
    %v3093 = vsel %vm55, %v2635, 0.0
    %3094 = vadd.xlane.f32.xlu0 %v3093
    %v3095 = vpop.xlane.xlu0 %3094
    %v3096 = vsel %vm55, %v2636, 0.0
    %3097 = vadd.xlane.f32.xlu0 %v3096
    %v3098 = vpop.xlane.xlu0 %3097
    %v3099 = vsel %vm55, %v2637, 0.0
    %3100 = vadd.xlane.f32.xlu0 %v3099
    %v3101 = vpop.xlane.xlu0 %3100
    %v3102 = vsel %vm55, %v2638, 0.0
    %3103 = vadd.xlane.f32.xlu0 %v3102
    %v3104 = vpop.xlane.xlu0 %3103
    %v3105 = vsel %vm55, %v2639, 0.0
    %3106 = vadd.xlane.f32.xlu0 %v3105
    %v3107 = vpop.xlane.xlu0 %3106
    %v3108 = vsel %vm55, %v2640, 0.0
    %3109 = vadd.xlane.f32.xlu0 %v3108
    %v3110 = vpop.xlane.xlu0 %3109
    %v3111 = vsel %vm55, %v2641, 0.0
    %3112 = vadd.xlane.f32.xlu0 %v3111
    %v3113 = vpop.xlane.xlu0 %3112
    %v3114 = vsel %vm55, %v2642, 0.0
    %3115 = vadd.xlane.f32.xlu0 %v3114
    %v3116 = vpop.xlane.xlu0 %3115
    %v3117 = vsel %vm55, %v2643, 0.0
    %3118 = vadd.xlane.f32.xlu0 %v3117
    %v3119 = vpop.xlane.xlu0 %3118
    %v3120 = vsel %vm55, %v2644, 0.0
    %3121 = vadd.xlane.f32.xlu0 %v3120
    %v3122 = vpop.xlane.xlu0 %3121
    %v3123 = vsel %vm55, %v2645, 0.0
    %3124 = vadd.xlane.f32.xlu0 %v3123
    %v3125 = vpop.xlane.xlu0 %3124
    %v3126 = vsel %vm55, %v2646, 0.0
    %3127 = vadd.xlane.f32.xlu0 %v3126
    %v3128 = vpop.xlane.xlu0 %3127
    %v3129 = vsel %vm55, %v2647, 0.0
    %3130 = vadd.xlane.f32.xlu0 %v3129
    %v3131 = vpop.xlane.xlu0 %3130
    %v3132 = vsel %vm55, %v2648, 0.0
    %3133 = vadd.xlane.f32.xlu0 %v3132
    %v3134 = vpop.xlane.xlu0 %3133
    %v3135 = vsel %vm55, %v2649, 0.0
    %3136 = vadd.xlane.f32.xlu0 %v3135
    %v3137 = vpop.xlane.xlu0 %3136
    %v3138 = vsel %vm55, %v2650, 0.0
    %3139 = vadd.xlane.f32.xlu0 %v3138
    %v3140 = vpop.xlane.xlu0 %3139
    %v3141 = vsel %vm55, %v2651, 0.0
    %3142 = vadd.xlane.f32.xlu0 %v3141
    %v3143 = vpop.xlane.xlu0 %3142
    %v3144 = vsel %vm55, %v2652, 0.0
    %3145 = vadd.xlane.f32.xlu0 %v3144
    %v3146 = vpop.xlane.xlu0 %3145
    %v3147 = vsel %vm55, %v2653, 0.0
    %3148 = vadd.xlane.f32.xlu0 %v3147
    %v3149 = vpop.xlane.xlu0 %3148
    %v3150 = vsel %vm55, %v2654, 0.0
    %3151 = vadd.xlane.f32.xlu0 %v3150
    %v3152 = vpop.xlane.xlu0 %3151
    %v3153 = vsel %vm55, %v2655, 0.0
    %3154 = vadd.xlane.f32.xlu0 %v3153
    %v3155 = vpop.xlane.xlu0 %3154
    %v3156 = vsel %vm55, %v2656, 0.0
    %3157 = vadd.xlane.f32.xlu0 %v3156
    %v3158 = vpop.xlane.xlu0 %3157
    %v3159 = vsel %vm55, %v2657, 0.0
    %3160 = vadd.xlane.f32.xlu0 %v3159
    %v3161 = vpop.xlane.xlu0 %3160
    %v3162 = vsel %vm55, %v2658, 0.0
    %3163 = vadd.xlane.f32.xlu0 %v3162
    %v3164 = vpop.xlane.xlu0 %3163
    %v3165 = vsel %vm55, %v2659, 0.0
    %3166 = vadd.xlane.f32.xlu0 %v3165
    %v3167 = vpop.xlane.xlu0 %3166
    %v3168 = vsel %vm55, %v2660, 0.0
    %3169 = vadd.xlane.f32.xlu0 %v3168
    %v3170 = vpop.xlane.xlu0 %3169
    %v3171 = vsel %vm55, %v2661, 0.0
    %3172 = vadd.xlane.f32.xlu0 %v3171
    %v3173 = vpop.xlane.xlu0 %3172
    %v3174 = vsel %vm55, %v2662, 0.0
    %3175 = vadd.xlane.f32.xlu0 %v3174
    %v3176 = vpop.xlane.xlu0 %3175
    %v3177 = vsel %vm55, %v2663, 0.0
    %3178 = vadd.xlane.f32.xlu0 %v3177
    %v3179 = vpop.xlane.xlu0 %3178
    %v3180 = vsel %vm55, %v2664, 0.0
    %3181 = vadd.xlane.f32.xlu0 %v3180
    %v3182 = vpop.xlane.xlu0 %3181
    %v3183 = vsel %vm55, %v2665, 0.0
    %3184 = vadd.xlane.f32.xlu0 %v3183
    %v3185 = vpop.xlane.xlu0 %3184
    %v3186 = vsel %vm55, %v2666, 0.0
    %3187 = vadd.xlane.f32.xlu0 %v3186
    %v3188 = vpop.xlane.xlu0 %3187
    %v3189 = vsel %vm55, %v2667, 0.0
    %3190 = vadd.xlane.f32.xlu0 %v3189
    %v3191 = vpop.xlane.xlu0 %3190
    %v3192 = vsel %vm55, %v2668, 0.0
    %3193 = vadd.xlane.f32.xlu0 %v3192
    %v3194 = vpop.xlane.xlu0 %3193
    %v3195 = vsel %vm55, %v2669, 0.0
    %3196 = vadd.xlane.f32.xlu0 %v3195
    %v3197 = vpop.xlane.xlu0 %3196
    %v3198 = vsel %vm55, %v2670, 0.0
    %3199 = vadd.xlane.f32.xlu0 %v3198
    %v3200 = vpop.xlane.xlu0 %3199
    %v3201 = vsel %vm55, %v2671, 0.0
    %3202 = vadd.xlane.f32.xlu0 %v3201
    %v3203 = vpop.xlane.xlu0 %3202
    %v3204 = vsel %vm55, %v2672, 0.0
    %3205 = vadd.xlane.f32.xlu0 %v3204
    %v3206 = vpop.xlane.xlu0 %3205
    %v3207 = vsel %vm55, %v2673, 0.0
    %3208 = vadd.xlane.f32.xlu0 %v3207
    %v3209 = vpop.xlane.xlu0 %3208
    %v3210 = vsel %vm55, %v2674, 0.0
    %3211 = vadd.xlane.f32.xlu0 %v3210
    %v3212 = vpop.xlane.xlu0 %3211
    %v3213 = vsel %vm55, %v2675, 0.0
    %3214 = vadd.xlane.f32.xlu0 %v3213
    %v3215 = vpop.xlane.xlu0 %3214
    %v3216 = vsel %vm55, %v2676, 0.0
    %3217 = vadd.xlane.f32.xlu0 %v3216
    %v3218 = vpop.xlane.xlu0 %3217
    %v3219 = vsel %vm55, %v2677, 0.0
    %3220 = vadd.xlane.f32.xlu0 %v3219
    %v3221 = vpop.xlane.xlu0 %3220
    %v3222 = vsel %vm55, %v2678, 0.0
    %3223 = vadd.xlane.f32.xlu0 %v3222
    %v3224 = vpop.xlane.xlu0 %3223
    %v3225 = vsel %vm55, %v2679, 0.0
    %3226 = vadd.xlane.f32.xlu0 %v3225
    %v3227 = vpop.xlane.xlu0 %3226
    %v3228 = vsel %vm55, %v2680, 0.0
    %3229 = vadd.xlane.f32.xlu0 %v3228
    %v3230 = vpop.xlane.xlu0 %3229
    %v3231 = vsel %vm55, %v2681, 0.0
    %3232 = vadd.xlane.f32.xlu0 %v3231
    %v3233 = vpop.xlane.xlu0 %3232
    %v3234 = vsel %vm55, %v2682, 0.0
    %3235 = vadd.xlane.f32.xlu0 %v3234
    %v3236 = vpop.xlane.xlu0 %3235
    %v3237 = vsel %vm55, %v2683, 0.0
    %3238 = vadd.xlane.f32.xlu0 %v3237
    %v3239 = vpop.xlane.xlu0 %3238
    %v3240 = vsel %vm55, %v2684, 0.0
    %3241 = vadd.xlane.f32.xlu0 %v3240
    %v3242 = vpop.xlane.xlu0 %3241
    %v3243 = vsel %vm55, %v2685, 0.0
    %3244 = vadd.xlane.f32.xlu0 %v3243
    %v3245 = vpop.xlane.xlu0 %3244
    %v3246 = vsel %vm55, %v2686, 0.0
    %3247 = vadd.xlane.f32.xlu0 %v3246
    %v3248 = vpop.xlane.xlu0 %3247
    %v3249 = vsel %vm55, %v2687, 0.0
    %3250 = vadd.xlane.f32.xlu0 %v3249
    %v3251 = vpop.xlane.xlu0 %3250
    %v3252 = vsel %vm55, %v2688, 0.0
    %3253 = vadd.xlane.f32.xlu0 %v3252
    %v3254 = vpop.xlane.xlu0 %3253
    %v3255 = vsel %vm55, %v2689, 0.0
    %3256 = vadd.xlane.f32.xlu0 %v3255
    %v3257 = vpop.xlane.xlu0 %3256
    %v3258 = vsel %vm55, %v2690, 0.0
    %3259 = vadd.xlane.f32.xlu0 %v3258
    %v3260 = vpop.xlane.xlu0 %3259
    %v3261 = vsel %vm55, %v2691, 0.0
    %3262 = vadd.xlane.f32.xlu0 %v3261
    %v3263 = vpop.xlane.xlu0 %3262
    %v3264 = vsel %vm55, %v2692, 0.0
    %3265 = vadd.xlane.f32.xlu0 %v3264
    %v3266 = vpop.xlane.xlu0 %3265
    %v3267 = vsel %vm55, %v2693, 0.0
    %3268 = vadd.xlane.f32.xlu0 %v3267
    %v3269 = vpop.xlane.xlu0 %3268
    %v3270 = vsel %vm55, %v2694, 0.0
    %3271 = vadd.xlane.f32.xlu0 %v3270
    %v3272 = vpop.xlane.xlu0 %3271
    %v3273 = vsel %vm55, %v2695, 0.0
    %3274 = vadd.xlane.f32.xlu0 %v3273
    %v3275 = vpop.xlane.xlu0 %3274
    %v3276 = vsel %vm55, %v2696, 0.0
    %3277 = vadd.xlane.f32.xlu0 %v3276
    %v3278 = vpop.xlane.xlu0 %3277
    %v3279 = vsel %vm55, %v2697, 0.0
    %3280 = vadd.xlane.f32.xlu0 %v3279
    %v3281 = vpop.xlane.xlu0 %3280
    %v3282 = vsel %vm55, %v2698, 0.0
    %3283 = vadd.xlane.f32.xlu0 %v3282
    %v3284 = vpop.xlane.xlu0 %3283
    %v3285 = vsel %vm55, %v2699, 0.0
    %3286 = vadd.xlane.f32.xlu0 %v3285
    %v3287 = vpop.xlane.xlu0 %3286
    %v3288 = vsel %vm55, %v2700, 0.0
    %3289 = vadd.xlane.f32.xlu0 %v3288
    %v3290 = vpop.xlane.xlu0 %3289
    %v3291 = vsel %vm55, %v2701, 0.0
    %3292 = vadd.xlane.f32.xlu0 %v3291
    %v3293 = vpop.xlane.xlu0 %3292
    %v3294 = vsel %vm55, %v2702, 0.0
    %3295 = vadd.xlane.f32.xlu0 %v3294
    %v3296 = vpop.xlane.xlu0 %3295
    %v3297 = vsel %vm55, %v2703, 0.0
    %3298 = vadd.xlane.f32.xlu0 %v3297
    %v3299 = vpop.xlane.xlu0 %3298
    %v3300 = vsel %vm55, %v2704, 0.0
    %3301 = vadd.xlane.f32.xlu0 %v3300
    %v3302 = vpop.xlane.xlu0 %3301
    %v3303 = vsel %vm55, %v2705, 0.0
    %3304 = vadd.xlane.f32.xlu0 %v3303
    %v3305 = vpop.xlane.xlu0 %3304
    %v3306 = vsel %vm55, %v2706, 0.0
    %3307 = vadd.xlane.f32.xlu0 %v3306
    %v3308 = vpop.xlane.xlu0 %3307
    %v3309 = vsel %vm55, %v2707, 0.0
    %3310 = vadd.xlane.f32.xlu0 %v3309
    %v3311 = vpop.xlane.xlu0 %3310
    %v3312 = vsel %vm55, %v2708, 0.0
    %3313 = vadd.xlane.f32.xlu0 %v3312
    %v3314 = vpop.xlane.xlu0 %3313
    %v3315 = vsel %vm55, %v2709, 0.0
    %3316 = vadd.xlane.f32.xlu0 %v3315
    %v3317 = vpop.xlane.xlu0 %3316
    %v3318 = vsel %vm55, %v2710, 0.0
    %3319 = vadd.xlane.f32.xlu0 %v3318
    %v3320 = vpop.xlane.xlu0 %3319
    %v3321 = vsel %vm55, %v2711, 0.0
    %3322 = vadd.xlane.f32.xlu0 %v3321
    %v3323 = vpop.xlane.xlu0 %3322
    %v3324 = vsel %vm55, %v2712, 0.0
    %3325 = vadd.xlane.f32.xlu0 %v3324
    %v3326 = vpop.xlane.xlu0 %3325
    %v3327 = vsel %vm55, %v2713, 0.0
    %3328 = vadd.xlane.f32.xlu0 %v3327
    %v3329 = vpop.xlane.xlu0 %3328
    %v3330 = vsel %vm55, %v2714, 0.0
    %3331 = vadd.xlane.f32.xlu0 %v3330
    %v3332 = vpop.xlane.xlu0 %3331
    %v3333 = vsel %vm55, %v2715, 0.0
    %3334 = vadd.xlane.f32.xlu0 %v3333
    %v3335 = vpop.xlane.xlu0 %3334
    %v3336 = vsel %vm55, %v2716, 0.0
    %3337 = vadd.xlane.f32.xlu0 %v3336
    %v3338 = vpop.xlane.xlu0 %3337
    %v3339 = vsel %vm55, %v2717, 0.0
    %3340 = vadd.xlane.f32.xlu0 %v3339
    %v3341 = vpop.xlane.xlu0 %3340
    %v3342 = vsel %vm55, %v2718, 0.0
    %3343 = vadd.xlane.f32.xlu0 %v3342
    %v3344 = vpop.xlane.xlu0 %3343
    %v3345 = vsel %vm55, %v2719, 0.0
    %3346 = vadd.xlane.f32.xlu0 %v3345
    %v3347 = vpop.xlane.xlu0 %3346
    %v3348 = vsel %vm55, %v2720, 0.0
    %3349 = vadd.xlane.f32.xlu0 %v3348
    %v3350 = vpop.xlane.xlu0 %3349
    %v3351 = vsel %vm55, %v2721, 0.0
    %3352 = vadd.xlane.f32.xlu0 %v3351
    %v3353 = vpop.xlane.xlu0 %3352
    %v3354 = vsel %vm55, %v2722, 0.0
    %3355 = vadd.xlane.f32.xlu0 %v3354
    %v3356 = vpop.xlane.xlu0 %3355
    %v3357 = vsel %vm55, %v2723, 0.0
    %3358 = vadd.xlane.f32.xlu0 %v3357
    %v3359 = vpop.xlane.xlu0 %3358
    %v3360 = vsel %vm55, %v2724, 0.0
    %3361 = vadd.xlane.f32.xlu0 %v3360
    %v3362 = vpop.xlane.xlu0 %3361
    %v3363 = vsel %vm55, %v2725, 0.0
    %3364 = vadd.xlane.f32.xlu0 %v3363
    %v3365 = vpop.xlane.xlu0 %3364
    %v3366 = vsel %vm55, %v2726, 0.0
    %3367 = vadd.xlane.f32.xlu0 %v3366
    %v3368 = vpop.xlane.xlu0 %3367
    %v3369 = vsel %vm55, %v2727, 0.0
    %3370 = vadd.xlane.f32.xlu0 %v3369
    %v3371 = vpop.xlane.xlu0 %3370
    %v3372 = vsel %vm55, %v2728, 0.0
    %3373 = vadd.xlane.f32.xlu0 %v3372
    %v3374 = vpop.xlane.xlu0 %3373
    %v3375 = vsel %vm55, %v2729, 0.0
    %3376 = vadd.xlane.f32.xlu0 %v3375
    %v3377 = vpop.xlane.xlu0 %3376
    %v3378 = vsel %vm55, %v2730, 0.0
    %3379 = vadd.xlane.f32.xlu0 %v3378
    %v3380 = vpop.xlane.xlu0 %3379
    %v3381 = vsel %vm55, %v2731, 0.0
    %3382 = vadd.xlane.f32.xlu0 %v3381
    %v3383 = vpop.xlane.xlu0 %3382
    %v3384 = vsel %vm55, %v2732, 0.0
    %3385 = vadd.xlane.f32.xlu0 %v3384
    %v3386 = vpop.xlane.xlu0 %3385
    %v3387 = vsel %vm55, %v2733, 0.0
    %3388 = vadd.xlane.f32.xlu0 %v3387
    %v3389 = vpop.xlane.xlu0 %3388
    %v3390 = vsel %vm55, %v2734, 0.0
    %3391 = vadd.xlane.f32.xlu0 %v3390
    %v3392 = vpop.xlane.xlu0 %3391
    %v3393 = vsel %vm55, %v2735, 0.0
    %3394 = vadd.xlane.f32.xlu0 %v3393
    %v3395 = vpop.xlane.xlu0 %3394
    %v3396 = vsel %vm55, %v2736, 0.0
    %3397 = vadd.xlane.f32.xlu0 %v3396
    %v3398 = vpop.xlane.xlu0 %3397
    %v3399 = vsel %vm55, %v2737, 0.0
    %3400 = vadd.xlane.f32.xlu0 %v3399
    %v3401 = vpop.xlane.xlu0 %3400
    %v3402 = vsel %vm55, %v2738, 0.0
    %3403 = vadd.xlane.f32.xlu0 %v3402
    %v3404 = vpop.xlane.xlu0 %3403
    %v3405 = vsel %vm55, %v2739, 0.0
    %3406 = vadd.xlane.f32.xlu0 %v3405
    %v3407 = vpop.xlane.xlu0 %3406
    %v3408 = vsel %vm55, %v2740, 0.0
    %3409 = vadd.xlane.f32.xlu0 %v3408
    %v3410 = vpop.xlane.xlu0 %3409
    %v3411 = vsel %vm55, %v2741, 0.0
    %3412 = vadd.xlane.f32.xlu0 %v3411
    %v3413 = vpop.xlane.xlu0 %3412
    %v3414 = vsel %vm55, %v2742, 0.0
    %3415 = vadd.xlane.f32.xlu0 %v3414
    %v3416 = vpop.xlane.xlu0 %3415
    %v3417 = vsel %vm55, %v2743, 0.0
    %3418 = vadd.xlane.f32.xlu0 %v3417
    %v3419 = vpop.xlane.xlu0 %3418
    %v3420 = vsel %vm55, %v2744, 0.0
    %3421 = vadd.xlane.f32.xlu0 %v3420
    %v3422 = vpop.xlane.xlu0 %3421
    %v3423 = vsel %vm55, %v2745, 0.0
    %3424 = vadd.xlane.f32.xlu0 %v3423
    %v3425 = vpop.xlane.xlu0 %3424
    %v3426 = vsel %vm55, %v2746, 0.0
    %3427 = vadd.xlane.f32.xlu0 %v3426
    %v3428 = vpop.xlane.xlu0 %3427
    %v3429 = vsel %vm55, %v2747, 0.0
    %3430 = vadd.xlane.f32.xlu0 %v3429
    %v3431 = vpop.xlane.xlu0 %3430
    %v3432 = vsel %vm55, %v2748, 0.0
    %3433 = vadd.xlane.f32.xlu0 %v3432
    %v3434 = vpop.xlane.xlu0 %3433
    %v3435 = vsel %vm55, %v2749, 0.0
    %3436 = vadd.xlane.f32.xlu0 %v3435
    %v3437 = vpop.xlane.xlu0 %3436
    %v3438 = vsel %vm55, %v2750, 0.0
    %3439 = vadd.xlane.f32.xlu0 %v3438
    %v3440 = vpop.xlane.xlu0 %3439
    %v3441 = vsel %vm55, %v2751, 0.0
    %3442 = vadd.xlane.f32.xlu0 %v3441
    %v3443 = vpop.xlane.xlu0 %3442
    %v3444 = vsel %vm55, %v2752, 0.0
    %3445 = vadd.xlane.f32.xlu0 %v3444
    %v3446 = vpop.xlane.xlu0 %3445
    %v3447 = vsel %vm55, %v2753, 0.0
    %3448 = vadd.xlane.f32.xlu0 %v3447
    %v3449 = vpop.xlane.xlu0 %3448
    %v3450 = vsel %vm55, %v2754, 0.0
    %3451 = vadd.xlane.f32.xlu0 %v3450
    %v3452 = vpop.xlane.xlu0 %3451
    %v3453 = vsel %vm55, %v2755, 0.0
    %3454 = vadd.xlane.f32.xlu0 %v3453
    %v3455 = vpop.xlane.xlu0 %3454
    %v3456 = vsel %vm55, %v2756, 0.0
    %3457 = vadd.xlane.f32.xlu0 %v3456
    %v3458 = vpop.xlane.xlu0 %3457
    %v3459 = vsel %vm55, %v2757, 0.0
    %3460 = vadd.xlane.f32.xlu0 %v3459
    %v3461 = vpop.xlane.xlu0 %3460
    %v3462 = vsel %vm55, %v2758, 0.0
    %3463 = vadd.xlane.f32.xlu0 %v3462
    %v3464 = vpop.xlane.xlu0 %3463
    %v3465 = vsel %vm55, %v2759, 0.0
    %3466 = vadd.xlane.f32.xlu0 %v3465
    %v3467 = vpop.xlane.xlu0 %3466
    %v3468 = vsel %vm55, %v2760, 0.0
    %3469 = vadd.xlane.f32.xlu0 %v3468
    %v3470 = vpop.xlane.xlu0 %3469
    %v3471 = vsel %vm55, %v2761, 0.0
    %3472 = vadd.xlane.f32.xlu0 %v3471
    %v3473 = vpop.xlane.xlu0 %3472
    %v3474 = vsel %vm55, %v2762, 0.0
    %3475 = vadd.xlane.f32.xlu0 %v3474
    %v3476 = vpop.xlane.xlu0 %3475
    %v3477 = vsel %vm55, %v2763, 0.0
    %3478 = vadd.xlane.f32.xlu0 %v3477
    %v3479 = vpop.xlane.xlu0 %3478
    %v3480 = vsel %vm55, %v2764, 0.0
    %3481 = vadd.xlane.f32.xlu0 %v3480
    %v3482 = vpop.xlane.xlu0 %3481
    %v3483 = vsel %vm55, %v2765, 0.0
    %3484 = vadd.xlane.f32.xlu0 %v3483
    %v3485 = vpop.xlane.xlu0 %3484
    %v3486 = vsel %vm55, %v2766, 0.0
    %3487 = vadd.xlane.f32.xlu0 %v3486
    %v3488 = vpop.xlane.xlu0 %3487
    %v3489 = vsel %vm55, %v2767, 0.0
    %3490 = vadd.xlane.f32.xlu0 %v3489
    %v3491 = vpop.xlane.xlu0 %3490
    %v3492 = vsel %vm55, %v2768, 0.0
    %3493 = vadd.xlane.f32.xlu0 %v3492
    %v3494 = vpop.xlane.xlu0 %3493
    %v3495 = vsel %vm55, %v2769, 0.0
    %3496 = vadd.xlane.f32.xlu0 %v3495
    %v3497 = vpop.xlane.xlu0 %3496
    %v3498 = vsel %vm55, %v2770, 0.0
    %3499 = vadd.xlane.f32.xlu0 %v3498
    %v3500 = vpop.xlane.xlu0 %3499
    %v3501 = vsel %vm55, %v2771, 0.0
    %3502 = vadd.xlane.f32.xlu0 %v3501
    %v3503 = vpop.xlane.xlu0 %3502
    %v3504 = vsel %vm55, %v2772, 0.0
    %3505 = vadd.xlane.f32.xlu0 %v3504
    %v3506 = vpop.xlane.xlu0 %3505
    %v3507 = vsel %vm55, %v2773, 0.0
    %3508 = vadd.xlane.f32.xlu0 %v3507
    %v3509 = vpop.xlane.xlu0 %3508
    %v3510 = vsel %vm55, %v2774, 0.0
    %3511 = vadd.xlane.f32.xlu0 %v3510
    %v3512 = vpop.xlane.xlu0 %3511
    %v3513 = vsel %vm55, %v2775, 0.0
    %3514 = vadd.xlane.f32.xlu0 %v3513
    %v3515 = vpop.xlane.xlu0 %3514
    %v3516 = vsel %vm55, %v2776, 0.0
    %3517 = vadd.xlane.f32.xlu0 %v3516
    %v3518 = vpop.xlane.xlu0 %3517
    %v3519 = vsel %vm55, %v2777, 0.0
    %3520 = vadd.xlane.f32.xlu0 %v3519
    %v3521 = vpop.xlane.xlu0 %3520
    %v3522 = vsel %vm55, %v2778, 0.0
    %3523 = vadd.xlane.f32.xlu0 %v3522
    %v3524 = vpop.xlane.xlu0 %3523
    %v3525 = vsel %vm55, %v2779, 0.0
    %3526 = vadd.xlane.f32.xlu0 %v3525
    %v3527 = vpop.xlane.xlu0 %3526
    %v3528 = vsel %vm55, %v2780, 0.0
    %3529 = vadd.xlane.f32.xlu0 %v3528
    %v3530 = vpop.xlane.xlu0 %3529
    %v3531 = vsel %vm55, %v2781, 0.0
    %3532 = vadd.xlane.f32.xlu0 %v3531
    %v3533 = vpop.xlane.xlu0 %3532
    %v3534 = vsel %vm55, %v2782, 0.0
    %3535 = vadd.xlane.f32.xlu0 %v3534
    %v3536 = vpop.xlane.xlu0 %3535
    %v3537 = vsel %vm55, %v2783, 0.0
    %3538 = vadd.xlane.f32.xlu0 %v3537
    %v3539 = vpop.xlane.xlu0 %3538
    %v3540 = vsel %vm55, %v2784, 0.0
    %3541 = vadd.xlane.f32.xlu0 %v3540
    %v3542 = vpop.xlane.xlu0 %3541
    %v3543 = vsel %vm55, %v2785, 0.0
    %3544 = vadd.xlane.f32.xlu0 %v3543
    %v3545 = vpop.xlane.xlu0 %3544
    %v3546 = vsel %vm55, %v2786, 0.0
    %3547 = vadd.xlane.f32.xlu0 %v3546
    %v3548 = vpop.xlane.xlu0 %3547
    %v3549 = vsel %vm55, %v2787, 0.0
    %3550 = vadd.xlane.f32.xlu0 %v3549
    %v3551 = vpop.xlane.xlu0 %3550
    %v3552 = vsel %vm55, %v2788, 0.0
    %3553 = vadd.xlane.f32.xlu0 %v3552
    %v3554 = vpop.xlane.xlu0 %3553
    %v3555 = vsel %vm55, %v2789, 0.0
    %3556 = vadd.xlane.f32.xlu0 %v3555
    %v3557 = vpop.xlane.xlu0 %3556
    %v3814 = vlaneseq
    %v3815 = vand.u32 %v3814, 127
    %v3816 = vperm.slane %v2792, %v3815
    %v3817 = vadd.s32 %v3815, 4294967288
    %v3818 = vperm.slane %v2795, %v3817
    %vm3819 = vcmask 130112
    %v3820 = vsel %vm3819, %v3818, %v3816
    %v3821 = vperm.slane %v2798, %v3815
    %v3822 = vperm.slane %v2801, %v3817
    %v3823 = vsel %vm3819, %v3822, %v3821
    %v3824 = vperm.slane %v2804, %v3815
    %v3825 = vperm.slane %v2807, %v3817
    %v3826 = vsel %vm3819, %v3825, %v3824
    %v3827 = vperm.slane %v2810, %v3815
    %v3828 = vperm.slane %v2813, %v3817
    %v3829 = vsel %vm3819, %v3828, %v3827
    %v3830 = vperm.slane %v2816, %v3815
    %v3831 = vperm.slane %v2819, %v3817
    %v3832 = vsel %vm3819, %v3831, %v3830
    %v3833 = vperm.slane %v2822, %v3815
    %v3834 = vperm.slane %v2825, %v3817
    %v3835 = vsel %vm3819, %v3834, %v3833
    %v3836 = vperm.slane %v2828, %v3815
    %v3837 = vperm.slane %v2831, %v3817
    %v3838 = vsel %vm3819, %v3837, %v3836
    %v3839 = vperm.slane %v2834, %v3815
    %v3840 = vperm.slane %v2837, %v3817
    %v3841 = vsel %vm3819, %v3840, %v3839
    %v3842 = vperm.slane %v2840, %v3815
    %v3843 = vperm.slane %v2843, %v3817
    %v3844 = vsel %vm3819, %v3843, %v3842
    %v3845 = vperm.slane %v2846, %v3815
    %v3846 = vperm.slane %v2849, %v3817
    %v3847 = vsel %vm3819, %v3846, %v3845
    %v3848 = vperm.slane %v2852, %v3815
    %v3849 = vperm.slane %v2855, %v3817
    %v3850 = vsel %vm3819, %v3849, %v3848
    %v3851 = vperm.slane %v2858, %v3815
    %v3852 = vperm.slane %v2861, %v3817
    %v3853 = vsel %vm3819, %v3852, %v3851
    %v3854 = vperm.slane %v2864, %v3815
    %v3855 = vperm.slane %v2867, %v3817
    %v3856 = vsel %vm3819, %v3855, %v3854
    %v3857 = vperm.slane %v2870, %v3815
    %v3858 = vperm.slane %v2873, %v3817
    %v3859 = vsel %vm3819, %v3858, %v3857
    %v3860 = vperm.slane %v2876, %v3815
    %v3861 = vperm.slane %v2879, %v3817
    %v3862 = vsel %vm3819, %v3861, %v3860
    %v3863 = vperm.slane %v2882, %v3815
    %v3864 = vperm.slane %v2885, %v3817
    %v3865 = vsel %vm3819, %v3864, %v3863
    %v3866 = vperm.slane %v2888, %v3815
    %v3867 = vperm.slane %v2891, %v3817
    %v3868 = vsel %vm3819, %v3867, %v3866
    %v3869 = vperm.slane %v2894, %v3815
    %v3870 = vperm.slane %v2897, %v3817
    %v3871 = vsel %vm3819, %v3870, %v3869
    %v3872 = vperm.slane %v2900, %v3815
    %v3873 = vperm.slane %v2903, %v3817
    %v3874 = vsel %vm3819, %v3873, %v3872
    %v3875 = vperm.slane %v2906, %v3815
    %v3876 = vperm.slane %v2909, %v3817
    %v3877 = vsel %vm3819, %v3876, %v3875
    %v3878 = vperm.slane %v2912, %v3815
    %v3879 = vperm.slane %v2915, %v3817
    %v3880 = vsel %vm3819, %v3879, %v3878
    %v3881 = vperm.slane %v2918, %v3815
    %v3882 = vperm.slane %v2921, %v3817
    %v3883 = vsel %vm3819, %v3882, %v3881
    %v3884 = vperm.slane %v2924, %v3815
    %v3885 = vperm.slane %v2927, %v3817
    %v3886 = vsel %vm3819, %v3885, %v3884
    %v3887 = vperm.slane %v2930, %v3815
    %v3888 = vperm.slane %v2933, %v3817
    %v3889 = vsel %vm3819, %v3888, %v3887
    %v3890 = vperm.slane %v2936, %v3815
    %v3891 = vperm.slane %v2939, %v3817
    %v3892 = vsel %vm3819, %v3891, %v3890
    %v3893 = vperm.slane %v2942, %v3815
    %v3894 = vperm.slane %v2945, %v3817
    %v3895 = vsel %vm3819, %v3894, %v3893
    %v3896 = vperm.slane %v2948, %v3815
    %v3897 = vperm.slane %v2951, %v3817
    %v3898 = vsel %vm3819, %v3897, %v3896
    %v3899 = vperm.slane %v2954, %v3815
    %v3900 = vperm.slane %v2957, %v3817
    %v3901 = vsel %vm3819, %v3900, %v3899
    %v3902 = vperm.slane %v2960, %v3815
    %v3903 = vperm.slane %v2963, %v3817
    %v3904 = vsel %vm3819, %v3903, %v3902
    %v3905 = vperm.slane %v2966, %v3815
    %v3906 = vperm.slane %v2969, %v3817
    %v3907 = vsel %vm3819, %v3906, %v3905
    %v3908 = vperm.slane %v2972, %v3815
    %v3909 = vperm.slane %v2975, %v3817
    %v3910 = vsel %vm3819, %v3909, %v3908
    %v3911 = vperm.slane %v2978, %v3815
    %v3912 = vperm.slane %v2981, %v3817
    %v3913 = vsel %vm3819, %v3912, %v3911
    %v3914 = vperm.slane %v2984, %v3815
    %v3915 = vperm.slane %v2987, %v3817
    %v3916 = vsel %vm3819, %v3915, %v3914
    %v3917 = vperm.slane %v2990, %v3815
    %v3918 = vperm.slane %v2993, %v3817
    %v3919 = vsel %vm3819, %v3918, %v3917
    %v3920 = vperm.slane %v2996, %v3815
    %v3921 = vperm.slane %v2999, %v3817
    %v3922 = vsel %vm3819, %v3921, %v3920
    %v3923 = vperm.slane %v3002, %v3815
    %v3924 = vperm.slane %v3005, %v3817
    %v3925 = vsel %vm3819, %v3924, %v3923
    %v3926 = vperm.slane %v3008, %v3815
    %v3927 = vperm.slane %v3011, %v3817
    %v3928 = vsel %vm3819, %v3927, %v3926
    %v3929 = vperm.slane %v3014, %v3815
    %v3930 = vperm.slane %v3017, %v3817
    %v3931 = vsel %vm3819, %v3930, %v3929
    %v3932 = vperm.slane %v3020, %v3815
    %v3933 = vperm.slane %v3023, %v3817
    %v3934 = vsel %vm3819, %v3933, %v3932
    %v3935 = vperm.slane %v3026, %v3815
    %v3936 = vperm.slane %v3029, %v3817
    %v3937 = vsel %vm3819, %v3936, %v3935
    %v3938 = vperm.slane %v3032, %v3815
    %v3939 = vperm.slane %v3035, %v3817
    %v3940 = vsel %vm3819, %v3939, %v3938
    %v3941 = vperm.slane %v3038, %v3815
    %v3942 = vperm.slane %v3041, %v3817
    %v3943 = vsel %vm3819, %v3942, %v3941
    %v3944 = vperm.slane %v3044, %v3815
    %v3945 = vperm.slane %v3047, %v3817
    %v3946 = vsel %vm3819, %v3945, %v3944
    %v3947 = vperm.slane %v3050, %v3815
    %v3948 = vperm.slane %v3053, %v3817
    %v3949 = vsel %vm3819, %v3948, %v3947
    %v3950 = vperm.slane %v3056, %v3815
    %v3951 = vperm.slane %v3059, %v3817
    %v3952 = vsel %vm3819, %v3951, %v3950
    %v3953 = vperm.slane %v3062, %v3815
    %v3954 = vperm.slane %v3065, %v3817
    %v3955 = vsel %vm3819, %v3954, %v3953
    %v3956 = vperm.slane %v3068, %v3815
    %v3957 = vperm.slane %v3071, %v3817
    %v3958 = vsel %vm3819, %v3957, %v3956
    %v3959 = vperm.slane %v3074, %v3815
    %v3960 = vperm.slane %v3077, %v3817
    %v3961 = vsel %vm3819, %v3960, %v3959
    %v3962 = vperm.slane %v3080, %v3815
    %v3963 = vperm.slane %v3083, %v3817
    %v3964 = vsel %vm3819, %v3963, %v3962
    %v3965 = vperm.slane %v3086, %v3815
    %v3966 = vperm.slane %v3089, %v3817
    %v3967 = vsel %vm3819, %v3966, %v3965
    %v3968 = vperm.slane %v3092, %v3815
    %v3969 = vperm.slane %v3095, %v3817
    %v3970 = vsel %vm3819, %v3969, %v3968
    %v3971 = vperm.slane %v3098, %v3815
    %v3972 = vperm.slane %v3101, %v3817
    %v3973 = vsel %vm3819, %v3972, %v3971
    %v3974 = vperm.slane %v3104, %v3815
    %v3975 = vperm.slane %v3107, %v3817
    %v3976 = vsel %vm3819, %v3975, %v3974
    %v3977 = vperm.slane %v3110, %v3815
    %v3978 = vperm.slane %v3113, %v3817
    %v3979 = vsel %vm3819, %v3978, %v3977
    %v3980 = vperm.slane %v3116, %v3815
    %v3981 = vperm.slane %v3119, %v3817
    %v3982 = vsel %vm3819, %v3981, %v3980
    %v3983 = vperm.slane %v3122, %v3815
    %v3984 = vperm.slane %v3125, %v3817
    %v3985 = vsel %vm3819, %v3984, %v3983
    %v3986 = vperm.slane %v3128, %v3815
    %v3987 = vperm.slane %v3131, %v3817
    %v3988 = vsel %vm3819, %v3987, %v3986
    %v3989 = vperm.slane %v3134, %v3815
    %v3990 = vperm.slane %v3137, %v3817
    %v3991 = vsel %vm3819, %v3990, %v3989
    %v3992 = vperm.slane %v3140, %v3815
    %v3993 = vperm.slane %v3143, %v3817
    %v3994 = vsel %vm3819, %v3993, %v3992
    %v3995 = vperm.slane %v3146, %v3815
    %v3996 = vperm.slane %v3149, %v3817
    %v3997 = vsel %vm3819, %v3996, %v3995
    %v3998 = vperm.slane %v3152, %v3815
    %v3999 = vperm.slane %v3155, %v3817
    %v4000 = vsel %vm3819, %v3999, %v3998
    %v4001 = vperm.slane %v3158, %v3815
    %v4002 = vperm.slane %v3161, %v3817
    %v4003 = vsel %vm3819, %v4002, %v4001
    %v4004 = vperm.slane %v3164, %v3815
    %v4005 = vperm.slane %v3167, %v3817
    %v4006 = vsel %vm3819, %v4005, %v4004
    %v4007 = vperm.slane %v3170, %v3815
    %v4008 = vperm.slane %v3173, %v3817
    %v4009 = vsel %vm3819, %v4008, %v4007
    %v4010 = vperm.slane %v3176, %v3815
    %v4011 = vperm.slane %v3179, %v3817
    %v4012 = vsel %vm3819, %v4011, %v4010
    %v4013 = vperm.slane %v3182, %v3815
    %v4014 = vperm.slane %v3185, %v3817
    %v4015 = vsel %vm3819, %v4014, %v4013
    %v4016 = vperm.slane %v3188, %v3815
    %v4017 = vperm.slane %v3191, %v3817
    %v4018 = vsel %vm3819, %v4017, %v4016
    %v4019 = vperm.slane %v3194, %v3815
    %v4020 = vperm.slane %v3197, %v3817
    %v4021 = vsel %vm3819, %v4020, %v4019
    %v4022 = vperm.slane %v3200, %v3815
    %v4023 = vperm.slane %v3203, %v3817
    %v4024 = vsel %vm3819, %v4023, %v4022
    %v4025 = vperm.slane %v3206, %v3815
    %v4026 = vperm.slane %v3209, %v3817
    %v4027 = vsel %vm3819, %v4026, %v4025
    %v4028 = vperm.slane %v3212, %v3815
    %v4029 = vperm.slane %v3215, %v3817
    %v4030 = vsel %vm3819, %v4029, %v4028
    %v4031 = vperm.slane %v3218, %v3815
    %v4032 = vperm.slane %v3221, %v3817
    %v4033 = vsel %vm3819, %v4032, %v4031
    %v4034 = vperm.slane %v3224, %v3815
    %v4035 = vperm.slane %v3227, %v3817
    %v4036 = vsel %vm3819, %v4035, %v4034
    %v4037 = vperm.slane %v3230, %v3815
    %v4038 = vperm.slane %v3233, %v3817
    %v4039 = vsel %vm3819, %v4038, %v4037
    %v4040 = vperm.slane %v3236, %v3815
    %v4041 = vperm.slane %v3239, %v3817
    %v4042 = vsel %vm3819, %v4041, %v4040
    %v4043 = vperm.slane %v3242, %v3815
    %v4044 = vperm.slane %v3245, %v3817
    %v4045 = vsel %vm3819, %v4044, %v4043
    %v4046 = vperm.slane %v3248, %v3815
    %v4047 = vperm.slane %v3251, %v3817
    %v4048 = vsel %vm3819, %v4047, %v4046
    %v4049 = vperm.slane %v3254, %v3815
    %v4050 = vperm.slane %v3257, %v3817
    %v4051 = vsel %vm3819, %v4050, %v4049
    %v4052 = vperm.slane %v3260, %v3815
    %v4053 = vperm.slane %v3263, %v3817
    %v4054 = vsel %vm3819, %v4053, %v4052
    %v4055 = vperm.slane %v3266, %v3815
    %v4056 = vperm.slane %v3269, %v3817
    %v4057 = vsel %vm3819, %v4056, %v4055
    %v4058 = vperm.slane %v3272, %v3815
    %v4059 = vperm.slane %v3275, %v3817
    %v4060 = vsel %vm3819, %v4059, %v4058
    %v4061 = vperm.slane %v3278, %v3815
    %v4062 = vperm.slane %v3281, %v3817
    %v4063 = vsel %vm3819, %v4062, %v4061
    %v4064 = vperm.slane %v3284, %v3815
    %v4065 = vperm.slane %v3287, %v3817
    %v4066 = vsel %vm3819, %v4065, %v4064
    %v4067 = vperm.slane %v3290, %v3815
    %v4068 = vperm.slane %v3293, %v3817
    %v4069 = vsel %vm3819, %v4068, %v4067
    %v4070 = vperm.slane %v3296, %v3815
    %v4071 = vperm.slane %v3299, %v3817
    %v4072 = vsel %vm3819, %v4071, %v4070
    %v4073 = vperm.slane %v3302, %v3815
    %v4074 = vperm.slane %v3305, %v3817
    %v4075 = vsel %vm3819, %v4074, %v4073
    %v4076 = vperm.slane %v3308, %v3815
    %v4077 = vperm.slane %v3311, %v3817
    %v4078 = vsel %vm3819, %v4077, %v4076
    %v4079 = vperm.slane %v3314, %v3815
    %v4080 = vperm.slane %v3317, %v3817
    %v4081 = vsel %vm3819, %v4080, %v4079
    %v4082 = vperm.slane %v3320, %v3815
    %v4083 = vperm.slane %v3323, %v3817
    %v4084 = vsel %vm3819, %v4083, %v4082
    %v4085 = vperm.slane %v3326, %v3815
    %v4086 = vperm.slane %v3329, %v3817
    %v4087 = vsel %vm3819, %v4086, %v4085
    %v4088 = vperm.slane %v3332, %v3815
    %v4089 = vperm.slane %v3335, %v3817
    %v4090 = vsel %vm3819, %v4089, %v4088
    %v4091 = vperm.slane %v3338, %v3815
    %v4092 = vperm.slane %v3341, %v3817
    %v4093 = vsel %vm3819, %v4092, %v4091
    %v4094 = vperm.slane %v3344, %v3815
    %v4095 = vperm.slane %v3347, %v3817
    %v4096 = vsel %vm3819, %v4095, %v4094
    %v4097 = vperm.slane %v3350, %v3815
    %v4098 = vperm.slane %v3353, %v3817
    %v4099 = vsel %vm3819, %v4098, %v4097
    %v4100 = vperm.slane %v3356, %v3815
    %v4101 = vperm.slane %v3359, %v3817
    %v4102 = vsel %vm3819, %v4101, %v4100
    %v4103 = vperm.slane %v3362, %v3815
    %v4104 = vperm.slane %v3365, %v3817
    %v4105 = vsel %vm3819, %v4104, %v4103
    %v4106 = vperm.slane %v3368, %v3815
    %v4107 = vperm.slane %v3371, %v3817
    %v4108 = vsel %vm3819, %v4107, %v4106
    %v4109 = vperm.slane %v3374, %v3815
    %v4110 = vperm.slane %v3377, %v3817
    %v4111 = vsel %vm3819, %v4110, %v4109
    %v4112 = vperm.slane %v3380, %v3815
    %v4113 = vperm.slane %v3383, %v3817
    %v4114 = vsel %vm3819, %v4113, %v4112
    %v4115 = vperm.slane %v3386, %v3815
    %v4116 = vperm.slane %v3389, %v3817
    %v4117 = vsel %vm3819, %v4116, %v4115
    %v4118 = vperm.slane %v3392, %v3815
    %v4119 = vperm.slane %v3395, %v3817
    %v4120 = vsel %vm3819, %v4119, %v4118
    %v4121 = vperm.slane %v3398, %v3815
    %v4122 = vperm.slane %v3401, %v3817
    %v4123 = vsel %vm3819, %v4122, %v4121
    %v4124 = vperm.slane %v3404, %v3815
    %v4125 = vperm.slane %v3407, %v3817
    %v4126 = vsel %vm3819, %v4125, %v4124
    %v4127 = vperm.slane %v3410, %v3815
    %v4128 = vperm.slane %v3413, %v3817
    %v4129 = vsel %vm3819, %v4128, %v4127
    %v4130 = vperm.slane %v3416, %v3815
    %v4131 = vperm.slane %v3419, %v3817
    %v4132 = vsel %vm3819, %v4131, %v4130
    %v4133 = vperm.slane %v3422, %v3815
    %v4134 = vperm.slane %v3425, %v3817
    %v4135 = vsel %vm3819, %v4134, %v4133
    %v4136 = vperm.slane %v3428, %v3815
    %v4137 = vperm.slane %v3431, %v3817
    %v4138 = vsel %vm3819, %v4137, %v4136
    %v4139 = vperm.slane %v3434, %v3815
    %v4140 = vperm.slane %v3437, %v3817
    %v4141 = vsel %vm3819, %v4140, %v4139
    %v4142 = vperm.slane %v3440, %v3815
    %v4143 = vperm.slane %v3443, %v3817
    %v4144 = vsel %vm3819, %v4143, %v4142
    %v4145 = vperm.slane %v3446, %v3815
    %v4146 = vperm.slane %v3449, %v3817
    %v4147 = vsel %vm3819, %v4146, %v4145
    %v4148 = vperm.slane %v3452, %v3815
    %v4149 = vperm.slane %v3455, %v3817
    %v4150 = vsel %vm3819, %v4149, %v4148
    %v4151 = vperm.slane %v3458, %v3815
    %v4152 = vperm.slane %v3461, %v3817
    %v4153 = vsel %vm3819, %v4152, %v4151
    %v4154 = vperm.slane %v3464, %v3815
    %v4155 = vperm.slane %v3467, %v3817
    %v4156 = vsel %vm3819, %v4155, %v4154
    %v4157 = vperm.slane %v3470, %v3815
    %v4158 = vperm.slane %v3473, %v3817
    %v4159 = vsel %vm3819, %v4158, %v4157
    %v4160 = vperm.slane %v3476, %v3815
    %v4161 = vperm.slane %v3479, %v3817
    %v4162 = vsel %vm3819, %v4161, %v4160
    %v4163 = vperm.slane %v3482, %v3815
    %v4164 = vperm.slane %v3485, %v3817
    %v4165 = vsel %vm3819, %v4164, %v4163
    %v4166 = vperm.slane %v3488, %v3815
    %v4167 = vperm.slane %v3491, %v3817
    %v4168 = vsel %vm3819, %v4167, %v4166
    %v4169 = vperm.slane %v3494, %v3815
    %v4170 = vperm.slane %v3497, %v3817
    %v4171 = vsel %vm3819, %v4170, %v4169
    %v4172 = vperm.slane %v3500, %v3815
    %v4173 = vperm.slane %v3503, %v3817
    %v4174 = vsel %vm3819, %v4173, %v4172
    %v4175 = vperm.slane %v3506, %v3815
    %v4176 = vperm.slane %v3509, %v3817
    %v4177 = vsel %vm3819, %v4176, %v4175
    %v4178 = vperm.slane %v3512, %v3815
    %v4179 = vperm.slane %v3515, %v3817
    %v4180 = vsel %vm3819, %v4179, %v4178
    %v4181 = vperm.slane %v3518, %v3815
    %v4182 = vperm.slane %v3521, %v3817
    %v4183 = vsel %vm3819, %v4182, %v4181
    %v4184 = vperm.slane %v3524, %v3815
    %v4185 = vperm.slane %v3527, %v3817
    %v4186 = vsel %vm3819, %v4185, %v4184
    %v4187 = vperm.slane %v3530, %v3815
    %v4188 = vperm.slane %v3533, %v3817
    %v4189 = vsel %vm3819, %v4188, %v4187
    %v4190 = vperm.slane %v3536, %v3815
    %v4191 = vperm.slane %v3539, %v3817
    %v4192 = vsel %vm3819, %v4191, %v4190
    %v4193 = vperm.slane %v3542, %v3815
    %v4194 = vperm.slane %v3545, %v3817
    %v4195 = vsel %vm3819, %v4194, %v4193
    %v4196 = vperm.slane %v3548, %v3815
    %v4197 = vperm.slane %v3551, %v3817
    %v4198 = vsel %vm3819, %v4197, %v4196
    %v4199 = vperm.slane %v3554, %v3815
    %v4200 = vperm.slane %v3557, %v3817
    %v4201 = vsel %vm3819, %v4200, %v4199
    %vm4202 = vcmask 1041409
    %v4203 = vsel %vm4202, %v3823, %v3820
    %vm4204 = vcmask 1042434
    %v4205 = vsel %vm4204, %v3826, %v4203
    %vm4206 = vcmask 1043459
    %v4207 = vsel %vm4206, %v3829, %v4205
    %vm4208 = vcmask 1044484
    %v4209 = vsel %vm4208, %v3832, %v4207
    %vm4210 = vcmask 1045509
    %v4211 = vsel %vm4210, %v3835, %v4209
    %vm4212 = vcmask 1046534
    %v4213 = vsel %vm4212, %v3838, %v4211
    %vm4214 = vcmask 1047559
    %v4215 = vsel %vm4214, %v3841, %v4213
    %v4216 = vsel %vm4202, %v3847, %v3844
    %v4217 = vsel %vm4204, %v3850, %v4216
    %v4218 = vsel %vm4206, %v3853, %v4217
    %v4219 = vsel %vm4208, %v3856, %v4218
    %v4220 = vsel %vm4210, %v3859, %v4219
    %v4221 = vsel %vm4212, %v3862, %v4220
    %v4222 = vsel %vm4214, %v3865, %v4221
    %v4223 = vsel %vm4202, %v3871, %v3868
    %v4224 = vsel %vm4204, %v3874, %v4223
    %v4225 = vsel %vm4206, %v3877, %v4224
    %v4226 = vsel %vm4208, %v3880, %v4225
    %v4227 = vsel %vm4210, %v3883, %v4226
    %v4228 = vsel %vm4212, %v3886, %v4227
    %v4229 = vsel %vm4214, %v3889, %v4228
    %v4230 = vsel %vm4202, %v3895, %v3892
    %v4231 = vsel %vm4204, %v3898, %v4230
    %v4232 = vsel %vm4206, %v3901, %v4231
    %v4233 = vsel %vm4208, %v3904, %v4232
    %v4234 = vsel %vm4210, %v3907, %v4233
    %v4235 = vsel %vm4212, %v3910, %v4234
    %v4236 = vsel %vm4214, %v3913, %v4235
    %v4237 = vsel %vm4202, %v3919, %v3916
    %v4238 = vsel %vm4204, %v3922, %v4237
    %v4239 = vsel %vm4206, %v3925, %v4238
    %v4240 = vsel %vm4208, %v3928, %v4239
    %v4241 = vsel %vm4210, %v3931, %v4240
    %v4242 = vsel %vm4212, %v3934, %v4241
    %v4243 = vsel %vm4214, %v3937, %v4242
    %v4244 = vsel %vm4202, %v3943, %v3940
    %v4245 = vsel %vm4204, %v3946, %v4244
    %v4246 = vsel %vm4206, %v3949, %v4245
    %v4247 = vsel %vm4208, %v3952, %v4246
    %v4248 = vsel %vm4210, %v3955, %v4247
    %v4249 = vsel %vm4212, %v3958, %v4248
    %v4250 = vsel %vm4214, %v3961, %v4249
    %v4251 = vsel %vm4202, %v3967, %v3964
    %v4252 = vsel %vm4204, %v3970, %v4251
    %v4253 = vsel %vm4206, %v3973, %v4252
    %v4254 = vsel %vm4208, %v3976, %v4253
    %v4255 = vsel %vm4210, %v3979, %v4254
    %v4256 = vsel %vm4212, %v3982, %v4255
    %v4257 = vsel %vm4214, %v3985, %v4256
    %v4258 = vsel %vm4202, %v3991, %v3988
    %v4259 = vsel %vm4204, %v3994, %v4258
    %v4260 = vsel %vm4206, %v3997, %v4259
    %v4261 = vsel %vm4208, %v4000, %v4260
    %v4262 = vsel %vm4210, %v4003, %v4261
    %v4263 = vsel %vm4212, %v4006, %v4262
    %v4264 = vsel %vm4214, %v4009, %v4263
    %v4265 = vsel %vm4202, %v4015, %v4012
    %v4266 = vsel %vm4204, %v4018, %v4265
    %v4267 = vsel %vm4206, %v4021, %v4266
    %v4268 = vsel %vm4208, %v4024, %v4267
    %v4269 = vsel %vm4210, %v4027, %v4268
    %v4270 = vsel %vm4212, %v4030, %v4269
    %v4271 = vsel %vm4214, %v4033, %v4270
    %v4272 = vsel %vm4202, %v4039, %v4036
    %v4273 = vsel %vm4204, %v4042, %v4272
    %v4274 = vsel %vm4206, %v4045, %v4273
    %v4275 = vsel %vm4208, %v4048, %v4274
    %v4276 = vsel %vm4210, %v4051, %v4275
    %v4277 = vsel %vm4212, %v4054, %v4276
    %v4278 = vsel %vm4214, %v4057, %v4277
    %v4279 = vsel %vm4202, %v4063, %v4060
    %v4280 = vsel %vm4204, %v4066, %v4279
    %v4281 = vsel %vm4206, %v4069, %v4280
    %v4282 = vsel %vm4208, %v4072, %v4281
    %v4283 = vsel %vm4210, %v4075, %v4282
    %v4284 = vsel %vm4212, %v4078, %v4283
    %v4285 = vsel %vm4214, %v4081, %v4284
    %v4286 = vsel %vm4202, %v4087, %v4084
    %v4287 = vsel %vm4204, %v4090, %v4286
    %v4288 = vsel %vm4206, %v4093, %v4287
    %v4289 = vsel %vm4208, %v4096, %v4288
    %v4290 = vsel %vm4210, %v4099, %v4289
    %v4291 = vsel %vm4212, %v4102, %v4290
    %v4292 = vsel %vm4214, %v4105, %v4291
    %v4293 = vsel %vm4202, %v4111, %v4108
    %v4294 = vsel %vm4204, %v4114, %v4293
    %v4295 = vsel %vm4206, %v4117, %v4294
    %v4296 = vsel %vm4208, %v4120, %v4295
    %v4297 = vsel %vm4210, %v4123, %v4296
    %v4298 = vsel %vm4212, %v4126, %v4297
    %v4299 = vsel %vm4214, %v4129, %v4298
    %v4300 = vsel %vm4202, %v4135, %v4132
    %v4301 = vsel %vm4204, %v4138, %v4300
    %v4302 = vsel %vm4206, %v4141, %v4301
    %v4303 = vsel %vm4208, %v4144, %v4302
    %v4304 = vsel %vm4210, %v4147, %v4303
    %v4305 = vsel %vm4212, %v4150, %v4304
    %v4306 = vsel %vm4214, %v4153, %v4305
    %v4307 = vsel %vm4202, %v4159, %v4156
    %v4308 = vsel %vm4204, %v4162, %v4307
    %v4309 = vsel %vm4206, %v4165, %v4308
    %v4310 = vsel %vm4208, %v4168, %v4309
    %v4311 = vsel %vm4210, %v4171, %v4310
    %v4312 = vsel %vm4212, %v4174, %v4311
    %v4313 = vsel %vm4214, %v4177, %v4312
    %v4314 = vsel %vm4202, %v4183, %v4180
    %v4315 = vsel %vm4204, %v4186, %v4314
    %v4316 = vsel %vm4206, %v4189, %v4315
    %v4317 = vsel %vm4208, %v4192, %v4316
    %v4318 = vsel %vm4210, %v4195, %v4317
    %v4319 = vsel %vm4212, %v4198, %v4318
    %v4320 = vsel %vm4214, %v4201, %v4319
    %4337 = vxpose.xlu0.b32.start [1/16] %v4215, 128
    %4338 = vxpose.xlu0.b32.cont [2/16] %v4222, 128
    %4339 = vxpose.xlu0.b32.cont [3/16] %v4229, 128
    %4340 = vxpose.xlu0.b32.cont [4/16] %v4236, 128
    %4341 = vxpose.xlu0.b32.cont [5/16] %v4243, 128
    %4342 = vxpose.xlu0.b32.cont [6/16] %v4250, 128
    %4343 = vxpose.xlu0.b32.cont [7/16] %v4257, 128
    %4344 = vxpose.xlu0.b32.cont [8/16] %v4264, 128
    %4345 = vxpose.xlu0.b32.cont [9/16] %v4271, 128
    %4346 = vxpose.xlu0.b32.cont [10/16] %v4278, 128
    %4347 = vxpose.xlu0.b32.cont [11/16] %v4285, 128
    %4348 = vxpose.xlu0.b32.cont [12/16] %v4292, 128
    %4349 = vxpose.xlu0.b32.cont [13/16] %v4299, 128
    %4350 = vxpose.xlu0.b32.cont [14/16] %v4306, 128
    %4351 = vxpose.xlu0.b32.cont [15/16] %v4313, 128
    %4352 = vxpose.xlu0.b32.end [16/16] %v4320, 128
    %v4353 = vpop.trf.xlu0
    %v4354 = vpop.trf.xlu0
    %v4355 = vpop.trf.xlu0
    %v4356 = vpop.trf.xlu0
    %v4357 = vpop.trf.xlu0
    %v4358 = vpop.trf.xlu0
    %v4359 = vpop.trf.xlu0
    %v4360 = vpop.trf.xlu0
    %v4361 = vpop.trf.xlu0
    %v4362 = vpop.trf.xlu0
    %v4363 = vpop.trf.xlu0
    %v4364 = vpop.trf.xlu0
    %v4365 = vpop.trf.xlu0
    %v4366 = vpop.trf.xlu0
    %v4367 = vpop.trf.xlu0
    %v4368 = vpop.trf.xlu0
    %v4369 = vld [vmem:[%s6] sm:$0xff]
    %v4370 = vld [vmem:[%s6 + $0x8] sm:$0xff]
    %vm4371 = vcmp.gt.f32.partialorder %v4369, 0.0
    %vm4372 = vcmp.gt.f32.partialorder %v4370, 0.0
    %v4373 = vsel %vm4371, -1e+12, %v4353
    %v4374 = vsel %vm4372, -1e+12, %v4354
    %4375 = vmax.xlane.f32.xlu0 %v4373
    %v4376 = vpop.xlane.xlu0 %4375
    %4377 = vmax.xlane.f32.xlu0 %v4374
    %v4378 = vpop.xlane.xlu0 %4377
    %v4379 = vsub.f32 %v4373, %v4376
    %v4380 = vsub.f32 %v4374, %v4378
    %v4381 = vmul.f32 %v4379, 1.442695
    %v4382 = vpow.pop %v4381
    %v4383 = vmul.f32 %v4380, 1.442695
    %v4384 = vpow.pop %v4383
    %4385 = vadd.xlane.f32.xlu0 %v4382
    %v4386 = vpop.xlane.xlu0 %4385
    %4387 = vadd.xlane.f32.xlu0 %v4384
    %v4388 = vpop.xlane.xlu0 %4387
    %v4389 = vrcp.pop %v4386
    %v4390 = vmul.f32 %v4386, %v4389
    %v4391 = vsub.f32 1.0, %v4390
    %v4392 = vmul.f32 %v4389, %v4391
    %v4393 = vadd.f32 %v4389, %v4392
    %vm4394 = vweird.f32 %v4386
    %vm4395 = vweird.f32 %v4389
    %vm4396 = vmor %vm4394, %vm4395
    %v4397 = vsel %vm4396, %v4389, %v4393
    %v4398 = vand.u32 2147483647, %v4386
    %vm4399 = vcmp.eq.f32.partialorder %v4398, 8.507059e+37
    %v4400 = vand.u32 %v4386, 2147483648
    %v4401 = vor.u32 1.1754944e-38, %v4400
    %v4402 = vsel %vm4399, %v4401, %v4397
    %v4403 = vmul.f32 %v4382, %v4402
    %v4404 = vrcp.pop %v4388
    %v4405 = vmul.f32 %v4388, %v4404
    %v4406 = vsub.f32 1.0, %v4405
    %v4407 = vmul.f32 %v4404, %v4406
    %v4408 = vadd.f32 %v4404, %v4407
    %vm4409 = vweird.f32 %v4388
    %vm4410 = vweird.f32 %v4404
    %vm4411 = vmor %vm4409, %vm4410
    %v4412 = vsel %vm4411, %v4404, %v4408
    %v4413 = vand.u32 2147483647, %v4388
    %vm4414 = vcmp.eq.f32.partialorder %v4413, 8.507059e+37
    %v4415 = vand.u32 %v4388, 2147483648
    %v4416 = vor.u32 1.1754944e-38, %v4415
    %v4417 = vsel %vm4414, %v4416, %v4412
    %v4418 = vmul.f32 %v4384, %v4417
    %4419 = vst [vmem:[#allocation2] sm:$0xff] %v4403
    %4420 = vst [vmem:[#allocation2 + $0x8] sm:$0xff] %v4418
    // Predicated region
    $region30: #{tpu_custom_call.1} parent=1 // pred_check
      _
    $region31: #{tpu_custom_call.1} parent=1 // pred_check_branch
      %4422 = sbr.rel (0) target = $region33
    $region32: #{tpu_custom_call.1} parent=1 // pred_region
      %4424 = vsyncadd [#allocation3], 0
      %s4425 = sshll.u32 [#allocation2], 4
      %s4426 = int_to_ptr.vmem [resolvable:$true] %s4425
      %s4427 = sshll.u32 %s7, 4
      %s4428 = int_to_ptr.hbm [resolvable:$true] %s4427
      %4433 = dma.vmem_to_hbm [thread:$0]  %s4426, 256, %s4428, [#allocation3], 128, 128, 8
    $region33: #{tpu_custom_call.1} parent=1 // pred_fallthru
      _
    // Predicated region
    $region34: #{tpu_custom_call.1} parent=1 // pred_check
      _
    $region35: #{tpu_custom_call.1} parent=1 // pred_check_branch
      %4435 = sbr.rel (0) target = $region37
    $region36: #{tpu_custom_call.1} parent=1 // pred_region
      %4437 = dma.done [#allocation3], 256
    $region37: #{tpu_custom_call.1} parent=1 // pred_fallthru
      _
    %4438 = vsyncpa [#allocation3], 1

// kernel: tpu_custom_call.1
$region0: #{tpu_custom_call.1}
  #allocation0 [shape = 'u32[]', space=smem, size = 0x4, offset = 0x4, fixed_abs, tag = 'smem constant byte address 0x4 - core index']
  #allocation1 [shape = 'u32[72,128]{1,0:T(1,128)}', space=vmem, size = 0x9000, scoped, tag = 'internal scratch']
  %s0 = inlined_call_operand.vmem [shape: bf16[16,32], index: 0, kind: input, shape index: {}]
  %s1 = inlined_call_operand.vmem [shape: bf16[128,16,32], index: 1, kind: input, shape index: {}]
  %s2 = inlined_call_operand.vmem [shape: bf16[32,32], index: 2, kind: input, shape index: {}]
  %s3 = inlined_call_operand.vmem [shape: bf16[32,32], index: 3, kind: input, shape index: {}]
  %s4 = inlined_call_operand.vmem [shape: f32[1,32], index: 4, kind: input, shape index: {}]
  %s5 = inlined_call_operand.vmem [shape: f32[1,32], index: 5, kind: input, shape index: {}]
  %s6 = inlined_call_operand.vmem [shape: f32[16,128], index: 6, kind: input, shape index: {}]
  %s7 = inlined_call_operand.hbm [shape: f32[16,128], index: 7, kind: output, shape index: {}]
  %s8 = sld [smem:[#allocation0]]
  $region38: #{tpu_custom_call.1} parent=0
    _
  %s10 = ssub.s32 1, %s8
  %s11 = scalar_select 0, %s10, %s8
  $region1: #{tpu_custom_call.1} parent=0
    #allocation2 [shape = 'u8[8192]{0}', space=vmem, size = 0x2000, scoped, tag = 'output window, operand 0, single buffered']
    #allocation3 [shape = 's32[1]{0}', space=sflag, size = 0x4, scoped, tag = 'scoped memory for tpu_custom_call.1']
    %12 = vsyncpa [#allocation3], 0
    // Predicated region
    $region2: #{tpu_custom_call.1} parent=1 // pred_check
      _
    $region3: #{tpu_custom_call.1} parent=1 // pred_check_branch
      %14 = sbr.rel (0) target = $region5
    $region4: #{tpu_custom_call.1} parent=1 // pred_region
      _
    $region5: #{tpu_custom_call.1} parent=1 // pred_fallthru
      _
    // Predicated region
    $region6: #{tpu_custom_call.1} parent=1 // pred_check
      _
    $region7: #{tpu_custom_call.1} parent=1 // pred_check_branch
      %16 = sbr.rel (0) target = $region9
    $region8: #{tpu_custom_call.1} parent=1 // pred_region
      _
    $region9: #{tpu_custom_call.1} parent=1 // pred_fallthru
      _
    // Predicated region
    $region10: #{tpu_custom_call.1} parent=1 // pred_check
      _
    $region11: #{tpu_custom_call.1} parent=1 // pred_check_branch
      %18 = sbr.rel (0) target = $region13
    $region12: #{tpu_custom_call.1} parent=1 // pred_region
      _
    $region13: #{tpu_custom_call.1} parent=1 // pred_fallthru
      _
    // Predicated region
    $region14: #{tpu_custom_call.1} parent=1 // pred_check
      _
    $region15: #{tpu_custom_call.1} parent=1 // pred_check_branch
      %20 = sbr.rel (0) target = $region17
    $region16: #{tpu_custom_call.1} parent=1 // pred_region
      _
    $region17: #{tpu_custom_call.1} parent=1 // pred_fallthru
      _
    // Predicated region
    $region18: #{tpu_custom_call.1} parent=1 // pred_check
      _
    $region19: #{tpu_custom_call.1} parent=1 // pred_check_branch
      %22 = sbr.rel (0) target = $region21
    $region20: #{tpu_custom_call.1} parent=1 // pred_region
      _
    $region21: #{tpu_custom_call.1} parent=1 // pred_fallthru
      _
    // Predicated region
    $region22: #{tpu_custom_call.1} parent=1 // pred_check
      _
    $region23: #{tpu_custom_call.1} parent=1 // pred_check_branch
      %24 = sbr.rel (0) target = $region25
    $region24: #{tpu_custom_call.1} parent=1 // pred_region
      _
    $region25: #{tpu_custom_call.1} parent=1 // pred_fallthru
      _
    // Predicated region
    $region26: #{tpu_custom_call.1} parent=1 // pred_check
      _
    $region27: #{tpu_custom_call.1} parent=1 // pred_check_branch
      %26 = sbr.rel (0) target = $region29
    $region28: #{tpu_custom_call.1} parent=1 // pred_region
      _
    $region29: #{tpu_custom_call.1} parent=1 // pred_fallthru
      _
    %v28 = vld [vmem:[%s0] sm:$0xf]
    %v29 = vld [vmem:[%s0 + $0x4] sm:$0xf]
    %v30 = vld [vmem:[%s2] sm:$0xf]
    %v31 = vld [vmem:[%s2 + $0x4] sm:$0xf]
    %v32 = vld [vmem:[%s2 + $0x8] sm:$0xf]
    %v33 = vld [vmem:[%s2 + $0xc] sm:$0xf]
    %v34 = vld [vmem:[%s4] sm:$0x1]
    %v36 = vperm.slane %v34, 0
    %v40 = vunpack.c.l.b16 %v28
    %v41 = vunpack.c.l.b16 %v29
    %v42 = vpack.c.b16 %v41, %v40
    %v47 = vunpack.c.l.b16 %v30
    %v48 = vunpack.c.l.b16 %v31
    %v49 = vunpack.c.l.b16 %v32
    %v50 = vunpack.c.l.b16 %v33
    %v51 = vpack.c.b16 %v48, %v47
    %v52 = vpack.c.b16 %v50, %v49
    %vm55 = vcmask 261120
    %v57 = vsel %vm55, %v42, 0
    %59 = vmatpush.bf16.msra.mxu0 0
    %60 = vmatpush.bf16.msra.mxu0 0
    %61 = vmatpush.bf16.msra.mxu0 0
    %62 = vmatpush.bf16.msra.mxu0 0
    %63 = vmatpush.bf16.msra.mxu0 0
    %64 = vmatpush.bf16.msra.mxu0 0
    %65 = vmatpush.bf16.msra.mxu0 %v52
    %66 = vmatpush.bf16.msra.mxu0 %v51
    %67 = vmatmul.bf16.gmra.mxu0 %v57
    %v68 = vpop.f32.mrf.mxu0
    %v69 = vadd.f32 %v36, %v68
    %v70 = vpop.f32.mrf.mxu0
    %v71 = vadd.f32 %v36, %v70
    %72 = vdwg.mxu0
    %v73 = vld [vmem:[%s1] sm:$0xf]
    %v74 = vld [vmem:[%s1 + $0x4] sm:$0xf]
    %v75 = vld [vmem:[%s1 + $0x8] sm:$0xf]
    %v76 = vld [vmem:[%s1 + $0xc] sm:$0xf]
    %v77 = vld [vmem:[%s1 + $0x10] sm:$0xf]
    %v78 = vld [vmem:[%s1 + $0x14] sm:$0xf]
    %v79 = vld [vmem:[%s1 + $0x18] sm:$0xf]
    %v80 = vld [vmem:[%s1 + $0x1c] sm:$0xf]
    %v81 = vld [vmem:[%s1 + $0x20] sm:$0xf]
    %v82 = vld [vmem:[%s1 + $0x24] sm:$0xf]
    %v83 = vld [vmem:[%s1 + $0x28] sm:$0xf]
    %v84 = vld [vmem:[%s1 + $0x2c] sm:$0xf]
    %v85 = vld [vmem:[%s1 + $0x30] sm:$0xf]
    %v86 = vld [vmem:[%s1 + $0x34] sm:$0xf]
    %v87 = vld [vmem:[%s1 + $0x38] sm:$0xf]
    %v88 = vld [vmem:[%s1 + $0x3c] sm:$0xf]
    %v89 = vld [vmem:[%s1 + $0x40] sm:$0xf]
    %v90 = vld [vmem:[%s1 + $0x44] sm:$0xf]
    %v91 = vld [vmem:[%s1 + $0x48] sm:$0xf]
    %v92 = vld [vmem:[%s1 + $0x4c] sm:$0xf]
    %v93 = vld [vmem:[%s1 + $0x50] sm:$0xf]
    %v94 = vld [vmem:[%s1 + $0x54] sm:$0xf]
    %v95 = vld [vmem:[%s1 + $0x58] sm:$0xf]
    %v96 = vld [vmem:[%s1 + $0x5c] sm:$0xf]
    %v97 = vld [vmem:[%s1 + $0x60] sm:$0xf]
    %v98 = vld [vmem:[%s1 + $0x64] sm:$0xf]
    %v99 = vld [vmem:[%s1 + $0x68] sm:$0xf]
    %v100 = vld [vmem:[%s1 + $0x6c] sm:$0xf]
    %v101 = vld [vmem:[%s1 + $0x70] sm:$0xf]
    %v102 = vld [vmem:[%s1 + $0x74] sm:$0xf]
    %v103 = vld [vmem:[%s1 + $0x78] sm:$0xf]
    %v104 = vld [vmem:[%s1 + $0x7c] sm:$0xf]
    %v105 = vld [vmem:[%s1 + $0x80] sm:$0xf]
    %v106 = vld [vmem:[%s1 + $0x84] sm:$0xf]
    %v107 = vld [vmem:[%s1 + $0x88] sm:$0xf]
    %v108 = vld [vmem:[%s1 + $0x8c] sm:$0xf]
    %v109 = vld [vmem:[%s1 + $0x90] sm:$0xf]
    %v110 = vld [vmem:[%s1 + $0x94] sm:$0xf]
    %v111 = vld [vmem:[%s1 + $0x98] sm:$0xf]
    %v112 = vld [vmem:[%s1 + $0x9c] sm:$0xf]
    %v113 = vld [vmem:[%s1 + $0xa0] sm:$0xf]
    %v114 = vld [vmem:[%s1 + $0xa4] sm:$0xf]
    %v115 = vld [vmem:[%s1 + $0xa8] sm:$0xf]
    %v116 = vld [vmem:[%s1 + $0xac] sm:$0xf]
    %v117 = vld [vmem:[%s1 + $0xb0] sm:$0xf]
    %v118 = vld [vmem:[%s1 + $0xb4] sm:$0xf]
    %v119 = vld [vmem:[%s1 + $0xb8] sm:$0xf]
    %v120 = vld [vmem:[%s1 + $0xbc] sm:$0xf]
    %v121 = vld [vmem:[%s1 + $0xc0] sm:$0xf]
    %v122 = vld [vmem:[%s1 + $0xc4] sm:$0xf]
    %v123 = vld [vmem:[%s1 + $0xc8] sm:$0xf]
    %v124 = vld [vmem:[%s1 + $0xcc] sm:$0xf]
    %v125 = vld [vmem:[%s1 + $0xd0] sm:$0xf]
    %v126 = vld [vmem:[%s1 + $0xd4] sm:$0xf]
    %v127 = vld [vmem:[%s1 + $0xd8] sm:$0xf]
    %v128 = vld [vmem:[%s1 + $0xdc] sm:$0xf]
    %v129 = vld [vmem:[%s1 + $0xe0] sm:$0xf]
    %v130 = vld [vmem:[%s1 + $0xe4] sm:$0xf]
    %v131 = vld [vmem:[%s1 + $0xe8] sm:$0xf]
    %v132 = vld [vmem:[%s1 + $0xec] sm:$0xf]
    %v133 = vld [vmem:[%s1 + $0xf0] sm:$0xf]
    %v134 = vld [vmem:[%s1 + $0xf4] sm:$0xf]
    %v135 = vld [vmem:[%s1 + $0xf8] sm:$0xf]
    %v136 = vld [vmem:[%s1 + $0xfc] sm:$0xf]
    %v137 = vld [vmem:[%s1 + $0x100] sm:$0xf]
    %v138 = vld [vmem:[%s1 + $0x104] sm:$0xf]
    %v139 = vld [vmem:[%s1 + $0x108] sm:$0xf]
    %v140 = vld [vmem:[%s1 + $0x10c] sm:$0xf]
    %v141 = vld [vmem:[%s1 + $0x110] sm:$0xf]
    %v142 = vld [vmem:[%s1 + $0x114] sm:$0xf]
    %v143 = vld [vmem:[%s1 + $0x118] sm:$0xf]
    %v144 = vld [vmem:[%s1 + $0x11c] sm:$0xf]
    %v145 = vld [vmem:[%s1 + $0x120] sm:$0xf]
    %v146 = vld [vmem:[%s1 + $0x124] sm:$0xf]
    %v147 = vld [vmem:[%s1 + $0x128] sm:$0xf]
    %v148 = vld [vmem:[%s1 + $0x12c] sm:$0xf]
    %v149 = vld [vmem:[%s1 + $0x130] sm:$0xf]
    %v150 = vld [vmem:[%s1 + $0x134] sm:$0xf]
    %v151 = vld [vmem:[%s1 + $0x138] sm:$0xf]
    %v152 = vld [vmem:[%s1 + $0x13c] sm:$0xf]
    %v153 = vld [vmem:[%s1 + $0x140] sm:$0xf]
    %v154 = vld [vmem:[%s1 + $0x144] sm:$0xf]
    %v155 = vld [vmem:[%s1 + $0x148] sm:$0xf]
    %v156 = vld [vmem:[%s1 + $0x14c] sm:$0xf]
    %v157 = vld [vmem:[%s1 + $0x150] sm:$0xf]
    %v158 = vld [vmem:[%s1 + $0x154] sm:$0xf]
    %v159 = vld [vmem:[%s1 + $0x158] sm:$0xf]
    %v160 = vld [vmem:[%s1 + $0x15c] sm:$0xf]
    %v161 = vld [vmem:[%s1 + $0x160] sm:$0xf]
    %v162 = vld [vmem:[%s1 + $0x164] sm:$0xf]
    %v163 = vld [vmem:[%s1 + $0x168] sm:$0xf]
    %v164 = vld [vmem:[%s1 + $0x16c] sm:$0xf]
    %v165 = vld [vmem:[%s1 + $0x170] sm:$0xf]
    %v166 = vld [vmem:[%s1 + $0x174] sm:$0xf]
    %v167 = vld [vmem:[%s1 + $0x178] sm:$0xf]
    %v168 = vld [vmem:[%s1 + $0x17c] sm:$0xf]
    %v169 = vld [vmem:[%s1 + $0x180] sm:$0xf]
    %v170 = vld [vmem:[%s1 + $0x184] sm:$0xf]
    %v171 = vld [vmem:[%s1 + $0x188] sm:$0xf]
    %v172 = vld [vmem:[%s1 + $0x18c] sm:$0xf]
    %v173 = vld [vmem:[%s1 + $0x190] sm:$0xf]
    %v174 = vld [vmem:[%s1 + $0x194] sm:$0xf]
    %v175 = vld [vmem:[%s1 + $0x198] sm:$0xf]
    %v176 = vld [vmem:[%s1 + $0x19c] sm:$0xf]
    %v177 = vld [vmem:[%s1 + $0x1a0] sm:$0xf]
    %v178 = vld [vmem:[%s1 + $0x1a4] sm:$0xf]
    %v179 = vld [vmem:[%s1 + $0x1a8] sm:$0xf]
    %v180 = vld [vmem:[%s1 + $0x1ac] sm:$0xf]
    %v181 = vld [vmem:[%s1 + $0x1b0] sm:$0xf]
    %v182 = vld [vmem:[%s1 + $0x1b4] sm:$0xf]
    %v183 = vld [vmem:[%s1 + $0x1b8] sm:$0xf]
    %v184 = vld [vmem:[%s1 + $0x1bc] sm:$0xf]
    %v185 = vld [vmem:[%s1 + $0x1c0] sm:$0xf]
    %v186 = vld [vmem:[%s1 + $0x1c4] sm:$0xf]
    %v187 = vld [vmem:[%s1 + $0x1c8] sm:$0xf]
    %v188 = vld [vmem:[%s1 + $0x1cc] sm:$0xf]
    %v189 = vld [vmem:[%s1 + $0x1d0] sm:$0xf]
    %v190 = vld [vmem:[%s1 + $0x1d4] sm:$0xf]
    %v191 = vld [vmem:[%s1 + $0x1d8] sm:$0xf]
    %v192 = vld [vmem:[%s1 + $0x1dc] sm:$0xf]
    %v193 = vld [vmem:[%s1 + $0x1e0] sm:$0xf]
    %v194 = vld [vmem:[%s1 + $0x1e4] sm:$0xf]
    %v195 = vld [vmem:[%s1 + $0x1e8] sm:$0xf]
    %v196 = vld [vmem:[%s1 + $0x1ec] sm:$0xf]
    %v197 = vld [vmem:[%s1 + $0x1f0] sm:$0xf]
    %v198 = vld [vmem:[%s1 + $0x1f4] sm:$0xf]
    %v199 = vld [vmem:[%s1 + $0x1f8] sm:$0xf]
    %v200 = vld [vmem:[%s1 + $0x1fc] sm:$0xf]
    %v201 = vld [vmem:[%s1 + $0x200] sm:$0xf]
    %v202 = vld [vmem:[%s1 + $0x204] sm:$0xf]
    %v203 = vld [vmem:[%s1 + $0x208] sm:$0xf]
    %v204 = vld [vmem:[%s1 + $0x20c] sm:$0xf]
    %v205 = vld [vmem:[%s1 + $0x210] sm:$0xf]
    %v206 = vld [vmem:[%s1 + $0x214] sm:$0xf]
    %v207 = vld [vmem:[%s1 + $0x218] sm:$0xf]
    %v208 = vld [vmem:[%s1 + $0x21c] sm:$0xf]
    %v209 = vld [vmem:[%s1 + $0x220] sm:$0xf]
    %v210 = vld [vmem:[%s1 + $0x224] sm:$0xf]
    %v211 = vld [vmem:[%s1 + $0x228] sm:$0xf]
    %v212 = vld [vmem:[%s1 + $0x22c] sm:$0xf]
    %v213 = vld [vmem:[%s1 + $0x230] sm:$0xf]
    %v214 = vld [vmem:[%s1 + $0x234] sm:$0xf]
    %v215 = vld [vmem:[%s1 + $0x238] sm:$0xf]
    %v216 = vld [vmem:[%s1 + $0x23c] sm:$0xf]
    %v217 = vld [vmem:[%s1 + $0x240] sm:$0xf]
    %v218 = vld [vmem:[%s1 + $0x244] sm:$0xf]
    %v219 = vld [vmem:[%s1 + $0x248] sm:$0xf]
    %v220 = vld [vmem:[%s1 + $0x24c] sm:$0xf]
    %v221 = vld [vmem:[%s1 + $0x250] sm:$0xf]
    %v222 = vld [vmem:[%s1 + $0x254] sm:$0xf]
    %v223 = vld [vmem:[%s1 + $0x258] sm:$0xf]
    %v224 = vld [vmem:[%s1 + $0x25c] sm:$0xf]
    %v225 = vld [vmem:[%s1 + $0x260] sm:$0xf]
    %v226 = vld [vmem:[%s1 + $0x264] sm:$0xf]
    %v227 = vld [vmem:[%s1 + $0x268] sm:$0xf]
    %v228 = vld [vmem:[%s1 + $0x26c] sm:$0xf]
    %v229 = vld [vmem:[%s1 + $0x270] sm:$0xf]
    %v230 = vld [vmem:[%s1 + $0x274] sm:$0xf]
    %v231 = vld [vmem:[%s1 + $0x278] sm:$0xf]
    %v232 = vld [vmem:[%s1 + $0x27c] sm:$0xf]
    %v233 = vld [vmem:[%s1 + $0x280] sm:$0xf]
    %v234 = vld [vmem:[%s1 + $0x284] sm:$0xf]
    %v235 = vld [vmem:[%s1 + $0x288] sm:$0xf]
    %v236 = vld [vmem:[%s1 + $0x28c] sm:$0xf]
    %v237 = vld [vmem:[%s1 + $0x290] sm:$0xf]
    %v238 = vld [vmem:[%s1 + $0x294] sm:$0xf]
    %v239 = vld [vmem:[%s1 + $0x298] sm:$0xf]
    %v240 = vld [vmem:[%s1 + $0x29c] sm:$0xf]
    %v241 = vld [vmem:[%s1 + $0x2a0] sm:$0xf]
    %v242 = vld [vmem:[%s1 + $0x2a4] sm:$0xf]
    %v243 = vld [vmem:[%s1 + $0x2a8] sm:$0xf]
    %v244 = vld [vmem:[%s1 + $0x2ac] sm:$0xf]
    %v245 = vld [vmem:[%s1 + $0x2b0] sm:$0xf]
    %v246 = vld [vmem:[%s1 + $0x2b4] sm:$0xf]
    %v247 = vld [vmem:[%s1 + $0x2b8] sm:$0xf]
    %v248 = vld [vmem:[%s1 + $0x2bc] sm:$0xf]
    %v249 = vld [vmem:[%s1 + $0x2c0] sm:$0xf]
    %v250 = vld [vmem:[%s1 + $0x2c4] sm:$0xf]
    %v251 = vld [vmem:[%s1 + $0x2c8] sm:$0xf]
    %v252 = vld [vmem:[%s1 + $0x2cc] sm:$0xf]
    %v253 = vld [vmem:[%s1 + $0x2d0] sm:$0xf]
    %v254 = vld [vmem:[%s1 + $0x2d4] sm:$0xf]
    %v255 = vld [vmem:[%s1 + $0x2d8] sm:$0xf]
    %v256 = vld [vmem:[%s1 + $0x2dc] sm:$0xf]
    %v257 = vld [vmem:[%s1 + $0x2e0] sm:$0xf]
    %v258 = vld [vmem:[%s1 + $0x2e4] sm:$0xf]
    %v259 = vld [vmem:[%s1 + $0x2e8] sm:$0xf]
    %v260 = vld [vmem:[%s1 + $0x2ec] sm:$0xf]
    %v261 = vld [vmem:[%s1 + $0x2f0] sm:$0xf]
    %v262 = vld [vmem:[%s1 + $0x2f4] sm:$0xf]
    %v263 = vld [vmem:[%s1 + $0x2f8] sm:$0xf]
    %v264 = vld [vmem:[%s1 + $0x2fc] sm:$0xf]
    %v265 = vld [vmem:[%s1 + $0x300] sm:$0xf]
    %v266 = vld [vmem:[%s1 + $0x304] sm:$0xf]
    %v267 = vld [vmem:[%s1 + $0x308] sm:$0xf]
    %v268 = vld [vmem:[%s1 + $0x30c] sm:$0xf]
    %v269 = vld [vmem:[%s1 + $0x310] sm:$0xf]
    %v270 = vld [vmem:[%s1 + $0x314] sm:$0xf]
    %v271 = vld [vmem:[%s1 + $0x318] sm:$0xf]
    %v272 = vld [vmem:[%s1 + $0x31c] sm:$0xf]
    %v273 = vld [vmem:[%s1 + $0x320] sm:$0xf]
    %v274 = vld [vmem:[%s1 + $0x324] sm:$0xf]
    %v275 = vld [vmem:[%s1 + $0x328] sm:$0xf]
    %v276 = vld [vmem:[%s1 + $0x32c] sm:$0xf]
    %v277 = vld [vmem:[%s1 + $0x330] sm:$0xf]
    %v278 = vld [vmem:[%s1 + $0x334] sm:$0xf]
    %v279 = vld [vmem:[%s1 + $0x338] sm:$0xf]
    %v280 = vld [vmem:[%s1 + $0x33c] sm:$0xf]
    %v281 = vld [vmem:[%s1 + $0x340] sm:$0xf]
    %v282 = vld [vmem:[%s1 + $0x344] sm:$0xf]
    %v283 = vld [vmem:[%s1 + $0x348] sm:$0xf]
    %v284 = vld [vmem:[%s1 + $0x34c] sm:$0xf]
    %v285 = vld [vmem:[%s1 + $0x350] sm:$0xf]
    %v286 = vld [vmem:[%s1 + $0x354] sm:$0xf]
    %v287 = vld [vmem:[%s1 + $0x358] sm:$0xf]
    %v288 = vld [vmem:[%s1 + $0x35c] sm:$0xf]
    %v289 = vld [vmem:[%s1 + $0x360] sm:$0xf]
    %v290 = vld [vmem:[%s1 + $0x364] sm:$0xf]
    %v291 = vld [vmem:[%s1 + $0x368] sm:$0xf]
    %v292 = vld [vmem:[%s1 + $0x36c] sm:$0xf]
    %v293 = vld [vmem:[%s1 + $0x370] sm:$0xf]
    %v294 = vld [vmem:[%s1 + $0x374] sm:$0xf]
    %v295 = vld [vmem:[%s1 + $0x378] sm:$0xf]
    %v296 = vld [vmem:[%s1 + $0x37c] sm:$0xf]
    %v297 = vld [vmem:[%s1 + $0x380] sm:$0xf]
    %v298 = vld [vmem:[%s1 + $0x384] sm:$0xf]
    %v299 = vld [vmem:[%s1 + $0x388] sm:$0xf]
    %v300 = vld [vmem:[%s1 + $0x38c] sm:$0xf]
    %v301 = vld [vmem:[%s1 + $0x390] sm:$0xf]
    %v302 = vld [vmem:[%s1 + $0x394] sm:$0xf]
    %v303 = vld [vmem:[%s1 + $0x398] sm:$0xf]
    %v304 = vld [vmem:[%s1 + $0x39c] sm:$0xf]
    %v305 = vld [vmem:[%s1 + $0x3a0] sm:$0xf]
    %v306 = vld [vmem:[%s1 + $0x3a4] sm:$0xf]
    %v307 = vld [vmem:[%s1 + $0x3a8] sm:$0xf]
    %v308 = vld [vmem:[%s1 + $0x3ac] sm:$0xf]
    %v309 = vld [vmem:[%s1 + $0x3b0] sm:$0xf]
    %v310 = vld [vmem:[%s1 + $0x3b4] sm:$0xf]
    %v311 = vld [vmem:[%s1 + $0x3b8] sm:$0xf]
    %v312 = vld [vmem:[%s1 + $0x3bc] sm:$0xf]
    %v313 = vld [vmem:[%s1 + $0x3c0] sm:$0xf]
    %v314 = vld [vmem:[%s1 + $0x3c4] sm:$0xf]
    %v315 = vld [vmem:[%s1 + $0x3c8] sm:$0xf]
    %v316 = vld [vmem:[%s1 + $0x3cc] sm:$0xf]
    %v317 = vld [vmem:[%s1 + $0x3d0] sm:$0xf]
    %v318 = vld [vmem:[%s1 + $0x3d4] sm:$0xf]
    %v319 = vld [vmem:[%s1 + $0x3d8] sm:$0xf]
    %v320 = vld [vmem:[%s1 + $0x3dc] sm:$0xf]
    %v321 = vld [vmem:[%s1 + $0x3e0] sm:$0xf]
    %v322 = vld [vmem:[%s1 + $0x3e4] sm:$0xf]
    %v323 = vld [vmem:[%s1 + $0x3e8] sm:$0xf]
    %v324 = vld [vmem:[%s1 + $0x3ec] sm:$0xf]
    %v325 = vld [vmem:[%s1 + $0x3f0] sm:$0xf]
    %v326 = vld [vmem:[%s1 + $0x3f4] sm:$0xf]
    %v327 = vld [vmem:[%s1 + $0x3f8] sm:$0xf]
    %v328 = vld [vmem:[%s1 + $0x3fc] sm:$0xf]
    %v329 = vld [vmem:[%s3] sm:$0xf]
    %v330 = vld [vmem:[%s3 + $0x4] sm:$0xf]
    %v331 = vld [vmem:[%s3 + $0x8] sm:$0xf]
    %v332 = vld [vmem:[%s3 + $0xc] sm:$0xf]
    %v589 = vunpack.c.l.b16 %v73
    %v590 = vunpack.c.l.b16 %v74
    %v591 = vunpack.c.l.b16 %v75
    %v592 = vunpack.c.l.b16 %v76
    %v593 = vunpack.c.l.b16 %v77
    %v594 = vunpack.c.l.b16 %v78
    %v595 = vunpack.c.l.b16 %v79
    %v596 = vunpack.c.l.b16 %v80
    %v597 = vunpack.c.l.b16 %v81
    %v598 = vunpack.c.l.b16 %v82
    %v599 = vunpack.c.l.b16 %v83
    %v600 = vunpack.c.l.b16 %v84
    %v601 = vunpack.c.l.b16 %v85
    %v602 = vunpack.c.l.b16 %v86
    %v603 = vunpack.c.l.b16 %v87
    %v604 = vunpack.c.l.b16 %v88
    %v605 = vunpack.c.l.b16 %v89
    %v606 = vunpack.c.l.b16 %v90
    %v607 = vunpack.c.l.b16 %v91
    %v608 = vunpack.c.l.b16 %v92
    %v609 = vunpack.c.l.b16 %v93
    %v610 = vunpack.c.l.b16 %v94
    %v611 = vunpack.c.l.b16 %v95
    %v612 = vunpack.c.l.b16 %v96
    %v613 = vunpack.c.l.b16 %v97
    %v614 = vunpack.c.l.b16 %v98
    %v615 = vunpack.c.l.b16 %v99
    %v616 = vunpack.c.l.b16 %v100
    %v617 = vunpack.c.l.b16 %v101
    %v618 = vunpack.c.l.b16 %v102
    %v619 = vunpack.c.l.b16 %v103
    %v620 = vunpack.c.l.b16 %v104
    %v621 = vunpack.c.l.b16 %v105
    %v622 = vunpack.c.l.b16 %v106
    %v623 = vunpack.c.l.b16 %v107
    %v624 = vunpack.c.l.b16 %v108
    %v625 = vunpack.c.l.b16 %v109
    %v626 = vunpack.c.l.b16 %v110
    %v627 = vunpack.c.l.b16 %v111
    %v628 = vunpack.c.l.b16 %v112
    %v629 = vunpack.c.l.b16 %v113
    %v630 = vunpack.c.l.b16 %v114
    %v631 = vunpack.c.l.b16 %v115
    %v632 = vunpack.c.l.b16 %v116
    %v633 = vunpack.c.l.b16 %v117
    %v634 = vunpack.c.l.b16 %v118
    %v635 = vunpack.c.l.b16 %v119
    %v636 = vunpack.c.l.b16 %v120
    %v637 = vunpack.c.l.b16 %v121
    %v638 = vunpack.c.l.b16 %v122
    %v639 = vunpack.c.l.b16 %v123
    %v640 = vunpack.c.l.b16 %v124
    %v641 = vunpack.c.l.b16 %v125
    %v642 = vunpack.c.l.b16 %v126
    %v643 = vunpack.c.l.b16 %v127
    %v644 = vunpack.c.l.b16 %v128
    %v645 = vunpack.c.l.b16 %v129
    %v646 = vunpack.c.l.b16 %v130
    %v647 = vunpack.c.l.b16 %v131
    %v648 = vunpack.c.l.b16 %v132
    %v649 = vunpack.c.l.b16 %v133
    %v650 = vunpack.c.l.b16 %v134
    %v651 = vunpack.c.l.b16 %v135
    %v652 = vunpack.c.l.b16 %v136
    %v653 = vunpack.c.l.b16 %v137
    %v654 = vunpack.c.l.b16 %v138
    %v655 = vunpack.c.l.b16 %v139
    %v656 = vunpack.c.l.b16 %v140
    %v657 = vunpack.c.l.b16 %v141
    %v658 = vunpack.c.l.b16 %v142
    %v659 = vunpack.c.l.b16 %v143
    %v660 = vunpack.c.l.b16 %v144
    %v661 = vunpack.c.l.b16 %v145
    %v662 = vunpack.c.l.b16 %v146
    %v663 = vunpack.c.l.b16 %v147
    %v664 = vunpack.c.l.b16 %v148
    %v665 = vunpack.c.l.b16 %v149
    %v666 = vunpack.c.l.b16 %v150
    %v667 = vunpack.c.l.b16 %v151
    %v668 = vunpack.c.l.b16 %v152
    %v669 = vunpack.c.l.b16 %v153
    %v670 = vunpack.c.l.b16 %v154
    %v671 = vunpack.c.l.b16 %v155
    %v672 = vunpack.c.l.b16 %v156
    %v673 = vunpack.c.l.b16 %v157
    %v674 = vunpack.c.l.b16 %v158
    %v675 = vunpack.c.l.b16 %v159
    %v676 = vunpack.c.l.b16 %v160
    %v677 = vunpack.c.l.b16 %v161
    %v678 = vunpack.c.l.b16 %v162
    %v679 = vunpack.c.l.b16 %v163
    %v680 = vunpack.c.l.b16 %v164
    %v681 = vunpack.c.l.b16 %v165
    %v682 = vunpack.c.l.b16 %v166
    %v683 = vunpack.c.l.b16 %v167
    %v684 = vunpack.c.l.b16 %v168
    %v685 = vunpack.c.l.b16 %v169
    %v686 = vunpack.c.l.b16 %v170
    %v687 = vunpack.c.l.b16 %v171
    %v688 = vunpack.c.l.b16 %v172
    %v689 = vunpack.c.l.b16 %v173
    %v690 = vunpack.c.l.b16 %v174
    %v691 = vunpack.c.l.b16 %v175
    %v692 = vunpack.c.l.b16 %v176
    %v693 = vunpack.c.l.b16 %v177
    %v694 = vunpack.c.l.b16 %v178
    %v695 = vunpack.c.l.b16 %v179
    %v696 = vunpack.c.l.b16 %v180
    %v697 = vunpack.c.l.b16 %v181
    %v698 = vunpack.c.l.b16 %v182
    %v699 = vunpack.c.l.b16 %v183
    %v700 = vunpack.c.l.b16 %v184
    %v701 = vunpack.c.l.b16 %v185
    %v702 = vunpack.c.l.b16 %v186
    %v703 = vunpack.c.l.b16 %v187
    %v704 = vunpack.c.l.b16 %v188
    %v705 = vunpack.c.l.b16 %v189
    %v706 = vunpack.c.l.b16 %v190
    %v707 = vunpack.c.l.b16 %v191
    %v708 = vunpack.c.l.b16 %v192
    %v709 = vunpack.c.l.b16 %v193
    %v710 = vunpack.c.l.b16 %v194
    %v711 = vunpack.c.l.b16 %v195
    %v712 = vunpack.c.l.b16 %v196
    %v713 = vunpack.c.l.b16 %v197
    %v714 = vunpack.c.l.b16 %v198
    %v715 = vunpack.c.l.b16 %v199
    %v716 = vunpack.c.l.b16 %v200
    %v717 = vunpack.c.l.b16 %v201
    %v718 = vunpack.c.l.b16 %v202
    %v719 = vunpack.c.l.b16 %v203
    %v720 = vunpack.c.l.b16 %v204
    %v721 = vunpack.c.l.b16 %v205
    %v722 = vunpack.c.l.b16 %v206
    %v723 = vunpack.c.l.b16 %v207
    %v724 = vunpack.c.l.b16 %v208
    %v725 = vunpack.c.l.b16 %v209
    %v726 = vunpack.c.l.b16 %v210
    %v727 = vunpack.c.l.b16 %v211
    %v728 = vunpack.c.l.b16 %v212
    %v729 = vunpack.c.l.b16 %v213
    %v730 = vunpack.c.l.b16 %v214
    %v731 = vunpack.c.l.b16 %v215
    %v732 = vunpack.c.l.b16 %v216
    %v733 = vunpack.c.l.b16 %v217
    %v734 = vunpack.c.l.b16 %v218
    %v735 = vunpack.c.l.b16 %v219
    %v736 = vunpack.c.l.b16 %v220
    %v737 = vunpack.c.l.b16 %v221
    %v738 = vunpack.c.l.b16 %v222
    %v739 = vunpack.c.l.b16 %v223
    %v740 = vunpack.c.l.b16 %v224
    %v741 = vunpack.c.l.b16 %v225
    %v742 = vunpack.c.l.b16 %v226
    %v743 = vunpack.c.l.b16 %v227
    %v744 = vunpack.c.l.b16 %v228
    %v745 = vunpack.c.l.b16 %v229
    %v746 = vunpack.c.l.b16 %v230
    %v747 = vunpack.c.l.b16 %v231
    %v748 = vunpack.c.l.b16 %v232
    %v749 = vunpack.c.l.b16 %v233
    %v750 = vunpack.c.l.b16 %v234
    %v751 = vunpack.c.l.b16 %v235
    %v752 = vunpack.c.l.b16 %v236
    %v753 = vunpack.c.l.b16 %v237
    %v754 = vunpack.c.l.b16 %v238
    %v755 = vunpack.c.l.b16 %v239
    %v756 = vunpack.c.l.b16 %v240
    %v757 = vunpack.c.l.b16 %v241
    %v758 = vunpack.c.l.b16 %v242
    %v759 = vunpack.c.l.b16 %v243
    %v760 = vunpack.c.l.b16 %v244
    %v761 = vunpack.c.l.b16 %v245
    %v762 = vunpack.c.l.b16 %v246
    %v763 = vunpack.c.l.b16 %v247
    %v764 = vunpack.c.l.b16 %v248
    %v765 = vunpack.c.l.b16 %v249
    %v766 = vunpack.c.l.b16 %v250
    %v767 = vunpack.c.l.b16 %v251
    %v768 = vunpack.c.l.b16 %v252
    %v769 = vunpack.c.l.b16 %v253
    %v770 = vunpack.c.l.b16 %v254
    %v771 = vunpack.c.l.b16 %v255
    %v772 = vunpack.c.l.b16 %v256
    %v773 = vunpack.c.l.b16 %v257
    %v774 = vunpack.c.l.b16 %v258
    %v775 = vunpack.c.l.b16 %v259
    %v776 = vunpack.c.l.b16 %v260
    %v777 = vunpack.c.l.b16 %v261
    %v778 = vunpack.c.l.b16 %v262
    %v779 = vunpack.c.l.b16 %v263
    %v780 = vunpack.c.l.b16 %v264
    %v781 = vunpack.c.l.b16 %v265
    %v782 = vunpack.c.l.b16 %v266
    %v783 = vunpack.c.l.b16 %v267
    %v784 = vunpack.c.l.b16 %v268
    %v785 = vunpack.c.l.b16 %v269
    %v786 = vunpack.c.l.b16 %v270
    %v787 = vunpack.c.l.b16 %v271
    %v788 = vunpack.c.l.b16 %v272
    %v789 = vunpack.c.l.b16 %v273
    %v790 = vunpack.c.l.b16 %v274
    %v791 = vunpack.c.l.b16 %v275
    %v792 = vunpack.c.l.b16 %v276
    %v793 = vunpack.c.l.b16 %v277
    %v794 = vunpack.c.l.b16 %v278
    %v795 = vunpack.c.l.b16 %v279
    %v796 = vunpack.c.l.b16 %v280
    %v797 = vunpack.c.l.b16 %v281
    %v798 = vunpack.c.l.b16 %v282
    %v799 = vunpack.c.l.b16 %v283
    %v800 = vunpack.c.l.b16 %v284
    %v801 = vunpack.c.l.b16 %v285
    %v802 = vunpack.c.l.b16 %v286
    %v803 = vunpack.c.l.b16 %v287
    %v804 = vunpack.c.l.b16 %v288
    %v805 = vunpack.c.l.b16 %v289
    %v806 = vunpack.c.l.b16 %v290
    %v807 = vunpack.c.l.b16 %v291
    %v808 = vunpack.c.l.b16 %v292
    %v809 = vunpack.c.l.b16 %v293
    %v810 = vunpack.c.l.b16 %v294
    %v811 = vunpack.c.l.b16 %v295
    %v812 = vunpack.c.l.b16 %v296
    %v813 = vunpack.c.l.b16 %v297
    %v814 = vunpack.c.l.b16 %v298
    %v815 = vunpack.c.l.b16 %v299
    %v816 = vunpack.c.l.b16 %v300
    %v817 = vunpack.c.l.b16 %v301
    %v818 = vunpack.c.l.b16 %v302
    %v819 = vunpack.c.l.b16 %v303
    %v820 = vunpack.c.l.b16 %v304
    %v821 = vunpack.c.l.b16 %v305
    %v822 = vunpack.c.l.b16 %v306
    %v823 = vunpack.c.l.b16 %v307
    %v824 = vunpack.c.l.b16 %v308
    %v825 = vunpack.c.l.b16 %v309
    %v826 = vunpack.c.l.b16 %v310
    %v827 = vunpack.c.l.b16 %v311
    %v828 = vunpack.c.l.b16 %v312
    %v829 = vunpack.c.l.b16 %v313
    %v830 = vunpack.c.l.b16 %v314
    %v831 = vunpack.c.l.b16 %v315
    %v832 = vunpack.c.l.b16 %v316
    %v833 = vunpack.c.l.b16 %v317
    %v834 = vunpack.c.l.b16 %v318
    %v835 = vunpack.c.l.b16 %v319
    %v836 = vunpack.c.l.b16 %v320
    %v837 = vunpack.c.l.b16 %v321
    %v838 = vunpack.c.l.b16 %v322
    %v839 = vunpack.c.l.b16 %v323
    %v840 = vunpack.c.l.b16 %v324
    %v841 = vunpack.c.l.b16 %v325
    %v842 = vunpack.c.l.b16 %v326
    %v843 = vunpack.c.l.b16 %v327
    %v844 = vunpack.c.l.b16 %v328
    %v845 = vpack.c.b16 %v590, %v589
    %v846 = vpack.c.b16 %v592, %v591
    %v847 = vpack.c.b16 %v594, %v593
    %v848 = vpack.c.b16 %v596, %v595
    %v849 = vpack.c.b16 %v598, %v597
    %v850 = vpack.c.b16 %v600, %v599
    %v851 = vpack.c.b16 %v602, %v601
    %v852 = vpack.c.b16 %v604, %v603
    %v853 = vpack.c.b16 %v606, %v605
    %v854 = vpack.c.b16 %v608, %v607
    %v855 = vpack.c.b16 %v610, %v609
    %v856 = vpack.c.b16 %v612, %v611
    %v857 = vpack.c.b16 %v614, %v613
    %v858 = vpack.c.b16 %v616, %v615
    %v859 = vpack.c.b16 %v618, %v617
    %v860 = vpack.c.b16 %v620, %v619
    %v861 = vpack.c.b16 %v622, %v621
    %v862 = vpack.c.b16 %v624, %v623
    %v863 = vpack.c.b16 %v626, %v625
    %v864 = vpack.c.b16 %v628, %v627
    %v865 = vpack.c.b16 %v630, %v629
    %v866 = vpack.c.b16 %v632, %v631
    %v867 = vpack.c.b16 %v634, %v633
    %v868 = vpack.c.b16 %v636, %v635
    %v869 = vpack.c.b16 %v638, %v637
    %v870 = vpack.c.b16 %v640, %v639
    %v871 = vpack.c.b16 %v642, %v641
    %v872 = vpack.c.b16 %v644, %v643
    %v873 = vpack.c.b16 %v646, %v645
    %v874 = vpack.c.b16 %v648, %v647
    %v875 = vpack.c.b16 %v650, %v649
    %v876 = vpack.c.b16 %v652, %v651
    %v877 = vpack.c.b16 %v654, %v653
    %v878 = vpack.c.b16 %v656, %v655
    %v879 = vpack.c.b16 %v658, %v657
    %v880 = vpack.c.b16 %v660, %v659
    %v881 = vpack.c.b16 %v662, %v661
    %v882 = vpack.c.b16 %v664, %v663
    %v883 = vpack.c.b16 %v666, %v665
    %v884 = vpack.c.b16 %v668, %v667
    %v885 = vpack.c.b16 %v670, %v669
    %v886 = vpack.c.b16 %v672, %v671
    %v887 = vpack.c.b16 %v674, %v673
    %v888 = vpack.c.b16 %v676, %v675
    %v889 = vpack.c.b16 %v678, %v677
    %v890 = vpack.c.b16 %v680, %v679
    %v891 = vpack.c.b16 %v682, %v681
    %v892 = vpack.c.b16 %v684, %v683
    %v893 = vpack.c.b16 %v686, %v685
    %v894 = vpack.c.b16 %v688, %v687
    %v895 = vpack.c.b16 %v690, %v689
    %v896 = vpack.c.b16 %v692, %v691
    %v897 = vpack.c.b16 %v694, %v693
    %v898 = vpack.c.b16 %v696, %v695
    %v899 = vpack.c.b16 %v698, %v697
    %v900 = vpack.c.b16 %v700, %v699
    %v901 = vpack.c.b16 %v702, %v701
    %v902 = vpack.c.b16 %v704, %v703
    %v903 = vpack.c.b16 %v706, %v705
    %v904 = vpack.c.b16 %v708, %v707
    %v905 = vpack.c.b16 %v710, %v709
    %v906 = vpack.c.b16 %v712, %v711
    %v907 = vpack.c.b16 %v714, %v713
    %v908 = vpack.c.b16 %v716, %v715
    %v909 = vpack.c.b16 %v718, %v717
    %v910 = vpack.c.b16 %v720, %v719
    %v911 = vpack.c.b16 %v722, %v721
    %v912 = vpack.c.b16 %v724, %v723
    %v913 = vpack.c.b16 %v726, %v725
    %v914 = vpack.c.b16 %v728, %v727
    %v915 = vpack.c.b16 %v730, %v729
    %v916 = vpack.c.b16 %v732, %v731
    %v917 = vpack.c.b16 %v734, %v733
    %v918 = vpack.c.b16 %v736, %v735
    %v919 = vpack.c.b16 %v738, %v737
    %v920 = vpack.c.b16 %v740, %v739
    %v921 = vpack.c.b16 %v742, %v741
    %v922 = vpack.c.b16 %v744, %v743
    %v923 = vpack.c.b16 %v746, %v745
    %v924 = vpack.c.b16 %v748, %v747
    %v925 = vpack.c.b16 %v750, %v749
    %v926 = vpack.c.b16 %v752, %v751
    %v927 = vpack.c.b16 %v754, %v753
    %v928 = vpack.c.b16 %v756, %v755
    %v929 = vpack.c.b16 %v758, %v757
    %v930 = vpack.c.b16 %v760, %v759
    %v931 = vpack.c.b16 %v762, %v761
    %v932 = vpack.c.b16 %v764, %v763
    %v933 = vpack.c.b16 %v766, %v765
    %v934 = vpack.c.b16 %v768, %v767
    %v935 = vpack.c.b16 %v770, %v769
    %v936 = vpack.c.b16 %v772, %v771
    %v937 = vpack.c.b16 %v774, %v773
    %v938 = vpack.c.b16 %v776, %v775
    %v939 = vpack.c.b16 %v778, %v777
    %v940 = vpack.c.b16 %v780, %v779
    %v941 = vpack.c.b16 %v782, %v781
    %v942 = vpack.c.b16 %v784, %v783
    %v943 = vpack.c.b16 %v786, %v785
    %v944 = vpack.c.b16 %v788, %v787
    %v945 = vpack.c.b16 %v790, %v789
    %v946 = vpack.c.b16 %v792, %v791
    %v947 = vpack.c.b16 %v794, %v793
    %v948 = vpack.c.b16 %v796, %v795
    %v949 = vpack.c.b16 %v798, %v797
    %v950 = vpack.c.b16 %v800, %v799
    %v951 = vpack.c.b16 %v802, %v801
    %v952 = vpack.c.b16 %v804, %v803
    %v953 = vpack.c.b16 %v806, %v805
    %v954 = vpack.c.b16 %v808, %v807
    %v955 = vpack.c.b16 %v810, %v809
    %v956 = vpack.c.b16 %v812, %v811
    %v957 = vpack.c.b16 %v814, %v813
    %v958 = vpack.c.b16 %v816, %v815
    %v959 = vpack.c.b16 %v818, %v817
    %v960 = vpack.c.b16 %v820, %v819
    %v961 = vpack.c.b16 %v822, %v821
    %v962 = vpack.c.b16 %v824, %v823
    %v963 = vpack.c.b16 %v826, %v825
    %v964 = vpack.c.b16 %v828, %v827
    %v965 = vpack.c.b16 %v830, %v829
    %v966 = vpack.c.b16 %v832, %v831
    %v967 = vpack.c.b16 %v834, %v833
    %v968 = vpack.c.b16 %v836, %v835
    %v969 = vpack.c.b16 %v838, %v837
    %v970 = vpack.c.b16 %v840, %v839
    %v971 = vpack.c.b16 %v842, %v841
    %v972 = vpack.c.b16 %v844, %v843
    %v977 = vunpack.c.l.b16 %v329
    %v978 = vunpack.c.l.b16 %v330
    %v979 = vunpack.c.l.b16 %v331
    %v980 = vunpack.c.l.b16 %v332
    %v981 = vpack.c.b16 %v978, %v977
    %v982 = vpack.c.b16 %v980, %v979
    %v986 = vsel %vm55, %v845, 0
    %v989 = vsel %vm55, %v846, 0
    %v992 = vsel %vm55, %v847, 0
    %v995 = vsel %vm55, %v848, 0
    %v998 = vsel %vm55, %v849, 0
    %v1001 = vsel %vm55, %v850, 0
    %v1004 = vsel %vm55, %v851, 0
    %v1007 = vsel %vm55, %v852, 0
    %v1010 = vsel %vm55, %v853, 0
    %v1013 = vsel %vm55, %v854, 0
    %v1016 = vsel %vm55, %v855, 0
    %v1019 = vsel %vm55, %v856, 0
    %v1022 = vsel %vm55, %v857, 0
    %v1025 = vsel %vm55, %v858, 0
    %v1028 = vsel %vm55, %v859, 0
    %v1031 = vsel %vm55, %v860, 0
    %v1034 = vsel %vm55, %v861, 0
    %v1037 = vsel %vm55, %v862, 0
    %v1040 = vsel %vm55, %v863, 0
    %v1043 = vsel %vm55, %v864, 0
    %v1046 = vsel %vm55, %v865, 0
    %v1049 = vsel %vm55, %v866, 0
    %v1052 = vsel %vm55, %v867, 0
    %v1055 = vsel %vm55, %v868, 0
    %v1058 = vsel %vm55, %v869, 0
    %v1061 = vsel %vm55, %v870, 0
    %v1064 = vsel %vm55, %v871, 0
    %v1067 = vsel %vm55, %v872, 0
    %v1070 = vsel %vm55, %v873, 0
    %v1073 = vsel %vm55, %v874, 0
    %v1076 = vsel %vm55, %v875, 0
    %v1079 = vsel %vm55, %v876, 0
    %v1082 = vsel %vm55, %v877, 0
    %v1085 = vsel %vm55, %v878, 0
    %v1088 = vsel %vm55, %v879, 0
    %v1091 = vsel %vm55, %v880, 0
    %v1094 = vsel %vm55, %v881, 0
    %v1097 = vsel %vm55, %v882, 0
    %v1100 = vsel %vm55, %v883, 0
    %v1103 = vsel %vm55, %v884, 0
    %v1106 = vsel %vm55, %v885, 0
    %v1109 = vsel %vm55, %v886, 0
    %v1112 = vsel %vm55, %v887, 0
    %v1115 = vsel %vm55, %v888, 0
    %v1118 = vsel %vm55, %v889, 0
    %v1121 = vsel %vm55, %v890, 0
    %v1124 = vsel %vm55, %v891, 0
    %v1127 = vsel %vm55, %v892, 0
    %v1130 = vsel %vm55, %v893, 0
    %v1133 = vsel %vm55, %v894, 0
    %v1136 = vsel %vm55, %v895, 0
    %v1139 = vsel %vm55, %v896, 0
    %v1142 = vsel %vm55, %v897, 0
    %v1145 = vsel %vm55, %v898, 0
    %v1148 = vsel %vm55, %v899, 0
    %v1151 = vsel %vm55, %v900, 0
    %v1154 = vsel %vm55, %v901, 0
    %v1157 = vsel %vm55, %v902, 0
    %v1160 = vsel %vm55, %v903, 0
    %v1163 = vsel %vm55, %v904, 0
    %v1166 = vsel %vm55, %v905, 0
    %v1169 = vsel %vm55, %v906, 0
    %v1172 = vsel %vm55, %v907, 0
    %v1175 = vsel %vm55, %v908, 0
    %v1178 = vsel %vm55, %v909, 0
    %v1181 = vsel %vm55, %v910, 0
    %v1184 = vsel %vm55, %v911, 0
    %v1187 = vsel %vm55, %v912, 0
    %v1190 = vsel %vm55, %v913, 0
    %v1193 = vsel %vm55, %v914, 0
    %v1196 = vsel %vm55, %v915, 0
    %v1199 = vsel %vm55, %v916, 0
    %v1202 = vsel %vm55, %v917, 0
    %v1205 = vsel %vm55, %v918, 0
    %v1208 = vsel %vm55, %v919, 0
    %v1211 = vsel %vm55, %v920, 0
    %v1214 = vsel %vm55, %v921, 0
    %v1217 = vsel %vm55, %v922, 0
    %v1220 = vsel %vm55, %v923, 0
    %v1223 = vsel %vm55, %v924, 0
    %v1226 = vsel %vm55, %v925, 0
    %v1229 = vsel %vm55, %v926, 0
    %v1232 = vsel %vm55, %v927, 0
    %v1235 = vsel %vm55, %v928, 0
    %v1238 = vsel %vm55, %v929, 0
    %v1241 = vsel %vm55, %v930, 0
    %v1244 = vsel %vm55, %v931, 0
    %v1247 = vsel %vm55, %v932, 0
    %v1250 = vsel %vm55, %v933, 0
    %v1253 = vsel %vm55, %v934, 0
    %v1256 = vsel %vm55, %v935, 0
    %v1259 = vsel %vm55, %v936, 0
    %v1262 = vsel %vm55, %v937, 0
    %v1265 = vsel %vm55, %v938, 0
    %v1268 = vsel %vm55, %v939, 0
    %v1271 = vsel %vm55, %v940, 0
    %v1274 = vsel %vm55, %v941, 0
    %v1277 = vsel %vm55, %v942, 0
    %v1280 = vsel %vm55, %v943, 0
    %v1283 = vsel %vm55, %v944, 0
    %v1286 = vsel %vm55, %v945, 0
    %v1289 = vsel %vm55, %v946, 0
    %v1292 = vsel %vm55, %v947, 0
    %v1295 = vsel %vm55, %v948, 0
    %v1298 = vsel %vm55, %v949, 0
    %v1301 = vsel %vm55, %v950, 0
    %v1304 = vsel %vm55, %v951, 0
    %v1307 = vsel %vm55, %v952, 0
    %v1310 = vsel %vm55, %v953, 0
    %v1313 = vsel %vm55, %v954, 0
    %v1316 = vsel %vm55, %v955, 0
    %v1319 = vsel %vm55, %v956, 0
    %v1322 = vsel %vm55, %v957, 0
    %v1325 = vsel %vm55, %v958, 0
    %v1328 = vsel %vm55, %v959, 0
    %v1331 = vsel %vm55, %v960, 0
    %v1334 = vsel %vm55, %v961, 0
    %v1337 = vsel %vm55, %v962, 0
    %v1340 = vsel %vm55, %v963, 0
    %v1343 = vsel %vm55, %v964, 0
    %v1346 = vsel %vm55, %v965, 0
    %v1349 = vsel %vm55, %v966, 0
    %v1352 = vsel %vm55, %v967, 0
    %v1355 = vsel %vm55, %v968, 0
    %v1358 = vsel %vm55, %v969, 0
    %v1361 = vsel %vm55, %v970, 0
    %v1364 = vsel %vm55, %v971, 0
    %v1367 = vsel %vm55, %v972, 0
    %1369 = vmatpush.bf16.msra.mxu0 0
    %1370 = vmatpush.bf16.msra.mxu0 0
    %1371 = vmatpush.bf16.msra.mxu0 0
    %1372 = vmatpush.bf16.msra.mxu0 0
    %1373 = vmatpush.bf16.msra.mxu0 0
    %1374 = vmatpush.bf16.msra.mxu0 0
    %1375 = vmatpush.bf16.msra.mxu0 %v982
    %1376 = vmatpush.bf16.msra.mxu0 %v981
    %1377 = vmatmul.bf16.gmra.mxu0 %v986
    %v1378 = vpop.f32.mrf.mxu0
    %v1379 = vadd.f32 0.0, %v1378
    %v1380 = vpop.f32.mrf.mxu0
    %v1381 = vadd.f32 0.0, %v1380
    %1382 = vmatmul.bf16.gmra.mxu0 %v989
    %v1383 = vpop.f32.mrf.mxu0
    %v1384 = vadd.f32 0.0, %v1383
    %v1385 = vpop.f32.mrf.mxu0
    %v1386 = vadd.f32 0.0, %v1385
    %1387 = vmatmul.bf16.gmra.mxu0 %v992
    %v1388 = vpop.f32.mrf.mxu0
    %v1389 = vadd.f32 0.0, %v1388
    %v1390 = vpop.f32.mrf.mxu0
    %v1391 = vadd.f32 0.0, %v1390
    %1392 = vmatmul.bf16.gmra.mxu0 %v995
    %v1393 = vpop.f32.mrf.mxu0
    %v1394 = vadd.f32 0.0, %v1393
    %v1395 = vpop.f32.mrf.mxu0
    %v1396 = vadd.f32 0.0, %v1395
    %1397 = vmatmul.bf16.gmra.mxu0 %v998
    %v1398 = vpop.f32.mrf.mxu0
    %v1399 = vadd.f32 0.0, %v1398
    %v1400 = vpop.f32.mrf.mxu0
    %v1401 = vadd.f32 0.0, %v1400
    %1402 = vmatmul.bf16.gmra.mxu0 %v1001
    %v1403 = vpop.f32.mrf.mxu0
    %v1404 = vadd.f32 0.0, %v1403
    %v1405 = vpop.f32.mrf.mxu0
    %v1406 = vadd.f32 0.0, %v1405
    %1407 = vmatmul.bf16.gmra.mxu0 %v1004
    %v1408 = vpop.f32.mrf.mxu0
    %v1409 = vadd.f32 0.0, %v1408
    %v1410 = vpop.f32.mrf.mxu0
    %v1411 = vadd.f32 0.0, %v1410
    %1412 = vmatmul.bf16.gmra.mxu0 %v1007
    %v1413 = vpop.f32.mrf.mxu0
    %v1414 = vadd.f32 0.0, %v1413
    %v1415 = vpop.f32.mrf.mxu0
    %v1416 = vadd.f32 0.0, %v1415
    %1417 = vmatmul.bf16.gmra.mxu0 %v1010
    %v1418 = vpop.f32.mrf.mxu0
    %v1419 = vadd.f32 0.0, %v1418
    %v1420 = vpop.f32.mrf.mxu0
    %v1421 = vadd.f32 0.0, %v1420
    %1422 = vmatmul.bf16.gmra.mxu0 %v1013
    %v1423 = vpop.f32.mrf.mxu0
    %v1424 = vadd.f32 0.0, %v1423
    %v1425 = vpop.f32.mrf.mxu0
    %v1426 = vadd.f32 0.0, %v1425
    %1427 = vmatmul.bf16.gmra.mxu0 %v1016
    %v1428 = vpop.f32.mrf.mxu0
    %v1429 = vadd.f32 0.0, %v1428
    %v1430 = vpop.f32.mrf.mxu0
    %v1431 = vadd.f32 0.0, %v1430
    %1432 = vmatmul.bf16.gmra.mxu0 %v1019
    %v1433 = vpop.f32.mrf.mxu0
    %v1434 = vadd.f32 0.0, %v1433
    %v1435 = vpop.f32.mrf.mxu0
    %v1436 = vadd.f32 0.0, %v1435
    %1437 = vmatmul.bf16.gmra.mxu0 %v1022
    %v1438 = vpop.f32.mrf.mxu0
    %v1439 = vadd.f32 0.0, %v1438
    %v1440 = vpop.f32.mrf.mxu0
    %v1441 = vadd.f32 0.0, %v1440
    %1442 = vmatmul.bf16.gmra.mxu0 %v1025
    %v1443 = vpop.f32.mrf.mxu0
    %v1444 = vadd.f32 0.0, %v1443
    %v1445 = vpop.f32.mrf.mxu0
    %v1446 = vadd.f32 0.0, %v1445
    %1447 = vmatmul.bf16.gmra.mxu0 %v1028
    %v1448 = vpop.f32.mrf.mxu0
    %v1449 = vadd.f32 0.0, %v1448
    %v1450 = vpop.f32.mrf.mxu0
    %v1451 = vadd.f32 0.0, %v1450
    %1452 = vmatmul.bf16.gmra.mxu0 %v1031
    %v1453 = vpop.f32.mrf.mxu0
    %v1454 = vadd.f32 0.0, %v1453
    %v1455 = vpop.f32.mrf.mxu0
    %v1456 = vadd.f32 0.0, %v1455
    %1457 = vmatmul.bf16.gmra.mxu0 %v1034
    %v1458 = vpop.f32.mrf.mxu0
    %v1459 = vadd.f32 0.0, %v1458
    %v1460 = vpop.f32.mrf.mxu0
    %v1461 = vadd.f32 0.0, %v1460
    %1462 = vmatmul.bf16.gmra.mxu0 %v1037
    %v1463 = vpop.f32.mrf.mxu0
    %v1464 = vadd.f32 0.0, %v1463
    %v1465 = vpop.f32.mrf.mxu0
    %v1466 = vadd.f32 0.0, %v1465
    %1467 = vmatmul.bf16.gmra.mxu0 %v1040
    %v1468 = vpop.f32.mrf.mxu0
    %v1469 = vadd.f32 0.0, %v1468
    %v1470 = vpop.f32.mrf.mxu0
    %v1471 = vadd.f32 0.0, %v1470
    %1472 = vmatmul.bf16.gmra.mxu0 %v1043
    %v1473 = vpop.f32.mrf.mxu0
    %v1474 = vadd.f32 0.0, %v1473
    %v1475 = vpop.f32.mrf.mxu0
    %v1476 = vadd.f32 0.0, %v1475
    %1477 = vmatmul.bf16.gmra.mxu0 %v1046
    %v1478 = vpop.f32.mrf.mxu0
    %v1479 = vadd.f32 0.0, %v1478
    %v1480 = vpop.f32.mrf.mxu0
    %v1481 = vadd.f32 0.0, %v1480
    %1482 = vmatmul.bf16.gmra.mxu0 %v1049
    %v1483 = vpop.f32.mrf.mxu0
    %v1484 = vadd.f32 0.0, %v1483
    %v1485 = vpop.f32.mrf.mxu0
    %v1486 = vadd.f32 0.0, %v1485
    %1487 = vmatmul.bf16.gmra.mxu0 %v1052
    %v1488 = vpop.f32.mrf.mxu0
    %v1489 = vadd.f32 0.0, %v1488
    %v1490 = vpop.f32.mrf.mxu0
    %v1491 = vadd.f32 0.0, %v1490
    %1492 = vmatmul.bf16.gmra.mxu0 %v1055
    %v1493 = vpop.f32.mrf.mxu0
    %v1494 = vadd.f32 0.0, %v1493
    %v1495 = vpop.f32.mrf.mxu0
    %v1496 = vadd.f32 0.0, %v1495
    %1497 = vmatmul.bf16.gmra.mxu0 %v1058
    %v1498 = vpop.f32.mrf.mxu0
    %v1499 = vadd.f32 0.0, %v1498
    %v1500 = vpop.f32.mrf.mxu0
    %v1501 = vadd.f32 0.0, %v1500
    %1502 = vmatmul.bf16.gmra.mxu0 %v1061
    %v1503 = vpop.f32.mrf.mxu0
    %v1504 = vadd.f32 0.0, %v1503
    %v1505 = vpop.f32.mrf.mxu0
    %v1506 = vadd.f32 0.0, %v1505
    %1507 = vmatmul.bf16.gmra.mxu0 %v1064
    %v1508 = vpop.f32.mrf.mxu0
    %v1509 = vadd.f32 0.0, %v1508
    %v1510 = vpop.f32.mrf.mxu0
    %v1511 = vadd.f32 0.0, %v1510
    %1512 = vmatmul.bf16.gmra.mxu0 %v1067
    %v1513 = vpop.f32.mrf.mxu0
    %v1514 = vadd.f32 0.0, %v1513
    %v1515 = vpop.f32.mrf.mxu0
    %v1516 = vadd.f32 0.0, %v1515
    %1517 = vmatmul.bf16.gmra.mxu0 %v1070
    %v1518 = vpop.f32.mrf.mxu0
    %v1519 = vadd.f32 0.0, %v1518
    %v1520 = vpop.f32.mrf.mxu0
    %v1521 = vadd.f32 0.0, %v1520
    %1522 = vmatmul.bf16.gmra.mxu0 %v1073
    %v1523 = vpop.f32.mrf.mxu0
    %v1524 = vadd.f32 0.0, %v1523
    %v1525 = vpop.f32.mrf.mxu0
    %v1526 = vadd.f32 0.0, %v1525
    %1527 = vmatmul.bf16.gmra.mxu0 %v1076
    %v1528 = vpop.f32.mrf.mxu0
    %v1529 = vadd.f32 0.0, %v1528
    %v1530 = vpop.f32.mrf.mxu0
    %v1531 = vadd.f32 0.0, %v1530
    %1532 = vmatmul.bf16.gmra.mxu0 %v1079
    %v1533 = vpop.f32.mrf.mxu0
    %v1534 = vadd.f32 0.0, %v1533
    %v1535 = vpop.f32.mrf.mxu0
    %v1536 = vadd.f32 0.0, %v1535
    %1537 = vmatmul.bf16.gmra.mxu0 %v1082
    %v1538 = vpop.f32.mrf.mxu0
    %v1539 = vadd.f32 0.0, %v1538
    %v1540 = vpop.f32.mrf.mxu0
    %v1541 = vadd.f32 0.0, %v1540
    %1542 = vmatmul.bf16.gmra.mxu0 %v1085
    %v1543 = vpop.f32.mrf.mxu0
    %v1544 = vadd.f32 0.0, %v1543
    %v1545 = vpop.f32.mrf.mxu0
    %v1546 = vadd.f32 0.0, %v1545
    %1547 = vmatmul.bf16.gmra.mxu0 %v1088
    %v1548 = vpop.f32.mrf.mxu0
    %v1549 = vadd.f32 0.0, %v1548
    %v1550 = vpop.f32.mrf.mxu0
    %v1551 = vadd.f32 0.0, %v1550
    %1552 = vmatmul.bf16.gmra.mxu0 %v1091
    %v1553 = vpop.f32.mrf.mxu0
    %v1554 = vadd.f32 0.0, %v1553
    %v1555 = vpop.f32.mrf.mxu0
    %v1556 = vadd.f32 0.0, %v1555
    %1557 = vmatmul.bf16.gmra.mxu0 %v1094
    %v1558 = vpop.f32.mrf.mxu0
    %v1559 = vadd.f32 0.0, %v1558
    %v1560 = vpop.f32.mrf.mxu0
    %v1561 = vadd.f32 0.0, %v1560
    %1562 = vmatmul.bf16.gmra.mxu0 %v1097
    %v1563 = vpop.f32.mrf.mxu0
    %v1564 = vadd.f32 0.0, %v1563
    %v1565 = vpop.f32.mrf.mxu0
    %v1566 = vadd.f32 0.0, %v1565
    %1567 = vmatmul.bf16.gmra.mxu0 %v1100
    %v1568 = vpop.f32.mrf.mxu0
    %v1569 = vadd.f32 0.0, %v1568
    %v1570 = vpop.f32.mrf.mxu0
    %v1571 = vadd.f32 0.0, %v1570
    %1572 = vmatmul.bf16.gmra.mxu0 %v1103
    %v1573 = vpop.f32.mrf.mxu0
    %v1574 = vadd.f32 0.0, %v1573
    %v1575 = vpop.f32.mrf.mxu0
    %v1576 = vadd.f32 0.0, %v1575
    %1577 = vmatmul.bf16.gmra.mxu0 %v1106
    %v1578 = vpop.f32.mrf.mxu0
    %v1579 = vadd.f32 0.0, %v1578
    %v1580 = vpop.f32.mrf.mxu0
    %v1581 = vadd.f32 0.0, %v1580
    %1582 = vmatmul.bf16.gmra.mxu0 %v1109
    %v1583 = vpop.f32.mrf.mxu0
    %v1584 = vadd.f32 0.0, %v1583
    %v1585 = vpop.f32.mrf.mxu0
    %v1586 = vadd.f32 0.0, %v1585
    %1587 = vmatmul.bf16.gmra.mxu0 %v1112
    %v1588 = vpop.f32.mrf.mxu0
    %v1589 = vadd.f32 0.0, %v1588
    %v1590 = vpop.f32.mrf.mxu0
    %v1591 = vadd.f32 0.0, %v1590
    %1592 = vmatmul.bf16.gmra.mxu0 %v1115
    %v1593 = vpop.f32.mrf.mxu0
    %v1594 = vadd.f32 0.0, %v1593
    %v1595 = vpop.f32.mrf.mxu0
    %v1596 = vadd.f32 0.0, %v1595
    %1597 = vmatmul.bf16.gmra.mxu0 %v1118
    %v1598 = vpop.f32.mrf.mxu0
    %v1599 = vadd.f32 0.0, %v1598
    %v1600 = vpop.f32.mrf.mxu0
    %v1601 = vadd.f32 0.0, %v1600
    %1602 = vmatmul.bf16.gmra.mxu0 %v1121
    %v1603 = vpop.f32.mrf.mxu0
    %v1604 = vadd.f32 0.0, %v1603
    %v1605 = vpop.f32.mrf.mxu0
    %v1606 = vadd.f32 0.0, %v1605
    %1607 = vmatmul.bf16.gmra.mxu0 %v1124
    %v1608 = vpop.f32.mrf.mxu0
    %v1609 = vadd.f32 0.0, %v1608
    %v1610 = vpop.f32.mrf.mxu0
    %v1611 = vadd.f32 0.0, %v1610
    %1612 = vmatmul.bf16.gmra.mxu0 %v1127
    %v1613 = vpop.f32.mrf.mxu0
    %v1614 = vadd.f32 0.0, %v1613
    %v1615 = vpop.f32.mrf.mxu0
    %v1616 = vadd.f32 0.0, %v1615
    %1617 = vmatmul.bf16.gmra.mxu0 %v1130
    %v1618 = vpop.f32.mrf.mxu0
    %v1619 = vadd.f32 0.0, %v1618
    %v1620 = vpop.f32.mrf.mxu0
    %v1621 = vadd.f32 0.0, %v1620
    %1622 = vmatmul.bf16.gmra.mxu0 %v1133
    %v1623 = vpop.f32.mrf.mxu0
    %v1624 = vadd.f32 0.0, %v1623
    %v1625 = vpop.f32.mrf.mxu0
    %v1626 = vadd.f32 0.0, %v1625
    %1627 = vmatmul.bf16.gmra.mxu0 %v1136
    %v1628 = vpop.f32.mrf.mxu0
    %v1629 = vadd.f32 0.0, %v1628
    %v1630 = vpop.f32.mrf.mxu0
    %v1631 = vadd.f32 0.0, %v1630
    %1632 = vmatmul.bf16.gmra.mxu0 %v1139
    %v1633 = vpop.f32.mrf.mxu0
    %v1634 = vadd.f32 0.0, %v1633
    %v1635 = vpop.f32.mrf.mxu0
    %v1636 = vadd.f32 0.0, %v1635
    %1637 = vmatmul.bf16.gmra.mxu0 %v1142
    %v1638 = vpop.f32.mrf.mxu0
    %v1639 = vadd.f32 0.0, %v1638
    %v1640 = vpop.f32.mrf.mxu0
    %v1641 = vadd.f32 0.0, %v1640
    %1642 = vmatmul.bf16.gmra.mxu0 %v1145
    %v1643 = vpop.f32.mrf.mxu0
    %v1644 = vadd.f32 0.0, %v1643
    %v1645 = vpop.f32.mrf.mxu0
    %v1646 = vadd.f32 0.0, %v1645
    %1647 = vmatmul.bf16.gmra.mxu0 %v1148
    %v1648 = vpop.f32.mrf.mxu0
    %v1649 = vadd.f32 0.0, %v1648
    %v1650 = vpop.f32.mrf.mxu0
    %v1651 = vadd.f32 0.0, %v1650
    %1652 = vmatmul.bf16.gmra.mxu0 %v1151
    %v1653 = vpop.f32.mrf.mxu0
    %v1654 = vadd.f32 0.0, %v1653
    %v1655 = vpop.f32.mrf.mxu0
    %v1656 = vadd.f32 0.0, %v1655
    %1657 = vmatmul.bf16.gmra.mxu0 %v1154
    %v1658 = vpop.f32.mrf.mxu0
    %v1659 = vadd.f32 0.0, %v1658
    %v1660 = vpop.f32.mrf.mxu0
    %v1661 = vadd.f32 0.0, %v1660
    %1662 = vmatmul.bf16.gmra.mxu0 %v1157
    %v1663 = vpop.f32.mrf.mxu0
    %v1664 = vadd.f32 0.0, %v1663
    %v1665 = vpop.f32.mrf.mxu0
    %v1666 = vadd.f32 0.0, %v1665
    %1667 = vmatmul.bf16.gmra.mxu0 %v1160
    %v1668 = vpop.f32.mrf.mxu0
    %v1669 = vadd.f32 0.0, %v1668
    %v1670 = vpop.f32.mrf.mxu0
    %v1671 = vadd.f32 0.0, %v1670
    %1672 = vmatmul.bf16.gmra.mxu0 %v1163
    %v1673 = vpop.f32.mrf.mxu0
    %v1674 = vadd.f32 0.0, %v1673
    %v1675 = vpop.f32.mrf.mxu0
    %v1676 = vadd.f32 0.0, %v1675
    %1677 = vmatmul.bf16.gmra.mxu0 %v1166
    %v1678 = vpop.f32.mrf.mxu0
    %v1679 = vadd.f32 0.0, %v1678
    %v1680 = vpop.f32.mrf.mxu0
    %v1681 = vadd.f32 0.0, %v1680
    %1682 = vmatmul.bf16.gmra.mxu0 %v1169
    %v1683 = vpop.f32.mrf.mxu0
    %v1684 = vadd.f32 0.0, %v1683
    %v1685 = vpop.f32.mrf.mxu0
    %v1686 = vadd.f32 0.0, %v1685
    %1687 = vmatmul.bf16.gmra.mxu0 %v1172
    %v1688 = vpop.f32.mrf.mxu0
    %v1689 = vadd.f32 0.0, %v1688
    %v1690 = vpop.f32.mrf.mxu0
    %v1691 = vadd.f32 0.0, %v1690
    %1692 = vmatmul.bf16.gmra.mxu0 %v1175
    %v1693 = vpop.f32.mrf.mxu0
    %v1694 = vadd.f32 0.0, %v1693
    %v1695 = vpop.f32.mrf.mxu0
    %v1696 = vadd.f32 0.0, %v1695
    %1697 = vmatmul.bf16.gmra.mxu0 %v1178
    %v1698 = vpop.f32.mrf.mxu0
    %v1699 = vadd.f32 0.0, %v1698
    %v1700 = vpop.f32.mrf.mxu0
    %v1701 = vadd.f32 0.0, %v1700
    %1702 = vmatmul.bf16.gmra.mxu0 %v1181
    %v1703 = vpop.f32.mrf.mxu0
    %v1704 = vadd.f32 0.0, %v1703
    %v1705 = vpop.f32.mrf.mxu0
    %v1706 = vadd.f32 0.0, %v1705
    %1707 = vmatmul.bf16.gmra.mxu0 %v1184
    %v1708 = vpop.f32.mrf.mxu0
    %v1709 = vadd.f32 0.0, %v1708
    %v1710 = vpop.f32.mrf.mxu0
    %v1711 = vadd.f32 0.0, %v1710
    %1712 = vmatmul.bf16.gmra.mxu0 %v1187
    %v1713 = vpop.f32.mrf.mxu0
    %v1714 = vadd.f32 0.0, %v1713
    %v1715 = vpop.f32.mrf.mxu0
    %v1716 = vadd.f32 0.0, %v1715
    %1717 = vmatmul.bf16.gmra.mxu0 %v1190
    %v1718 = vpop.f32.mrf.mxu0
    %v1719 = vadd.f32 0.0, %v1718
    %v1720 = vpop.f32.mrf.mxu0
    %v1721 = vadd.f32 0.0, %v1720
    %1722 = vmatmul.bf16.gmra.mxu0 %v1193
    %v1723 = vpop.f32.mrf.mxu0
    %v1724 = vadd.f32 0.0, %v1723
    %v1725 = vpop.f32.mrf.mxu0
    %v1726 = vadd.f32 0.0, %v1725
    %1727 = vmatmul.bf16.gmra.mxu0 %v1196
    %v1728 = vpop.f32.mrf.mxu0
    %v1729 = vadd.f32 0.0, %v1728
    %v1730 = vpop.f32.mrf.mxu0
    %v1731 = vadd.f32 0.0, %v1730
    %1732 = vmatmul.bf16.gmra.mxu0 %v1199
    %v1733 = vpop.f32.mrf.mxu0
    %v1734 = vadd.f32 0.0, %v1733
    %v1735 = vpop.f32.mrf.mxu0
    %v1736 = vadd.f32 0.0, %v1735
    %1737 = vmatmul.bf16.gmra.mxu0 %v1202
    %v1738 = vpop.f32.mrf.mxu0
    %v1739 = vadd.f32 0.0, %v1738
    %v1740 = vpop.f32.mrf.mxu0
    %v1741 = vadd.f32 0.0, %v1740
    %1742 = vmatmul.bf16.gmra.mxu0 %v1205
    %v1743 = vpop.f32.mrf.mxu0
    %v1744 = vadd.f32 0.0, %v1743
    %v1745 = vpop.f32.mrf.mxu0
    %v1746 = vadd.f32 0.0, %v1745
    %1747 = vmatmul.bf16.gmra.mxu0 %v1208
    %v1748 = vpop.f32.mrf.mxu0
    %v1749 = vadd.f32 0.0, %v1748
    %v1750 = vpop.f32.mrf.mxu0
    %v1751 = vadd.f32 0.0, %v1750
    %1752 = vmatmul.bf16.gmra.mxu0 %v1211
    %v1753 = vpop.f32.mrf.mxu0
    %v1754 = vadd.f32 0.0, %v1753
    %v1755 = vpop.f32.mrf.mxu0
    %v1756 = vadd.f32 0.0, %v1755
    %1757 = vmatmul.bf16.gmra.mxu0 %v1214
    %v1758 = vpop.f32.mrf.mxu0
    %v1759 = vadd.f32 0.0, %v1758
    %v1760 = vpop.f32.mrf.mxu0
    %v1761 = vadd.f32 0.0, %v1760
    %1762 = vmatmul.bf16.gmra.mxu0 %v1217
    %v1763 = vpop.f32.mrf.mxu0
    %v1764 = vadd.f32 0.0, %v1763
    %v1765 = vpop.f32.mrf.mxu0
    %v1766 = vadd.f32 0.0, %v1765
    %1767 = vmatmul.bf16.gmra.mxu0 %v1220
    %v1768 = vpop.f32.mrf.mxu0
    %v1769 = vadd.f32 0.0, %v1768
    %v1770 = vpop.f32.mrf.mxu0
    %v1771 = vadd.f32 0.0, %v1770
    %1772 = vmatmul.bf16.gmra.mxu0 %v1223
    %v1773 = vpop.f32.mrf.mxu0
    %v1774 = vadd.f32 0.0, %v1773
    %v1775 = vpop.f32.mrf.mxu0
    %v1776 = vadd.f32 0.0, %v1775
    %1777 = vmatmul.bf16.gmra.mxu0 %v1226
    %v1778 = vpop.f32.mrf.mxu0
    %v1779 = vadd.f32 0.0, %v1778
    %v1780 = vpop.f32.mrf.mxu0
    %v1781 = vadd.f32 0.0, %v1780
    %1782 = vmatmul.bf16.gmra.mxu0 %v1229
    %v1783 = vpop.f32.mrf.mxu0
    %v1784 = vadd.f32 0.0, %v1783
    %v1785 = vpop.f32.mrf.mxu0
    %v1786 = vadd.f32 0.0, %v1785
    %1787 = vmatmul.bf16.gmra.mxu0 %v1232
    %v1788 = vpop.f32.mrf.mxu0
    %v1789 = vadd.f32 0.0, %v1788
    %v1790 = vpop.f32.mrf.mxu0
    %v1791 = vadd.f32 0.0, %v1790
    %1792 = vmatmul.bf16.gmra.mxu0 %v1235
    %v1793 = vpop.f32.mrf.mxu0
    %v1794 = vadd.f32 0.0, %v1793
    %v1795 = vpop.f32.mrf.mxu0
    %v1796 = vadd.f32 0.0, %v1795
    %1797 = vmatmul.bf16.gmra.mxu0 %v1238
    %v1798 = vpop.f32.mrf.mxu0
    %v1799 = vadd.f32 0.0, %v1798
    %v1800 = vpop.f32.mrf.mxu0
    %v1801 = vadd.f32 0.0, %v1800
    %1802 = vmatmul.bf16.gmra.mxu0 %v1241
    %v1803 = vpop.f32.mrf.mxu0
    %v1804 = vadd.f32 0.0, %v1803
    %v1805 = vpop.f32.mrf.mxu0
    %v1806 = vadd.f32 0.0, %v1805
    %1807 = vmatmul.bf16.gmra.mxu0 %v1244
    %v1808 = vpop.f32.mrf.mxu0
    %v1809 = vadd.f32 0.0, %v1808
    %v1810 = vpop.f32.mrf.mxu0
    %v1811 = vadd.f32 0.0, %v1810
    %1812 = vmatmul.bf16.gmra.mxu0 %v1247
    %v1813 = vpop.f32.mrf.mxu0
    %v1814 = vadd.f32 0.0, %v1813
    %v1815 = vpop.f32.mrf.mxu0
    %v1816 = vadd.f32 0.0, %v1815
    %1817 = vmatmul.bf16.gmra.mxu0 %v1250
    %v1818 = vpop.f32.mrf.mxu0
    %v1819 = vadd.f32 0.0, %v1818
    %v1820 = vpop.f32.mrf.mxu0
    %v1821 = vadd.f32 0.0, %v1820
    %1822 = vmatmul.bf16.gmra.mxu0 %v1253
    %v1823 = vpop.f32.mrf.mxu0
    %v1824 = vadd.f32 0.0, %v1823
    %v1825 = vpop.f32.mrf.mxu0
    %v1826 = vadd.f32 0.0, %v1825
    %1827 = vmatmul.bf16.gmra.mxu0 %v1256
    %v1828 = vpop.f32.mrf.mxu0
    %v1829 = vadd.f32 0.0, %v1828
    %v1830 = vpop.f32.mrf.mxu0
    %v1831 = vadd.f32 0.0, %v1830
    %1832 = vmatmul.bf16.gmra.mxu0 %v1259
    %v1833 = vpop.f32.mrf.mxu0
    %v1834 = vadd.f32 0.0, %v1833
    %v1835 = vpop.f32.mrf.mxu0
    %v1836 = vadd.f32 0.0, %v1835
    %1837 = vmatmul.bf16.gmra.mxu0 %v1262
    %v1838 = vpop.f32.mrf.mxu0
    %v1839 = vadd.f32 0.0, %v1838
    %v1840 = vpop.f32.mrf.mxu0
    %v1841 = vadd.f32 0.0, %v1840
    %1842 = vmatmul.bf16.gmra.mxu0 %v1265
    %v1843 = vpop.f32.mrf.mxu0
    %v1844 = vadd.f32 0.0, %v1843
    %v1845 = vpop.f32.mrf.mxu0
    %v1846 = vadd.f32 0.0, %v1845
    %1847 = vmatmul.bf16.gmra.mxu0 %v1268
    %v1848 = vpop.f32.mrf.mxu0
    %v1849 = vadd.f32 0.0, %v1848
    %v1850 = vpop.f32.mrf.mxu0
    %v1851 = vadd.f32 0.0, %v1850
    %1852 = vmatmul.bf16.gmra.mxu0 %v1271
    %v1853 = vpop.f32.mrf.mxu0
    %v1854 = vadd.f32 0.0, %v1853
    %v1855 = vpop.f32.mrf.mxu0
    %v1856 = vadd.f32 0.0, %v1855
    %1857 = vmatmul.bf16.gmra.mxu0 %v1274
    %v1858 = vpop.f32.mrf.mxu0
    %v1859 = vadd.f32 0.0, %v1858
    %v1860 = vpop.f32.mrf.mxu0
    %v1861 = vadd.f32 0.0, %v1860
    %1862 = vmatmul.bf16.gmra.mxu0 %v1277
    %v1863 = vpop.f32.mrf.mxu0
    %v1864 = vadd.f32 0.0, %v1863
    %v1865 = vpop.f32.mrf.mxu0
    %v1866 = vadd.f32 0.0, %v1865
    %1867 = vmatmul.bf16.gmra.mxu0 %v1280
    %v1868 = vpop.f32.mrf.mxu0
    %v1869 = vadd.f32 0.0, %v1868
    %v1870 = vpop.f32.mrf.mxu0
    %v1871 = vadd.f32 0.0, %v1870
    %1872 = vmatmul.bf16.gmra.mxu0 %v1283
    %v1873 = vpop.f32.mrf.mxu0
    %v1874 = vadd.f32 0.0, %v1873
    %v1875 = vpop.f32.mrf.mxu0
    %v1876 = vadd.f32 0.0, %v1875
    %1877 = vmatmul.bf16.gmra.mxu0 %v1286
    %v1878 = vpop.f32.mrf.mxu0
    %v1879 = vadd.f32 0.0, %v1878
    %v1880 = vpop.f32.mrf.mxu0
    %v1881 = vadd.f32 0.0, %v1880
    %1882 = vmatmul.bf16.gmra.mxu0 %v1289
    %v1883 = vpop.f32.mrf.mxu0
    %v1884 = vadd.f32 0.0, %v1883
    %v1885 = vpop.f32.mrf.mxu0
    %v1886 = vadd.f32 0.0, %v1885
    %1887 = vmatmul.bf16.gmra.mxu0 %v1292
    %v1888 = vpop.f32.mrf.mxu0
    %v1889 = vadd.f32 0.0, %v1888
    %v1890 = vpop.f32.mrf.mxu0
    %v1891 = vadd.f32 0.0, %v1890
    %1892 = vmatmul.bf16.gmra.mxu0 %v1295
    %v1893 = vpop.f32.mrf.mxu0
    %v1894 = vadd.f32 0.0, %v1893
    %v1895 = vpop.f32.mrf.mxu0
    %v1896 = vadd.f32 0.0, %v1895
    %1897 = vmatmul.bf16.gmra.mxu0 %v1298
    %v1898 = vpop.f32.mrf.mxu0
    %v1899 = vadd.f32 0.0, %v1898
    %v1900 = vpop.f32.mrf.mxu0
    %v1901 = vadd.f32 0.0, %v1900
    %1902 = vmatmul.bf16.gmra.mxu0 %v1301
    %v1903 = vpop.f32.mrf.mxu0
    %v1904 = vadd.f32 0.0, %v1903
    %v1905 = vpop.f32.mrf.mxu0
    %v1906 = vadd.f32 0.0, %v1905
    %1907 = vmatmul.bf16.gmra.mxu0 %v1304
    %v1908 = vpop.f32.mrf.mxu0
    %v1909 = vadd.f32 0.0, %v1908
    %v1910 = vpop.f32.mrf.mxu0
    %v1911 = vadd.f32 0.0, %v1910
    %1912 = vmatmul.bf16.gmra.mxu0 %v1307
    %v1913 = vpop.f32.mrf.mxu0
    %v1914 = vadd.f32 0.0, %v1913
    %v1915 = vpop.f32.mrf.mxu0
    %v1916 = vadd.f32 0.0, %v1915
    %1917 = vmatmul.bf16.gmra.mxu0 %v1310
    %v1918 = vpop.f32.mrf.mxu0
    %v1919 = vadd.f32 0.0, %v1918
    %v1920 = vpop.f32.mrf.mxu0
    %v1921 = vadd.f32 0.0, %v1920
    %1922 = vmatmul.bf16.gmra.mxu0 %v1313
    %v1923 = vpop.f32.mrf.mxu0
    %v1924 = vadd.f32 0.0, %v1923
    %v1925 = vpop.f32.mrf.mxu0
    %v1926 = vadd.f32 0.0, %v1925
    %1927 = vmatmul.bf16.gmra.mxu0 %v1316
    %v1928 = vpop.f32.mrf.mxu0
    %v1929 = vadd.f32 0.0, %v1928
    %v1930 = vpop.f32.mrf.mxu0
    %v1931 = vadd.f32 0.0, %v1930
    %1932 = vmatmul.bf16.gmra.mxu0 %v1319
    %v1933 = vpop.f32.mrf.mxu0
    %v1934 = vadd.f32 0.0, %v1933
    %v1935 = vpop.f32.mrf.mxu0
    %v1936 = vadd.f32 0.0, %v1935
    %1937 = vmatmul.bf16.gmra.mxu0 %v1322
    %v1938 = vpop.f32.mrf.mxu0
    %v1939 = vadd.f32 0.0, %v1938
    %v1940 = vpop.f32.mrf.mxu0
    %v1941 = vadd.f32 0.0, %v1940
    %1942 = vmatmul.bf16.gmra.mxu0 %v1325
    %v1943 = vpop.f32.mrf.mxu0
    %v1944 = vadd.f32 0.0, %v1943
    %v1945 = vpop.f32.mrf.mxu0
    %v1946 = vadd.f32 0.0, %v1945
    %1947 = vmatmul.bf16.gmra.mxu0 %v1328
    %v1948 = vpop.f32.mrf.mxu0
    %v1949 = vadd.f32 0.0, %v1948
    %v1950 = vpop.f32.mrf.mxu0
    %v1951 = vadd.f32 0.0, %v1950
    %1952 = vmatmul.bf16.gmra.mxu0 %v1331
    %v1953 = vpop.f32.mrf.mxu0
    %v1954 = vadd.f32 0.0, %v1953
    %v1955 = vpop.f32.mrf.mxu0
    %v1956 = vadd.f32 0.0, %v1955
    %1957 = vmatmul.bf16.gmra.mxu0 %v1334
    %v1958 = vpop.f32.mrf.mxu0
    %v1959 = vadd.f32 0.0, %v1958
    %v1960 = vpop.f32.mrf.mxu0
    %v1961 = vadd.f32 0.0, %v1960
    %1962 = vmatmul.bf16.gmra.mxu0 %v1337
    %v1963 = vpop.f32.mrf.mxu0
    %v1964 = vadd.f32 0.0, %v1963
    %v1965 = vpop.f32.mrf.mxu0
    %v1966 = vadd.f32 0.0, %v1965
    %1967 = vmatmul.bf16.gmra.mxu0 %v1340
    %v1968 = vpop.f32.mrf.mxu0
    %v1969 = vadd.f32 0.0, %v1968
    %v1970 = vpop.f32.mrf.mxu0
    %v1971 = vadd.f32 0.0, %v1970
    %1972 = vmatmul.bf16.gmra.mxu0 %v1343
    %v1973 = vpop.f32.mrf.mxu0
    %v1974 = vadd.f32 0.0, %v1973
    %v1975 = vpop.f32.mrf.mxu0
    %v1976 = vadd.f32 0.0, %v1975
    %1977 = vmatmul.bf16.gmra.mxu0 %v1346
    %v1978 = vpop.f32.mrf.mxu0
    %v1979 = vadd.f32 0.0, %v1978
    %v1980 = vpop.f32.mrf.mxu0
    %v1981 = vadd.f32 0.0, %v1980
    %1982 = vmatmul.bf16.gmra.mxu0 %v1349
    %v1983 = vpop.f32.mrf.mxu0
    %v1984 = vadd.f32 0.0, %v1983
    %v1985 = vpop.f32.mrf.mxu0
    %v1986 = vadd.f32 0.0, %v1985
    %1987 = vmatmul.bf16.gmra.mxu0 %v1352
    %v1988 = vpop.f32.mrf.mxu0
    %v1989 = vadd.f32 0.0, %v1988
    %v1990 = vpop.f32.mrf.mxu0
    %v1991 = vadd.f32 0.0, %v1990
    %1992 = vmatmul.bf16.gmra.mxu0 %v1355
    %v1993 = vpop.f32.mrf.mxu0
    %v1994 = vadd.f32 0.0, %v1993
    %v1995 = vpop.f32.mrf.mxu0
    %v1996 = vadd.f32 0.0, %v1995
    %1997 = vmatmul.bf16.gmra.mxu0 %v1358
    %v1998 = vpop.f32.mrf.mxu0
    %v1999 = vadd.f32 0.0, %v1998
    %v2000 = vpop.f32.mrf.mxu0
    %v2001 = vadd.f32 0.0, %v2000
    %2002 = vmatmul.bf16.gmra.mxu0 %v1361
    %v2003 = vpop.f32.mrf.mxu0
    %v2004 = vadd.f32 0.0, %v2003
    %v2005 = vpop.f32.mrf.mxu0
    %v2006 = vadd.f32 0.0, %v2005
    %2007 = vmatmul.bf16.gmra.mxu0 %v1364
    %v2008 = vpop.f32.mrf.mxu0
    %v2009 = vadd.f32 0.0, %v2008
    %v2010 = vpop.f32.mrf.mxu0
    %v2011 = vadd.f32 0.0, %v2010
    %2012 = vmatmul.bf16.gmra.mxu0 %v1367
    %v2013 = vpop.f32.mrf.mxu0
    %v2014 = vadd.f32 0.0, %v2013
    %v2015 = vpop.f32.mrf.mxu0
    %v2016 = vadd.f32 0.0, %v2015
    %2017 = vdwg.mxu0
    %v2018 = vadd.f32 %v1379, %v69
    %v2019 = vadd.f32 %v1381, %v71
    %v2020 = vadd.f32 %v1384, %v69
    %v2021 = vadd.f32 %v1386, %v71
    %v2022 = vadd.f32 %v1389, %v69
    %v2023 = vadd.f32 %v1391, %v71
    %v2024 = vadd.f32 %v1394, %v69
    %v2025 = vadd.f32 %v1396, %v71
    %v2026 = vadd.f32 %v1399, %v69
    %v2027 = vadd.f32 %v1401, %v71
    %v2028 = vadd.f32 %v1404, %v69
    %v2029 = vadd.f32 %v1406, %v71
    %v2030 = vadd.f32 %v1409, %v69
    %v2031 = vadd.f32 %v1411, %v71
    %v2032 = vadd.f32 %v1414, %v69
    %v2033 = vadd.f32 %v1416, %v71
    %v2034 = vadd.f32 %v1419, %v69
    %v2035 = vadd.f32 %v1421, %v71
    %v2036 = vadd.f32 %v1424, %v69
    %v2037 = vadd.f32 %v1426, %v71
    %v2038 = vadd.f32 %v1429, %v69
    %v2039 = vadd.f32 %v1431, %v71
    %v2040 = vadd.f32 %v1434, %v69
    %v2041 = vadd.f32 %v1436, %v71
    %v2042 = vadd.f32 %v1439, %v69
    %v2043 = vadd.f32 %v1441, %v71
    %v2044 = vadd.f32 %v1444, %v69
    %v2045 = vadd.f32 %v1446, %v71
    %v2046 = vadd.f32 %v1449, %v69
    %v2047 = vadd.f32 %v1451, %v71
    %v2048 = vadd.f32 %v1454, %v69
    %v2049 = vadd.f32 %v1456, %v71
    %v2050 = vadd.f32 %v1459, %v69
    %v2051 = vadd.f32 %v1461, %v71
    %v2052 = vadd.f32 %v1464, %v69
    %v2053 = vadd.f32 %v1466, %v71
    %v2054 = vadd.f32 %v1469, %v69
    %v2055 = vadd.f32 %v1471, %v71
    %v2056 = vadd.f32 %v1474, %v69
    %v2057 = vadd.f32 %v1476, %v71
    %v2058 = vadd.f32 %v1479, %v69
    %v2059 = vadd.f32 %v1481, %v71
    %v2060 = vadd.f32 %v1484, %v69
    %v2061 = vadd.f32 %v1486, %v71
    %v2062 = vadd.f32 %v1489, %v69
    %v2063 = vadd.f32 %v1491, %v71
    %v2064 = vadd.f32 %v1494, %v69
    %v2065 = vadd.f32 %v1496, %v71
    %v2066 = vadd.f32 %v1499, %v69
    %v2067 = vadd.f32 %v1501, %v71
    %v2068 = vadd.f32 %v1504, %v69
    %v2069 = vadd.f32 %v1506, %v71
    %v2070 = vadd.f32 %v1509, %v69
    %v2071 = vadd.f32 %v1511, %v71
    %v2072 = vadd.f32 %v1514, %v69
    %v2073 = vadd.f32 %v1516, %v71
    %v2074 = vadd.f32 %v1519, %v69
    %v2075 = vadd.f32 %v1521, %v71
    %v2076 = vadd.f32 %v1524, %v69
    %v2077 = vadd.f32 %v1526, %v71
    %v2078 = vadd.f32 %v1529, %v69
    %v2079 = vadd.f32 %v1531, %v71
    %v2080 = vadd.f32 %v1534, %v69
    %v2081 = vadd.f32 %v1536, %v71
    %v2082 = vadd.f32 %v1539, %v69
    %v2083 = vadd.f32 %v1541, %v71
    %v2084 = vadd.f32 %v1544, %v69
    %v2085 = vadd.f32 %v1546, %v71
    %v2086 = vadd.f32 %v1549, %v69
    %v2087 = vadd.f32 %v1551, %v71
    %v2088 = vadd.f32 %v1554, %v69
    %v2089 = vadd.f32 %v1556, %v71
    %v2090 = vadd.f32 %v1559, %v69
    %v2091 = vadd.f32 %v1561, %v71
    %v2092 = vadd.f32 %v1564, %v69
    %v2093 = vadd.f32 %v1566, %v71
    %v2094 = vadd.f32 %v1569, %v69
    %v2095 = vadd.f32 %v1571, %v71
    %v2096 = vadd.f32 %v1574, %v69
    %v2097 = vadd.f32 %v1576, %v71
    %v2098 = vadd.f32 %v1579, %v69
    %v2099 = vadd.f32 %v1581, %v71
    %v2100 = vadd.f32 %v1584, %v69
    %v2101 = vadd.f32 %v1586, %v71
    %v2102 = vadd.f32 %v1589, %v69
    %v2103 = vadd.f32 %v1591, %v71
    %v2104 = vadd.f32 %v1594, %v69
    %v2105 = vadd.f32 %v1596, %v71
    %v2106 = vadd.f32 %v1599, %v69
    %v2107 = vadd.f32 %v1601, %v71
    %v2108 = vadd.f32 %v1604, %v69
    %v2109 = vadd.f32 %v1606, %v71
    %v2110 = vadd.f32 %v1609, %v69
    %v2111 = vadd.f32 %v1611, %v71
    %v2112 = vadd.f32 %v1614, %v69
    %v2113 = vadd.f32 %v1616, %v71
    %v2114 = vadd.f32 %v1619, %v69
    %v2115 = vadd.f32 %v1621, %v71
    %v2116 = vadd.f32 %v1624, %v69
    %v2117 = vadd.f32 %v1626, %v71
    %v2118 = vadd.f32 %v1629, %v69
    %v2119 = vadd.f32 %v1631, %v71
    %v2120 = vadd.f32 %v1634, %v69
    %v2121 = vadd.f32 %v1636, %v71
    %v2122 = vadd.f32 %v1639, %v69
    %v2123 = vadd.f32 %v1641, %v71
    %v2124 = vadd.f32 %v1644, %v69
    %v2125 = vadd.f32 %v1646, %v71
    %v2126 = vadd.f32 %v1649, %v69
    %v2127 = vadd.f32 %v1651, %v71
    %v2128 = vadd.f32 %v1654, %v69
    %v2129 = vadd.f32 %v1656, %v71
    %v2130 = vadd.f32 %v1659, %v69
    %v2131 = vadd.f32 %v1661, %v71
    %v2132 = vadd.f32 %v1664, %v69
    %v2133 = vadd.f32 %v1666, %v71
    %v2134 = vadd.f32 %v1669, %v69
    %v2135 = vadd.f32 %v1671, %v71
    %v2136 = vadd.f32 %v1674, %v69
    %v2137 = vadd.f32 %v1676, %v71
    %v2138 = vadd.f32 %v1679, %v69
    %v2139 = vadd.f32 %v1681, %v71
    %v2140 = vadd.f32 %v1684, %v69
    %v2141 = vadd.f32 %v1686, %v71
    %v2142 = vadd.f32 %v1689, %v69
    %v2143 = vadd.f32 %v1691, %v71
    %v2144 = vadd.f32 %v1694, %v69
    %v2145 = vadd.f32 %v1696, %v71
    %v2146 = vadd.f32 %v1699, %v69
    %v2147 = vadd.f32 %v1701, %v71
    %v2148 = vadd.f32 %v1704, %v69
    %v2149 = vadd.f32 %v1706, %v71
    %v2150 = vadd.f32 %v1709, %v69
    %v2151 = vadd.f32 %v1711, %v71
    %v2152 = vadd.f32 %v1714, %v69
    %v2153 = vadd.f32 %v1716, %v71
    %v2154 = vadd.f32 %v1719, %v69
    %v2155 = vadd.f32 %v1721, %v71
    %v2156 = vadd.f32 %v1724, %v69
    %v2157 = vadd.f32 %v1726, %v71
    %v2158 = vadd.f32 %v1729, %v69
    %v2159 = vadd.f32 %v1731, %v71
    %v2160 = vadd.f32 %v1734, %v69
    %v2161 = vadd.f32 %v1736, %v71
    %v2162 = vadd.f32 %v1739, %v69
    %v2163 = vadd.f32 %v1741, %v71
    %v2164 = vadd.f32 %v1744, %v69
    %v2165 = vadd.f32 %v1746, %v71
    %v2166 = vadd.f32 %v1749, %v69
    %v2167 = vadd.f32 %v1751, %v71
    %v2168 = vadd.f32 %v1754, %v69
    %v2169 = vadd.f32 %v1756, %v71
    %v2170 = vadd.f32 %v1759, %v69
    %v2171 = vadd.f32 %v1761, %v71
    %v2172 = vadd.f32 %v1764, %v69
    %v2173 = vadd.f32 %v1766, %v71
    %v2174 = vadd.f32 %v1769, %v69
    %v2175 = vadd.f32 %v1771, %v71
    %v2176 = vadd.f32 %v1774, %v69
    %v2177 = vadd.f32 %v1776, %v71
    %v2178 = vadd.f32 %v1779, %v69
    %v2179 = vadd.f32 %v1781, %v71
    %v2180 = vadd.f32 %v1784, %v69
    %v2181 = vadd.f32 %v1786, %v71
    %v2182 = vadd.f32 %v1789, %v69
    %v2183 = vadd.f32 %v1791, %v71
    %v2184 = vadd.f32 %v1794, %v69
    %v2185 = vadd.f32 %v1796, %v71
    %v2186 = vadd.f32 %v1799, %v69
    %v2187 = vadd.f32 %v1801, %v71
    %v2188 = vadd.f32 %v1804, %v69
    %v2189 = vadd.f32 %v1806, %v71
    %v2190 = vadd.f32 %v1809, %v69
    %v2191 = vadd.f32 %v1811, %v71
    %v2192 = vadd.f32 %v1814, %v69
    %v2193 = vadd.f32 %v1816, %v71
    %v2194 = vadd.f32 %v1819, %v69
    %v2195 = vadd.f32 %v1821, %v71
    %v2196 = vadd.f32 %v1824, %v69
    %v2197 = vadd.f32 %v1826, %v71
    %v2198 = vadd.f32 %v1829, %v69
    %v2199 = vadd.f32 %v1831, %v71
    %v2200 = vadd.f32 %v1834, %v69
    %v2201 = vadd.f32 %v1836, %v71
    %v2202 = vadd.f32 %v1839, %v69
    %v2203 = vadd.f32 %v1841, %v71
    %v2204 = vadd.f32 %v1844, %v69
    %v2205 = vadd.f32 %v1846, %v71
    %v2206 = vadd.f32 %v1849, %v69
    %v2207 = vadd.f32 %v1851, %v71
    %v2208 = vadd.f32 %v1854, %v69
    %v2209 = vadd.f32 %v1856, %v71
    %v2210 = vadd.f32 %v1859, %v69
    %v2211 = vadd.f32 %v1861, %v71
    %v2212 = vadd.f32 %v1864, %v69
    %v2213 = vadd.f32 %v1866, %v71
    %v2214 = vadd.f32 %v1869, %v69
    %v2215 = vadd.f32 %v1871, %v71
    %v2216 = vadd.f32 %v1874, %v69
    %v2217 = vadd.f32 %v1876, %v71
    %v2218 = vadd.f32 %v1879, %v69
    %v2219 = vadd.f32 %v1881, %v71
    %v2220 = vadd.f32 %v1884, %v69
    %v2221 = vadd.f32 %v1886, %v71
    %v2222 = vadd.f32 %v1889, %v69
    %v2223 = vadd.f32 %v1891, %v71
    %v2224 = vadd.f32 %v1894, %v69
    %v2225 = vadd.f32 %v1896, %v71
    %v2226 = vadd.f32 %v1899, %v69
    %v2227 = vadd.f32 %v1901, %v71
    %v2228 = vadd.f32 %v1904, %v69
    %v2229 = vadd.f32 %v1906, %v71
    %v2230 = vadd.f32 %v1909, %v69
    %v2231 = vadd.f32 %v1911, %v71
    %v2232 = vadd.f32 %v1914, %v69
    %v2233 = vadd.f32 %v1916, %v71
    %v2234 = vadd.f32 %v1919, %v69
    %v2235 = vadd.f32 %v1921, %v71
    %v2236 = vadd.f32 %v1924, %v69
    %v2237 = vadd.f32 %v1926, %v71
    %v2238 = vadd.f32 %v1929, %v69
    %v2239 = vadd.f32 %v1931, %v71
    %v2240 = vadd.f32 %v1934, %v69
    %v2241 = vadd.f32 %v1936, %v71
    %v2242 = vadd.f32 %v1939, %v69
    %v2243 = vadd.f32 %v1941, %v71
    %v2244 = vadd.f32 %v1944, %v69
    %v2245 = vadd.f32 %v1946, %v71
    %v2246 = vadd.f32 %v1949, %v69
    %v2247 = vadd.f32 %v1951, %v71
    %v2248 = vadd.f32 %v1954, %v69
    %v2249 = vadd.f32 %v1956, %v71
    %v2250 = vadd.f32 %v1959, %v69
    %v2251 = vadd.f32 %v1961, %v71
    %v2252 = vadd.f32 %v1964, %v69
    %v2253 = vadd.f32 %v1966, %v71
    %v2254 = vadd.f32 %v1969, %v69
    %v2255 = vadd.f32 %v1971, %v71
    %v2256 = vadd.f32 %v1974, %v69
    %v2257 = vadd.f32 %v1976, %v71
    %v2258 = vadd.f32 %v1979, %v69
    %v2259 = vadd.f32 %v1981, %v71
    %v2260 = vadd.f32 %v1984, %v69
    %v2261 = vadd.f32 %v1986, %v71
    %v2262 = vadd.f32 %v1989, %v69
    %v2263 = vadd.f32 %v1991, %v71
    %v2264 = vadd.f32 %v1994, %v69
    %v2265 = vadd.f32 %v1996, %v71
    %v2266 = vadd.f32 %v1999, %v69
    %v2267 = vadd.f32 %v2001, %v71
    %v2268 = vadd.f32 %v2004, %v69
    %v2269 = vadd.f32 %v2006, %v71
    %v2270 = vadd.f32 %v2009, %v69
    %v2271 = vadd.f32 %v2011, %v71
    %v2272 = vadd.f32 %v2014, %v69
    %v2273 = vadd.f32 %v2016, %v71
    %v2274 = vtanh.pop %v2018
    %v2275 = vtanh.pop %v2019
    %v2276 = vtanh.pop %v2020
    %v2277 = vtanh.pop %v2021
    %v2278 = vtanh.pop %v2022
    %v2279 = vtanh.pop %v2023
    %v2280 = vtanh.pop %v2024
    %v2281 = vtanh.pop %v2025
    %v2282 = vtanh.pop %v2026
    %v2283 = vtanh.pop %v2027
    %v2284 = vtanh.pop %v2028
    %v2285 = vtanh.pop %v2029
    %v2286 = vtanh.pop %v2030
    %v2287 = vtanh.pop %v2031
    %v2288 = vtanh.pop %v2032
    %v2289 = vtanh.pop %v2033
    %v2290 = vtanh.pop %v2034
    %v2291 = vtanh.pop %v2035
    %v2292 = vtanh.pop %v2036
    %v2293 = vtanh.pop %v2037
    %v2294 = vtanh.pop %v2038
    %v2295 = vtanh.pop %v2039
    %v2296 = vtanh.pop %v2040
    %v2297 = vtanh.pop %v2041
    %v2298 = vtanh.pop %v2042
    %v2299 = vtanh.pop %v2043
    %v2300 = vtanh.pop %v2044
    %v2301 = vtanh.pop %v2045
    %v2302 = vtanh.pop %v2046
    %v2303 = vtanh.pop %v2047
    %v2304 = vtanh.pop %v2048
    %v2305 = vtanh.pop %v2049
    %v2306 = vtanh.pop %v2050
    %v2307 = vtanh.pop %v2051
    %v2308 = vtanh.pop %v2052
    %v2309 = vtanh.pop %v2053
    %v2310 = vtanh.pop %v2054
    %v2311 = vtanh.pop %v2055
    %v2312 = vtanh.pop %v2056
    %v2313 = vtanh.pop %v2057
    %v2314 = vtanh.pop %v2058
    %v2315 = vtanh.pop %v2059
    %v2316 = vtanh.pop %v2060
    %v2317 = vtanh.pop %v2061
    %v2318 = vtanh.pop %v2062
    %v2319 = vtanh.pop %v2063
    %v2320 = vtanh.pop %v2064
    %v2321 = vtanh.pop %v2065
    %v2322 = vtanh.pop %v2066
    %v2323 = vtanh.pop %v2067
    %v2324 = vtanh.pop %v2068
    %v2325 = vtanh.pop %v2069
    %v2326 = vtanh.pop %v2070
    %v2327 = vtanh.pop %v2071
    %v2328 = vtanh.pop %v2072
    %v2329 = vtanh.pop %v2073
    %v2330 = vtanh.pop %v2074
    %v2331 = vtanh.pop %v2075
    %v2332 = vtanh.pop %v2076
    %v2333 = vtanh.pop %v2077
    %v2334 = vtanh.pop %v2078
    %v2335 = vtanh.pop %v2079
    %v2336 = vtanh.pop %v2080
    %v2337 = vtanh.pop %v2081
    %v2338 = vtanh.pop %v2082
    %v2339 = vtanh.pop %v2083
    %v2340 = vtanh.pop %v2084
    %v2341 = vtanh.pop %v2085
    %v2342 = vtanh.pop %v2086
    %v2343 = vtanh.pop %v2087
    %v2344 = vtanh.pop %v2088
    %v2345 = vtanh.pop %v2089
    %v2346 = vtanh.pop %v2090
    %v2347 = vtanh.pop %v2091
    %v2348 = vtanh.pop %v2092
    %v2349 = vtanh.pop %v2093
    %v2350 = vtanh.pop %v2094
    %v2351 = vtanh.pop %v2095
    %v2352 = vtanh.pop %v2096
    %v2353 = vtanh.pop %v2097
    %v2354 = vtanh.pop %v2098
    %v2355 = vtanh.pop %v2099
    %v2356 = vtanh.pop %v2100
    %v2357 = vtanh.pop %v2101
    %v2358 = vtanh.pop %v2102
    %v2359 = vtanh.pop %v2103
    %v2360 = vtanh.pop %v2104
    %v2361 = vtanh.pop %v2105
    %v2362 = vtanh.pop %v2106
    %v2363 = vtanh.pop %v2107
    %v2364 = vtanh.pop %v2108
    %v2365 = vtanh.pop %v2109
    %v2366 = vtanh.pop %v2110
    %v2367 = vtanh.pop %v2111
    %v2368 = vtanh.pop %v2112
    %v2369 = vtanh.pop %v2113
    %v2370 = vtanh.pop %v2114
    %v2371 = vtanh.pop %v2115
    %v2372 = vtanh.pop %v2116
    %v2373 = vtanh.pop %v2117
    %v2374 = vtanh.pop %v2118
    %v2375 = vtanh.pop %v2119
    %v2376 = vtanh.pop %v2120
    %v2377 = vtanh.pop %v2121
    %v2378 = vtanh.pop %v2122
    %v2379 = vtanh.pop %v2123
    %v2380 = vtanh.pop %v2124
    %v2381 = vtanh.pop %v2125
    %v2382 = vtanh.pop %v2126
    %v2383 = vtanh.pop %v2127
    %v2384 = vtanh.pop %v2128
    %v2385 = vtanh.pop %v2129
    %v2386 = vtanh.pop %v2130
    %v2387 = vtanh.pop %v2131
    %v2388 = vtanh.pop %v2132
    %v2389 = vtanh.pop %v2133
    %v2390 = vtanh.pop %v2134
    %v2391 = vtanh.pop %v2135
    %v2392 = vtanh.pop %v2136
    %v2393 = vtanh.pop %v2137
    %v2394 = vtanh.pop %v2138
    %v2395 = vtanh.pop %v2139
    %v2396 = vtanh.pop %v2140
    %v2397 = vtanh.pop %v2141
    %v2398 = vtanh.pop %v2142
    %v2399 = vtanh.pop %v2143
    %v2400 = vtanh.pop %v2144
    %v2401 = vtanh.pop %v2145
    %v2402 = vtanh.pop %v2146
    %v2403 = vtanh.pop %v2147
    %v2404 = vtanh.pop %v2148
    %v2405 = vtanh.pop %v2149
    %v2406 = vtanh.pop %v2150
    %v2407 = vtanh.pop %v2151
    %v2408 = vtanh.pop %v2152
    %v2409 = vtanh.pop %v2153
    %v2410 = vtanh.pop %v2154
    %v2411 = vtanh.pop %v2155
    %v2412 = vtanh.pop %v2156
    %v2413 = vtanh.pop %v2157
    %v2414 = vtanh.pop %v2158
    %v2415 = vtanh.pop %v2159
    %v2416 = vtanh.pop %v2160
    %v2417 = vtanh.pop %v2161
    %v2418 = vtanh.pop %v2162
    %v2419 = vtanh.pop %v2163
    %v2420 = vtanh.pop %v2164
    %v2421 = vtanh.pop %v2165
    %v2422 = vtanh.pop %v2166
    %v2423 = vtanh.pop %v2167
    %v2424 = vtanh.pop %v2168
    %v2425 = vtanh.pop %v2169
    %v2426 = vtanh.pop %v2170
    %v2427 = vtanh.pop %v2171
    %v2428 = vtanh.pop %v2172
    %v2429 = vtanh.pop %v2173
    %v2430 = vtanh.pop %v2174
    %v2431 = vtanh.pop %v2175
    %v2432 = vtanh.pop %v2176
    %v2433 = vtanh.pop %v2177
    %v2434 = vtanh.pop %v2178
    %v2435 = vtanh.pop %v2179
    %v2436 = vtanh.pop %v2180
    %v2437 = vtanh.pop %v2181
    %v2438 = vtanh.pop %v2182
    %v2439 = vtanh.pop %v2183
    %v2440 = vtanh.pop %v2184
    %v2441 = vtanh.pop %v2185
    %v2442 = vtanh.pop %v2186
    %v2443 = vtanh.pop %v2187
    %v2444 = vtanh.pop %v2188
    %v2445 = vtanh.pop %v2189
    %v2446 = vtanh.pop %v2190
    %v2447 = vtanh.pop %v2191
    %v2448 = vtanh.pop %v2192
    %v2449 = vtanh.pop %v2193
    %v2450 = vtanh.pop %v2194
    %v2451 = vtanh.pop %v2195
    %v2452 = vtanh.pop %v2196
    %v2453 = vtanh.pop %v2197
    %v2454 = vtanh.pop %v2198
    %v2455 = vtanh.pop %v2199
    %v2456 = vtanh.pop %v2200
    %v2457 = vtanh.pop %v2201
    %v2458 = vtanh.pop %v2202
    %v2459 = vtanh.pop %v2203
    %v2460 = vtanh.pop %v2204
    %v2461 = vtanh.pop %v2205
    %v2462 = vtanh.pop %v2206
    %v2463 = vtanh.pop %v2207
    %v2464 = vtanh.pop %v2208
    %v2465 = vtanh.pop %v2209
    %v2466 = vtanh.pop %v2210
    %v2467 = vtanh.pop %v2211
    %v2468 = vtanh.pop %v2212
    %v2469 = vtanh.pop %v2213
    %v2470 = vtanh.pop %v2214
    %v2471 = vtanh.pop %v2215
    %v2472 = vtanh.pop %v2216
    %v2473 = vtanh.pop %v2217
    %v2474 = vtanh.pop %v2218
    %v2475 = vtanh.pop %v2219
    %v2476 = vtanh.pop %v2220
    %v2477 = vtanh.pop %v2221
    %v2478 = vtanh.pop %v2222
    %v2479 = vtanh.pop %v2223
    %v2480 = vtanh.pop %v2224
    %v2481 = vtanh.pop %v2225
    %v2482 = vtanh.pop %v2226
    %v2483 = vtanh.pop %v2227
    %v2484 = vtanh.pop %v2228
    %v2485 = vtanh.pop %v2229
    %v2486 = vtanh.pop %v2230
    %v2487 = vtanh.pop %v2231
    %v2488 = vtanh.pop %v2232
    %v2489 = vtanh.pop %v2233
    %v2490 = vtanh.pop %v2234
    %v2491 = vtanh.pop %v2235
    %v2492 = vtanh.pop %v2236
    %v2493 = vtanh.pop %v2237
    %v2494 = vtanh.pop %v2238
    %v2495 = vtanh.pop %v2239
    %v2496 = vtanh.pop %v2240
    %v2497 = vtanh.pop %v2241
    %v2498 = vtanh.pop %v2242
    %v2499 = vtanh.pop %v2243
    %v2500 = vtanh.pop %v2244
    %v2501 = vtanh.pop %v2245
    %v2502 = vtanh.pop %v2246
    %v2503 = vtanh.pop %v2247
    %v2504 = vtanh.pop %v2248
    %v2505 = vtanh.pop %v2249
    %v2506 = vtanh.pop %v2250
    %v2507 = vtanh.pop %v2251
    %v2508 = vtanh.pop %v2252
    %v2509 = vtanh.pop %v2253
    %v2510 = vtanh.pop %v2254
    %v2511 = vtanh.pop %v2255
    %v2512 = vtanh.pop %v2256
    %v2513 = vtanh.pop %v2257
    %v2514 = vtanh.pop %v2258
    %v2515 = vtanh.pop %v2259
    %v2516 = vtanh.pop %v2260
    %v2517 = vtanh.pop %v2261
    %v2518 = vtanh.pop %v2262
    %v2519 = vtanh.pop %v2263
    %v2520 = vtanh.pop %v2264
    %v2521 = vtanh.pop %v2265
    %v2522 = vtanh.pop %v2266
    %v2523 = vtanh.pop %v2267
    %v2524 = vtanh.pop %v2268
    %v2525 = vtanh.pop %v2269
    %v2526 = vtanh.pop %v2270
    %v2527 = vtanh.pop %v2271
    %v2528 = vtanh.pop %v2272
    %v2529 = vtanh.pop %v2273
    %v2530 = vld [vmem:[%s5] sm:$0x1]
    %v2532 = vperm.slane %v2530, 0
    %v2534 = vmul.f32 %v2274, %v2532
    %v2535 = vmul.f32 %v2275, %v2532
    %v2536 = vmul.f32 %v2276, %v2532
    %v2537 = vmul.f32 %v2277, %v2532
    %v2538 = vmul.f32 %v2278, %v2532
    %v2539 = vmul.f32 %v2279, %v2532
    %v2540 = vmul.f32 %v2280, %v2532
    %v2541 = vmul.f32 %v2281, %v2532
    %v2542 = vmul.f32 %v2282, %v2532
    %v2543 = vmul.f32 %v2283, %v2532
    %v2544 = vmul.f32 %v2284, %v2532
    %v2545 = vmul.f32 %v2285, %v2532
    %v2546 = vmul.f32 %v2286, %v2532
    %v2547 = vmul.f32 %v2287, %v2532
    %v2548 = vmul.f32 %v2288, %v2532
    %v2549 = vmul.f32 %v2289, %v2532
    %v2550 = vmul.f32 %v2290, %v2532
    %v2551 = vmul.f32 %v2291, %v2532
    %v2552 = vmul.f32 %v2292, %v2532
    %v2553 = vmul.f32 %v2293, %v2532
    %v2554 = vmul.f32 %v2294, %v2532
    %v2555 = vmul.f32 %v2295, %v2532
    %v2556 = vmul.f32 %v2296, %v2532
    %v2557 = vmul.f32 %v2297, %v2532
    %v2558 = vmul.f32 %v2298, %v2532
    %v2559 = vmul.f32 %v2299, %v2532
    %v2560 = vmul.f32 %v2300, %v2532
    %v2561 = vmul.f32 %v2301, %v2532
    %v2562 = vmul.f32 %v2302, %v2532
    %v2563 = vmul.f32 %v2303, %v2532
    %v2564 = vmul.f32 %v2304, %v2532
    %v2565 = vmul.f32 %v2305, %v2532
    %v2566 = vmul.f32 %v2306, %v2532
    %v2567 = vmul.f32 %v2307, %v2532
    %v2568 = vmul.f32 %v2308, %v2532
    %v2569 = vmul.f32 %v2309, %v2532
    %v2570 = vmul.f32 %v2310, %v2532
    %v2571 = vmul.f32 %v2311, %v2532
    %v2572 = vmul.f32 %v2312, %v2532
    %v2573 = vmul.f32 %v2313, %v2532
    %v2574 = vmul.f32 %v2314, %v2532
    %v2575 = vmul.f32 %v2315, %v2532
    %v2576 = vmul.f32 %v2316, %v2532
    %v2577 = vmul.f32 %v2317, %v2532
    %v2578 = vmul.f32 %v2318, %v2532
    %v2579 = vmul.f32 %v2319, %v2532
    %v2580 = vmul.f32 %v2320, %v2532
    %v2581 = vmul.f32 %v2321, %v2532
    %v2582 = vmul.f32 %v2322, %v2532
    %v2583 = vmul.f32 %v2323, %v2532
    %v2584 = vmul.f32 %v2324, %v2532
    %v2585 = vmul.f32 %v2325, %v2532
    %v2586 = vmul.f32 %v2326, %v2532
    %v2587 = vmul.f32 %v2327, %v2532
    %v2588 = vmul.f32 %v2328, %v2532
    %v2589 = vmul.f32 %v2329, %v2532
    %v2590 = vmul.f32 %v2330, %v2532
    %v2591 = vmul.f32 %v2331, %v2532
    %v2592 = vmul.f32 %v2332, %v2532
    %v2593 = vmul.f32 %v2333, %v2532
    %v2594 = vmul.f32 %v2334, %v2532
    %v2595 = vmul.f32 %v2335, %v2532
    %v2596 = vmul.f32 %v2336, %v2532
    %v2597 = vmul.f32 %v2337, %v2532
    %v2598 = vmul.f32 %v2338, %v2532
    %v2599 = vmul.f32 %v2339, %v2532
    %v2600 = vmul.f32 %v2340, %v2532
    %v2601 = vmul.f32 %v2341, %v2532
    %v2602 = vmul.f32 %v2342, %v2532
    %v2603 = vmul.f32 %v2343, %v2532
    %v2604 = vmul.f32 %v2344, %v2532
    %v2605 = vmul.f32 %v2345, %v2532
    %v2606 = vmul.f32 %v2346, %v2532
    %v2607 = vmul.f32 %v2347, %v2532
    %v2608 = vmul.f32 %v2348, %v2532
    %v2609 = vmul.f32 %v2349, %v2532
    %v2610 = vmul.f32 %v2350, %v2532
    %v2611 = vmul.f32 %v2351, %v2532
    %v2612 = vmul.f32 %v2352, %v2532
    %v2613 = vmul.f32 %v2353, %v2532
    %v2614 = vmul.f32 %v2354, %v2532
    %v2615 = vmul.f32 %v2355, %v2532
    %v2616 = vmul.f32 %v2356, %v2532
    %v2617 = vmul.f32 %v2357, %v2532
    %v2618 = vmul.f32 %v2358, %v2532
    %v2619 = vmul.f32 %v2359, %v2532
    %v2620 = vmul.f32 %v2360, %v2532
    %v2621 = vmul.f32 %v2361, %v2532
    %v2622 = vmul.f32 %v2362, %v2532
    %v2623 = vmul.f32 %v2363, %v2532
    %v2624 = vmul.f32 %v2364, %v2532
    %v2625 = vmul.f32 %v2365, %v2532
    %v2626 = vmul.f32 %v2366, %v2532
    %v2627 = vmul.f32 %v2367, %v2532
    %v2628 = vmul.f32 %v2368, %v2532
    %v2629 = vmul.f32 %v2369, %v2532
    %v2630 = vmul.f32 %v2370, %v2532
    %v2631 = vmul.f32 %v2371, %v2532
    %v2632 = vmul.f32 %v2372, %v2532
    %v2633 = vmul.f32 %v2373, %v2532
    %v2634 = vmul.f32 %v2374, %v2532
    %v2635 = vmul.f32 %v2375, %v2532
    %v2636 = vmul.f32 %v2376, %v2532
    %v2637 = vmul.f32 %v2377, %v2532
    %v2638 = vmul.f32 %v2378, %v2532
    %v2639 = vmul.f32 %v2379, %v2532
    %v2640 = vmul.f32 %v2380, %v2532
    %v2641 = vmul.f32 %v2381, %v2532
    %v2642 = vmul.f32 %v2382, %v2532
    %v2643 = vmul.f32 %v2383, %v2532
    %v2644 = vmul.f32 %v2384, %v2532
    %v2645 = vmul.f32 %v2385, %v2532
    %v2646 = vmul.f32 %v2386, %v2532
    %v2647 = vmul.f32 %v2387, %v2532
    %v2648 = vmul.f32 %v2388, %v2532
    %v2649 = vmul.f32 %v2389, %v2532
    %v2650 = vmul.f32 %v2390, %v2532
    %v2651 = vmul.f32 %v2391, %v2532
    %v2652 = vmul.f32 %v2392, %v2532
    %v2653 = vmul.f32 %v2393, %v2532
    %v2654 = vmul.f32 %v2394, %v2532
    %v2655 = vmul.f32 %v2395, %v2532
    %v2656 = vmul.f32 %v2396, %v2532
    %v2657 = vmul.f32 %v2397, %v2532
    %v2658 = vmul.f32 %v2398, %v2532
    %v2659 = vmul.f32 %v2399, %v2532
    %v2660 = vmul.f32 %v2400, %v2532
    %v2661 = vmul.f32 %v2401, %v2532
    %v2662 = vmul.f32 %v2402, %v2532
    %v2663 = vmul.f32 %v2403, %v2532
    %v2664 = vmul.f32 %v2404, %v2532
    %v2665 = vmul.f32 %v2405, %v2532
    %v2666 = vmul.f32 %v2406, %v2532
    %v2667 = vmul.f32 %v2407, %v2532
    %v2668 = vmul.f32 %v2408, %v2532
    %v2669 = vmul.f32 %v2409, %v2532
    %v2670 = vmul.f32 %v2410, %v2532
    %v2671 = vmul.f32 %v2411, %v2532
    %v2672 = vmul.f32 %v2412, %v2532
    %v2673 = vmul.f32 %v2413, %v2532
    %v2674 = vmul.f32 %v2414, %v2532
    %v2675 = vmul.f32 %v2415, %v2532
    %v2676 = vmul.f32 %v2416, %v2532
    %v2677 = vmul.f32 %v2417, %v2532
    %v2678 = vmul.f32 %v2418, %v2532
    %v2679 = vmul.f32 %v2419, %v2532
    %v2680 = vmul.f32 %v2420, %v2532
    %v2681 = vmul.f32 %v2421, %v2532
    %v2682 = vmul.f32 %v2422, %v2532
    %v2683 = vmul.f32 %v2423, %v2532
    %v2684 = vmul.f32 %v2424, %v2532
    %v2685 = vmul.f32 %v2425, %v2532
    %v2686 = vmul.f32 %v2426, %v2532
    %v2687 = vmul.f32 %v2427, %v2532
    %v2688 = vmul.f32 %v2428, %v2532
    %v2689 = vmul.f32 %v2429, %v2532
    %v2690 = vmul.f32 %v2430, %v2532
    %v2691 = vmul.f32 %v2431, %v2532
    %v2692 = vmul.f32 %v2432, %v2532
    %v2693 = vmul.f32 %v2433, %v2532
    %v2694 = vmul.f32 %v2434, %v2532
    %v2695 = vmul.f32 %v2435, %v2532
    %v2696 = vmul.f32 %v2436, %v2532
    %v2697 = vmul.f32 %v2437, %v2532
    %v2698 = vmul.f32 %v2438, %v2532
    %v2699 = vmul.f32 %v2439, %v2532
    %v2700 = vmul.f32 %v2440, %v2532
    %v2701 = vmul.f32 %v2441, %v2532
    %v2702 = vmul.f32 %v2442, %v2532
    %v2703 = vmul.f32 %v2443, %v2532
    %v2704 = vmul.f32 %v2444, %v2532
    %v2705 = vmul.f32 %v2445, %v2532
    %v2706 = vmul.f32 %v2446, %v2532
    %v2707 = vmul.f32 %v2447, %v2532
    %v2708 = vmul.f32 %v2448, %v2532
    %v2709 = vmul.f32 %v2449, %v2532
    %v2710 = vmul.f32 %v2450, %v2532
    %v2711 = vmul.f32 %v2451, %v2532
    %v2712 = vmul.f32 %v2452, %v2532
    %v2713 = vmul.f32 %v2453, %v2532
    %v2714 = vmul.f32 %v2454, %v2532
    %v2715 = vmul.f32 %v2455, %v2532
    %v2716 = vmul.f32 %v2456, %v2532
    %v2717 = vmul.f32 %v2457, %v2532
    %v2718 = vmul.f32 %v2458, %v2532
    %v2719 = vmul.f32 %v2459, %v2532
    %v2720 = vmul.f32 %v2460, %v2532
    %v2721 = vmul.f32 %v2461, %v2532
    %v2722 = vmul.f32 %v2462, %v2532
    %v2723 = vmul.f32 %v2463, %v2532
    %v2724 = vmul.f32 %v2464, %v2532
    %v2725 = vmul.f32 %v2465, %v2532
    %v2726 = vmul.f32 %v2466, %v2532
    %v2727 = vmul.f32 %v2467, %v2532
    %v2728 = vmul.f32 %v2468, %v2532
    %v2729 = vmul.f32 %v2469, %v2532
    %v2730 = vmul.f32 %v2470, %v2532
    %v2731 = vmul.f32 %v2471, %v2532
    %v2732 = vmul.f32 %v2472, %v2532
    %v2733 = vmul.f32 %v2473, %v2532
    %v2734 = vmul.f32 %v2474, %v2532
    %v2735 = vmul.f32 %v2475, %v2532
    %v2736 = vmul.f32 %v2476, %v2532
    %v2737 = vmul.f32 %v2477, %v2532
    %v2738 = vmul.f32 %v2478, %v2532
    %v2739 = vmul.f32 %v2479, %v2532
    %v2740 = vmul.f32 %v2480, %v2532
    %v2741 = vmul.f32 %v2481, %v2532
    %v2742 = vmul.f32 %v2482, %v2532
    %v2743 = vmul.f32 %v2483, %v2532
    %v2744 = vmul.f32 %v2484, %v2532
    %v2745 = vmul.f32 %v2485, %v2532
    %v2746 = vmul.f32 %v2486, %v2532
    %v2747 = vmul.f32 %v2487, %v2532
    %v2748 = vmul.f32 %v2488, %v2532
    %v2749 = vmul.f32 %v2489, %v2532
    %v2750 = vmul.f32 %v2490, %v2532
    %v2751 = vmul.f32 %v2491, %v2532
    %v2752 = vmul.f32 %v2492, %v2532
    %v2753 = vmul.f32 %v2493, %v2532
    %v2754 = vmul.f32 %v2494, %v2532
    %v2755 = vmul.f32 %v2495, %v2532
    %v2756 = vmul.f32 %v2496, %v2532
    %v2757 = vmul.f32 %v2497, %v2532
    %v2758 = vmul.f32 %v2498, %v2532
    %v2759 = vmul.f32 %v2499, %v2532
    %v2760 = vmul.f32 %v2500, %v2532
    %v2761 = vmul.f32 %v2501, %v2532
    %v2762 = vmul.f32 %v2502, %v2532
    %v2763 = vmul.f32 %v2503, %v2532
    %v2764 = vmul.f32 %v2504, %v2532
    %v2765 = vmul.f32 %v2505, %v2532
    %v2766 = vmul.f32 %v2506, %v2532
    %v2767 = vmul.f32 %v2507, %v2532
    %v2768 = vmul.f32 %v2508, %v2532
    %v2769 = vmul.f32 %v2509, %v2532
    %v2770 = vmul.f32 %v2510, %v2532
    %v2771 = vmul.f32 %v2511, %v2532
    %v2772 = vmul.f32 %v2512, %v2532
    %v2773 = vmul.f32 %v2513, %v2532
    %v2774 = vmul.f32 %v2514, %v2532
    %v2775 = vmul.f32 %v2515, %v2532
    %v2776 = vmul.f32 %v2516, %v2532
    %v2777 = vmul.f32 %v2517, %v2532
    %v2778 = vmul.f32 %v2518, %v2532
    %v2779 = vmul.f32 %v2519, %v2532
    %v2780 = vmul.f32 %v2520, %v2532
    %v2781 = vmul.f32 %v2521, %v2532
    %v2782 = vmul.f32 %v2522, %v2532
    %v2783 = vmul.f32 %v2523, %v2532
    %v2784 = vmul.f32 %v2524, %v2532
    %v2785 = vmul.f32 %v2525, %v2532
    %v2786 = vmul.f32 %v2526, %v2532
    %v2787 = vmul.f32 %v2527, %v2532
    %v2788 = vmul.f32 %v2528, %v2532
    %v2789 = vmul.f32 %v2529, %v2532
    %v2790 = vsel %vm55, %v2534, 0.0
    %2791 = vadd.xlane.f32.xlu0 %v2790
    %v2792 = vpop.xlane.xlu0 %2791
    %v2793 = vsel %vm55, %v2535, 0.0
    %2794 = vadd.xlane.f32.xlu0 %v2793
    %v2795 = vpop.xlane.xlu0 %2794
    %v2796 = vsel %vm55, %v2536, 0.0
    %2797 = vadd.xlane.f32.xlu0 %v2796
    %v2798 = vpop.xlane.xlu0 %2797
    %v2799 = vsel %vm55, %v2537, 0.0
    %2800 = vadd.xlane.f32.xlu0 %v2799
    %v2801 = vpop.xlane.xlu0 %2800
    %v2802 = vsel %vm55, %v2538, 0.0
    %2803 = vadd.xlane.f32.xlu0 %v2802
    %v2804 = vpop.xlane.xlu0 %2803
    %v2805 = vsel %vm55, %v2539, 0.0
    %2806 = vadd.xlane.f32.xlu0 %v2805
    %v2807 = vpop.xlane.xlu0 %2806
    %v2808 = vsel %vm55, %v2540, 0.0
    %2809 = vadd.xlane.f32.xlu0 %v2808
    %v2810 = vpop.xlane.xlu0 %2809
    %v2811 = vsel %vm55, %v2541, 0.0
    %2812 = vadd.xlane.f32.xlu0 %v2811
    %v2813 = vpop.xlane.xlu0 %2812
    %v2814 = vsel %vm55, %v2542, 0.0
    %2815 = vadd.xlane.f32.xlu0 %v2814
    %v2816 = vpop.xlane.xlu0 %2815
    %v2817 = vsel %vm55, %v2543, 0.0
    %2818 = vadd.xlane.f32.xlu0 %v2817
    %v2819 = vpop.xlane.xlu0 %2818
    %v2820 = vsel %vm55, %v2544, 0.0
    %2821 = vadd.xlane.f32.xlu0 %v2820
    %v2822 = vpop.xlane.xlu0 %2821
    %v2823 = vsel %vm55, %v2545, 0.0
    %2824 = vadd.xlane.f32.xlu0 %v2823
    %v2825 = vpop.xlane.xlu0 %2824
    %v2826 = vsel %vm55, %v2546, 0.0
    %2827 = vadd.xlane.f32.xlu0 %v2826
    %v2828 = vpop.xlane.xlu0 %2827
    %v2829 = vsel %vm55, %v2547, 0.0
    %2830 = vadd.xlane.f32.xlu0 %v2829
    %v2831 = vpop.xlane.xlu0 %2830
    %v2832 = vsel %vm55, %v2548, 0.0
    %2833 = vadd.xlane.f32.xlu0 %v2832
    %v2834 = vpop.xlane.xlu0 %2833
    %v2835 = vsel %vm55, %v2549, 0.0
    %2836 = vadd.xlane.f32.xlu0 %v2835
    %v2837 = vpop.xlane.xlu0 %2836
    %v2838 = vsel %vm55, %v2550, 0.0
    %2839 = vadd.xlane.f32.xlu0 %v2838
    %v2840 = vpop.xlane.xlu0 %2839
    %v2841 = vsel %vm55, %v2551, 0.0
    %2842 = vadd.xlane.f32.xlu0 %v2841
    %v2843 = vpop.xlane.xlu0 %2842
    %v2844 = vsel %vm55, %v2552, 0.0
    %2845 = vadd.xlane.f32.xlu0 %v2844
    %v2846 = vpop.xlane.xlu0 %2845
    %v2847 = vsel %vm55, %v2553, 0.0
    %2848 = vadd.xlane.f32.xlu0 %v2847
    %v2849 = vpop.xlane.xlu0 %2848
    %v2850 = vsel %vm55, %v2554, 0.0
    %2851 = vadd.xlane.f32.xlu0 %v2850
    %v2852 = vpop.xlane.xlu0 %2851
    %v2853 = vsel %vm55, %v2555, 0.0
    %2854 = vadd.xlane.f32.xlu0 %v2853
    %v2855 = vpop.xlane.xlu0 %2854
    %v2856 = vsel %vm55, %v2556, 0.0
    %2857 = vadd.xlane.f32.xlu0 %v2856
    %v2858 = vpop.xlane.xlu0 %2857
    %v2859 = vsel %vm55, %v2557, 0.0
    %2860 = vadd.xlane.f32.xlu0 %v2859
    %v2861 = vpop.xlane.xlu0 %2860
    %v2862 = vsel %vm55, %v2558, 0.0
    %2863 = vadd.xlane.f32.xlu0 %v2862
    %v2864 = vpop.xlane.xlu0 %2863
    %v2865 = vsel %vm55, %v2559, 0.0
    %2866 = vadd.xlane.f32.xlu0 %v2865
    %v2867 = vpop.xlane.xlu0 %2866
    %v2868 = vsel %vm55, %v2560, 0.0
    %2869 = vadd.xlane.f32.xlu0 %v2868
    %v2870 = vpop.xlane.xlu0 %2869
    %v2871 = vsel %vm55, %v2561, 0.0
    %2872 = vadd.xlane.f32.xlu0 %v2871
    %v2873 = vpop.xlane.xlu0 %2872
    %v2874 = vsel %vm55, %v2562, 0.0
    %2875 = vadd.xlane.f32.xlu0 %v2874
    %v2876 = vpop.xlane.xlu0 %2875
    %v2877 = vsel %vm55, %v2563, 0.0
    %2878 = vadd.xlane.f32.xlu0 %v2877
    %v2879 = vpop.xlane.xlu0 %2878
    %v2880 = vsel %vm55, %v2564, 0.0
    %2881 = vadd.xlane.f32.xlu0 %v2880
    %v2882 = vpop.xlane.xlu0 %2881
    %v2883 = vsel %vm55, %v2565, 0.0
    %2884 = vadd.xlane.f32.xlu0 %v2883
    %v2885 = vpop.xlane.xlu0 %2884
    %v2886 = vsel %vm55, %v2566, 0.0
    %2887 = vadd.xlane.f32.xlu0 %v2886
    %v2888 = vpop.xlane.xlu0 %2887
    %v2889 = vsel %vm55, %v2567, 0.0
    %2890 = vadd.xlane.f32.xlu0 %v2889
    %v2891 = vpop.xlane.xlu0 %2890
    %v2892 = vsel %vm55, %v2568, 0.0
    %2893 = vadd.xlane.f32.xlu0 %v2892
    %v2894 = vpop.xlane.xlu0 %2893
    %v2895 = vsel %vm55, %v2569, 0.0
    %2896 = vadd.xlane.f32.xlu0 %v2895
    %v2897 = vpop.xlane.xlu0 %2896
    %v2898 = vsel %vm55, %v2570, 0.0
    %2899 = vadd.xlane.f32.xlu0 %v2898
    %v2900 = vpop.xlane.xlu0 %2899
    %v2901 = vsel %vm55, %v2571, 0.0
    %2902 = vadd.xlane.f32.xlu0 %v2901
    %v2903 = vpop.xlane.xlu0 %2902
    %v2904 = vsel %vm55, %v2572, 0.0
    %2905 = vadd.xlane.f32.xlu0 %v2904
    %v2906 = vpop.xlane.xlu0 %2905
    %v2907 = vsel %vm55, %v2573, 0.0
    %2908 = vadd.xlane.f32.xlu0 %v2907
    %v2909 = vpop.xlane.xlu0 %2908
    %v2910 = vsel %vm55, %v2574, 0.0
    %2911 = vadd.xlane.f32.xlu0 %v2910
    %v2912 = vpop.xlane.xlu0 %2911
    %v2913 = vsel %vm55, %v2575, 0.0
    %2914 = vadd.xlane.f32.xlu0 %v2913
    %v2915 = vpop.xlane.xlu0 %2914
    %v2916 = vsel %vm55, %v2576, 0.0
    %2917 = vadd.xlane.f32.xlu0 %v2916
    %v2918 = vpop.xlane.xlu0 %2917
    %v2919 = vsel %vm55, %v2577, 0.0
    %2920 = vadd.xlane.f32.xlu0 %v2919
    %v2921 = vpop.xlane.xlu0 %2920
    %v2922 = vsel %vm55, %v2578, 0.0
    %2923 = vadd.xlane.f32.xlu0 %v2922
    %v2924 = vpop.xlane.xlu0 %2923
    %v2925 = vsel %vm55, %v2579, 0.0
    %2926 = vadd.xlane.f32.xlu0 %v2925
    %v2927 = vpop.xlane.xlu0 %2926
    %v2928 = vsel %vm55, %v2580, 0.0
    %2929 = vadd.xlane.f32.xlu0 %v2928
    %v2930 = vpop.xlane.xlu0 %2929
    %v2931 = vsel %vm55, %v2581, 0.0
    %2932 = vadd.xlane.f32.xlu0 %v2931
    %v2933 = vpop.xlane.xlu0 %2932
    %v2934 = vsel %vm55, %v2582, 0.0
    %2935 = vadd.xlane.f32.xlu0 %v2934
    %v2936 = vpop.xlane.xlu0 %2935
    %v2937 = vsel %vm55, %v2583, 0.0
    %2938 = vadd.xlane.f32.xlu0 %v2937
    %v2939 = vpop.xlane.xlu0 %2938
    %v2940 = vsel %vm55, %v2584, 0.0
    %2941 = vadd.xlane.f32.xlu0 %v2940
    %v2942 = vpop.xlane.xlu0 %2941
    %v2943 = vsel %vm55, %v2585, 0.0
    %2944 = vadd.xlane.f32.xlu0 %v2943
    %v2945 = vpop.xlane.xlu0 %2944
    %v2946 = vsel %vm55, %v2586, 0.0
    %2947 = vadd.xlane.f32.xlu0 %v2946
    %v2948 = vpop.xlane.xlu0 %2947
    %v2949 = vsel %vm55, %v2587, 0.0
    %2950 = vadd.xlane.f32.xlu0 %v2949
    %v2951 = vpop.xlane.xlu0 %2950
    %v2952 = vsel %vm55, %v2588, 0.0
    %2953 = vadd.xlane.f32.xlu0 %v2952
    %v2954 = vpop.xlane.xlu0 %2953
    %v2955 = vsel %vm55, %v2589, 0.0
    %2956 = vadd.xlane.f32.xlu0 %v2955
    %v2957 = vpop.xlane.xlu0 %2956
    %v2958 = vsel %vm55, %v2590, 0.0
    %2959 = vadd.xlane.f32.xlu0 %v2958
    %v2960 = vpop.xlane.xlu0 %2959
    %v2961 = vsel %vm55, %v2591, 0.0
    %2962 = vadd.xlane.f32.xlu0 %v2961
    %v2963 = vpop.xlane.xlu0 %2962
    %v2964 = vsel %vm55, %v2592, 0.0
    %2965 = vadd.xlane.f32.xlu0 %v2964
    %v2966 = vpop.xlane.xlu0 %2965
    %v2967 = vsel %vm55, %v2593, 0.0
    %2968 = vadd.xlane.f32.xlu0 %v2967
    %v2969 = vpop.xlane.xlu0 %2968
    %v2970 = vsel %vm55, %v2594, 0.0
    %2971 = vadd.xlane.f32.xlu0 %v2970
    %v2972 = vpop.xlane.xlu0 %2971
    %v2973 = vsel %vm55, %v2595, 0.0
    %2974 = vadd.xlane.f32.xlu0 %v2973
    %v2975 = vpop.xlane.xlu0 %2974
    %v2976 = vsel %vm55, %v2596, 0.0
    %2977 = vadd.xlane.f32.xlu0 %v2976
    %v2978 = vpop.xlane.xlu0 %2977
    %v2979 = vsel %vm55, %v2597, 0.0
    %2980 = vadd.xlane.f32.xlu0 %v2979
    %v2981 = vpop.xlane.xlu0 %2980
    %v2982 = vsel %vm55, %v2598, 0.0
    %2983 = vadd.xlane.f32.xlu0 %v2982
    %v2984 = vpop.xlane.xlu0 %2983
    %v2985 = vsel %vm55, %v2599, 0.0
    %2986 = vadd.xlane.f32.xlu0 %v2985
    %v2987 = vpop.xlane.xlu0 %2986
    %v2988 = vsel %vm55, %v2600, 0.0
    %2989 = vadd.xlane.f32.xlu0 %v2988
    %v2990 = vpop.xlane.xlu0 %2989
    %v2991 = vsel %vm55, %v2601, 0.0
    %2992 = vadd.xlane.f32.xlu0 %v2991
    %v2993 = vpop.xlane.xlu0 %2992
    %v2994 = vsel %vm55, %v2602, 0.0
    %2995 = vadd.xlane.f32.xlu0 %v2994
    %v2996 = vpop.xlane.xlu0 %2995
    %v2997 = vsel %vm55, %v2603, 0.0
    %2998 = vadd.xlane.f32.xlu0 %v2997
    %v2999 = vpop.xlane.xlu0 %2998
    %v3000 = vsel %vm55, %v2604, 0.0
    %3001 = vadd.xlane.f32.xlu0 %v3000
    %v3002 = vpop.xlane.xlu0 %3001
    %v3003 = vsel %vm55, %v2605, 0.0
    %3004 = vadd.xlane.f32.xlu0 %v3003
    %v3005 = vpop.xlane.xlu0 %3004
    %v3006 = vsel %vm55, %v2606, 0.0
    %3007 = vadd.xlane.f32.xlu0 %v3006
    %v3008 = vpop.xlane.xlu0 %3007
    %v3009 = vsel %vm55, %v2607, 0.0
    %3010 = vadd.xlane.f32.xlu0 %v3009
    %v3011 = vpop.xlane.xlu0 %3010
    %v3012 = vsel %vm55, %v2608, 0.0
    %3013 = vadd.xlane.f32.xlu0 %v3012
    %v3014 = vpop.xlane.xlu0 %3013
    %v3015 = vsel %vm55, %v2609, 0.0
    %3016 = vadd.xlane.f32.xlu0 %v3015
    %v3017 = vpop.xlane.xlu0 %3016
    %v3018 = vsel %vm55, %v2610, 0.0
    %3019 = vadd.xlane.f32.xlu0 %v3018
    %v3020 = vpop.xlane.xlu0 %3019
    %v3021 = vsel %vm55, %v2611, 0.0
    %3022 = vadd.xlane.f32.xlu0 %v3021
    %v3023 = vpop.xlane.xlu0 %3022
    %v3024 = vsel %vm55, %v2612, 0.0
    %3025 = vadd.xlane.f32.xlu0 %v3024
    %v3026 = vpop.xlane.xlu0 %3025
    %v3027 = vsel %vm55, %v2613, 0.0
    %3028 = vadd.xlane.f32.xlu0 %v3027
    %v3029 = vpop.xlane.xlu0 %3028
    %v3030 = vsel %vm55, %v2614, 0.0
    %3031 = vadd.xlane.f32.xlu0 %v3030
    %v3032 = vpop.xlane.xlu0 %3031
    %v3033 = vsel %vm55, %v2615, 0.0
    %3034 = vadd.xlane.f32.xlu0 %v3033
    %v3035 = vpop.xlane.xlu0 %3034
    %v3036 = vsel %vm55, %v2616, 0.0
    %3037 = vadd.xlane.f32.xlu0 %v3036
    %v3038 = vpop.xlane.xlu0 %3037
    %v3039 = vsel %vm55, %v2617, 0.0
    %3040 = vadd.xlane.f32.xlu0 %v3039
    %v3041 = vpop.xlane.xlu0 %3040
    %v3042 = vsel %vm55, %v2618, 0.0
    %3043 = vadd.xlane.f32.xlu0 %v3042
    %v3044 = vpop.xlane.xlu0 %3043
    %v3045 = vsel %vm55, %v2619, 0.0
    %3046 = vadd.xlane.f32.xlu0 %v3045
    %v3047 = vpop.xlane.xlu0 %3046
    %v3048 = vsel %vm55, %v2620, 0.0
    %3049 = vadd.xlane.f32.xlu0 %v3048
    %v3050 = vpop.xlane.xlu0 %3049
    %v3051 = vsel %vm55, %v2621, 0.0
    %3052 = vadd.xlane.f32.xlu0 %v3051
    %v3053 = vpop.xlane.xlu0 %3052
    %v3054 = vsel %vm55, %v2622, 0.0
    %3055 = vadd.xlane.f32.xlu0 %v3054
    %v3056 = vpop.xlane.xlu0 %3055
    %v3057 = vsel %vm55, %v2623, 0.0
    %3058 = vadd.xlane.f32.xlu0 %v3057
    %v3059 = vpop.xlane.xlu0 %3058
    %v3060 = vsel %vm55, %v2624, 0.0
    %3061 = vadd.xlane.f32.xlu0 %v3060
    %v3062 = vpop.xlane.xlu0 %3061
    %v3063 = vsel %vm55, %v2625, 0.0
    %3064 = vadd.xlane.f32.xlu0 %v3063
    %v3065 = vpop.xlane.xlu0 %3064
    %v3066 = vsel %vm55, %v2626, 0.0
    %3067 = vadd.xlane.f32.xlu0 %v3066
    %v3068 = vpop.xlane.xlu0 %3067
    %v3069 = vsel %vm55, %v2627, 0.0
    %3070 = vadd.xlane.f32.xlu0 %v3069
    %v3071 = vpop.xlane.xlu0 %3070
    %v3072 = vsel %vm55, %v2628, 0.0
    %3073 = vadd.xlane.f32.xlu0 %v3072
    %v3074 = vpop.xlane.xlu0 %3073
    %v3075 = vsel %vm55, %v2629, 0.0
    %3076 = vadd.xlane.f32.xlu0 %v3075
    %v3077 = vpop.xlane.xlu0 %3076
    %v3078 = vsel %vm55, %v2630, 0.0
    %3079 = vadd.xlane.f32.xlu0 %v3078
    %v3080 = vpop.xlane.xlu0 %3079
    %v3081 = vsel %vm55, %v2631, 0.0
    %3082 = vadd.xlane.f32.xlu0 %v3081
    %v3083 = vpop.xlane.xlu0 %3082
    %v3084 = vsel %vm55, %v2632, 0.0
    %3085 = vadd.xlane.f32.xlu0 %v3084
    %v3086 = vpop.xlane.xlu0 %3085
    %v3087 = vsel %vm55, %v2633, 0.0
    %3088 = vadd.xlane.f32.xlu0 %v3087
    %v3089 = vpop.xlane.xlu0 %3088
    %v3090 = vsel %vm55, %v2634, 0.0
    %3091 = vadd.xlane.f32.xlu0 %v3090
    %v3092 = vpop.xlane.xlu0 %3091
    %v3093 = vsel %vm55, %v2635, 0.0
    %3094 = vadd.xlane.f32.xlu0 %v3093
    %v3095 = vpop.xlane.xlu0 %3094
    %v3096 = vsel %vm55, %v2636, 0.0
    %3097 = vadd.xlane.f32.xlu0 %v3096
    %v3098 = vpop.xlane.xlu0 %3097
    %v3099 = vsel %vm55, %v2637, 0.0
    %3100 = vadd.xlane.f32.xlu0 %v3099
    %v3101 = vpop.xlane.xlu0 %3100
    %v3102 = vsel %vm55, %v2638, 0.0
    %3103 = vadd.xlane.f32.xlu0 %v3102
    %v3104 = vpop.xlane.xlu0 %3103
    %v3105 = vsel %vm55, %v2639, 0.0
    %3106 = vadd.xlane.f32.xlu0 %v3105
    %v3107 = vpop.xlane.xlu0 %3106
    %v3108 = vsel %vm55, %v2640, 0.0
    %3109 = vadd.xlane.f32.xlu0 %v3108
    %v3110 = vpop.xlane.xlu0 %3109
    %v3111 = vsel %vm55, %v2641, 0.0
    %3112 = vadd.xlane.f32.xlu0 %v3111
    %v3113 = vpop.xlane.xlu0 %3112
    %v3114 = vsel %vm55, %v2642, 0.0
    %3115 = vadd.xlane.f32.xlu0 %v3114
    %v3116 = vpop.xlane.xlu0 %3115
    %v3117 = vsel %vm55, %v2643, 0.0
    %3118 = vadd.xlane.f32.xlu0 %v3117
    %v3119 = vpop.xlane.xlu0 %3118
    %v3120 = vsel %vm55, %v2644, 0.0
    %3121 = vadd.xlane.f32.xlu0 %v3120
    %v3122 = vpop.xlane.xlu0 %3121
    %v3123 = vsel %vm55, %v2645, 0.0
    %3124 = vadd.xlane.f32.xlu0 %v3123
    %v3125 = vpop.xlane.xlu0 %3124
    %v3126 = vsel %vm55, %v2646, 0.0
    %3127 = vadd.xlane.f32.xlu0 %v3126
    %v3128 = vpop.xlane.xlu0 %3127
    %v3129 = vsel %vm55, %v2647, 0.0
    %3130 = vadd.xlane.f32.xlu0 %v3129
    %v3131 = vpop.xlane.xlu0 %3130
    %v3132 = vsel %vm55, %v2648, 0.0
    %3133 = vadd.xlane.f32.xlu0 %v3132
    %v3134 = vpop.xlane.xlu0 %3133
    %v3135 = vsel %vm55, %v2649, 0.0
    %3136 = vadd.xlane.f32.xlu0 %v3135
    %v3137 = vpop.xlane.xlu0 %3136
    %v3138 = vsel %vm55, %v2650, 0.0
    %3139 = vadd.xlane.f32.xlu0 %v3138
    %v3140 = vpop.xlane.xlu0 %3139
    %v3141 = vsel %vm55, %v2651, 0.0
    %3142 = vadd.xlane.f32.xlu0 %v3141
    %v3143 = vpop.xlane.xlu0 %3142
    %v3144 = vsel %vm55, %v2652, 0.0
    %3145 = vadd.xlane.f32.xlu0 %v3144
    %v3146 = vpop.xlane.xlu0 %3145
    %v3147 = vsel %vm55, %v2653, 0.0
    %3148 = vadd.xlane.f32.xlu0 %v3147
    %v3149 = vpop.xlane.xlu0 %3148
    %v3150 = vsel %vm55, %v2654, 0.0
    %3151 = vadd.xlane.f32.xlu0 %v3150
    %v3152 = vpop.xlane.xlu0 %3151
    %v3153 = vsel %vm55, %v2655, 0.0
    %3154 = vadd.xlane.f32.xlu0 %v3153
    %v3155 = vpop.xlane.xlu0 %3154
    %v3156 = vsel %vm55, %v2656, 0.0
    %3157 = vadd.xlane.f32.xlu0 %v3156
    %v3158 = vpop.xlane.xlu0 %3157
    %v3159 = vsel %vm55, %v2657, 0.0
    %3160 = vadd.xlane.f32.xlu0 %v3159
    %v3161 = vpop.xlane.xlu0 %3160
    %v3162 = vsel %vm55, %v2658, 0.0
    %3163 = vadd.xlane.f32.xlu0 %v3162
    %v3164 = vpop.xlane.xlu0 %3163
    %v3165 = vsel %vm55, %v2659, 0.0
    %3166 = vadd.xlane.f32.xlu0 %v3165
    %v3167 = vpop.xlane.xlu0 %3166
    %v3168 = vsel %vm55, %v2660, 0.0
    %3169 = vadd.xlane.f32.xlu0 %v3168
    %v3170 = vpop.xlane.xlu0 %3169
    %v3171 = vsel %vm55, %v2661, 0.0
    %3172 = vadd.xlane.f32.xlu0 %v3171
    %v3173 = vpop.xlane.xlu0 %3172
    %v3174 = vsel %vm55, %v2662, 0.0
    %3175 = vadd.xlane.f32.xlu0 %v3174
    %v3176 = vpop.xlane.xlu0 %3175
    %v3177 = vsel %vm55, %v2663, 0.0
    %3178 = vadd.xlane.f32.xlu0 %v3177
    %v3179 = vpop.xlane.xlu0 %3178
    %v3180 = vsel %vm55, %v2664, 0.0
    %3181 = vadd.xlane.f32.xlu0 %v3180
    %v3182 = vpop.xlane.xlu0 %3181
    %v3183 = vsel %vm55, %v2665, 0.0
    %3184 = vadd.xlane.f32.xlu0 %v3183
    %v3185 = vpop.xlane.xlu0 %3184
    %v3186 = vsel %vm55, %v2666, 0.0
    %3187 = vadd.xlane.f32.xlu0 %v3186
    %v3188 = vpop.xlane.xlu0 %3187
    %v3189 = vsel %vm55, %v2667, 0.0
    %3190 = vadd.xlane.f32.xlu0 %v3189
    %v3191 = vpop.xlane.xlu0 %3190
    %v3192 = vsel %vm55, %v2668, 0.0
    %3193 = vadd.xlane.f32.xlu0 %v3192
    %v3194 = vpop.xlane.xlu0 %3193
    %v3195 = vsel %vm55, %v2669, 0.0
    %3196 = vadd.xlane.f32.xlu0 %v3195
    %v3197 = vpop.xlane.xlu0 %3196
    %v3198 = vsel %vm55, %v2670, 0.0
    %3199 = vadd.xlane.f32.xlu0 %v3198
    %v3200 = vpop.xlane.xlu0 %3199
    %v3201 = vsel %vm55, %v2671, 0.0
    %3202 = vadd.xlane.f32.xlu0 %v3201
    %v3203 = vpop.xlane.xlu0 %3202
    %v3204 = vsel %vm55, %v2672, 0.0
    %3205 = vadd.xlane.f32.xlu0 %v3204
    %v3206 = vpop.xlane.xlu0 %3205
    %v3207 = vsel %vm55, %v2673, 0.0
    %3208 = vadd.xlane.f32.xlu0 %v3207
    %v3209 = vpop.xlane.xlu0 %3208
    %v3210 = vsel %vm55, %v2674, 0.0
    %3211 = vadd.xlane.f32.xlu0 %v3210
    %v3212 = vpop.xlane.xlu0 %3211
    %v3213 = vsel %vm55, %v2675, 0.0
    %3214 = vadd.xlane.f32.xlu0 %v3213
    %v3215 = vpop.xlane.xlu0 %3214
    %v3216 = vsel %vm55, %v2676, 0.0
    %3217 = vadd.xlane.f32.xlu0 %v3216
    %v3218 = vpop.xlane.xlu0 %3217
    %v3219 = vsel %vm55, %v2677, 0.0
    %3220 = vadd.xlane.f32.xlu0 %v3219
    %v3221 = vpop.xlane.xlu0 %3220
    %v3222 = vsel %vm55, %v2678, 0.0
    %3223 = vadd.xlane.f32.xlu0 %v3222
    %v3224 = vpop.xlane.xlu0 %3223
    %v3225 = vsel %vm55, %v2679, 0.0
    %3226 = vadd.xlane.f32.xlu0 %v3225
    %v3227 = vpop.xlane.xlu0 %3226
    %v3228 = vsel %vm55, %v2680, 0.0
    %3229 = vadd.xlane.f32.xlu0 %v3228
    %v3230 = vpop.xlane.xlu0 %3229
    %v3231 = vsel %vm55, %v2681, 0.0
    %3232 = vadd.xlane.f32.xlu0 %v3231
    %v3233 = vpop.xlane.xlu0 %3232
    %v3234 = vsel %vm55, %v2682, 0.0
    %3235 = vadd.xlane.f32.xlu0 %v3234
    %v3236 = vpop.xlane.xlu0 %3235
    %v3237 = vsel %vm55, %v2683, 0.0
    %3238 = vadd.xlane.f32.xlu0 %v3237
    %v3239 = vpop.xlane.xlu0 %3238
    %v3240 = vsel %vm55, %v2684, 0.0
    %3241 = vadd.xlane.f32.xlu0 %v3240
    %v3242 = vpop.xlane.xlu0 %3241
    %v3243 = vsel %vm55, %v2685, 0.0
    %3244 = vadd.xlane.f32.xlu0 %v3243
    %v3245 = vpop.xlane.xlu0 %3244
    %v3246 = vsel %vm55, %v2686, 0.0
    %3247 = vadd.xlane.f32.xlu0 %v3246
    %v3248 = vpop.xlane.xlu0 %3247
    %v3249 = vsel %vm55, %v2687, 0.0
    %3250 = vadd.xlane.f32.xlu0 %v3249
    %v3251 = vpop.xlane.xlu0 %3250
    %v3252 = vsel %vm55, %v2688, 0.0
    %3253 = vadd.xlane.f32.xlu0 %v3252
    %v3254 = vpop.xlane.xlu0 %3253
    %v3255 = vsel %vm55, %v2689, 0.0
    %3256 = vadd.xlane.f32.xlu0 %v3255
    %v3257 = vpop.xlane.xlu0 %3256
    %v3258 = vsel %vm55, %v2690, 0.0
    %3259 = vadd.xlane.f32.xlu0 %v3258
    %v3260 = vpop.xlane.xlu0 %3259
    %v3261 = vsel %vm55, %v2691, 0.0
    %3262 = vadd.xlane.f32.xlu0 %v3261
    %v3263 = vpop.xlane.xlu0 %3262
    %v3264 = vsel %vm55, %v2692, 0.0
    %3265 = vadd.xlane.f32.xlu0 %v3264
    %v3266 = vpop.xlane.xlu0 %3265
    %v3267 = vsel %vm55, %v2693, 0.0
    %3268 = vadd.xlane.f32.xlu0 %v3267
    %v3269 = vpop.xlane.xlu0 %3268
    %v3270 = vsel %vm55, %v2694, 0.0
    %3271 = vadd.xlane.f32.xlu0 %v3270
    %v3272 = vpop.xlane.xlu0 %3271
    %v3273 = vsel %vm55, %v2695, 0.0
    %3274 = vadd.xlane.f32.xlu0 %v3273
    %v3275 = vpop.xlane.xlu0 %3274
    %v3276 = vsel %vm55, %v2696, 0.0
    %3277 = vadd.xlane.f32.xlu0 %v3276
    %v3278 = vpop.xlane.xlu0 %3277
    %v3279 = vsel %vm55, %v2697, 0.0
    %3280 = vadd.xlane.f32.xlu0 %v3279
    %v3281 = vpop.xlane.xlu0 %3280
    %v3282 = vsel %vm55, %v2698, 0.0
    %3283 = vadd.xlane.f32.xlu0 %v3282
    %v3284 = vpop.xlane.xlu0 %3283
    %v3285 = vsel %vm55, %v2699, 0.0
    %3286 = vadd.xlane.f32.xlu0 %v3285
    %v3287 = vpop.xlane.xlu0 %3286
    %v3288 = vsel %vm55, %v2700, 0.0
    %3289 = vadd.xlane.f32.xlu0 %v3288
    %v3290 = vpop.xlane.xlu0 %3289
    %v3291 = vsel %vm55, %v2701, 0.0
    %3292 = vadd.xlane.f32.xlu0 %v3291
    %v3293 = vpop.xlane.xlu0 %3292
    %v3294 = vsel %vm55, %v2702, 0.0
    %3295 = vadd.xlane.f32.xlu0 %v3294
    %v3296 = vpop.xlane.xlu0 %3295
    %v3297 = vsel %vm55, %v2703, 0.0
    %3298 = vadd.xlane.f32.xlu0 %v3297
    %v3299 = vpop.xlane.xlu0 %3298
    %v3300 = vsel %vm55, %v2704, 0.0
    %3301 = vadd.xlane.f32.xlu0 %v3300
    %v3302 = vpop.xlane.xlu0 %3301
    %v3303 = vsel %vm55, %v2705, 0.0
    %3304 = vadd.xlane.f32.xlu0 %v3303
    %v3305 = vpop.xlane.xlu0 %3304
    %v3306 = vsel %vm55, %v2706, 0.0
    %3307 = vadd.xlane.f32.xlu0 %v3306
    %v3308 = vpop.xlane.xlu0 %3307
    %v3309 = vsel %vm55, %v2707, 0.0
    %3310 = vadd.xlane.f32.xlu0 %v3309
    %v3311 = vpop.xlane.xlu0 %3310
    %v3312 = vsel %vm55, %v2708, 0.0
    %3313 = vadd.xlane.f32.xlu0 %v3312
    %v3314 = vpop.xlane.xlu0 %3313
    %v3315 = vsel %vm55, %v2709, 0.0
    %3316 = vadd.xlane.f32.xlu0 %v3315
    %v3317 = vpop.xlane.xlu0 %3316
    %v3318 = vsel %vm55, %v2710, 0.0
    %3319 = vadd.xlane.f32.xlu0 %v3318
    %v3320 = vpop.xlane.xlu0 %3319
    %v3321 = vsel %vm55, %v2711, 0.0
    %3322 = vadd.xlane.f32.xlu0 %v3321
    %v3323 = vpop.xlane.xlu0 %3322
    %v3324 = vsel %vm55, %v2712, 0.0
    %3325 = vadd.xlane.f32.xlu0 %v3324
    %v3326 = vpop.xlane.xlu0 %3325
    %v3327 = vsel %vm55, %v2713, 0.0
    %3328 = vadd.xlane.f32.xlu0 %v3327
    %v3329 = vpop.xlane.xlu0 %3328
    %v3330 = vsel %vm55, %v2714, 0.0
    %3331 = vadd.xlane.f32.xlu0 %v3330
    %v3332 = vpop.xlane.xlu0 %3331
    %v3333 = vsel %vm55, %v2715, 0.0
    %3334 = vadd.xlane.f32.xlu0 %v3333
    %v3335 = vpop.xlane.xlu0 %3334
    %v3336 = vsel %vm55, %v2716, 0.0
    %3337 = vadd.xlane.f32.xlu0 %v3336
    %v3338 = vpop.xlane.xlu0 %3337
    %v3339 = vsel %vm55, %v2717, 0.0
    %3340 = vadd.xlane.f32.xlu0 %v3339
    %v3341 = vpop.xlane.xlu0 %3340
    %v3342 = vsel %vm55, %v2718, 0.0
    %3343 = vadd.xlane.f32.xlu0 %v3342
    %v3344 = vpop.xlane.xlu0 %3343
    %v3345 = vsel %vm55, %v2719, 0.0
    %3346 = vadd.xlane.f32.xlu0 %v3345
    %v3347 = vpop.xlane.xlu0 %3346
    %v3348 = vsel %vm55, %v2720, 0.0
    %3349 = vadd.xlane.f32.xlu0 %v3348
    %v3350 = vpop.xlane.xlu0 %3349
    %v3351 = vsel %vm55, %v2721, 0.0
    %3352 = vadd.xlane.f32.xlu0 %v3351
    %v3353 = vpop.xlane.xlu0 %3352
    %v3354 = vsel %vm55, %v2722, 0.0
    %3355 = vadd.xlane.f32.xlu0 %v3354
    %v3356 = vpop.xlane.xlu0 %3355
    %v3357 = vsel %vm55, %v2723, 0.0
    %3358 = vadd.xlane.f32.xlu0 %v3357
    %v3359 = vpop.xlane.xlu0 %3358
    %v3360 = vsel %vm55, %v2724, 0.0
    %3361 = vadd.xlane.f32.xlu0 %v3360
    %v3362 = vpop.xlane.xlu0 %3361
    %v3363 = vsel %vm55, %v2725, 0.0
    %3364 = vadd.xlane.f32.xlu0 %v3363
    %v3365 = vpop.xlane.xlu0 %3364
    %v3366 = vsel %vm55, %v2726, 0.0
    %3367 = vadd.xlane.f32.xlu0 %v3366
    %v3368 = vpop.xlane.xlu0 %3367
    %v3369 = vsel %vm55, %v2727, 0.0
    %3370 = vadd.xlane.f32.xlu0 %v3369
    %v3371 = vpop.xlane.xlu0 %3370
    %v3372 = vsel %vm55, %v2728, 0.0
    %3373 = vadd.xlane.f32.xlu0 %v3372
    %v3374 = vpop.xlane.xlu0 %3373
    %v3375 = vsel %vm55, %v2729, 0.0
    %3376 = vadd.xlane.f32.xlu0 %v3375
    %v3377 = vpop.xlane.xlu0 %3376
    %v3378 = vsel %vm55, %v2730, 0.0
    %3379 = vadd.xlane.f32.xlu0 %v3378
    %v3380 = vpop.xlane.xlu0 %3379
    %v3381 = vsel %vm55, %v2731, 0.0
    %3382 = vadd.xlane.f32.xlu0 %v3381
    %v3383 = vpop.xlane.xlu0 %3382
    %v3384 = vsel %vm55, %v2732, 0.0
    %3385 = vadd.xlane.f32.xlu0 %v3384
    %v3386 = vpop.xlane.xlu0 %3385
    %v3387 = vsel %vm55, %v2733, 0.0
    %3388 = vadd.xlane.f32.xlu0 %v3387
    %v3389 = vpop.xlane.xlu0 %3388
    %v3390 = vsel %vm55, %v2734, 0.0
    %3391 = vadd.xlane.f32.xlu0 %v3390
    %v3392 = vpop.xlane.xlu0 %3391
    %v3393 = vsel %vm55, %v2735, 0.0
    %3394 = vadd.xlane.f32.xlu0 %v3393
    %v3395 = vpop.xlane.xlu0 %3394
    %v3396 = vsel %vm55, %v2736, 0.0
    %3397 = vadd.xlane.f32.xlu0 %v3396
    %v3398 = vpop.xlane.xlu0 %3397
    %v3399 = vsel %vm55, %v2737, 0.0
    %3400 = vadd.xlane.f32.xlu0 %v3399
    %v3401 = vpop.xlane.xlu0 %3400
    %v3402 = vsel %vm55, %v2738, 0.0
    %3403 = vadd.xlane.f32.xlu0 %v3402
    %v3404 = vpop.xlane.xlu0 %3403
    %v3405 = vsel %vm55, %v2739, 0.0
    %3406 = vadd.xlane.f32.xlu0 %v3405
    %v3407 = vpop.xlane.xlu0 %3406
    %v3408 = vsel %vm55, %v2740, 0.0
    %3409 = vadd.xlane.f32.xlu0 %v3408
    %v3410 = vpop.xlane.xlu0 %3409
    %v3411 = vsel %vm55, %v2741, 0.0
    %3412 = vadd.xlane.f32.xlu0 %v3411
    %v3413 = vpop.xlane.xlu0 %3412
    %v3414 = vsel %vm55, %v2742, 0.0
    %3415 = vadd.xlane.f32.xlu0 %v3414
    %v3416 = vpop.xlane.xlu0 %3415
    %v3417 = vsel %vm55, %v2743, 0.0
    %3418 = vadd.xlane.f32.xlu0 %v3417
    %v3419 = vpop.xlane.xlu0 %3418
    %v3420 = vsel %vm55, %v2744, 0.0
    %3421 = vadd.xlane.f32.xlu0 %v3420
    %v3422 = vpop.xlane.xlu0 %3421
    %v3423 = vsel %vm55, %v2745, 0.0
    %3424 = vadd.xlane.f32.xlu0 %v3423
    %v3425 = vpop.xlane.xlu0 %3424
    %v3426 = vsel %vm55, %v2746, 0.0
    %3427 = vadd.xlane.f32.xlu0 %v3426
    %v3428 = vpop.xlane.xlu0 %3427
    %v3429 = vsel %vm55, %v2747, 0.0
    %3430 = vadd.xlane.f32.xlu0 %v3429
    %v3431 = vpop.xlane.xlu0 %3430
    %v3432 = vsel %vm55, %v2748, 0.0
    %3433 = vadd.xlane.f32.xlu0 %v3432
    %v3434 = vpop.xlane.xlu0 %3433
    %v3435 = vsel %vm55, %v2749, 0.0
    %3436 = vadd.xlane.f32.xlu0 %v3435
    %v3437 = vpop.xlane.xlu0 %3436
    %v3438 = vsel %vm55, %v2750, 0.0
    %3439 = vadd.xlane.f32.xlu0 %v3438
    %v3440 = vpop.xlane.xlu0 %3439
    %v3441 = vsel %vm55, %v2751, 0.0
    %3442 = vadd.xlane.f32.xlu0 %v3441
    %v3443 = vpop.xlane.xlu0 %3442
    %v3444 = vsel %vm55, %v2752, 0.0
    %3445 = vadd.xlane.f32.xlu0 %v3444
    %v3446 = vpop.xlane.xlu0 %3445
    %v3447 = vsel %vm55, %v2753, 0.0
    %3448 = vadd.xlane.f32.xlu0 %v3447
    %v3449 = vpop.xlane.xlu0 %3448
    %v3450 = vsel %vm55, %v2754, 0.0
    %3451 = vadd.xlane.f32.xlu0 %v3450
    %v3452 = vpop.xlane.xlu0 %3451
    %v3453 = vsel %vm55, %v2755, 0.0
    %3454 = vadd.xlane.f32.xlu0 %v3453
    %v3455 = vpop.xlane.xlu0 %3454
    %v3456 = vsel %vm55, %v2756, 0.0
    %3457 = vadd.xlane.f32.xlu0 %v3456
    %v3458 = vpop.xlane.xlu0 %3457
    %v3459 = vsel %vm55, %v2757, 0.0
    %3460 = vadd.xlane.f32.xlu0 %v3459
    %v3461 = vpop.xlane.xlu0 %3460
    %v3462 = vsel %vm55, %v2758, 0.0
    %3463 = vadd.xlane.f32.xlu0 %v3462
    %v3464 = vpop.xlane.xlu0 %3463
    %v3465 = vsel %vm55, %v2759, 0.0
    %3466 = vadd.xlane.f32.xlu0 %v3465
    %v3467 = vpop.xlane.xlu0 %3466
    %v3468 = vsel %vm55, %v2760, 0.0
    %3469 = vadd.xlane.f32.xlu0 %v3468
    %v3470 = vpop.xlane.xlu0 %3469
    %v3471 = vsel %vm55, %v2761, 0.0
    %3472 = vadd.xlane.f32.xlu0 %v3471
    %v3473 = vpop.xlane.xlu0 %3472
    %v3474 = vsel %vm55, %v2762, 0.0
    %3475 = vadd.xlane.f32.xlu0 %v3474
    %v3476 = vpop.xlane.xlu0 %3475
    %v3477 = vsel %vm55, %v2763, 0.0
    %3478 = vadd.xlane.f32.xlu0 %v3477
    %v3479 = vpop.xlane.xlu0 %3478
    %v3480 = vsel %vm55, %v2764, 0.0
    %3481 = vadd.xlane.f32.xlu0 %v3480
    %v3482 = vpop.xlane.xlu0 %3481
    %v3483 = vsel %vm55, %v2765, 0.0
    %3484 = vadd.xlane.f32.xlu0 %v3483
    %v3485 = vpop.xlane.xlu0 %3484
    %v3486 = vsel %vm55, %v2766, 0.0
    %3487 = vadd.xlane.f32.xlu0 %v3486
    %v3488 = vpop.xlane.xlu0 %3487
    %v3489 = vsel %vm55, %v2767, 0.0
    %3490 = vadd.xlane.f32.xlu0 %v3489
    %v3491 = vpop.xlane.xlu0 %3490
    %v3492 = vsel %vm55, %v2768, 0.0
    %3493 = vadd.xlane.f32.xlu0 %v3492
    %v3494 = vpop.xlane.xlu0 %3493
    %v3495 = vsel %vm55, %v2769, 0.0
    %3496 = vadd.xlane.f32.xlu0 %v3495
    %v3497 = vpop.xlane.xlu0 %3496
    %v3498 = vsel %vm55, %v2770, 0.0
    %3499 = vadd.xlane.f32.xlu0 %v3498
    %v3500 = vpop.xlane.xlu0 %3499
    %v3501 = vsel %vm55, %v2771, 0.0
    %3502 = vadd.xlane.f32.xlu0 %v3501
    %v3503 = vpop.xlane.xlu0 %3502
    %v3504 = vsel %vm55, %v2772, 0.0
    %3505 = vadd.xlane.f32.xlu0 %v3504
    %v3506 = vpop.xlane.xlu0 %3505
    %v3507 = vsel %vm55, %v2773, 0.0
    %3508 = vadd.xlane.f32.xlu0 %v3507
    %v3509 = vpop.xlane.xlu0 %3508
    %v3510 = vsel %vm55, %v2774, 0.0
    %3511 = vadd.xlane.f32.xlu0 %v3510
    %v3512 = vpop.xlane.xlu0 %3511
    %v3513 = vsel %vm55, %v2775, 0.0
    %3514 = vadd.xlane.f32.xlu0 %v3513
    %v3515 = vpop.xlane.xlu0 %3514
    %v3516 = vsel %vm55, %v2776, 0.0
    %3517 = vadd.xlane.f32.xlu0 %v3516
    %v3518 = vpop.xlane.xlu0 %3517
    %v3519 = vsel %vm55, %v2777, 0.0
    %3520 = vadd.xlane.f32.xlu0 %v3519
    %v3521 = vpop.xlane.xlu0 %3520
    %v3522 = vsel %vm55, %v2778, 0.0
    %3523 = vadd.xlane.f32.xlu0 %v3522
    %v3524 = vpop.xlane.xlu0 %3523
    %v3525 = vsel %vm55, %v2779, 0.0
    %3526 = vadd.xlane.f32.xlu0 %v3525
    %v3527 = vpop.xlane.xlu0 %3526
    %v3528 = vsel %vm55, %v2780, 0.0
    %3529 = vadd.xlane.f32.xlu0 %v3528
    %v3530 = vpop.xlane.xlu0 %3529
    %v3531 = vsel %vm55, %v2781, 0.0
    %3532 = vadd.xlane.f32.xlu0 %v3531
    %v3533 = vpop.xlane.xlu0 %3532
    %v3534 = vsel %vm55, %v2782, 0.0
    %3535 = vadd.xlane.f32.xlu0 %v3534
    %v3536 = vpop.xlane.xlu0 %3535
    %v3537 = vsel %vm55, %v2783, 0.0
    %3538 = vadd.xlane.f32.xlu0 %v3537
    %v3539 = vpop.xlane.xlu0 %3538
    %v3540 = vsel %vm55, %v2784, 0.0
    %3541 = vadd.xlane.f32.xlu0 %v3540
    %v3542 = vpop.xlane.xlu0 %3541
    %v3543 = vsel %vm55, %v2785, 0.0
    %3544 = vadd.xlane.f32.xlu0 %v3543
    %v3545 = vpop.xlane.xlu0 %3544
    %v3546 = vsel %vm55, %v2786, 0.0
    %3547 = vadd.xlane.f32.xlu0 %v3546
    %v3548 = vpop.xlane.xlu0 %3547
    %v3549 = vsel %vm55, %v2787, 0.0
    %3550 = vadd.xlane.f32.xlu0 %v3549
    %v3551 = vpop.xlane.xlu0 %3550
    %v3552 = vsel %vm55, %v2788, 0.0
    %3553 = vadd.xlane.f32.xlu0 %v3552
    %v3554 = vpop.xlane.xlu0 %3553
    %v3555 = vsel %vm55, %v2789, 0.0
    %3556 = vadd.xlane.f32.xlu0 %v3555
    %v3557 = vpop.xlane.xlu0 %3556
    %v3814 = vlaneseq
    %v3815 = vand.u32 %v3814, 127
    %v3816 = vperm.slane %v2792, %v3815
    %v3817 = vadd.s32 %v3815, 4294967288
    %v3818 = vperm.slane %v2795, %v3817
    %vm3819 = vcmask 130112
    %v3820 = vsel %vm3819, %v3818, %v3816
    %v3821 = vperm.slane %v2798, %v3815
    %v3822 = vperm.slane %v2801, %v3817
    %v3823 = vsel %vm3819, %v3822, %v3821
    %v3824 = vperm.slane %v2804, %v3815
    %v3825 = vperm.slane %v2807, %v3817
    %v3826 = vsel %vm3819, %v3825, %v3824
    %v3827 = vperm.slane %v2810, %v3815
    %v3828 = vperm.slane %v2813, %v3817
    %v3829 = vsel %vm3819, %v3828, %v3827
    %v3830 = vperm.slane %v2816, %v3815
    %v3831 = vperm.slane %v2819, %v3817
    %v3832 = vsel %vm3819, %v3831, %v3830
    %v3833 = vperm.slane %v2822, %v3815
    %v3834 = vperm.slane %v2825, %v3817
    %v3835 = vsel %vm3819, %v3834, %v3833
    %v3836 = vperm.slane %v2828, %v3815
    %v3837 = vperm.slane %v2831, %v3817
    %v3838 = vsel %vm3819, %v3837, %v3836
    %v3839 = vperm.slane %v2834, %v3815
    %v3840 = vperm.slane %v2837, %v3817
    %v3841 = vsel %vm3819, %v3840, %v3839
    %v3842 = vperm.slane %v2840, %v3815
    %v3843 = vperm.slane %v2843, %v3817
    %v3844 = vsel %vm3819, %v3843, %v3842
    %v3845 = vperm.slane %v2846, %v3815
    %v3846 = vperm.slane %v2849, %v3817
    %v3847 = vsel %vm3819, %v3846, %v3845
    %v3848 = vperm.slane %v2852, %v3815
    %v3849 = vperm.slane %v2855, %v3817
    %v3850 = vsel %vm3819, %v3849, %v3848
    %v3851 = vperm.slane %v2858, %v3815
    %v3852 = vperm.slane %v2861, %v3817
    %v3853 = vsel %vm3819, %v3852, %v3851
    %v3854 = vperm.slane %v2864, %v3815
    %v3855 = vperm.slane %v2867, %v3817
    %v3856 = vsel %vm3819, %v3855, %v3854
    %v3857 = vperm.slane %v2870, %v3815
    %v3858 = vperm.slane %v2873, %v3817
    %v3859 = vsel %vm3819, %v3858, %v3857
    %v3860 = vperm.slane %v2876, %v3815
    %v3861 = vperm.slane %v2879, %v3817
    %v3862 = vsel %vm3819, %v3861, %v3860
    %v3863 = vperm.slane %v2882, %v3815
    %v3864 = vperm.slane %v2885, %v3817
    %v3865 = vsel %vm3819, %v3864, %v3863
    %v3866 = vperm.slane %v2888, %v3815
    %v3867 = vperm.slane %v2891, %v3817
    %v3868 = vsel %vm3819, %v3867, %v3866
    %v3869 = vperm.slane %v2894, %v3815
    %v3870 = vperm.slane %v2897, %v3817
    %v3871 = vsel %vm3819, %v3870, %v3869
    %v3872 = vperm.slane %v2900, %v3815
    %v3873 = vperm.slane %v2903, %v3817
    %v3874 = vsel %vm3819, %v3873, %v3872
    %v3875 = vperm.slane %v2906, %v3815
    %v3876 = vperm.slane %v2909, %v3817
    %v3877 = vsel %vm3819, %v3876, %v3875
    %v3878 = vperm.slane %v2912, %v3815
    %v3879 = vperm.slane %v2915, %v3817
    %v3880 = vsel %vm3819, %v3879, %v3878
    %v3881 = vperm.slane %v2918, %v3815
    %v3882 = vperm.slane %v2921, %v3817
    %v3883 = vsel %vm3819, %v3882, %v3881
    %v3884 = vperm.slane %v2924, %v3815
    %v3885 = vperm.slane %v2927, %v3817
    %v3886 = vsel %vm3819, %v3885, %v3884
    %v3887 = vperm.slane %v2930, %v3815
    %v3888 = vperm.slane %v2933, %v3817
    %v3889 = vsel %vm3819, %v3888, %v3887
    %v3890 = vperm.slane %v2936, %v3815
    %v3891 = vperm.slane %v2939, %v3817
    %v3892 = vsel %vm3819, %v3891, %v3890
    %v3893 = vperm.slane %v2942, %v3815
    %v3894 = vperm.slane %v2945, %v3817
    %v3895 = vsel %vm3819, %v3894, %v3893
    %v3896 = vperm.slane %v2948, %v3815
    %v3897 = vperm.slane %v2951, %v3817
    %v3898 = vsel %vm3819, %v3897, %v3896
    %v3899 = vperm.slane %v2954, %v3815
    %v3900 = vperm.slane %v2957, %v3817
    %v3901 = vsel %vm3819, %v3900, %v3899
    %v3902 = vperm.slane %v2960, %v3815
    %v3903 = vperm.slane %v2963, %v3817
    %v3904 = vsel %vm3819, %v3903, %v3902
    %v3905 = vperm.slane %v2966, %v3815
    %v3906 = vperm.slane %v2969, %v3817
    %v3907 = vsel %vm3819, %v3906, %v3905
    %v3908 = vperm.slane %v2972, %v3815
    %v3909 = vperm.slane %v2975, %v3817
    %v3910 = vsel %vm3819, %v3909, %v3908
    %v3911 = vperm.slane %v2978, %v3815
    %v3912 = vperm.slane %v2981, %v3817
    %v3913 = vsel %vm3819, %v3912, %v3911
    %v3914 = vperm.slane %v2984, %v3815
    %v3915 = vperm.slane %v2987, %v3817
    %v3916 = vsel %vm3819, %v3915, %v3914
    %v3917 = vperm.slane %v2990, %v3815
    %v3918 = vperm.slane %v2993, %v3817
    %v3919 = vsel %vm3819, %v3918, %v3917
    %v3920 = vperm.slane %v2996, %v3815
    %v3921 = vperm.slane %v2999, %v3817
    %v3922 = vsel %vm3819, %v3921, %v3920
    %v3923 = vperm.slane %v3002, %v3815
    %v3924 = vperm.slane %v3005, %v3817
    %v3925 = vsel %vm3819, %v3924, %v3923
    %v3926 = vperm.slane %v3008, %v3815
    %v3927 = vperm.slane %v3011, %v3817
    %v3928 = vsel %vm3819, %v3927, %v3926
    %v3929 = vperm.slane %v3014, %v3815
    %v3930 = vperm.slane %v3017, %v3817
    %v3931 = vsel %vm3819, %v3930, %v3929
    %v3932 = vperm.slane %v3020, %v3815
    %v3933 = vperm.slane %v3023, %v3817
    %v3934 = vsel %vm3819, %v3933, %v3932
    %v3935 = vperm.slane %v3026, %v3815
    %v3936 = vperm.slane %v3029, %v3817
    %v3937 = vsel %vm3819, %v3936, %v3935
    %v3938 = vperm.slane %v3032, %v3815
    %v3939 = vperm.slane %v3035, %v3817
    %v3940 = vsel %vm3819, %v3939, %v3938
    %v3941 = vperm.slane %v3038, %v3815
    %v3942 = vperm.slane %v3041, %v3817
    %v3943 = vsel %vm3819, %v3942, %v3941
    %v3944 = vperm.slane %v3044, %v3815
    %v3945 = vperm.slane %v3047, %v3817
    %v3946 = vsel %vm3819, %v3945, %v3944
    %v3947 = vperm.slane %v3050, %v3815
    %v3948 = vperm.slane %v3053, %v3817
    %v3949 = vsel %vm3819, %v3948, %v3947
    %v3950 = vperm.slane %v3056, %v3815
    %v3951 = vperm.slane %v3059, %v3817
    %v3952 = vsel %vm3819, %v3951, %v3950
    %v3953 = vperm.slane %v3062, %v3815
    %v3954 = vperm.slane %v3065, %v3817
    %v3955 = vsel %vm3819, %v3954, %v3953
    %v3956 = vperm.slane %v3068, %v3815
    %v3957 = vperm.slane %v3071, %v3817
    %v3958 = vsel %vm3819, %v3957, %v3956
    %v3959 = vperm.slane %v3074, %v3815
    %v3960 = vperm.slane %v3077, %v3817
    %v3961 = vsel %vm3819, %v3960, %v3959
    %v3962 = vperm.slane %v3080, %v3815
    %v3963 = vperm.slane %v3083, %v3817
    %v3964 = vsel %vm3819, %v3963, %v3962
    %v3965 = vperm.slane %v3086, %v3815
    %v3966 = vperm.slane %v3089, %v3817
    %v3967 = vsel %vm3819, %v3966, %v3965
    %v3968 = vperm.slane %v3092, %v3815
    %v3969 = vperm.slane %v3095, %v3817
    %v3970 = vsel %vm3819, %v3969, %v3968
    %v3971 = vperm.slane %v3098, %v3815
    %v3972 = vperm.slane %v3101, %v3817
    %v3973 = vsel %vm3819, %v3972, %v3971
    %v3974 = vperm.slane %v3104, %v3815
    %v3975 = vperm.slane %v3107, %v3817
    %v3976 = vsel %vm3819, %v3975, %v3974
    %v3977 = vperm.slane %v3110, %v3815
    %v3978 = vperm.slane %v3113, %v3817
    %v3979 = vsel %vm3819, %v3978, %v3977
    %v3980 = vperm.slane %v3116, %v3815
    %v3981 = vperm.slane %v3119, %v3817
    %v3982 = vsel %vm3819, %v3981, %v3980
    %v3983 = vperm.slane %v3122, %v3815
    %v3984 = vperm.slane %v3125, %v3817
    %v3985 = vsel %vm3819, %v3984, %v3983
    %v3986 = vperm.slane %v3128, %v3815
    %v3987 = vperm.slane %v3131, %v3817
    %v3988 = vsel %vm3819, %v3987, %v3986
    %v3989 = vperm.slane %v3134, %v3815
    %v3990 = vperm.slane %v3137, %v3817
    %v3991 = vsel %vm3819, %v3990, %v3989
    %v3992 = vperm.slane %v3140, %v3815
    %v3993 = vperm.slane %v3143, %v3817
    %v3994 = vsel %vm3819, %v3993, %v3992
    %v3995 = vperm.slane %v3146, %v3815
    %v3996 = vperm.slane %v3149, %v3817
    %v3997 = vsel %vm3819, %v3996, %v3995
    %v3998 = vperm.slane %v3152, %v3815
    %v3999 = vperm.slane %v3155, %v3817
    %v4000 = vsel %vm3819, %v3999, %v3998
    %v4001 = vperm.slane %v3158, %v3815
    %v4002 = vperm.slane %v3161, %v3817
    %v4003 = vsel %vm3819, %v4002, %v4001
    %v4004 = vperm.slane %v3164, %v3815
    %v4005 = vperm.slane %v3167, %v3817
    %v4006 = vsel %vm3819, %v4005, %v4004
    %v4007 = vperm.slane %v3170, %v3815
    %v4008 = vperm.slane %v3173, %v3817
    %v4009 = vsel %vm3819, %v4008, %v4007
    %v4010 = vperm.slane %v3176, %v3815
    %v4011 = vperm.slane %v3179, %v3817
    %v4012 = vsel %vm3819, %v4011, %v4010
    %v4013 = vperm.slane %v3182, %v3815
    %v4014 = vperm.slane %v3185, %v3817
    %v4015 = vsel %vm3819, %v4014, %v4013
    %v4016 = vperm.slane %v3188, %v3815
    %v4017 = vperm.slane %v3191, %v3817
    %v4018 = vsel %vm3819, %v4017, %v4016
    %v4019 = vperm.slane %v3194, %v3815
    %v4020 = vperm.slane %v3197, %v3817
    %v4021 = vsel %vm3819, %v4020, %v4019
    %v4022 = vperm.slane %v3200, %v3815
    %v4023 = vperm.slane %v3203, %v3817
    %v4024 = vsel %vm3819, %v4023, %v4022
    %v4025 = vperm.slane %v3206, %v3815
    %v4026 = vperm.slane %v3209, %v3817
    %v4027 = vsel %vm3819, %v4026, %v4025
    %v4028 = vperm.slane %v3212, %v3815
    %v4029 = vperm.slane %v3215, %v3817
    %v4030 = vsel %vm3819, %v4029, %v4028
    %v4031 = vperm.slane %v3218, %v3815
    %v4032 = vperm.slane %v3221, %v3817
    %v4033 = vsel %vm3819, %v4032, %v4031
    %v4034 = vperm.slane %v3224, %v3815
    %v4035 = vperm.slane %v3227, %v3817
    %v4036 = vsel %vm3819, %v4035, %v4034
    %v4037 = vperm.slane %v3230, %v3815
    %v4038 = vperm.slane %v3233, %v3817
    %v4039 = vsel %vm3819, %v4038, %v4037
    %v4040 = vperm.slane %v3236, %v3815
    %v4041 = vperm.slane %v3239, %v3817
    %v4042 = vsel %vm3819, %v4041, %v4040
    %v4043 = vperm.slane %v3242, %v3815
    %v4044 = vperm.slane %v3245, %v3817
    %v4045 = vsel %vm3819, %v4044, %v4043
    %v4046 = vperm.slane %v3248, %v3815
    %v4047 = vperm.slane %v3251, %v3817
    %v4048 = vsel %vm3819, %v4047, %v4046
    %v4049 = vperm.slane %v3254, %v3815
    %v4050 = vperm.slane %v3257, %v3817
    %v4051 = vsel %vm3819, %v4050, %v4049
    %v4052 = vperm.slane %v3260, %v3815
    %v4053 = vperm.slane %v3263, %v3817
    %v4054 = vsel %vm3819, %v4053, %v4052
    %v4055 = vperm.slane %v3266, %v3815
    %v4056 = vperm.slane %v3269, %v3817
    %v4057 = vsel %vm3819, %v4056, %v4055
    %v4058 = vperm.slane %v3272, %v3815
    %v4059 = vperm.slane %v3275, %v3817
    %v4060 = vsel %vm3819, %v4059, %v4058
    %v4061 = vperm.slane %v3278, %v3815
    %v4062 = vperm.slane %v3281, %v3817
    %v4063 = vsel %vm3819, %v4062, %v4061
    %v4064 = vperm.slane %v3284, %v3815
    %v4065 = vperm.slane %v3287, %v3817
    %v4066 = vsel %vm3819, %v4065, %v4064
    %v4067 = vperm.slane %v3290, %v3815
    %v4068 = vperm.slane %v3293, %v3817
    %v4069 = vsel %vm3819, %v4068, %v4067
    %v4070 = vperm.slane %v3296, %v3815
    %v4071 = vperm.slane %v3299, %v3817
    %v4072 = vsel %vm3819, %v4071, %v4070
    %v4073 = vperm.slane %v3302, %v3815
    %v4074 = vperm.slane %v3305, %v3817
    %v4075 = vsel %vm3819, %v4074, %v4073
    %v4076 = vperm.slane %v3308, %v3815
    %v4077 = vperm.slane %v3311, %v3817
    %v4078 = vsel %vm3819, %v4077, %v4076
    %v4079 = vperm.slane %v3314, %v3815
    %v4080 = vperm.slane %v3317, %v3817
    %v4081 = vsel %vm3819, %v4080, %v4079
    %v4082 = vperm.slane %v3320, %v3815
    %v4083 = vperm.slane %v3323, %v3817
    %v4084 = vsel %vm3819, %v4083, %v4082
    %v4085 = vperm.slane %v3326, %v3815
    %v4086 = vperm.slane %v3329, %v3817
    %v4087 = vsel %vm3819, %v4086, %v4085
    %v4088 = vperm.slane %v3332, %v3815
    %v4089 = vperm.slane %v3335, %v3817
    %v4090 = vsel %vm3819, %v4089, %v4088
    %v4091 = vperm.slane %v3338, %v3815
    %v4092 = vperm.slane %v3341, %v3817
    %v4093 = vsel %vm3819, %v4092, %v4091
    %v4094 = vperm.slane %v3344, %v3815
    %v4095 = vperm.slane %v3347, %v3817
    %v4096 = vsel %vm3819, %v4095, %v4094
    %v4097 = vperm.slane %v3350, %v3815
    %v4098 = vperm.slane %v3353, %v3817
    %v4099 = vsel %vm3819, %v4098, %v4097
    %v4100 = vperm.slane %v3356, %v3815
    %v4101 = vperm.slane %v3359, %v3817
    %v4102 = vsel %vm3819, %v4101, %v4100
    %v4103 = vperm.slane %v3362, %v3815
    %v4104 = vperm.slane %v3365, %v3817
    %v4105 = vsel %vm3819, %v4104, %v4103
    %v4106 = vperm.slane %v3368, %v3815
    %v4107 = vperm.slane %v3371, %v3817
    %v4108 = vsel %vm3819, %v4107, %v4106
    %v4109 = vperm.slane %v3374, %v3815
    %v4110 = vperm.slane %v3377, %v3817
    %v4111 = vsel %vm3819, %v4110, %v4109
    %v4112 = vperm.slane %v3380, %v3815
    %v4113 = vperm.slane %v3383, %v3817
    %v4114 = vsel %vm3819, %v4113, %v4112
    %v4115 = vperm.slane %v3386, %v3815
    %v4116 = vperm.slane %v3389, %v3817
    %v4117 = vsel %vm3819, %v4116, %v4115
    %v4118 = vperm.slane %v3392, %v3815
    %v4119 = vperm.slane %v3395, %v3817
    %v4120 = vsel %vm3819, %v4119, %v4118
    %v4121 = vperm.slane %v3398, %v3815
    %v4122 = vperm.slane %v3401, %v3817
    %v4123 = vsel %vm3819, %v4122, %v4121
    %v4124 = vperm.slane %v3404, %v3815
    %v4125 = vperm.slane %v3407, %v3817
    %v4126 = vsel %vm3819, %v4125, %v4124
    %v4127 = vperm.slane %v3410, %v3815
    %v4128 = vperm.slane %v3413, %v3817
    %v4129 = vsel %vm3819, %v4128, %v4127
    %v4130 = vperm.slane %v3416, %v3815
    %v4131 = vperm.slane %v3419, %v3817
    %v4132 = vsel %vm3819, %v4131, %v4130
    %v4133 = vperm.slane %v3422, %v3815
    %v4134 = vperm.slane %v3425, %v3817
    %v4135 = vsel %vm3819, %v4134, %v4133
    %v4136 = vperm.slane %v3428, %v3815
    %v4137 = vperm.slane %v3431, %v3817
    %v4138 = vsel %vm3819, %v4137, %v4136
    %v4139 = vperm.slane %v3434, %v3815
    %v4140 = vperm.slane %v3437, %v3817
    %v4141 = vsel %vm3819, %v4140, %v4139
    %v4142 = vperm.slane %v3440, %v3815
    %v4143 = vperm.slane %v3443, %v3817
    %v4144 = vsel %vm3819, %v4143, %v4142
    %v4145 = vperm.slane %v3446, %v3815
    %v4146 = vperm.slane %v3449, %v3817
    %v4147 = vsel %vm3819, %v4146, %v4145
    %v4148 = vperm.slane %v3452, %v3815
    %v4149 = vperm.slane %v3455, %v3817
    %v4150 = vsel %vm3819, %v4149, %v4148
    %v4151 = vperm.slane %v3458, %v3815
    %v4152 = vperm.slane %v3461, %v3817
    %v4153 = vsel %vm3819, %v4152, %v4151
    %v4154 = vperm.slane %v3464, %v3815
    %v4155 = vperm.slane %v3467, %v3817
    %v4156 = vsel %vm3819, %v4155, %v4154
    %v4157 = vperm.slane %v3470, %v3815
    %v4158 = vperm.slane %v3473, %v3817
    %v4159 = vsel %vm3819, %v4158, %v4157
    %v4160 = vperm.slane %v3476, %v3815
    %v4161 = vperm.slane %v3479, %v3817
    %v4162 = vsel %vm3819, %v4161, %v4160
    %v4163 = vperm.slane %v3482, %v3815
    %v4164 = vperm.slane %v3485, %v3817
    %v4165 = vsel %vm3819, %v4164, %v4163
    %v4166 = vperm.slane %v3488, %v3815
    %v4167 = vperm.slane %v3491, %v3817
    %v4168 = vsel %vm3819, %v4167, %v4166
    %v4169 = vperm.slane %v3494, %v3815
    %v4170 = vperm.slane %v3497, %v3817
    %v4171 = vsel %vm3819, %v4170, %v4169
    %v4172 = vperm.slane %v3500, %v3815
    %v4173 = vperm.slane %v3503, %v3817
    %v4174 = vsel %vm3819, %v4173, %v4172
    %v4175 = vperm.slane %v3506, %v3815
    %v4176 = vperm.slane %v3509, %v3817
    %v4177 = vsel %vm3819, %v4176, %v4175
    %v4178 = vperm.slane %v3512, %v3815
    %v4179 = vperm.slane %v3515, %v3817
    %v4180 = vsel %vm3819, %v4179, %v4178
    %v4181 = vperm.slane %v3518, %v3815
    %v4182 = vperm.slane %v3521, %v3817
    %v4183 = vsel %vm3819, %v4182, %v4181
    %v4184 = vperm.slane %v3524, %v3815
    %v4185 = vperm.slane %v3527, %v3817
    %v4186 = vsel %vm3819, %v4185, %v4184
    %v4187 = vperm.slane %v3530, %v3815
    %v4188 = vperm.slane %v3533, %v3817
    %v4189 = vsel %vm3819, %v4188, %v4187
    %v4190 = vperm.slane %v3536, %v3815
    %v4191 = vperm.slane %v3539, %v3817
    %v4192 = vsel %vm3819, %v4191, %v4190
    %v4193 = vperm.slane %v3542, %v3815
    %v4194 = vperm.slane %v3545, %v3817
    %v4195 = vsel %vm3819, %v4194, %v4193
    %v4196 = vperm.slane %v3548, %v3815
    %v4197 = vperm.slane %v3551, %v3817
    %v4198 = vsel %vm3819, %v4197, %v4196
    %v4199 = vperm.slane %v3554, %v3815
    %v4200 = vperm.slane %v3557, %v3817
    %v4201 = vsel %vm3819, %v4200, %v4199
    %vm4202 = vcmask 1041409
    %v4203 = vsel %vm4202, %v3823, %v3820
    %vm4204 = vcmask 1042434
    %v4205 = vsel %vm4204, %v3826, %v4203
    %vm4206 = vcmask 1043459
    %v4207 = vsel %vm4206, %v3829, %v4205
    %vm4208 = vcmask 1044484
    %v4209 = vsel %vm4208, %v3832, %v4207
    %vm4210 = vcmask 1045509
    %v4211 = vsel %vm4210, %v3835, %v4209
    %vm4212 = vcmask 1046534
    %v4213 = vsel %vm4212, %v3838, %v4211
    %vm4214 = vcmask 1047559
    %v4215 = vsel %vm4214, %v3841, %v4213
    %v4216 = vsel %vm4202, %v3847, %v3844
    %v4217 = vsel %vm4204, %v3850, %v4216
    %v4218 = vsel %vm4206, %v3853, %v4217
    %v4219 = vsel %vm4208, %v3856, %v4218
    %v4220 = vsel %vm4210, %v3859, %v4219
    %v4221 = vsel %vm4212, %v3862, %v4220
    %v4222 = vsel %vm4214, %v3865, %v4221
    %v4223 = vsel %vm4202, %v3871, %v3868
    %v4224 = vsel %vm4204, %v3874, %v4223
    %v4225 = vsel %vm4206, %v3877, %v4224
    %v4226 = vsel %vm4208, %v3880, %v4225
    %v4227 = vsel %vm4210, %v3883, %v4226
    %v4228 = vsel %vm4212, %v3886, %v4227
    %v4229 = vsel %vm4214, %v3889, %v4228
    %v4230 = vsel %vm4202, %v3895, %v3892
    %v4231 = vsel %vm4204, %v3898, %v4230
    %v4232 = vsel %vm4206, %v3901, %v4231
    %v4233 = vsel %vm4208, %v3904, %v4232
    %v4234 = vsel %vm4210, %v3907, %v4233
    %v4235 = vsel %vm4212, %v3910, %v4234
    %v4236 = vsel %vm4214, %v3913, %v4235
    %v4237 = vsel %vm4202, %v3919, %v3916
    %v4238 = vsel %vm4204, %v3922, %v4237
    %v4239 = vsel %vm4206, %v3925, %v4238
    %v4240 = vsel %vm4208, %v3928, %v4239
    %v4241 = vsel %vm4210, %v3931, %v4240
    %v4242 = vsel %vm4212, %v3934, %v4241
    %v4243 = vsel %vm4214, %v3937, %v4242
    %v4244 = vsel %vm4202, %v3943, %v3940
    %v4245 = vsel %vm4204, %v3946, %v4244
    %v4246 = vsel %vm4206, %v3949, %v4245
    %v4247 = vsel %vm4208, %v3952, %v4246
    %v4248 = vsel %vm4210, %v3955, %v4247
    %v4249 = vsel %vm4212, %v3958, %v4248
    %v4250 = vsel %vm4214, %v3961, %v4249
    %v4251 = vsel %vm4202, %v3967, %v3964
    %v4252 = vsel %vm4204, %v3970, %v4251
    %v4253 = vsel %vm4206, %v3973, %v4252
    %v4254 = vsel %vm4208, %v3976, %v4253
    %v4255 = vsel %vm4210, %v3979, %v4254
    %v4256 = vsel %vm4212, %v3982, %v4255
    %v4257 = vsel %vm4214, %v3985, %v4256
    %v4258 = vsel %vm4202, %v3991, %v3988
    %v4259 = vsel %vm4204, %v3994, %v4258
    %v4260 = vsel %vm4206, %v3997, %v4259
    %v4261 = vsel %vm4208, %v4000, %v4260
    %v4262 = vsel %vm4210, %v4003, %v4261
    %v4263 = vsel %vm4212, %v4006, %v4262
    %v4264 = vsel %vm4214, %v4009, %v4263
    %v4265 = vsel %vm4202, %v4015, %v4012
    %v4266 = vsel %vm4204, %v4018, %v4265
    %v4267 = vsel %vm4206, %v4021, %v4266
    %v4268 = vsel %vm4208, %v4024, %v4267
    %v4269 = vsel %vm4210, %v4027, %v4268
    %v4270 = vsel %vm4212, %v4030, %v4269
    %v4271 = vsel %vm4214, %v4033, %v4270
    %v4272 = vsel %vm4202, %v4039, %v4036
    %v4273 = vsel %vm4204, %v4042, %v4272
    %v4274 = vsel %vm4206, %v4045, %v4273
    %v4275 = vsel %vm4208, %v4048, %v4274
    %v4276 = vsel %vm4210, %v4051, %v4275
    %v4277 = vsel %vm4212, %v4054, %v4276
    %v4278 = vsel %vm4214, %v4057, %v4277
    %v4279 = vsel %vm4202, %v4063, %v4060
    %v4280 = vsel %vm4204, %v4066, %v4279
    %v4281 = vsel %vm4206, %v4069, %v4280
    %v4282 = vsel %vm4208, %v4072, %v4281
    %v4283 = vsel %vm4210, %v4075, %v4282
    %v4284 = vsel %vm4212, %v4078, %v4283
    %v4285 = vsel %vm4214, %v4081, %v4284
    %v4286 = vsel %vm4202, %v4087, %v4084
    %v4287 = vsel %vm4204, %v4090, %v4286
    %v4288 = vsel %vm4206, %v4093, %v4287
    %v4289 = vsel %vm4208, %v4096, %v4288
    %v4290 = vsel %vm4210, %v4099, %v4289
    %v4291 = vsel %vm4212, %v4102, %v4290
    %v4292 = vsel %vm4214, %v4105, %v4291
    %v4293 = vsel %vm4202, %v4111, %v4108
    %v4294 = vsel %vm4204, %v4114, %v4293
    %v4295 = vsel %vm4206, %v4117, %v4294
    %v4296 = vsel %vm4208, %v4120, %v4295
    %v4297 = vsel %vm4210, %v4123, %v4296
    %v4298 = vsel %vm4212, %v4126, %v4297
    %v4299 = vsel %vm4214, %v4129, %v4298
    %v4300 = vsel %vm4202, %v4135, %v4132
    %v4301 = vsel %vm4204, %v4138, %v4300
    %v4302 = vsel %vm4206, %v4141, %v4301
    %v4303 = vsel %vm4208, %v4144, %v4302
    %v4304 = vsel %vm4210, %v4147, %v4303
    %v4305 = vsel %vm4212, %v4150, %v4304
    %v4306 = vsel %vm4214, %v4153, %v4305
    %v4307 = vsel %vm4202, %v4159, %v4156
    %v4308 = vsel %vm4204, %v4162, %v4307
    %v4309 = vsel %vm4206, %v4165, %v4308
    %v4310 = vsel %vm4208, %v4168, %v4309
    %v4311 = vsel %vm4210, %v4171, %v4310
    %v4312 = vsel %vm4212, %v4174, %v4311
    %v4313 = vsel %vm4214, %v4177, %v4312
    %v4314 = vsel %vm4202, %v4183, %v4180
    %v4315 = vsel %vm4204, %v4186, %v4314
    %v4316 = vsel %vm4206, %v4189, %v4315
    %v4317 = vsel %vm4208, %v4192, %v4316
    %v4318 = vsel %vm4210, %v4195, %v4317
    %v4319 = vsel %vm4212, %v4198, %v4318
    %v4320 = vsel %vm4214, %v4201, %v4319
    %4337 = vxpose.xlu0.b32.start [1/16] %v4215, 128
    %4338 = vxpose.xlu0.b32.cont [2/16] %v4222, 128
    %4339 = vxpose.xlu0.b32.cont [3/16] %v4229, 128
    %4340 = vxpose.xlu0.b32.cont [4/16] %v4236, 128
    %4341 = vxpose.xlu0.b32.cont [5/16] %v4243, 128
    %4342 = vxpose.xlu0.b32.cont [6/16] %v4250, 128
    %4343 = vxpose.xlu0.b32.cont [7/16] %v4257, 128
    %4344 = vxpose.xlu0.b32.cont [8/16] %v4264, 128
    %4345 = vxpose.xlu0.b32.cont [9/16] %v4271, 128
    %4346 = vxpose.xlu0.b32.cont [10/16] %v4278, 128
    %4347 = vxpose.xlu0.b32.cont [11/16] %v4285, 128
    %4348 = vxpose.xlu0.b32.cont [12/16] %v4292, 128
    %4349 = vxpose.xlu0.b32.cont [13/16] %v4299, 128
    %4350 = vxpose.xlu0.b32.cont [14/16] %v4306, 128
    %4351 = vxpose.xlu0.b32.cont [15/16] %v4313, 128
    %4352 = vxpose.xlu0.b32.end [16/16] %v4320, 128
    %v4353 = vpop.trf.xlu0
    %v4354 = vpop.trf.xlu0
    %v4355 = vpop.trf.xlu0
    %v4356 = vpop.trf.xlu0
    %v4357 = vpop.trf.xlu0
    %v4358 = vpop.trf.xlu0
    %v4359 = vpop.trf.xlu0
    %v4360 = vpop.trf.xlu0
    %v4361 = vpop.trf.xlu0
    %v4362 = vpop.trf.xlu0
    %v4363 = vpop.trf.xlu0
    %v4364 = vpop.trf.xlu0
    %v4365 = vpop.trf.xlu0
    %v4366 = vpop.trf.xlu0
    %v4367 = vpop.trf.xlu0
    %v4368 = vpop.trf.xlu0
    %v4369 = vld [vmem:[%s6] sm:$0xff]
    %v4370 = vld [vmem:[%s6 + $0x8] sm:$0xff]
    %vm4371 = vcmp.gt.f32.partialorder %v4369, 0.0
    %vm4372 = vcmp.gt.f32.partialorder %v4370, 0.0
    %v4373 = vsel %vm4371, -1e+12, %v4353
    %v4374 = vsel %vm4372, -1e+12, %v4354
    %4375 = vmax.xlane.f32.xlu0 %v4373
    %v4376 = vpop.xlane.xlu0 %4375
    %4377 = vmax.xlane.f32.xlu0 %v4374
    %v4378 = vpop.xlane.xlu0 %4377
    %v4379 = vsub.f32 %v4373, %v4376
    %v4380 = vsub.f32 %v4374, %v4378
    %v4381 = vmul.f32 %v4379, 1.442695
    %v4382 = vpow.pop %v4381
    %v4383 = vmul.f32 %v4380, 1.442695
    %v4384 = vpow.pop %v4383
    %4385 = vadd.xlane.f32.xlu0 %v4382
    %v4386 = vpop.xlane.xlu0 %4385
    %4387 = vadd.xlane.f32.xlu0 %v4384
    %v4388 = vpop.xlane.xlu0 %4387
    %v4389 = vrcp.pop %v4386
    %v4390 = vmul.f32 %v4386, %v4389
    %v4391 = vsub.f32 1.0, %v4390
    %v4392 = vmul.f32 %v4389, %v4391
    %v4393 = vadd.f32 %v4389, %v4392
    %vm4394 = vweird.f32 %v4386
    %vm4395 = vweird.f32 %v4389
    %vm4396 = vmor %vm4394, %vm4395
    %v4397 = vsel %vm4396, %v4389, %v4393
    %v4398 = vand.u32 2147483647, %v4386
    %vm4399 = vcmp.eq.f32.partialorder %v4398, 8.507059e+37
    %v4400 = vand.u32 %v4386, 2147483648
    %v4401 = vor.u32 1.1754944e-38, %v4400
    %v4402 = vsel %vm4399, %v4401, %v4397
    %v4403 = vmul.f32 %v4382, %v4402
    %v4404 = vrcp.pop %v4388
    %v4405 = vmul.f32 %v4388, %v4404
    %v4406 = vsub.f32 1.0, %v4405
    %v4407 = vmul.f32 %v4404, %v4406
    %v4408 = vadd.f32 %v4404, %v4407
    %vm4409 = vweird.f32 %v4388
    %vm4410 = vweird.f32 %v4404
    %vm4411 = vmor %vm4409, %vm4410
    %v4412 = vsel %vm4411, %v4404, %v4408
    %v4413 = vand.u32 2147483647, %v4388
    %vm4414 = vcmp.eq.f32.partialorder %v4413, 8.507059e+37
    %v4415 = vand.u32 %v4388, 2147483648
    %v4416 = vor.u32 1.1754944e-38, %v4415
    %v4417 = vsel %vm4414, %v4416, %v4412
    %v4418 = vmul.f32 %v4384, %v4417
    %4419 = vst [vmem:[#allocation2] sm:$0xff] %v4403
    %4420 = vst [vmem:[#allocation2 + $0x8] sm:$0xff] %v4418
    // Predicated region
    $region30: #{tpu_custom_call.1} parent=1 // pred_check
      _
    $region31: #{tpu_custom_call.1} parent=1 // pred_check_branch
      %4422 = sbr.rel (0) target = $region33
    $region32: #{tpu_custom_call.1} parent=1 // pred_region
      %4424 = vsyncadd [#allocation3], 0
      %s4425 = sshll.u32 [#allocation2], 4
      %s4426 = int_to_ptr.vmem [resolvable:$true] %s4425
      %s4427 = sshll.u32 %s7, 4
      %s4428 = int_to_ptr.hbm [resolvable:$true] %s4427
      %4433 = dma.vmem_to_hbm [thread:$0]  %s4426, 256, %s4428, [#allocation3], 128, 128, 8
    $region33: #{tpu_custom_call.1} parent=1 // pred_fallthru
      _
    // Predicated region
    $region34: #{tpu_custom_call.1} parent=1 // pred_check
      _
    $region35: #{tpu_custom_call.1} parent=1 // pred_check_branch
      %4435 = sbr.rel (0) target = $region37
    $region36: #{tpu_custom_call.1} parent=1 // pred_region
      %4437 = dma.done [#allocation3], 256
    $region37: #{tpu_custom_call.1} parent=1 // pred_fallthru
      _
    %4438 = vsyncpa [#allocation3], 1

</llo_original>
